<compile_context>
chip_gen: v6e
topology: v6e:2x2x1
jax: 0.10.0
libtpu: 0.0.40
codegen_flags: <defaults>
</compile_context>

<pallas_src>
import jax
import jax.numpy as jnp
from jax import lax
from jax.experimental import pallas as pl
from jax.experimental.pallas import tpu as pltpu

D_IN = 800       # project_layer input dim  (nn.Linear(800, 2664))
D_OUT = 2664     # project_layer output dim (vocab size for CTC)
V_PAD = 2688     # 21 * 128 -> lane-dense output stores
NEG_INF = -1.0e30


def _round_up(x, m):
    return ((x + m - 1) // m) * m


# ---------------------------------------------------------------------------
# Pallas kernel: fused Linear(800 -> V_PAD) + log_softmax over the vocab dim.
# ---------------------------------------------------------------------------
def _proj_logsoftmax_kernel(x_ref, w_ref, b_ref, o_ref):
    # In-kernel bf16 cast of the activations (VPU), f32 MXU accumulation.
    x = x_ref[...].astype(jnp.bfloat16)              # (TM, 800)
    w = w_ref[...]                                   # (800, 2688) bf16, resident
    b = b_ref[...]                                   # (1, 2688)   f32 (pad=-inf)
    logits = jnp.dot(x, w, preferred_element_type=jnp.float32) + b
    m = jnp.max(logits, axis=-1, keepdims=True)      # row max (real cols win)
    s = jnp.sum(jnp.exp(logits - m), axis=-1, keepdims=True)  # pads underflow to 0
    lse = m + jnp.log(s)                             # single (TM, 1) epilogue value
    o_ref[...] = (logits - lse).astype(o_ref.dtype)


def pack_projection_params(weight, bias):
    """One-time packing of the projection params (call OUTSIDE jit).

    Returns a bf16 weight padded to (800, V_PAD) and an f32 (1, V_PAD) bias
    whose padded vocab columns are -inf, so the fused log_softmax over the
    real vocab stays exact.
    """
    assert weight.shape == (D_IN, D_OUT) and bias.shape == (D_OUT,)
    w_bf = jnp.pad(weight.astype(jnp.bfloat16), ((0, 0), (0, V_PAD - D_OUT)))
    b_pad = jnp.pad(bias.astype(jnp.float32).reshape(1, D_OUT),
                    ((0, 0), (0, V_PAD - D_OUT)), constant_values=NEG_INF)
    return {"w_packed": w_bf, "b_packed": b_pad}


def project_log_softmax(x_2d, w_packed, b_packed, *, tile_m=512):
    """x_2d: (M, 800) f32 -> (M, V_PAD) f32 log-probs, computed in Pallas.

    Columns [D_OUT:V_PAD] of the result are ~-inf and are never indexed by CTC
    (targets < D_OUT, blank = 0), and they contribute 0 to the softmax sum, so
    the log-probs over the real vocab are exact.
    """
    M, K = x_2d.shape
    assert K == D_IN and w_packed.shape == (D_IN, V_PAD)

    # Tile sizing: big tiles for pipeline efficiency, never bigger than needed.
    tile_m = min(tile_m, _round_up(max(M, 1), 8))
    # v7x has 2 TensorCores: give the 'parallel' M axis at least 2 grid steps
    # whenever there is enough work to split.
    if M > 8 and _round_up(M, tile_m) // tile_m < 2:
        tile_m = max(8, _round_up(-(-M // 2), 8))
    M_pad = _round_up(M, tile_m)

    x_in = x_2d.astype(jnp.float32)
    if M_pad != M:
        x_in = jnp.pad(x_in, ((0, M_pad - M), (0, 0)))

    out = pl.pallas_call(
        _proj_logsoftmax_kernel,
        out_shape=jax.ShapeDtypeStruct((M_pad, V_PAD), jnp.float32),
        grid_spec=pltpu.PrefetchScalarGridSpec(
            num_scalar_prefetch=0,
            grid=(M_pad // tile_m,),
            in_specs=[
                pl.BlockSpec((tile_m, D_IN), lambda i: (i, 0)),   # activations f32
                pl.BlockSpec((D_IN, V_PAD), lambda i: (0, 0)),    # weight bf16 (resident)
                pl.BlockSpec((1, V_PAD), lambda i: (0, 0)),       # bias f32
            ],
            out_specs=pl.BlockSpec((tile_m, V_PAD), lambda i: (i, 0)),
        ),
        compiler_params=pltpu.CompilerParams(
            dimension_semantics=("parallel",),
            # ~23 MiB live at tile_m=512; 32 MiB fits v5e/v6e/v7x scoped VMEM.
            vmem_limit_bytes=32 * 1024 * 1024),
    )(x_in, w_packed, b_packed)

    return out[:M] if M_pad != M else out


# ---------------------------------------------------------------------------
# Plain-JAX CTC loss (standard alpha recursion, blank=0, 'mean' reduction).
# ---------------------------------------------------------------------------
def _ctc_loss_single(log_probs, targets, input_length, target_length, blank=0):
    # log_probs: (T, V) f32 ; targets: (S,) int32 ; lengths: scalars
    T, _ = log_probs.shape
    S = targets.shape[0]
    ext_len = 2 * S + 1
    ext = jnp.full((ext_len,), blank, dtype=targets.dtype)
    ext = ext.at[1::2].set(targets)
    ext_prev2 = jnp.concatenate(
        [jnp.full((2,), blank, dtype=targets.dtype), ext[:-2]])
    can_skip = (ext != blank) & (ext != ext_prev2)

    lp0 = log_probs[0]
    alpha0 = jnp.full((ext_len,), NEG_INF, dtype=jnp.float32)
    alpha0 = alpha0.at[0].set(lp0[blank])
    alpha0 = alpha0.at[1].set(lp0[ext[1]])

    def step(alpha, t):
        lp = log_probs[t]
        a1 = jnp.concatenate([jnp.array([NEG_INF], jnp.float32), alpha[:-1]])
        a2 = jnp.concatenate([jnp.full((2,), NEG_INF, jnp.float32), alpha[:-2]])
        a2 = jnp.where(can_skip, a2, NEG_INF)
        new = jax.scipy.special.logsumexp(
            jnp.stack([alpha, a1, a2]), axis=0) + lp[ext]
        new = jnp.where(t < input_length, new, alpha)   # freeze past T_b
        return new, None

    alpha_T, _ = lax.scan(step, alpha0, jnp.arange(1, T))
    end1 = alpha_T[2 * target_length - 1]
    end2 = alpha_T[2 * target_length]
    return -jnp.logaddexp(end1, end2)


def ctc_loss(log_probs_btv, targets, input_lengths, target_lengths):
    # log_probs_btv: (B, T, V); targets: (B, S).  vmap over the batch axis
    # directly -> no (B,T,V)->(T,B,V) transpose / extra HBM traffic needed.
    losses = jax.vmap(_ctc_loss_single, in_axes=(0, 0, 0, 0))(
        log_probs_btv, targets, input_lengths, target_lengths)
    return jnp.mean(losses / target_lengths.astype(jnp.float32))


# ---------------------------------------------------------------------------
# Pre_encoder.forward
# ---------------------------------------------------------------------------
@jax.jit
def pre_encoder_forward(packed_params, inputs, inputs_length, targets,
                        targets_length):
    B, T, _ = inputs.shape
    # encoder: identity stand-in on (B, T, 800) features.
    # TODO(synk): replace with the real encoder once its architecture is known.
    enc = inputs
    # project_layer + log_softmax (needed by CTC) fused in the Pallas kernel.
    logp = project_log_softmax(
        enc.reshape(B * T, D_IN),
        packed_params["w_packed"], packed_params["b_packed"])
    logp = logp.reshape(B, T, V_PAD)
    # Original code permutes to (T, B, V) purely to satisfy torch's CTC API;
    # our CTC consumes (B, T, V) directly, which is semantically identical.
    return ctc_loss(logp, targets, inputs_length, targets_length)


if __name__ == "__main__":
    key = jax.random.PRNGKey(0)
    k_x, k_w, k_b, k_t = jax.random.split(key, 4)

    B, T, S = 2, 8, 3
    # Deterministic synthetic parameters (shapes from nn.Linear(800, 2664)).
    bound = 1.0 / (D_IN ** 0.5)
    weight = jax.random.uniform(k_w, (D_IN, D_OUT), jnp.float32, -bound, bound)
    bias = jax.random.uniform(k_b, (D_OUT,), jnp.float32, -bound, bound)
    # Pack once, outside jit (no per-step weight cast/pad under the trace).
    packed_params = pack_projection_params(weight, bias)
    packed_params = jax.tree_util.tree_map(jax.block_until_ready, packed_params)

    inputs = jax.random.normal(k_x, (B, T, D_IN), jnp.float32)
    inputs_length = jnp.array([T, T - 2], dtype=jnp.int32)
    targets = jax.random.randint(k_t, (B, S), 1, D_OUT, dtype=jnp.int32)
    targets_length = jnp.array([S, S - 1], dtype=jnp.int32)

    loss = pre_encoder_forward(packed_params, inputs, inputs_length,
                               targets, targets_length)
    jax.block_until_ready(loss)
    assert jnp.isfinite(loss)
    print("KERNEL_OK")
</pallas_src>

<mosaic_0001>
module attributes {stable_mosaic.version = 11 : i64} {
  func.func @_proj_logsoftmax_kernel(%arg0: i32, %arg1: memref<8x800xf32, #tpu.memory_space<vmem>>, %arg2: memref<800x2688xbf16, #tpu.memory_space<vmem>>, %arg3: memref<1x2688xf32, #tpu.memory_space<vmem>>, %arg4: memref<8x2688xf32, #tpu.memory_space<vmem>>) attributes {dimension_semantics = [#tpu.dimension_semantics<parallel>], iteration_bounds = array<i64: 2>, scalar_prefetch = 0 : i64, scratch_operands = 0 : i64, tpu.core_type = #tpu.core_type<tc>, window_params = [{transform_indices = @transform_0, window_bounds = array<i64: 8, 800>}, {pipeline_mode = #tpu.pipeline_mode<synchronous>, transform_indices = @transform_1, window_bounds = array<i64: 800, 2688>}, {pipeline_mode = #tpu.pipeline_mode<synchronous>, transform_indices = @transform_2, window_bounds = array<i64: 1, 2688>}, {transform_indices = @transform_3, window_bounds = array<i64: 8, 2688>}]} {
    %c0 = arith.constant 0 : index
    %c0_0 = arith.constant 0 : index
    %0 = vector.load %arg1[%c0, %c0_0] : memref<8x800xf32, #tpu.memory_space<vmem>>, vector<8x800xf32>
    %1 = arith.truncf %0 : vector<8x800xf32> to vector<8x800xbf16>
    %c0_1 = arith.constant 0 : index
    %c0_2 = arith.constant 0 : index
    %2 = vector.load %arg2[%c0_1, %c0_2] : memref<800x2688xbf16, #tpu.memory_space<vmem>>, vector<800x2688xbf16>
    %c0_3 = arith.constant 0 : index
    %c0_4 = arith.constant 0 : index
    %3 = vector.load %arg3[%c0_3, %c0_4] : memref<1x2688xf32, #tpu.memory_space<vmem>>, vector<1x2688xf32>
    %cst = arith.constant dense<0.000000e+00> : vector<8x2688xf32>
    %4 = tpu.matmul %1, %2, %cst {dimension_numbers = #tpu.dot_dimension_numbers<[1], [0], [0], [1], [0, 0, 1, 1], [], []>} : vector<8x800xbf16>, vector<800x2688xbf16>, vector<8x2688xf32> -> vector<8x2688xf32>
    %5 = vector.broadcast %3 : vector<1x2688xf32> to vector<8x2688xf32>
    %6 = arith.addf %4, %5 : vector<8x2688xf32>
    %cst_5 = arith.constant dense<0xFF800000> : vector<8xf32>
    %7 = vector.multi_reduction <maximumf>, %6, %cst_5 [1] : vector<8x2688xf32> to vector<8xf32>
    %8 = vector.shape_cast %7 : vector<8xf32> to vector<8x1xf32>
    %9 = vector.broadcast %8 : vector<8x1xf32> to vector<8x2688xf32>
    %10 = arith.subf %6, %9 : vector<8x2688xf32>
    %11 = math.exp %10 : vector<8x2688xf32>
    %cst_6 = arith.constant dense<0.000000e+00> : vector<8xf32>
    %12 = vector.multi_reduction <add>, %11, %cst_6 [1] : vector<8x2688xf32> to vector<8xf32>
    %13 = vector.shape_cast %12 : vector<8xf32> to vector<8x1xf32>
    %14 = math.log %13 : vector<8x1xf32>
    %15 = arith.addf %8, %14 : vector<8x1xf32>
    %16 = vector.broadcast %15 : vector<8x1xf32> to vector<8x2688xf32>
    %17 = arith.subf %6, %16 : vector<8x2688xf32>
    %c0_7 = arith.constant 0 : index
    %c0_8 = arith.constant 0 : index
    %18 = vector.load %arg4[%c0_7, %c0_8] : memref<8x2688xf32, #tpu.memory_space<vmem>>, vector<8x2688xf32>
    tpu.vector_store %arg4[%c0_7, %c0_8], %17 {strides = array<i32>} : memref<8x2688xf32, #tpu.memory_space<vmem>>, vector<8x2688xf32>,
    return
  }
  func.func @transform_0(%arg0: i32) -> (i32, i32) {
    %c0_i32 = arith.constant 0 : i32
    %c0_i32_0 = arith.constant 0 : i32
    return %arg0, %c0_i32 : i32, i32
  }
  func.func @transform_1(%arg0: i32) -> (i32, i32) {
    %c0_i32 = arith.constant 0 : i32
    %c0_i32_0 = arith.constant 0 : i32
    %c0_i32_1 = arith.constant 0 : i32
    return %c0_i32, %c0_i32_0 : i32, i32
  }
  func.func @transform_2(%arg0: i32) -> (i32, i32) {
    %c0_i32 = arith.constant 0 : i32
    %c0_i32_0 = arith.constant 0 : i32
    %c0_i32_1 = arith.constant 0 : i32
    return %c0_i32, %c0_i32_0 : i32, i32
  }
  func.func @transform_3(%arg0: i32) -> (i32, i32) {
    %c0_i32 = arith.constant 0 : i32
    %c0_i32_0 = arith.constant 0 : i32
    return %arg0, %c0_i32 : i32, i32
  }
}

</mosaic_0001>

<llo_original>
// kernel: pre_encoder_forward.1
$region0: #{pre_encoder_forward.1}
  #allocation0 [shape = 'u32[]', space=smem, size = 0x4, offset = 0x4, fixed_abs, tag = 'smem constant byte address 0x4 - core index']
  #allocation1 [shape = 'u32[144,128]{1,0:T(1,128)}', space=vmem, size = 0x12000, scoped, tag = 'internal scratch']
  %s0 = inlined_call_operand.hbm [shape: f32[16,800], index: 0, kind: input, shape index: {}]
  %s1 = inlined_call_operand.hbm [shape: bf16[800,2688], index: 1, kind: input, shape index: {}]
  %s2 = inlined_call_operand.hbm [shape: f32[1,2688], index: 2, kind: input, shape index: {}]
  %s3 = inlined_call_operand.vmem [shape: f32[16,2688], index: 3, kind: output, shape index: {}]
  %s4 = sld [smem:[#allocation0]]
  $region57: #{pre_encoder_forward.1} parent=0
    _
  %s6 = ssub.s32 1, %s4
  %s7 = scalar_select 0, %s6, %s4
  $region1: #{pre_encoder_forward.1} parent=0
    #allocation2 [shape = 'u8[57344]{0}', space=vmem, size = 0xe000, scoped, tag = 'input window, operand 0']
    #allocation3 [shape = 's32[2]{0}', space=sflag, size = 0x8, scoped, tag = 'scoped memory for pre_encoder_forward.1']
    #allocation4 [shape = 'u8[4300800]{0}', space=vmem, size = 0x41a000, scoped, tag = 'input window, operand 1, single buffered']
    #allocation5 [shape = 's32[1]{0}', space=sflag, size = 0x4, scoped, tag = 'scoped memory for pre_encoder_forward.1']
    #allocation6 [shape = 'u8[10752]{0}', space=vmem, size = 0x2c00, scoped, tag = 'input window, operand 2, single buffered']
    %8 = vsyncpa [#allocation3], 0
    %s9 = scalar_lea.sflag [#allocation3], 1
    %10 = vsyncpa %s9, 0
    %11 = vsyncpa [#allocation5], 0
    loop: start=0, step=1, limit=4
    $region2: #{pre_encoder_forward.1} parent=1 // loop_pre_header
      _
    $region3: #{pre_encoder_forward.1} parent=1 // loop_header
      %s13 = sphi 0, %s17
      %p14 = scmp.ge.s32.totalorder %s13, 4
      %s23 = sphi 0, %s25
      %s26 = sphi 0, %s23
      %s27 = sphi 0, %s26
      %s43 = sphi 0, %s27
      %s47 = sphi 0, %s47
      %s49 = sphi 0, %s47
      %s50 = sphi 0, %s49
      %s64 = sphi 0, %s50
      %s68 = sphi 0, %s68
      %s70 = sphi 0, %s68
      %s71 = sphi 0, %s70
      %s85 = sphi 0, %s71
      %s91 = sphi 0, %s93
      %s94 = sphi 0, %s91
      %s95 = sphi 0, %s94
      %s111 = sphi 0, %s95
    $region4: #{pre_encoder_forward.1} parent=1 // loop_header_branch
      %16 = sbr.rel (%p14) target = $region8
    $region5: #{pre_encoder_forward.1} parent=1 // loop_body
      %s18 = ssub.s32 %s13, 1
      %s19 = ssub.s32 %s13, 2
      %s20 = sadd.s32 %s13, 1
      %s21 = ssub.s32 %s13, %s20
      %p22 = scmp.eq.s32.totalorder %s21, 0
      %s24 = sadd.s32 %s23, 1
      %s25 = scalar_select %p22, %s23, %s24
      %p28 = pneg %p22
      %p29 = scmp.eq.s32.totalorder %s13, 1
      %p30 = por %p28, %p29
      %p31 = scmp.ne.s32.totalorder %s23, %s26
      %p32 = scmp.eq.s32.totalorder %s13, 0
      %p33 = por %p31, %p32
      %p34 = scmp.ne.s32.totalorder %s23, %s26
      %p35 = scmp.eq.s32.totalorder %s18, 1
      %p36 = por %p34, %p35
      %p37 = scmp.ne.s32.totalorder %s26, %s27
      %p38 = scmp.eq.s32.totalorder %s18, 0
      %p39 = por %p37, %p38
      %p40 = scmp.ne.s32.totalorder %s26, %s27
      %p41 = scmp.eq.s32.totalorder %s19, 1
      %p42 = por %p40, %p41
      %p44 = scmp.ne.s32.totalorder %s27, %s43
      %p45 = scmp.eq.s32.totalorder %s19, 0
      %p46 = por %p44, %p45
      %s48 = sadd.s32 %s47, 1
      %p51 = scmp.eq.s32.totalorder %s13, 1
      %p52 = scmp.ne.s32.totalorder %s47, %s49
      %p53 = scmp.eq.s32.totalorder %s13, 0
      %p54 = por %p52, %p53
      %p55 = scmp.ne.s32.totalorder %s47, %s49
      %p56 = scmp.eq.s32.totalorder %s18, 1
      %p57 = por %p55, %p56
      %p58 = scmp.ne.s32.totalorder %s49, %s50
      %p59 = scmp.eq.s32.totalorder %s18, 0
      %p60 = por %p58, %p59
      %p61 = scmp.ne.s32.totalorder %s49, %s50
      %p62 = scmp.eq.s32.totalorder %s19, 1
      %p63 = por %p61, %p62
      %p65 = scmp.ne.s32.totalorder %s50, %s64
      %p66 = scmp.eq.s32.totalorder %s19, 0
      %p67 = por %p65, %p66
      %s69 = sadd.s32 %s68, 1
      %p72 = scmp.eq.s32.totalorder %s13, 1
      %p73 = scmp.ne.s32.totalorder %s68, %s70
      %p74 = scmp.eq.s32.totalorder %s13, 0
      %p75 = por %p73, %p74
      %p76 = scmp.ne.s32.totalorder %s68, %s70
      %p77 = scmp.eq.s32.totalorder %s18, 1
      %p78 = por %p76, %p77
      %p79 = scmp.ne.s32.totalorder %s70, %s71
      %p80 = scmp.eq.s32.totalorder %s18, 0
      %p81 = por %p79, %p80
      %p82 = scmp.ne.s32.totalorder %s70, %s71
      %p83 = scmp.eq.s32.totalorder %s19, 1
      %p84 = por %p82, %p83
      %p86 = scmp.ne.s32.totalorder %s71, %s85
      %p87 = scmp.eq.s32.totalorder %s19, 0
      %p88 = por %p86, %p87
      %s89 = ssub.s32 %s13, %s20
      %p90 = scmp.eq.s32.totalorder %s89, 0
      %s92 = sadd.s32 %s91, 1
      %s93 = scalar_select %p90, %s91, %s92
      %p96 = pneg %p90
      %p97 = scmp.eq.s32.totalorder %s13, 1
      %p98 = por %p96, %p97
      %p99 = scmp.ne.s32.totalorder %s91, %s94
      %p100 = scmp.eq.s32.totalorder %s13, 0
      %p101 = por %p99, %p100
      %p102 = scmp.ne.s32.totalorder %s91, %s94
      %p103 = scmp.eq.s32.totalorder %s18, 1
      %p104 = por %p102, %p103
      %p105 = scmp.ne.s32.totalorder %s94, %s95
      %p106 = scmp.eq.s32.totalorder %s18, 0
      %p107 = por %p105, %p106
      %p108 = scmp.ne.s32.totalorder %s94, %s95
      %p109 = scmp.eq.s32.totalorder %s19, 1
      %p110 = por %p108, %p109
      %p112 = scmp.ne.s32.totalorder %s95, %s111
      %p113 = scmp.eq.s32.totalorder %s19, 0
      %p114 = por %p112, %p113
      %p115 = scmp.le.s32.totalorder 1, %s13
      %p116 = scmp.lt.s32.totalorder %s13, 3
      %p117 = pnand %p115, %p116
      %p118 = pneg %p117
      // Predicated region
      $region9: #{pre_encoder_forward.1} parent=5 // pred_check
        _
      $region10: #{pre_encoder_forward.1} parent=5 // pred_check_branch
        %120 = sbr.rel (%p117) target = $region12
      $region11: #{pre_encoder_forward.1} parent=5 // pred_region
        %s121 = ssub.s32 %s13, 1
        // Predicated region
        $region13: #{pre_encoder_forward.1} parent=11 // pred_check
          %p122 = pneg %p60
        $region14: #{pre_encoder_forward.1} parent=11 // pred_check_branch
          %124 = sbr.rel (%p122) target = $region16
        $region15: #{pre_encoder_forward.1} parent=11 // pred_region
          %s126 = ssub.s32 134400, 134400
          %127 = vsyncadd [#allocation5], %s126
          %s128 = sshll.u32 [#allocation4], 4
          %s129 = int_to_ptr.vmem [resolvable:$true] %s128
          %134 = dma.hbm_to_vmem [thread:$0]  %s1, 134400, %s129, [#allocation5], 1344, 1344, 84
        $region16: #{pre_encoder_forward.1} parent=11 // pred_fallthru
          _
        // Predicated region
        $region17: #{pre_encoder_forward.1} parent=11 // pred_check
          %p135 = pneg %p81
        $region18: #{pre_encoder_forward.1} parent=11 // pred_check_branch
          %137 = sbr.rel (%p135) target = $region20
        $region19: #{pre_encoder_forward.1} parent=11 // pred_region
          %s139 = ssub.s32 336, 336
          %140 = vsyncadd [#allocation5], %s139
          %s142 = sshll.u32 [#allocation6], 4
          %s143 = int_to_ptr.vmem [resolvable:$true] %s142
          %145 = dma.hbm_to_vmem [thread:$0]  %s2, 336, %s143, [#allocation5]
        $region20: #{pre_encoder_forward.1} parent=11 // pred_fallthru
          _
      $region12: #{pre_encoder_forward.1} parent=5 // pred_fallthru
        _
      %p146 = scmp.lt.s32.totalorder %s13, 2
      // Predicated region
      $region21: #{pre_encoder_forward.1} parent=5 // pred_check
        %p147 = pneg %p146
      $region22: #{pre_encoder_forward.1} parent=5 // pred_check_branch
        %149 = sbr.rel (%p147) target = $region24
      $region23: #{pre_encoder_forward.1} parent=5 // pred_region
        // Predicated region
        $region25: #{pre_encoder_forward.1} parent=23 // pred_check
          %p150 = pneg %p33
        $region26: #{pre_encoder_forward.1} parent=23 // pred_check_branch
          %152 = sbr.rel (%p150) target = $region28
        $region27: #{pre_encoder_forward.1} parent=23 // pred_region
          %s153 = sand.u32 %s23, 1
          %s154 = scalar_lea.sflag [#allocation3], %s153
          %s155 = sand.u32 %s23, 1
          %s156 = smul.addr %s155, 56
          %s157 = scalar_lea.vmem [#allocation2], %s156
          %s159 = ssub.s32 896, 896
          %160 = vsyncadd %s154, %s159
          %s161 = smul.addr %s13, 7
          %s162 = smul.addr %s161, 128
          %s163 = scalar_lea.hbm %s0, %s162
          %s165 = sshll.u32 %s157, 4
          %s166 = int_to_ptr.vmem [resolvable:$true] %s165
          %168 = dma.hbm_to_vmem [thread:$0]  %s163, 896, %s166, %s154
        $region28: #{pre_encoder_forward.1} parent=23 // pred_fallthru
          _
      $region24: #{pre_encoder_forward.1} parent=5 // pred_fallthru
        _
      %p169 = scmp.le.s32.totalorder 1, %s13
      %p170 = scmp.lt.s32.totalorder %s13, 3
      %p171 = pnand %p169, %p170
      %p172 = pneg %p171
      // Predicated region
      $region29: #{pre_encoder_forward.1} parent=5 // pred_check
        _
      $region30: #{pre_encoder_forward.1} parent=5 // pred_check_branch
        %174 = sbr.rel (%p171) target = $region32
      $region31: #{pre_encoder_forward.1} parent=5 // pred_region
        %s175 = ssub.s32 %s13, 1
        %s176 = sand.u32 %s26, 1
        %s177 = scalar_lea.sflag [#allocation3], %s176
        %s178 = sand.u32 %s26, 1
        %s179 = smul.addr %s178, 56
        %s180 = scalar_lea.vmem [#allocation2], %s179
        // Predicated region
        $region33: #{pre_encoder_forward.1} parent=31 // pred_check
          %p181 = pneg %p39
        $region34: #{pre_encoder_forward.1} parent=31 // pred_check_branch
          %183 = sbr.rel (%p181) target = $region36
        $region35: #{pre_encoder_forward.1} parent=31 // pred_region
          %184 = dma.done %s177, 896
        $region36: #{pre_encoder_forward.1} parent=31 // pred_fallthru
          _
        // Predicated region
        $region37: #{pre_encoder_forward.1} parent=31 // pred_check
          %p185 = pneg %p60
        $region38: #{pre_encoder_forward.1} parent=31 // pred_check_branch
          %187 = sbr.rel (%p185) target = $region40
        $region39: #{pre_encoder_forward.1} parent=31 // pred_region
          %188 = dma.done [#allocation5], 134400
        $region40: #{pre_encoder_forward.1} parent=31 // pred_fallthru
          _
        // Predicated region
        $region41: #{pre_encoder_forward.1} parent=31 // pred_check
          %p189 = pneg %p81
        $region42: #{pre_encoder_forward.1} parent=31 // pred_check_branch
          %191 = sbr.rel (%p189) target = $region44
        $region43: #{pre_encoder_forward.1} parent=31 // pred_region
          %192 = dma.done [#allocation5], 336
        $region44: #{pre_encoder_forward.1} parent=31 // pred_fallthru
          _
        %s193 = sand.u32 %s26, 1
        %s194 = scalar_lea.sflag [#allocation3], %s193
        %s195 = sand.u32 %s26, 1
        %s196 = smul.addr %s195, 56
        %s197 = scalar_lea.vmem [#allocation2], %s196
        %p198 = pneg %p39
        %p199 = pneg %p36
        %p200 = pneg %p60
        %p201 = pneg %p57
        %p202 = pneg %p81
        %p203 = pneg %p78
        %p204 = pneg %p107
        %p205 = pneg %p104
        %p206 = scmp.lt.s32.totalorder %s18, 1
        %s207 = scalar_select %p206, %s18, 1
        %s208 = smul.addr %s207, 21
        %s209 = smul.addr %s208, 8
        %s210 = scalar_lea.vmem %s3, %s209
        %p211 = scmp.lt.s32.totalorder %s18, 1
        %s212 = scalar_select %p211, %s18, 1
        %s213 = smul.addr %s212, 21
        %s214 = smul.addr %s213, 8
        %s215 = scalar_lea.vmem %s3, %s214
        %v217 = vld [vmem:[%s180] sm:$0xff]
        %v218 = vld [vmem:[%s180 + $0x8] sm:$0xff]
        %v219 = vld [vmem:[%s180 + $0x10] sm:$0xff]
        %v220 = vld [vmem:[%s180 + $0x18] sm:$0xff]
        %v221 = vld [vmem:[%s180 + $0x20] sm:$0xff]
        %v222 = vld [vmem:[%s180 + $0x28] sm:$0xff]
        %v223 = vld [vmem:[%s180 + $0x30] sm:$0xff]
        %v224 = vpack.c.bf16 %v217, %v217
        %v225 = vpack.c.bf16 %v218, %v218
        %v226 = vpack.c.bf16 %v219, %v219
        %v227 = vpack.c.bf16 %v220, %v220
        %v228 = vpack.c.bf16 %v221, %v221
        %v229 = vpack.c.bf16 %v222, %v222
        %v230 = vpack.c.bf16 %v223, %v223
        %v231 = vld [vmem:[#allocation4] sm:$0xff]
        %v232 = vld [vmem:[#allocation4 + $0x8] sm:$0xff]
        %v233 = vld [vmem:[#allocation4 + $0x10] sm:$0xff]
        %v234 = vld [vmem:[#allocation4 + $0x18] sm:$0xff]
        %v235 = vld [vmem:[#allocation4 + $0x20] sm:$0xff]
        %v236 = vld [vmem:[#allocation4 + $0x28] sm:$0xff]
        %v237 = vld [vmem:[#allocation4 + $0x30] sm:$0xff]
        %v238 = vld [vmem:[#allocation4 + $0x38] sm:$0xff]
        %v239 = vld [vmem:[#allocation4 + $0x40] sm:$0xff]
        %v240 = vld [vmem:[#allocation4 + $0x48] sm:$0xff]
        %v241 = vld [vmem:[#allocation4 + $0x50] sm:$0xf]
        %v242 = vld [vmem:[#allocation4 + $0x54] sm:$0xff]
        %v243 = vld [vmem:[#allocation4 + $0x5c] sm:$0xff]
        %v244 = vld [vmem:[#allocation4 + $0x64] sm:$0xff]
        %v245 = vld [vmem:[#allocation4 + $0x6c] sm:$0xff]
        %v246 = vld [vmem:[#allocation4 + $0x74] sm:$0xff]
        %v247 = vld [vmem:[#allocation4 + $0x7c] sm:$0xff]
        %v248 = vld [vmem:[#allocation4 + $0x84] sm:$0xff]
        %v249 = vld [vmem:[#allocation4 + $0x8c] sm:$0xff]
        %v250 = vld [vmem:[#allocation4 + $0x94] sm:$0xff]
        %v251 = vld [vmem:[#allocation4 + $0x9c] sm:$0xff]
        %v252 = vld [vmem:[#allocation4 + $0xa4] sm:$0xf]
        %v253 = vld [vmem:[#allocation4 + $0xa8] sm:$0xff]
        %v254 = vld [vmem:[#allocation4 + $0xb0] sm:$0xff]
        %v255 = vld [vmem:[#allocation4 + $0xb8] sm:$0xff]
        %v256 = vld [vmem:[#allocation4 + $0xc0] sm:$0xff]
        %v257 = vld [vmem:[#allocation4 + $0xc8] sm:$0xff]
        %v258 = vld [vmem:[#allocation4 + $0xd0] sm:$0xff]
        %v259 = vld [vmem:[#allocation4 + $0xd8] sm:$0xff]
        %v260 = vld [vmem:[#allocation4 + $0xe0] sm:$0xff]
        %v261 = vld [vmem:[#allocation4 + $0xe8] sm:$0xff]
        %v262 = vld [vmem:[#allocation4 + $0xf0] sm:$0xff]
        %v263 = vld [vmem:[#allocation4 + $0xf8] sm:$0xf]
        %v264 = vld [vmem:[#allocation4 + $0xfc] sm:$0xff]
        %v265 = vld [vmem:[#allocation4 + $0x104] sm:$0xff]
        %v266 = vld [vmem:[#allocation4 + $0x10c] sm:$0xff]
        %v267 = vld [vmem:[#allocation4 + $0x114] sm:$0xff]
        %v268 = vld [vmem:[#allocation4 + $0x11c] sm:$0xff]
        %v269 = vld [vmem:[#allocation4 + $0x124] sm:$0xff]
        %v270 = vld [vmem:[#allocation4 + $0x12c] sm:$0xff]
        %v271 = vld [vmem:[#allocation4 + $0x134] sm:$0xff]
        %v272 = vld [vmem:[#allocation4 + $0x13c] sm:$0xff]
        %v273 = vld [vmem:[#allocation4 + $0x144] sm:$0xff]
        %v274 = vld [vmem:[#allocation4 + $0x14c] sm:$0xf]
        %v275 = vld [vmem:[#allocation4 + $0x150] sm:$0xff]
        %v276 = vld [vmem:[#allocation4 + $0x158] sm:$0xff]
        %v277 = vld [vmem:[#allocation4 + $0x160] sm:$0xff]
        %v278 = vld [vmem:[#allocation4 + $0x168] sm:$0xff]
        %v279 = vld [vmem:[#allocation4 + $0x170] sm:$0xff]
        %v280 = vld [vmem:[#allocation4 + $0x178] sm:$0xff]
        %v281 = vld [vmem:[#allocation4 + $0x180] sm:$0xff]
        %v282 = vld [vmem:[#allocation4 + $0x188] sm:$0xff]
        %v283 = vld [vmem:[#allocation4 + $0x190] sm:$0xff]
        %v284 = vld [vmem:[#allocation4 + $0x198] sm:$0xff]
        %v285 = vld [vmem:[#allocation4 + $0x1a0] sm:$0xf]
        %v286 = vld [vmem:[#allocation4 + $0x1a4] sm:$0xff]
        %v287 = vld [vmem:[#allocation4 + $0x1ac] sm:$0xff]
        %v288 = vld [vmem:[#allocation4 + $0x1b4] sm:$0xff]
        %v289 = vld [vmem:[#allocation4 + $0x1bc] sm:$0xff]
        %v290 = vld [vmem:[#allocation4 + $0x1c4] sm:$0xff]
        %v291 = vld [vmem:[#allocation4 + $0x1cc] sm:$0xff]
        %v292 = vld [vmem:[#allocation4 + $0x1d4] sm:$0xff]
        %v293 = vld [vmem:[#allocation4 + $0x1dc] sm:$0xff]
        %v294 = vld [vmem:[#allocation4 + $0x1e4] sm:$0xff]
        %v295 = vld [vmem:[#allocation4 + $0x1ec] sm:$0xff]
        %v296 = vld [vmem:[#allocation4 + $0x1f4] sm:$0xf]
        %v297 = vld [vmem:[#allocation4 + $0x1f8] sm:$0xff]
        %v298 = vld [vmem:[#allocation4 + $0x200] sm:$0xff]
        %v299 = vld [vmem:[#allocation4 + $0x208] sm:$0xff]
        %v300 = vld [vmem:[#allocation4 + $0x210] sm:$0xff]
        %v301 = vld [vmem:[#allocation4 + $0x218] sm:$0xff]
        %v302 = vld [vmem:[#allocation4 + $0x220] sm:$0xff]
        %v303 = vld [vmem:[#allocation4 + $0x228] sm:$0xff]
        %v304 = vld [vmem:[#allocation4 + $0x230] sm:$0xff]
        %v305 = vld [vmem:[#allocation4 + $0x238] sm:$0xff]
        %v306 = vld [vmem:[#allocation4 + $0x240] sm:$0xff]
        %v307 = vld [vmem:[#allocation4 + $0x248] sm:$0xf]
        %v308 = vld [vmem:[#allocation4 + $0x24c] sm:$0xff]
        %v309 = vld [vmem:[#allocation4 + $0x254] sm:$0xff]
        %v310 = vld [vmem:[#allocation4 + $0x25c] sm:$0xff]
        %v311 = vld [vmem:[#allocation4 + $0x264] sm:$0xff]
        %v312 = vld [vmem:[#allocation4 + $0x26c] sm:$0xff]
        %v313 = vld [vmem:[#allocation4 + $0x274] sm:$0xff]
        %v314 = vld [vmem:[#allocation4 + $0x27c] sm:$0xff]
        %v315 = vld [vmem:[#allocation4 + $0x284] sm:$0xff]
        %v316 = vld [vmem:[#allocation4 + $0x28c] sm:$0xff]
        %v317 = vld [vmem:[#allocation4 + $0x294] sm:$0xff]
        %v318 = vld [vmem:[#allocation4 + $0x29c] sm:$0xf]
        %v319 = vld [vmem:[#allocation4 + $0x2a0] sm:$0xff]
        %v320 = vld [vmem:[#allocation4 + $0x2a8] sm:$0xff]
        %v321 = vld [vmem:[#allocation4 + $0x2b0] sm:$0xff]
        %v322 = vld [vmem:[#allocation4 + $0x2b8] sm:$0xff]
        %v323 = vld [vmem:[#allocation4 + $0x2c0] sm:$0xff]
        %v324 = vld [vmem:[#allocation4 + $0x2c8] sm:$0xff]
        %v325 = vld [vmem:[#allocation4 + $0x2d0] sm:$0xff]
        %v326 = vld [vmem:[#allocation4 + $0x2d8] sm:$0xff]
        %v327 = vld [vmem:[#allocation4 + $0x2e0] sm:$0xff]
        %v328 = vld [vmem:[#allocation4 + $0x2e8] sm:$0xff]
        %v329 = vld [vmem:[#allocation4 + $0x2f0] sm:$0xf]
        %v330 = vld [vmem:[#allocation4 + $0x2f4] sm:$0xff]
        %v331 = vld [vmem:[#allocation4 + $0x2fc] sm:$0xff]
        %v332 = vld [vmem:[#allocation4 + $0x304] sm:$0xff]
        %v333 = vld [vmem:[#allocation4 + $0x30c] sm:$0xff]
        %v334 = vld [vmem:[#allocation4 + $0x314] sm:$0xff]
        %v335 = vld [vmem:[#allocation4 + $0x31c] sm:$0xff]
        %v336 = vld [vmem:[#allocation4 + $0x324] sm:$0xff]
        %v337 = vld [vmem:[#allocation4 + $0x32c] sm:$0xff]
        %v338 = vld [vmem:[#allocation4 + $0x334] sm:$0xff]
        %v339 = vld [vmem:[#allocation4 + $0x33c] sm:$0xff]
        %v340 = vld [vmem:[#allocation4 + $0x344] sm:$0xf]
        %v341 = vld [vmem:[#allocation4 + $0x348] sm:$0xff]
        %v342 = vld [vmem:[#allocation4 + $0x350] sm:$0xff]
        %v343 = vld [vmem:[#allocation4 + $0x358] sm:$0xff]
        %v344 = vld [vmem:[#allocation4 + $0x360] sm:$0xff]
        %v345 = vld [vmem:[#allocation4 + $0x368] sm:$0xff]
        %v346 = vld [vmem:[#allocation4 + $0x370] sm:$0xff]
        %v347 = vld [vmem:[#allocation4 + $0x378] sm:$0xff]
        %v348 = vld [vmem:[#allocation4 + $0x380] sm:$0xff]
        %v349 = vld [vmem:[#allocation4 + $0x388] sm:$0xff]
        %v350 = vld [vmem:[#allocation4 + $0x390] sm:$0xff]
        %v351 = vld [vmem:[#allocation4 + $0x398] sm:$0xf]
        %v352 = vld [vmem:[#allocation4 + $0x39c] sm:$0xff]
        %v353 = vld [vmem:[#allocation4 + $0x3a4] sm:$0xff]
        %v354 = vld [vmem:[#allocation4 + $0x3ac] sm:$0xff]
        %v355 = vld [vmem:[#allocation4 + $0x3b4] sm:$0xff]
        %v356 = vld [vmem:[#allocation4 + $0x3bc] sm:$0xff]
        %v357 = vld [vmem:[#allocation4 + $0x3c4] sm:$0xff]
        %v358 = vld [vmem:[#allocation4 + $0x3cc] sm:$0xff]
        %v359 = vld [vmem:[#allocation4 + $0x3d4] sm:$0xff]
        %v360 = vld [vmem:[#allocation4 + $0x3dc] sm:$0xff]
        %v361 = vld [vmem:[#allocation4 + $0x3e4] sm:$0xff]
        %v362 = vld [vmem:[#allocation4 + $0x3ec] sm:$0xf]
        %v363 = vld [vmem:[#allocation4 + $0x3f0] sm:$0xff]
        %v364 = vld [vmem:[#allocation4 + $0x3f8] sm:$0xff]
        %v365 = vld [vmem:[#allocation4 + $0x400] sm:$0xff]
        %v366 = vld [vmem:[#allocation4 + $0x408] sm:$0xff]
        %v367 = vld [vmem:[#allocation4 + $0x410] sm:$0xff]
        %v368 = vld [vmem:[#allocation4 + $0x418] sm:$0xff]
        %v369 = vld [vmem:[#allocation4 + $0x420] sm:$0xff]
        %v370 = vld [vmem:[#allocation4 + $0x428] sm:$0xff]
        %v371 = vld [vmem:[#allocation4 + $0x430] sm:$0xff]
        %v372 = vld [vmem:[#allocation4 + $0x438] sm:$0xff]
        %v373 = vld [vmem:[#allocation4 + $0x440] sm:$0xf]
        %v374 = vld [vmem:[#allocation4 + $0x444] sm:$0xff]
        %v375 = vld [vmem:[#allocation4 + $0x44c] sm:$0xff]
        %v376 = vld [vmem:[#allocation4 + $0x454] sm:$0xff]
        %v377 = vld [vmem:[#allocation4 + $0x45c] sm:$0xff]
        %v378 = vld [vmem:[#allocation4 + $0x464] sm:$0xff]
        %v379 = vld [vmem:[#allocation4 + $0x46c] sm:$0xff]
        %v380 = vld [vmem:[#allocation4 + $0x474] sm:$0xff]
        %v381 = vld [vmem:[#allocation4 + $0x47c] sm:$0xff]
        %v382 = vld [vmem:[#allocation4 + $0x484] sm:$0xff]
        %v383 = vld [vmem:[#allocation4 + $0x48c] sm:$0xff]
        %v384 = vld [vmem:[#allocation4 + $0x494] sm:$0xf]
        %v385 = vld [vmem:[#allocation4 + $0x498] sm:$0xff]
        %v386 = vld [vmem:[#allocation4 + $0x4a0] sm:$0xff]
        %v387 = vld [vmem:[#allocation4 + $0x4a8] sm:$0xff]
        %v388 = vld [vmem:[#allocation4 + $0x4b0] sm:$0xff]
        %v389 = vld [vmem:[#allocation4 + $0x4b8] sm:$0xff]
        %v390 = vld [vmem:[#allocation4 + $0x4c0] sm:$0xff]
        %v391 = vld [vmem:[#allocation4 + $0x4c8] sm:$0xff]
        %v392 = vld [vmem:[#allocation4 + $0x4d0] sm:$0xff]
        %v393 = vld [vmem:[#allocation4 + $0x4d8] sm:$0xff]
        %v394 = vld [vmem:[#allocation4 + $0x4e0] sm:$0xff]
        %v395 = vld [vmem:[#allocation4 + $0x4e8] sm:$0xf]
        %v396 = vld [vmem:[#allocation4 + $0x4ec] sm:$0xff]
        %v397 = vld [vmem:[#allocation4 + $0x4f4] sm:$0xff]
        %v398 = vld [vmem:[#allocation4 + $0x4fc] sm:$0xff]
        %v399 = vld [vmem:[#allocation4 + $0x504] sm:$0xff]
        %v400 = vld [vmem:[#allocation4 + $0x50c] sm:$0xff]
        %v401 = vld [vmem:[#allocation4 + $0x514] sm:$0xff]
        %v402 = vld [vmem:[#allocation4 + $0x51c] sm:$0xff]
        %v403 = vld [vmem:[#allocation4 + $0x524] sm:$0xff]
        %v404 = vld [vmem:[#allocation4 + $0x52c] sm:$0xff]
        %v405 = vld [vmem:[#allocation4 + $0x534] sm:$0xff]
        %v406 = vld [vmem:[#allocation4 + $0x53c] sm:$0xf]
        %v407 = vld [vmem:[#allocation4 + $0x540] sm:$0xff]
        %v408 = vld [vmem:[#allocation4 + $0x548] sm:$0xff]
        %v409 = vld [vmem:[#allocation4 + $0x550] sm:$0xff]
        %v410 = vld [vmem:[#allocation4 + $0x558] sm:$0xff]
        %v411 = vld [vmem:[#allocation4 + $0x560] sm:$0xff]
        %v412 = vld [vmem:[#allocation4 + $0x568] sm:$0xff]
        %v413 = vld [vmem:[#allocation4 + $0x570] sm:$0xff]
        %v414 = vld [vmem:[#allocation4 + $0x578] sm:$0xff]
        %v415 = vld [vmem:[#allocation4 + $0x580] sm:$0xff]
        %v416 = vld [vmem:[#allocation4 + $0x588] sm:$0xff]
        %v417 = vld [vmem:[#allocation4 + $0x590] sm:$0xf]
        %v418 = vld [vmem:[#allocation4 + $0x594] sm:$0xff]
        %v419 = vld [vmem:[#allocation4 + $0x59c] sm:$0xff]
        %v420 = vld [vmem:[#allocation4 + $0x5a4] sm:$0xff]
        %v421 = vld [vmem:[#allocation4 + $0x5ac] sm:$0xff]
        %v422 = vld [vmem:[#allocation4 + $0x5b4] sm:$0xff]
        %v423 = vld [vmem:[#allocation4 + $0x5bc] sm:$0xff]
        %v424 = vld [vmem:[#allocation4 + $0x5c4] sm:$0xff]
        %v425 = vld [vmem:[#allocation4 + $0x5cc] sm:$0xff]
        %v426 = vld [vmem:[#allocation4 + $0x5d4] sm:$0xff]
        %v427 = vld [vmem:[#allocation4 + $0x5dc] sm:$0xff]
        %v428 = vld [vmem:[#allocation4 + $0x5e4] sm:$0xf]
        %v429 = vld [vmem:[#allocation4 + $0x5e8] sm:$0xff]
        %v430 = vld [vmem:[#allocation4 + $0x5f0] sm:$0xff]
        %v431 = vld [vmem:[#allocation4 + $0x5f8] sm:$0xff]
        %v432 = vld [vmem:[#allocation4 + $0x600] sm:$0xff]
        %v433 = vld [vmem:[#allocation4 + $0x608] sm:$0xff]
        %v434 = vld [vmem:[#allocation4 + $0x610] sm:$0xff]
        %v435 = vld [vmem:[#allocation4 + $0x618] sm:$0xff]
        %v436 = vld [vmem:[#allocation4 + $0x620] sm:$0xff]
        %v437 = vld [vmem:[#allocation4 + $0x628] sm:$0xff]
        %v438 = vld [vmem:[#allocation4 + $0x630] sm:$0xff]
        %v439 = vld [vmem:[#allocation4 + $0x638] sm:$0xf]
        %v440 = vld [vmem:[#allocation4 + $0x63c] sm:$0xff]
        %v441 = vld [vmem:[#allocation4 + $0x644] sm:$0xff]
        %v442 = vld [vmem:[#allocation4 + $0x64c] sm:$0xff]
        %v443 = vld [vmem:[#allocation4 + $0x654] sm:$0xff]
        %v444 = vld [vmem:[#allocation4 + $0x65c] sm:$0xff]
        %v445 = vld [vmem:[#allocation4 + $0x664] sm:$0xff]
        %v446 = vld [vmem:[#allocation4 + $0x66c] sm:$0xff]
        %v447 = vld [vmem:[#allocation4 + $0x674] sm:$0xff]
        %v448 = vld [vmem:[#allocation4 + $0x67c] sm:$0xff]
        %v449 = vld [vmem:[#allocation4 + $0x684] sm:$0xff]
        %v450 = vld [vmem:[#allocation4 + $0x68c] sm:$0xf]
        %v451 = vld [vmem:[#allocation4 + $0x690] sm:$0xff]
        %v452 = vld [vmem:[#allocation4 + $0x698] sm:$0xff]
        %v453 = vld [vmem:[#allocation4 + $0x6a0] sm:$0xff]
        %v454 = vld [vmem:[#allocation4 + $0x6a8] sm:$0xff]
        %v455 = vld [vmem:[#allocation4 + $0x6b0] sm:$0xff]
        %v456 = vld [vmem:[#allocation4 + $0x6b8] sm:$0xff]
        %v457 = vld [vmem:[#allocation4 + $0x6c0] sm:$0xff]
        %v458 = vld [vmem:[#allocation4 + $0x6c8] sm:$0xff]
        %v459 = vld [vmem:[#allocation4 + $0x6d0] sm:$0xff]
        %v460 = vld [vmem:[#allocation4 + $0x6d8] sm:$0xff]
        %v461 = vld [vmem:[#allocation4 + $0x6e0] sm:$0xf]
        %v462 = vld [vmem:[#allocation4 + $0x6e4] sm:$0xff]
        %v463 = vld [vmem:[#allocation4 + $0x6ec] sm:$0xff]
        %v464 = vld [vmem:[#allocation4 + $0x6f4] sm:$0xff]
        %v465 = vld [vmem:[#allocation4 + $0x6fc] sm:$0xff]
        %v466 = vld [vmem:[#allocation4 + $0x704] sm:$0xff]
        %v467 = vld [vmem:[#allocation4 + $0x70c] sm:$0xff]
        %v468 = vld [vmem:[#allocation4 + $0x714] sm:$0xff]
        %v469 = vld [vmem:[#allocation4 + $0x71c] sm:$0xff]
        %v470 = vld [vmem:[#allocation4 + $0x724] sm:$0xff]
        %v471 = vld [vmem:[#allocation4 + $0x72c] sm:$0xff]
        %v472 = vld [vmem:[#allocation4 + $0x734] sm:$0xf]
        %v473 = vld [vmem:[#allocation4 + $0x738] sm:$0xff]
        %v474 = vld [vmem:[#allocation4 + $0x740] sm:$0xff]
        %v475 = vld [vmem:[#allocation4 + $0x748] sm:$0xff]
        %v476 = vld [vmem:[#allocation4 + $0x750] sm:$0xff]
        %v477 = vld [vmem:[#allocation4 + $0x758] sm:$0xff]
        %v478 = vld [vmem:[#allocation4 + $0x760] sm:$0xff]
        %v479 = vld [vmem:[#allocation4 + $0x768] sm:$0xff]
        %v480 = vld [vmem:[#allocation4 + $0x770] sm:$0xff]
        %v481 = vld [vmem:[#allocation4 + $0x778] sm:$0xff]
        %v482 = vld [vmem:[#allocation4 + $0x780] sm:$0xff]
        %v483 = vld [vmem:[#allocation4 + $0x788] sm:$0xf]
        %v484 = vld [vmem:[#allocation4 + $0x78c] sm:$0xff]
        %v485 = vld [vmem:[#allocation4 + $0x794] sm:$0xff]
        %v486 = vld [vmem:[#allocation4 + $0x79c] sm:$0xff]
        %v487 = vld [vmem:[#allocation4 + $0x7a4] sm:$0xff]
        %v488 = vld [vmem:[#allocation4 + $0x7ac] sm:$0xff]
        %v489 = vld [vmem:[#allocation4 + $0x7b4] sm:$0xff]
        %v490 = vld [vmem:[#allocation4 + $0x7bc] sm:$0xff]
        %v491 = vld [vmem:[#allocation4 + $0x7c4] sm:$0xff]
        %v492 = vld [vmem:[#allocation4 + $0x7cc] sm:$0xff]
        %v493 = vld [vmem:[#allocation4 + $0x7d4] sm:$0xff]
        %v494 = vld [vmem:[#allocation4 + $0x7dc] sm:$0xf]
        %v495 = vld [vmem:[#allocation4 + $0x7e0] sm:$0xff]
        %v496 = vld [vmem:[#allocation4 + $0x7e8] sm:$0xff]
        %v497 = vld [vmem:[#allocation4 + $0x7f0] sm:$0xff]
        %v498 = vld [vmem:[#allocation4 + $0x7f8] sm:$0xff]
        %v499 = vld [vmem:[#allocation4 + $0x800] sm:$0xff]
        %v500 = vld [vmem:[#allocation4 + $0x808] sm:$0xff]
        %v501 = vld [vmem:[#allocation4 + $0x810] sm:$0xff]
        %v502 = vld [vmem:[#allocation4 + $0x818] sm:$0xff]
        %v503 = vld [vmem:[#allocation4 + $0x820] sm:$0xff]
        %v504 = vld [vmem:[#allocation4 + $0x828] sm:$0xff]
        %v505 = vld [vmem:[#allocation4 + $0x830] sm:$0xf]
        %v506 = vld [vmem:[#allocation4 + $0x834] sm:$0xff]
        %v507 = vld [vmem:[#allocation4 + $0x83c] sm:$0xff]
        %v508 = vld [vmem:[#allocation4 + $0x844] sm:$0xff]
        %v509 = vld [vmem:[#allocation4 + $0x84c] sm:$0xff]
        %v510 = vld [vmem:[#allocation4 + $0x854] sm:$0xff]
        %v511 = vld [vmem:[#allocation4 + $0x85c] sm:$0xff]
        %v512 = vld [vmem:[#allocation4 + $0x864] sm:$0xff]
        %v513 = vld [vmem:[#allocation4 + $0x86c] sm:$0xff]
        %v514 = vld [vmem:[#allocation4 + $0x874] sm:$0xff]
        %v515 = vld [vmem:[#allocation4 + $0x87c] sm:$0xff]
        %v516 = vld [vmem:[#allocation4 + $0x884] sm:$0xf]
        %v517 = vld [vmem:[#allocation4 + $0x888] sm:$0xff]
        %v518 = vld [vmem:[#allocation4 + $0x890] sm:$0xff]
        %v519 = vld [vmem:[#allocation4 + $0x898] sm:$0xff]
        %v520 = vld [vmem:[#allocation4 + $0x8a0] sm:$0xff]
        %v521 = vld [vmem:[#allocation4 + $0x8a8] sm:$0xff]
        %v522 = vld [vmem:[#allocation4 + $0x8b0] sm:$0xff]
        %v523 = vld [vmem:[#allocation4 + $0x8b8] sm:$0xff]
        %v524 = vld [vmem:[#allocation4 + $0x8c0] sm:$0xff]
        %v525 = vld [vmem:[#allocation4 + $0x8c8] sm:$0xff]
        %v526 = vld [vmem:[#allocation4 + $0x8d0] sm:$0xff]
        %v527 = vld [vmem:[#allocation4 + $0x8d8] sm:$0xf]
        %v528 = vld [vmem:[#allocation4 + $0x8dc] sm:$0xff]
        %v529 = vld [vmem:[#allocation4 + $0x8e4] sm:$0xff]
        %v530 = vld [vmem:[#allocation4 + $0x8ec] sm:$0xff]
        %v531 = vld [vmem:[#allocation4 + $0x8f4] sm:$0xff]
        %v532 = vld [vmem:[#allocation4 + $0x8fc] sm:$0xff]
        %v533 = vld [vmem:[#allocation4 + $0x904] sm:$0xff]
        %v534 = vld [vmem:[#allocation4 + $0x90c] sm:$0xff]
        %v535 = vld [vmem:[#allocation4 + $0x914] sm:$0xff]
        %v536 = vld [vmem:[#allocation4 + $0x91c] sm:$0xff]
        %v537 = vld [vmem:[#allocation4 + $0x924] sm:$0xff]
        %v538 = vld [vmem:[#allocation4 + $0x92c] sm:$0xf]
        %v539 = vld [vmem:[#allocation4 + $0x930] sm:$0xff]
        %v540 = vld [vmem:[#allocation4 + $0x938] sm:$0xff]
        %v541 = vld [vmem:[#allocation4 + $0x940] sm:$0xff]
        %v542 = vld [vmem:[#allocation4 + $0x948] sm:$0xff]
        %v543 = vld [vmem:[#allocation4 + $0x950] sm:$0xff]
        %v544 = vld [vmem:[#allocation4 + $0x958] sm:$0xff]
        %v545 = vld [vmem:[#allocation4 + $0x960] sm:$0xff]
        %v546 = vld [vmem:[#allocation4 + $0x968] sm:$0xff]
        %v547 = vld [vmem:[#allocation4 + $0x970] sm:$0xff]
        %v548 = vld [vmem:[#allocation4 + $0x978] sm:$0xff]
        %v549 = vld [vmem:[#allocation4 + $0x980] sm:$0xf]
        %v550 = vld [vmem:[#allocation4 + $0x984] sm:$0xff]
        %v551 = vld [vmem:[#allocation4 + $0x98c] sm:$0xff]
        %v552 = vld [vmem:[#allocation4 + $0x994] sm:$0xff]
        %v553 = vld [vmem:[#allocation4 + $0x99c] sm:$0xff]
        %v554 = vld [vmem:[#allocation4 + $0x9a4] sm:$0xff]
        %v555 = vld [vmem:[#allocation4 + $0x9ac] sm:$0xff]
        %v556 = vld [vmem:[#allocation4 + $0x9b4] sm:$0xff]
        %v557 = vld [vmem:[#allocation4 + $0x9bc] sm:$0xff]
        %v558 = vld [vmem:[#allocation4 + $0x9c4] sm:$0xff]
        %v559 = vld [vmem:[#allocation4 + $0x9cc] sm:$0xff]
        %v560 = vld [vmem:[#allocation4 + $0x9d4] sm:$0xf]
        %v561 = vld [vmem:[#allocation4 + $0x9d8] sm:$0xff]
        %v562 = vld [vmem:[#allocation4 + $0x9e0] sm:$0xff]
        %v563 = vld [vmem:[#allocation4 + $0x9e8] sm:$0xff]
        %v564 = vld [vmem:[#allocation4 + $0x9f0] sm:$0xff]
        %v565 = vld [vmem:[#allocation4 + $0x9f8] sm:$0xff]
        %v566 = vld [vmem:[#allocation4 + $0xa00] sm:$0xff]
        %v567 = vld [vmem:[#allocation4 + $0xa08] sm:$0xff]
        %v568 = vld [vmem:[#allocation4 + $0xa10] sm:$0xff]
        %v569 = vld [vmem:[#allocation4 + $0xa18] sm:$0xff]
        %v570 = vld [vmem:[#allocation4 + $0xa20] sm:$0xff]
        %v571 = vld [vmem:[#allocation4 + $0xa28] sm:$0xf]
        %v572 = vld [vmem:[#allocation4 + $0xa2c] sm:$0xff]
        %v573 = vld [vmem:[#allocation4 + $0xa34] sm:$0xff]
        %v574 = vld [vmem:[#allocation4 + $0xa3c] sm:$0xff]
        %v575 = vld [vmem:[#allocation4 + $0xa44] sm:$0xff]
        %v576 = vld [vmem:[#allocation4 + $0xa4c] sm:$0xff]
        %v577 = vld [vmem:[#allocation4 + $0xa54] sm:$0xff]
        %v578 = vld [vmem:[#allocation4 + $0xa5c] sm:$0xff]
        %v579 = vld [vmem:[#allocation4 + $0xa64] sm:$0xff]
        %v580 = vld [vmem:[#allocation4 + $0xa6c] sm:$0xff]
        %v581 = vld [vmem:[#allocation4 + $0xa74] sm:$0xff]
        %v582 = vld [vmem:[#allocation4 + $0xa7c] sm:$0xf]
        %v583 = vld [vmem:[#allocation4 + $0xa80] sm:$0xff]
        %v584 = vld [vmem:[#allocation4 + $0xa88] sm:$0xff]
        %v585 = vld [vmem:[#allocation4 + $0xa90] sm:$0xff]
        %v586 = vld [vmem:[#allocation4 + $0xa98] sm:$0xff]
        %v587 = vld [vmem:[#allocation4 + $0xaa0] sm:$0xff]
        %v588 = vld [vmem:[#allocation4 + $0xaa8] sm:$0xff]
        %v589 = vld [vmem:[#allocation4 + $0xab0] sm:$0xff]
        %v590 = vld [vmem:[#allocation4 + $0xab8] sm:$0xff]
        %v591 = vld [vmem:[#allocation4 + $0xac0] sm:$0xff]
        %v592 = vld [vmem:[#allocation4 + $0xac8] sm:$0xff]
        %v593 = vld [vmem:[#allocation4 + $0xad0] sm:$0xf]
        %v594 = vld [vmem:[#allocation4 + $0xad4] sm:$0xff]
        %v595 = vld [vmem:[#allocation4 + $0xadc] sm:$0xff]
        %v596 = vld [vmem:[#allocation4 + $0xae4] sm:$0xff]
        %v597 = vld [vmem:[#allocation4 + $0xaec] sm:$0xff]
        %v598 = vld [vmem:[#allocation4 + $0xaf4] sm:$0xff]
        %v599 = vld [vmem:[#allocation4 + $0xafc] sm:$0xff]
        %v600 = vld [vmem:[#allocation4 + $0xb04] sm:$0xff]
        %v601 = vld [vmem:[#allocation4 + $0xb0c] sm:$0xff]
        %v602 = vld [vmem:[#allocation4 + $0xb14] sm:$0xff]
        %v603 = vld [vmem:[#allocation4 + $0xb1c] sm:$0xff]
        %v604 = vld [vmem:[#allocation4 + $0xb24] sm:$0xf]
        %v605 = vld [vmem:[#allocation4 + $0xb28] sm:$0xff]
        %v606 = vld [vmem:[#allocation4 + $0xb30] sm:$0xff]
        %v607 = vld [vmem:[#allocation4 + $0xb38] sm:$0xff]
        %v608 = vld [vmem:[#allocation4 + $0xb40] sm:$0xff]
        %v609 = vld [vmem:[#allocation4 + $0xb48] sm:$0xff]
        %v610 = vld [vmem:[#allocation4 + $0xb50] sm:$0xff]
        %v611 = vld [vmem:[#allocation4 + $0xb58] sm:$0xff]
        %v612 = vld [vmem:[#allocation4 + $0xb60] sm:$0xff]
        %v613 = vld [vmem:[#allocation4 + $0xb68] sm:$0xff]
        %v614 = vld [vmem:[#allocation4 + $0xb70] sm:$0xff]
        %v615 = vld [vmem:[#allocation4 + $0xb78] sm:$0xf]
        %v616 = vld [vmem:[#allocation4 + $0xb7c] sm:$0xff]
        %v617 = vld [vmem:[#allocation4 + $0xb84] sm:$0xff]
        %v618 = vld [vmem:[#allocation4 + $0xb8c] sm:$0xff]
        %v619 = vld [vmem:[#allocation4 + $0xb94] sm:$0xff]
        %v620 = vld [vmem:[#allocation4 + $0xb9c] sm:$0xff]
        %v621 = vld [vmem:[#allocation4 + $0xba4] sm:$0xff]
        %v622 = vld [vmem:[#allocation4 + $0xbac] sm:$0xff]
        %v623 = vld [vmem:[#allocation4 + $0xbb4] sm:$0xff]
        %v624 = vld [vmem:[#allocation4 + $0xbbc] sm:$0xff]
        %v625 = vld [vmem:[#allocation4 + $0xbc4] sm:$0xff]
        %v626 = vld [vmem:[#allocation4 + $0xbcc] sm:$0xf]
        %v627 = vld [vmem:[#allocation4 + $0xbd0] sm:$0xff]
        %v628 = vld [vmem:[#allocation4 + $0xbd8] sm:$0xff]
        %v629 = vld [vmem:[#allocation4 + $0xbe0] sm:$0xff]
        %v630 = vld [vmem:[#allocation4 + $0xbe8] sm:$0xff]
        %v631 = vld [vmem:[#allocation4 + $0xbf0] sm:$0xff]
        %v632 = vld [vmem:[#allocation4 + $0xbf8] sm:$0xff]
        %v633 = vld [vmem:[#allocation4 + $0xc00] sm:$0xff]
        %v634 = vld [vmem:[#allocation4 + $0xc08] sm:$0xff]
        %v635 = vld [vmem:[#allocation4 + $0xc10] sm:$0xff]
        %v636 = vld [vmem:[#allocation4 + $0xc18] sm:$0xff]
        %v637 = vld [vmem:[#allocation4 + $0xc20] sm:$0xf]
        %v638 = vld [vmem:[#allocation4 + $0xc24] sm:$0xff]
        %v639 = vld [vmem:[#allocation4 + $0xc2c] sm:$0xff]
        %v640 = vld [vmem:[#allocation4 + $0xc34] sm:$0xff]
        %v641 = vld [vmem:[#allocation4 + $0xc3c] sm:$0xff]
        %v642 = vld [vmem:[#allocation4 + $0xc44] sm:$0xff]
        %v643 = vld [vmem:[#allocation4 + $0xc4c] sm:$0xff]
        %v644 = vld [vmem:[#allocation4 + $0xc54] sm:$0xff]
        %v645 = vld [vmem:[#allocation4 + $0xc5c] sm:$0xff]
        %v646 = vld [vmem:[#allocation4 + $0xc64] sm:$0xff]
        %v647 = vld [vmem:[#allocation4 + $0xc6c] sm:$0xff]
        %v648 = vld [vmem:[#allocation4 + $0xc74] sm:$0xf]
        %v649 = vld [vmem:[#allocation4 + $0xc78] sm:$0xff]
        %v650 = vld [vmem:[#allocation4 + $0xc80] sm:$0xff]
        %v651 = vld [vmem:[#allocation4 + $0xc88] sm:$0xff]
        %v652 = vld [vmem:[#allocation4 + $0xc90] sm:$0xff]
        %v653 = vld [vmem:[#allocation4 + $0xc98] sm:$0xff]
        %v654 = vld [vmem:[#allocation4 + $0xca0] sm:$0xff]
        %v655 = vld [vmem:[#allocation4 + $0xca8] sm:$0xff]
        %v656 = vld [vmem:[#allocation4 + $0xcb0] sm:$0xff]
        %v657 = vld [vmem:[#allocation4 + $0xcb8] sm:$0xff]
        %v658 = vld [vmem:[#allocation4 + $0xcc0] sm:$0xff]
        %v659 = vld [vmem:[#allocation4 + $0xcc8] sm:$0xf]
        %v660 = vld [vmem:[#allocation4 + $0xccc] sm:$0xff]
        %v661 = vld [vmem:[#allocation4 + $0xcd4] sm:$0xff]
        %v662 = vld [vmem:[#allocation4 + $0xcdc] sm:$0xff]
        %v663 = vld [vmem:[#allocation4 + $0xce4] sm:$0xff]
        %v664 = vld [vmem:[#allocation4 + $0xcec] sm:$0xff]
        %v665 = vld [vmem:[#allocation4 + $0xcf4] sm:$0xff]
        %v666 = vld [vmem:[#allocation4 + $0xcfc] sm:$0xff]
        %v667 = vld [vmem:[#allocation4 + $0xd04] sm:$0xff]
        %v668 = vld [vmem:[#allocation4 + $0xd0c] sm:$0xff]
        %v669 = vld [vmem:[#allocation4 + $0xd14] sm:$0xff]
        %v670 = vld [vmem:[#allocation4 + $0xd1c] sm:$0xf]
        %v671 = vld [vmem:[#allocation4 + $0xd20] sm:$0xff]
        %v672 = vld [vmem:[#allocation4 + $0xd28] sm:$0xff]
        %v673 = vld [vmem:[#allocation4 + $0xd30] sm:$0xff]
        %v674 = vld [vmem:[#allocation4 + $0xd38] sm:$0xff]
        %v675 = vld [vmem:[#allocation4 + $0xd40] sm:$0xff]
        %v676 = vld [vmem:[#allocation4 + $0xd48] sm:$0xff]
        %v677 = vld [vmem:[#allocation4 + $0xd50] sm:$0xff]
        %v678 = vld [vmem:[#allocation4 + $0xd58] sm:$0xff]
        %v679 = vld [vmem:[#allocation4 + $0xd60] sm:$0xff]
        %v680 = vld [vmem:[#allocation4 + $0xd68] sm:$0xff]
        %v681 = vld [vmem:[#allocation4 + $0xd70] sm:$0xf]
        %v682 = vld [vmem:[#allocation4 + $0xd74] sm:$0xff]
        %v683 = vld [vmem:[#allocation4 + $0xd7c] sm:$0xff]
        %v684 = vld [vmem:[#allocation4 + $0xd84] sm:$0xff]
        %v685 = vld [vmem:[#allocation4 + $0xd8c] sm:$0xff]
        %v686 = vld [vmem:[#allocation4 + $0xd94] sm:$0xff]
        %v687 = vld [vmem:[#allocation4 + $0xd9c] sm:$0xff]
        %v688 = vld [vmem:[#allocation4 + $0xda4] sm:$0xff]
        %v689 = vld [vmem:[#allocation4 + $0xdac] sm:$0xff]
        %v690 = vld [vmem:[#allocation4 + $0xdb4] sm:$0xff]
        %v691 = vld [vmem:[#allocation4 + $0xdbc] sm:$0xff]
        %v692 = vld [vmem:[#allocation4 + $0xdc4] sm:$0xf]
        %v693 = vld [vmem:[#allocation4 + $0xdc8] sm:$0xff]
        %v694 = vld [vmem:[#allocation4 + $0xdd0] sm:$0xff]
        %v695 = vld [vmem:[#allocation4 + $0xdd8] sm:$0xff]
        %v696 = vld [vmem:[#allocation4 + $0xde0] sm:$0xff]
        %v697 = vld [vmem:[#allocation4 + $0xde8] sm:$0xff]
        %v698 = vld [vmem:[#allocation4 + $0xdf0] sm:$0xff]
        %v699 = vld [vmem:[#allocation4 + $0xdf8] sm:$0xff]
        %v700 = vld [vmem:[#allocation4 + $0xe00] sm:$0xff]
        %v701 = vld [vmem:[#allocation4 + $0xe08] sm:$0xff]
        %v702 = vld [vmem:[#allocation4 + $0xe10] sm:$0xff]
        %v703 = vld [vmem:[#allocation4 + $0xe18] sm:$0xf]
        %v704 = vld [vmem:[#allocation4 + $0xe1c] sm:$0xff]
        %v705 = vld [vmem:[#allocation4 + $0xe24] sm:$0xff]
        %v706 = vld [vmem:[#allocation4 + $0xe2c] sm:$0xff]
        %v707 = vld [vmem:[#allocation4 + $0xe34] sm:$0xff]
        %v708 = vld [vmem:[#allocation4 + $0xe3c] sm:$0xff]
        %v709 = vld [vmem:[#allocation4 + $0xe44] sm:$0xff]
        %v710 = vld [vmem:[#allocation4 + $0xe4c] sm:$0xff]
        %v711 = vld [vmem:[#allocation4 + $0xe54] sm:$0xff]
        %v712 = vld [vmem:[#allocation4 + $0xe5c] sm:$0xff]
        %v713 = vld [vmem:[#allocation4 + $0xe64] sm:$0xff]
        %v714 = vld [vmem:[#allocation4 + $0xe6c] sm:$0xf]
        %v715 = vld [vmem:[#allocation4 + $0xe70] sm:$0xff]
        %v716 = vld [vmem:[#allocation4 + $0xe78] sm:$0xff]
        %v717 = vld [vmem:[#allocation4 + $0xe80] sm:$0xff]
        %v718 = vld [vmem:[#allocation4 + $0xe88] sm:$0xff]
        %v719 = vld [vmem:[#allocation4 + $0xe90] sm:$0xff]
        %v720 = vld [vmem:[#allocation4 + $0xe98] sm:$0xff]
        %v721 = vld [vmem:[#allocation4 + $0xea0] sm:$0xff]
        %v722 = vld [vmem:[#allocation4 + $0xea8] sm:$0xff]
        %v723 = vld [vmem:[#allocation4 + $0xeb0] sm:$0xff]
        %v724 = vld [vmem:[#allocation4 + $0xeb8] sm:$0xff]
        %v725 = vld [vmem:[#allocation4 + $0xec0] sm:$0xf]
        %v726 = vld [vmem:[#allocation4 + $0xec4] sm:$0xff]
        %v727 = vld [vmem:[#allocation4 + $0xecc] sm:$0xff]
        %v728 = vld [vmem:[#allocation4 + $0xed4] sm:$0xff]
        %v729 = vld [vmem:[#allocation4 + $0xedc] sm:$0xff]
        %v730 = vld [vmem:[#allocation4 + $0xee4] sm:$0xff]
        %v731 = vld [vmem:[#allocation4 + $0xeec] sm:$0xff]
        %v732 = vld [vmem:[#allocation4 + $0xef4] sm:$0xff]
        %v733 = vld [vmem:[#allocation4 + $0xefc] sm:$0xff]
        %v734 = vld [vmem:[#allocation4 + $0xf04] sm:$0xff]
        %v735 = vld [vmem:[#allocation4 + $0xf0c] sm:$0xff]
        %v736 = vld [vmem:[#allocation4 + $0xf14] sm:$0xf]
        %v737 = vld [vmem:[#allocation4 + $0xf18] sm:$0xff]
        %v738 = vld [vmem:[#allocation4 + $0xf20] sm:$0xff]
        %v739 = vld [vmem:[#allocation4 + $0xf28] sm:$0xff]
        %v740 = vld [vmem:[#allocation4 + $0xf30] sm:$0xff]
        %v741 = vld [vmem:[#allocation4 + $0xf38] sm:$0xff]
        %v742 = vld [vmem:[#allocation4 + $0xf40] sm:$0xff]
        %v743 = vld [vmem:[#allocation4 + $0xf48] sm:$0xff]
        %v744 = vld [vmem:[#allocation4 + $0xf50] sm:$0xff]
        %v745 = vld [vmem:[#allocation4 + $0xf58] sm:$0xff]
        %v746 = vld [vmem:[#allocation4 + $0xf60] sm:$0xff]
        %v747 = vld [vmem:[#allocation4 + $0xf68] sm:$0xf]
        %v748 = vld [vmem:[#allocation4 + $0xf6c] sm:$0xff]
        %v749 = vld [vmem:[#allocation4 + $0xf74] sm:$0xff]
        %v750 = vld [vmem:[#allocation4 + $0xf7c] sm:$0xff]
        %v751 = vld [vmem:[#allocation4 + $0xf84] sm:$0xff]
        %v752 = vld [vmem:[#allocation4 + $0xf8c] sm:$0xff]
        %v753 = vld [vmem:[#allocation4 + $0xf94] sm:$0xff]
        %v754 = vld [vmem:[#allocation4 + $0xf9c] sm:$0xff]
        %v755 = vld [vmem:[#allocation4 + $0xfa4] sm:$0xff]
        %v756 = vld [vmem:[#allocation4 + $0xfac] sm:$0xff]
        %v757 = vld [vmem:[#allocation4 + $0xfb4] sm:$0xff]
        %v758 = vld [vmem:[#allocation4 + $0xfbc] sm:$0xf]
        %v759 = vld [vmem:[#allocation4 + $0xfc0] sm:$0xff]
        %v760 = vld [vmem:[#allocation4 + $0xfc8] sm:$0xff]
        %v761 = vld [vmem:[#allocation4 + $0xfd0] sm:$0xff]
        %v762 = vld [vmem:[#allocation4 + $0xfd8] sm:$0xff]
        %v763 = vld [vmem:[#allocation4 + $0xfe0] sm:$0xff]
        %v764 = vld [vmem:[#allocation4 + $0xfe8] sm:$0xff]
        %v765 = vld [vmem:[#allocation4 + $0xff0] sm:$0xff]
        %v766 = vld [vmem:[#allocation4 + $0xff8] sm:$0xff]
        %v767 = vld [vmem:[#allocation4 + $0x1000] sm:$0xff]
        %v768 = vld [vmem:[#allocation4 + $0x1008] sm:$0xff]
        %v769 = vld [vmem:[#allocation4 + $0x1010] sm:$0xf]
        %v770 = vld [vmem:[#allocation4 + $0x1014] sm:$0xff]
        %v771 = vld [vmem:[#allocation4 + $0x101c] sm:$0xff]
        %v772 = vld [vmem:[#allocation4 + $0x1024] sm:$0xff]
        %v773 = vld [vmem:[#allocation4 + $0x102c] sm:$0xff]
        %v774 = vld [vmem:[#allocation4 + $0x1034] sm:$0xff]
        %v775 = vld [vmem:[#allocation4 + $0x103c] sm:$0xff]
        %v776 = vld [vmem:[#allocation4 + $0x1044] sm:$0xff]
        %v777 = vld [vmem:[#allocation4 + $0x104c] sm:$0xff]
        %v778 = vld [vmem:[#allocation4 + $0x1054] sm:$0xff]
        %v779 = vld [vmem:[#allocation4 + $0x105c] sm:$0xff]
        %v780 = vld [vmem:[#allocation4 + $0x1064] sm:$0xf]
        %v781 = vld [vmem:[#allocation4 + $0x1068] sm:$0xff]
        %v782 = vld [vmem:[#allocation4 + $0x1070] sm:$0xff]
        %v783 = vld [vmem:[#allocation4 + $0x1078] sm:$0xff]
        %v784 = vld [vmem:[#allocation4 + $0x1080] sm:$0xff]
        %v785 = vld [vmem:[#allocation4 + $0x1088] sm:$0xff]
        %v786 = vld [vmem:[#allocation4 + $0x1090] sm:$0xff]
        %v787 = vld [vmem:[#allocation4 + $0x1098] sm:$0xff]
        %v788 = vld [vmem:[#allocation4 + $0x10a0] sm:$0xff]
        %v789 = vld [vmem:[#allocation4 + $0x10a8] sm:$0xff]
        %v790 = vld [vmem:[#allocation4 + $0x10b0] sm:$0xff]
        %v791 = vld [vmem:[#allocation4 + $0x10b8] sm:$0xf]
        %v792 = vld [vmem:[#allocation4 + $0x10bc] sm:$0xff]
        %v793 = vld [vmem:[#allocation4 + $0x10c4] sm:$0xff]
        %v794 = vld [vmem:[#allocation4 + $0x10cc] sm:$0xff]
        %v795 = vld [vmem:[#allocation4 + $0x10d4] sm:$0xff]
        %v796 = vld [vmem:[#allocation4 + $0x10dc] sm:$0xff]
        %v797 = vld [vmem:[#allocation4 + $0x10e4] sm:$0xff]
        %v798 = vld [vmem:[#allocation4 + $0x10ec] sm:$0xff]
        %v799 = vld [vmem:[#allocation4 + $0x10f4] sm:$0xff]
        %v800 = vld [vmem:[#allocation4 + $0x10fc] sm:$0xff]
        %v801 = vld [vmem:[#allocation4 + $0x1104] sm:$0xff]
        %v802 = vld [vmem:[#allocation4 + $0x110c] sm:$0xf]
        %v803 = vld [vmem:[#allocation4 + $0x1110] sm:$0xff]
        %v804 = vld [vmem:[#allocation4 + $0x1118] sm:$0xff]
        %v805 = vld [vmem:[#allocation4 + $0x1120] sm:$0xff]
        %v806 = vld [vmem:[#allocation4 + $0x1128] sm:$0xff]
        %v807 = vld [vmem:[#allocation4 + $0x1130] sm:$0xff]
        %v808 = vld [vmem:[#allocation4 + $0x1138] sm:$0xff]
        %v809 = vld [vmem:[#allocation4 + $0x1140] sm:$0xff]
        %v810 = vld [vmem:[#allocation4 + $0x1148] sm:$0xff]
        %v811 = vld [vmem:[#allocation4 + $0x1150] sm:$0xff]
        %v812 = vld [vmem:[#allocation4 + $0x1158] sm:$0xff]
        %v813 = vld [vmem:[#allocation4 + $0x1160] sm:$0xf]
        %v814 = vld [vmem:[#allocation4 + $0x1164] sm:$0xff]
        %v815 = vld [vmem:[#allocation4 + $0x116c] sm:$0xff]
        %v816 = vld [vmem:[#allocation4 + $0x1174] sm:$0xff]
        %v817 = vld [vmem:[#allocation4 + $0x117c] sm:$0xff]
        %v818 = vld [vmem:[#allocation4 + $0x1184] sm:$0xff]
        %v819 = vld [vmem:[#allocation4 + $0x118c] sm:$0xff]
        %v820 = vld [vmem:[#allocation4 + $0x1194] sm:$0xff]
        %v821 = vld [vmem:[#allocation4 + $0x119c] sm:$0xff]
        %v822 = vld [vmem:[#allocation4 + $0x11a4] sm:$0xff]
        %v823 = vld [vmem:[#allocation4 + $0x11ac] sm:$0xff]
        %v824 = vld [vmem:[#allocation4 + $0x11b4] sm:$0xf]
        %v825 = vld [vmem:[#allocation4 + $0x11b8] sm:$0xff]
        %v826 = vld [vmem:[#allocation4 + $0x11c0] sm:$0xff]
        %v827 = vld [vmem:[#allocation4 + $0x11c8] sm:$0xff]
        %v828 = vld [vmem:[#allocation4 + $0x11d0] sm:$0xff]
        %v829 = vld [vmem:[#allocation4 + $0x11d8] sm:$0xff]
        %v830 = vld [vmem:[#allocation4 + $0x11e0] sm:$0xff]
        %v831 = vld [vmem:[#allocation4 + $0x11e8] sm:$0xff]
        %v832 = vld [vmem:[#allocation4 + $0x11f0] sm:$0xff]
        %v833 = vld [vmem:[#allocation4 + $0x11f8] sm:$0xff]
        %v834 = vld [vmem:[#allocation4 + $0x1200] sm:$0xff]
        %v835 = vld [vmem:[#allocation4 + $0x1208] sm:$0xf]
        %v836 = vld [vmem:[#allocation4 + $0x120c] sm:$0xff]
        %v837 = vld [vmem:[#allocation4 + $0x1214] sm:$0xff]
        %v838 = vld [vmem:[#allocation4 + $0x121c] sm:$0xff]
        %v839 = vld [vmem:[#allocation4 + $0x1224] sm:$0xff]
        %v840 = vld [vmem:[#allocation4 + $0x122c] sm:$0xff]
        %v841 = vld [vmem:[#allocation4 + $0x1234] sm:$0xff]
        %v842 = vld [vmem:[#allocation4 + $0x123c] sm:$0xff]
        %v843 = vld [vmem:[#allocation4 + $0x1244] sm:$0xff]
        %v844 = vld [vmem:[#allocation4 + $0x124c] sm:$0xff]
        %v845 = vld [vmem:[#allocation4 + $0x1254] sm:$0xff]
        %v846 = vld [vmem:[#allocation4 + $0x125c] sm:$0xf]
        %v847 = vld [vmem:[#allocation4 + $0x1260] sm:$0xff]
        %v848 = vld [vmem:[#allocation4 + $0x1268] sm:$0xff]
        %v849 = vld [vmem:[#allocation4 + $0x1270] sm:$0xff]
        %v850 = vld [vmem:[#allocation4 + $0x1278] sm:$0xff]
        %v851 = vld [vmem:[#allocation4 + $0x1280] sm:$0xff]
        %v852 = vld [vmem:[#allocation4 + $0x1288] sm:$0xff]
        %v853 = vld [vmem:[#allocation4 + $0x1290] sm:$0xff]
        %v854 = vld [vmem:[#allocation4 + $0x1298] sm:$0xff]
        %v855 = vld [vmem:[#allocation4 + $0x12a0] sm:$0xff]
        %v856 = vld [vmem:[#allocation4 + $0x12a8] sm:$0xff]
        %v857 = vld [vmem:[#allocation4 + $0x12b0] sm:$0xf]
        %v858 = vld [vmem:[#allocation4 + $0x12b4] sm:$0xff]
        %v859 = vld [vmem:[#allocation4 + $0x12bc] sm:$0xff]
        %v860 = vld [vmem:[#allocation4 + $0x12c4] sm:$0xff]
        %v861 = vld [vmem:[#allocation4 + $0x12cc] sm:$0xff]
        %v862 = vld [vmem:[#allocation4 + $0x12d4] sm:$0xff]
        %v863 = vld [vmem:[#allocation4 + $0x12dc] sm:$0xff]
        %v864 = vld [vmem:[#allocation4 + $0x12e4] sm:$0xff]
        %v865 = vld [vmem:[#allocation4 + $0x12ec] sm:$0xff]
        %v866 = vld [vmem:[#allocation4 + $0x12f4] sm:$0xff]
        %v867 = vld [vmem:[#allocation4 + $0x12fc] sm:$0xff]
        %v868 = vld [vmem:[#allocation4 + $0x1304] sm:$0xf]
        %v869 = vld [vmem:[#allocation4 + $0x1308] sm:$0xff]
        %v870 = vld [vmem:[#allocation4 + $0x1310] sm:$0xff]
        %v871 = vld [vmem:[#allocation4 + $0x1318] sm:$0xff]
        %v872 = vld [vmem:[#allocation4 + $0x1320] sm:$0xff]
        %v873 = vld [vmem:[#allocation4 + $0x1328] sm:$0xff]
        %v874 = vld [vmem:[#allocation4 + $0x1330] sm:$0xff]
        %v875 = vld [vmem:[#allocation4 + $0x1338] sm:$0xff]
        %v876 = vld [vmem:[#allocation4 + $0x1340] sm:$0xff]
        %v877 = vld [vmem:[#allocation4 + $0x1348] sm:$0xff]
        %v878 = vld [vmem:[#allocation4 + $0x1350] sm:$0xff]
        %v879 = vld [vmem:[#allocation4 + $0x1358] sm:$0xf]
        %v880 = vld [vmem:[#allocation4 + $0x135c] sm:$0xff]
        %v881 = vld [vmem:[#allocation4 + $0x1364] sm:$0xff]
        %v882 = vld [vmem:[#allocation4 + $0x136c] sm:$0xff]
        %v883 = vld [vmem:[#allocation4 + $0x1374] sm:$0xff]
        %v884 = vld [vmem:[#allocation4 + $0x137c] sm:$0xff]
        %v885 = vld [vmem:[#allocation4 + $0x1384] sm:$0xff]
        %v886 = vld [vmem:[#allocation4 + $0x138c] sm:$0xff]
        %v887 = vld [vmem:[#allocation4 + $0x1394] sm:$0xff]
        %v888 = vld [vmem:[#allocation4 + $0x139c] sm:$0xff]
        %v889 = vld [vmem:[#allocation4 + $0x13a4] sm:$0xff]
        %v890 = vld [vmem:[#allocation4 + $0x13ac] sm:$0xf]
        %v891 = vld [vmem:[#allocation4 + $0x13b0] sm:$0xff]
        %v892 = vld [vmem:[#allocation4 + $0x13b8] sm:$0xff]
        %v893 = vld [vmem:[#allocation4 + $0x13c0] sm:$0xff]
        %v894 = vld [vmem:[#allocation4 + $0x13c8] sm:$0xff]
        %v895 = vld [vmem:[#allocation4 + $0x13d0] sm:$0xff]
        %v896 = vld [vmem:[#allocation4 + $0x13d8] sm:$0xff]
        %v897 = vld [vmem:[#allocation4 + $0x13e0] sm:$0xff]
        %v898 = vld [vmem:[#allocation4 + $0x13e8] sm:$0xff]
        %v899 = vld [vmem:[#allocation4 + $0x13f0] sm:$0xff]
        %v900 = vld [vmem:[#allocation4 + $0x13f8] sm:$0xff]
        %v901 = vld [vmem:[#allocation4 + $0x1400] sm:$0xf]
        %v902 = vld [vmem:[#allocation4 + $0x1404] sm:$0xff]
        %v903 = vld [vmem:[#allocation4 + $0x140c] sm:$0xff]
        %v904 = vld [vmem:[#allocation4 + $0x1414] sm:$0xff]
        %v905 = vld [vmem:[#allocation4 + $0x141c] sm:$0xff]
        %v906 = vld [vmem:[#allocation4 + $0x1424] sm:$0xff]
        %v907 = vld [vmem:[#allocation4 + $0x142c] sm:$0xff]
        %v908 = vld [vmem:[#allocation4 + $0x1434] sm:$0xff]
        %v909 = vld [vmem:[#allocation4 + $0x143c] sm:$0xff]
        %v910 = vld [vmem:[#allocation4 + $0x1444] sm:$0xff]
        %v911 = vld [vmem:[#allocation4 + $0x144c] sm:$0xff]
        %v912 = vld [vmem:[#allocation4 + $0x1454] sm:$0xf]
        %v913 = vld [vmem:[#allocation4 + $0x1458] sm:$0xff]
        %v914 = vld [vmem:[#allocation4 + $0x1460] sm:$0xff]
        %v915 = vld [vmem:[#allocation4 + $0x1468] sm:$0xff]
        %v916 = vld [vmem:[#allocation4 + $0x1470] sm:$0xff]
        %v917 = vld [vmem:[#allocation4 + $0x1478] sm:$0xff]
        %v918 = vld [vmem:[#allocation4 + $0x1480] sm:$0xff]
        %v919 = vld [vmem:[#allocation4 + $0x1488] sm:$0xff]
        %v920 = vld [vmem:[#allocation4 + $0x1490] sm:$0xff]
        %v921 = vld [vmem:[#allocation4 + $0x1498] sm:$0xff]
        %v922 = vld [vmem:[#allocation4 + $0x14a0] sm:$0xff]
        %v923 = vld [vmem:[#allocation4 + $0x14a8] sm:$0xf]
        %v924 = vld [vmem:[#allocation4 + $0x14ac] sm:$0xff]
        %v925 = vld [vmem:[#allocation4 + $0x14b4] sm:$0xff]
        %v926 = vld [vmem:[#allocation4 + $0x14bc] sm:$0xff]
        %v927 = vld [vmem:[#allocation4 + $0x14c4] sm:$0xff]
        %v928 = vld [vmem:[#allocation4 + $0x14cc] sm:$0xff]
        %v929 = vld [vmem:[#allocation4 + $0x14d4] sm:$0xff]
        %v930 = vld [vmem:[#allocation4 + $0x14dc] sm:$0xff]
        %v931 = vld [vmem:[#allocation4 + $0x14e4] sm:$0xff]
        %v932 = vld [vmem:[#allocation4 + $0x14ec] sm:$0xff]
        %v933 = vld [vmem:[#allocation4 + $0x14f4] sm:$0xff]
        %v934 = vld [vmem:[#allocation4 + $0x14fc] sm:$0xf]
        %v935 = vld [vmem:[#allocation4 + $0x1500] sm:$0xff]
        %v936 = vld [vmem:[#allocation4 + $0x1508] sm:$0xff]
        %v937 = vld [vmem:[#allocation4 + $0x1510] sm:$0xff]
        %v938 = vld [vmem:[#allocation4 + $0x1518] sm:$0xff]
        %v939 = vld [vmem:[#allocation4 + $0x1520] sm:$0xff]
        %v940 = vld [vmem:[#allocation4 + $0x1528] sm:$0xff]
        %v941 = vld [vmem:[#allocation4 + $0x1530] sm:$0xff]
        %v942 = vld [vmem:[#allocation4 + $0x1538] sm:$0xff]
        %v943 = vld [vmem:[#allocation4 + $0x1540] sm:$0xff]
        %v944 = vld [vmem:[#allocation4 + $0x1548] sm:$0xff]
        %v945 = vld [vmem:[#allocation4 + $0x1550] sm:$0xf]
        %v946 = vld [vmem:[#allocation4 + $0x1554] sm:$0xff]
        %v947 = vld [vmem:[#allocation4 + $0x155c] sm:$0xff]
        %v948 = vld [vmem:[#allocation4 + $0x1564] sm:$0xff]
        %v949 = vld [vmem:[#allocation4 + $0x156c] sm:$0xff]
        %v950 = vld [vmem:[#allocation4 + $0x1574] sm:$0xff]
        %v951 = vld [vmem:[#allocation4 + $0x157c] sm:$0xff]
        %v952 = vld [vmem:[#allocation4 + $0x1584] sm:$0xff]
        %v953 = vld [vmem:[#allocation4 + $0x158c] sm:$0xff]
        %v954 = vld [vmem:[#allocation4 + $0x1594] sm:$0xff]
        %v955 = vld [vmem:[#allocation4 + $0x159c] sm:$0xff]
        %v956 = vld [vmem:[#allocation4 + $0x15a4] sm:$0xf]
        %v957 = vld [vmem:[#allocation4 + $0x15a8] sm:$0xff]
        %v958 = vld [vmem:[#allocation4 + $0x15b0] sm:$0xff]
        %v959 = vld [vmem:[#allocation4 + $0x15b8] sm:$0xff]
        %v960 = vld [vmem:[#allocation4 + $0x15c0] sm:$0xff]
        %v961 = vld [vmem:[#allocation4 + $0x15c8] sm:$0xff]
        %v962 = vld [vmem:[#allocation4 + $0x15d0] sm:$0xff]
        %v963 = vld [vmem:[#allocation4 + $0x15d8] sm:$0xff]
        %v964 = vld [vmem:[#allocation4 + $0x15e0] sm:$0xff]
        %v965 = vld [vmem:[#allocation4 + $0x15e8] sm:$0xff]
        %v966 = vld [vmem:[#allocation4 + $0x15f0] sm:$0xff]
        %v967 = vld [vmem:[#allocation4 + $0x15f8] sm:$0xf]
        %v968 = vld [vmem:[#allocation4 + $0x15fc] sm:$0xff]
        %v969 = vld [vmem:[#allocation4 + $0x1604] sm:$0xff]
        %v970 = vld [vmem:[#allocation4 + $0x160c] sm:$0xff]
        %v971 = vld [vmem:[#allocation4 + $0x1614] sm:$0xff]
        %v972 = vld [vmem:[#allocation4 + $0x161c] sm:$0xff]
        %v973 = vld [vmem:[#allocation4 + $0x1624] sm:$0xff]
        %v974 = vld [vmem:[#allocation4 + $0x162c] sm:$0xff]
        %v975 = vld [vmem:[#allocation4 + $0x1634] sm:$0xff]
        %v976 = vld [vmem:[#allocation4 + $0x163c] sm:$0xff]
        %v977 = vld [vmem:[#allocation4 + $0x1644] sm:$0xff]
        %v978 = vld [vmem:[#allocation4 + $0x164c] sm:$0xf]
        %v979 = vld [vmem:[#allocation4 + $0x1650] sm:$0xff]
        %v980 = vld [vmem:[#allocation4 + $0x1658] sm:$0xff]
        %v981 = vld [vmem:[#allocation4 + $0x1660] sm:$0xff]
        %v982 = vld [vmem:[#allocation4 + $0x1668] sm:$0xff]
        %v983 = vld [vmem:[#allocation4 + $0x1670] sm:$0xff]
        %v984 = vld [vmem:[#allocation4 + $0x1678] sm:$0xff]
        %v985 = vld [vmem:[#allocation4 + $0x1680] sm:$0xff]
        %v986 = vld [vmem:[#allocation4 + $0x1688] sm:$0xff]
        %v987 = vld [vmem:[#allocation4 + $0x1690] sm:$0xff]
        %v988 = vld [vmem:[#allocation4 + $0x1698] sm:$0xff]
        %v989 = vld [vmem:[#allocation4 + $0x16a0] sm:$0xf]
        %v990 = vld [vmem:[#allocation4 + $0x16a4] sm:$0xff]
        %v991 = vld [vmem:[#allocation4 + $0x16ac] sm:$0xff]
        %v992 = vld [vmem:[#allocation4 + $0x16b4] sm:$0xff]
        %v993 = vld [vmem:[#allocation4 + $0x16bc] sm:$0xff]
        %v994 = vld [vmem:[#allocation4 + $0x16c4] sm:$0xff]
        %v995 = vld [vmem:[#allocation4 + $0x16cc] sm:$0xff]
        %v996 = vld [vmem:[#allocation4 + $0x16d4] sm:$0xff]
        %v997 = vld [vmem:[#allocation4 + $0x16dc] sm:$0xff]
        %v998 = vld [vmem:[#allocation4 + $0x16e4] sm:$0xff]
        %v999 = vld [vmem:[#allocation4 + $0x16ec] sm:$0xff]
        %v1000 = vld [vmem:[#allocation4 + $0x16f4] sm:$0xf]
        %v1001 = vld [vmem:[#allocation4 + $0x16f8] sm:$0xff]
        %v1002 = vld [vmem:[#allocation4 + $0x1700] sm:$0xff]
        %v1003 = vld [vmem:[#allocation4 + $0x1708] sm:$0xff]
        %v1004 = vld [vmem:[#allocation4 + $0x1710] sm:$0xff]
        %v1005 = vld [vmem:[#allocation4 + $0x1718] sm:$0xff]
        %v1006 = vld [vmem:[#allocation4 + $0x1720] sm:$0xff]
        %v1007 = vld [vmem:[#allocation4 + $0x1728] sm:$0xff]
        %v1008 = vld [vmem:[#allocation4 + $0x1730] sm:$0xff]
        %v1009 = vld [vmem:[#allocation4 + $0x1738] sm:$0xff]
        %v1010 = vld [vmem:[#allocation4 + $0x1740] sm:$0xff]
        %v1011 = vld [vmem:[#allocation4 + $0x1748] sm:$0xf]
        %v1012 = vld [vmem:[#allocation4 + $0x174c] sm:$0xff]
        %v1013 = vld [vmem:[#allocation4 + $0x1754] sm:$0xff]
        %v1014 = vld [vmem:[#allocation4 + $0x175c] sm:$0xff]
        %v1015 = vld [vmem:[#allocation4 + $0x1764] sm:$0xff]
        %v1016 = vld [vmem:[#allocation4 + $0x176c] sm:$0xff]
        %v1017 = vld [vmem:[#allocation4 + $0x1774] sm:$0xff]
        %v1018 = vld [vmem:[#allocation4 + $0x177c] sm:$0xff]
        %v1019 = vld [vmem:[#allocation4 + $0x1784] sm:$0xff]
        %v1020 = vld [vmem:[#allocation4 + $0x178c] sm:$0xff]
        %v1021 = vld [vmem:[#allocation4 + $0x1794] sm:$0xff]
        %v1022 = vld [vmem:[#allocation4 + $0x179c] sm:$0xf]
        %v1023 = vld [vmem:[#allocation4 + $0x17a0] sm:$0xff]
        %v1024 = vld [vmem:[#allocation4 + $0x17a8] sm:$0xff]
        %v1025 = vld [vmem:[#allocation4 + $0x17b0] sm:$0xff]
        %v1026 = vld [vmem:[#allocation4 + $0x17b8] sm:$0xff]
        %v1027 = vld [vmem:[#allocation4 + $0x17c0] sm:$0xff]
        %v1028 = vld [vmem:[#allocation4 + $0x17c8] sm:$0xff]
        %v1029 = vld [vmem:[#allocation4 + $0x17d0] sm:$0xff]
        %v1030 = vld [vmem:[#allocation4 + $0x17d8] sm:$0xff]
        %v1031 = vld [vmem:[#allocation4 + $0x17e0] sm:$0xff]
        %v1032 = vld [vmem:[#allocation4 + $0x17e8] sm:$0xff]
        %v1033 = vld [vmem:[#allocation4 + $0x17f0] sm:$0xf]
        %v1034 = vld [vmem:[#allocation4 + $0x17f4] sm:$0xff]
        %v1035 = vld [vmem:[#allocation4 + $0x17fc] sm:$0xff]
        %v1036 = vld [vmem:[#allocation4 + $0x1804] sm:$0xff]
        %v1037 = vld [vmem:[#allocation4 + $0x180c] sm:$0xff]
        %v1038 = vld [vmem:[#allocation4 + $0x1814] sm:$0xff]
        %v1039 = vld [vmem:[#allocation4 + $0x181c] sm:$0xff]
        %v1040 = vld [vmem:[#allocation4 + $0x1824] sm:$0xff]
        %v1041 = vld [vmem:[#allocation4 + $0x182c] sm:$0xff]
        %v1042 = vld [vmem:[#allocation4 + $0x1834] sm:$0xff]
        %v1043 = vld [vmem:[#allocation4 + $0x183c] sm:$0xff]
        %v1044 = vld [vmem:[#allocation4 + $0x1844] sm:$0xf]
        %v1045 = vld [vmem:[#allocation4 + $0x1848] sm:$0xff]
        %v1046 = vld [vmem:[#allocation4 + $0x1850] sm:$0xff]
        %v1047 = vld [vmem:[#allocation4 + $0x1858] sm:$0xff]
        %v1048 = vld [vmem:[#allocation4 + $0x1860] sm:$0xff]
        %v1049 = vld [vmem:[#allocation4 + $0x1868] sm:$0xff]
        %v1050 = vld [vmem:[#allocation4 + $0x1870] sm:$0xff]
        %v1051 = vld [vmem:[#allocation4 + $0x1878] sm:$0xff]
        %v1052 = vld [vmem:[#allocation4 + $0x1880] sm:$0xff]
        %v1053 = vld [vmem:[#allocation4 + $0x1888] sm:$0xff]
        %v1054 = vld [vmem:[#allocation4 + $0x1890] sm:$0xff]
        %v1055 = vld [vmem:[#allocation4 + $0x1898] sm:$0xf]
        %v1056 = vld [vmem:[#allocation4 + $0x189c] sm:$0xff]
        %v1057 = vld [vmem:[#allocation4 + $0x18a4] sm:$0xff]
        %v1058 = vld [vmem:[#allocation4 + $0x18ac] sm:$0xff]
        %v1059 = vld [vmem:[#allocation4 + $0x18b4] sm:$0xff]
        %v1060 = vld [vmem:[#allocation4 + $0x18bc] sm:$0xff]
        %v1061 = vld [vmem:[#allocation4 + $0x18c4] sm:$0xff]
        %v1062 = vld [vmem:[#allocation4 + $0x18cc] sm:$0xff]
        %v1063 = vld [vmem:[#allocation4 + $0x18d4] sm:$0xff]
        %v1064 = vld [vmem:[#allocation4 + $0x18dc] sm:$0xff]
        %v1065 = vld [vmem:[#allocation4 + $0x18e4] sm:$0xff]
        %v1066 = vld [vmem:[#allocation4 + $0x18ec] sm:$0xf]
        %v1067 = vld [vmem:[#allocation4 + $0x18f0] sm:$0xff]
        %v1068 = vld [vmem:[#allocation4 + $0x18f8] sm:$0xff]
        %v1069 = vld [vmem:[#allocation4 + $0x1900] sm:$0xff]
        %v1070 = vld [vmem:[#allocation4 + $0x1908] sm:$0xff]
        %v1071 = vld [vmem:[#allocation4 + $0x1910] sm:$0xff]
        %v1072 = vld [vmem:[#allocation4 + $0x1918] sm:$0xff]
        %v1073 = vld [vmem:[#allocation4 + $0x1920] sm:$0xff]
        %v1074 = vld [vmem:[#allocation4 + $0x1928] sm:$0xff]
        %v1075 = vld [vmem:[#allocation4 + $0x1930] sm:$0xff]
        %v1076 = vld [vmem:[#allocation4 + $0x1938] sm:$0xff]
        %v1077 = vld [vmem:[#allocation4 + $0x1940] sm:$0xf]
        %v1078 = vld [vmem:[#allocation4 + $0x1944] sm:$0xff]
        %v1079 = vld [vmem:[#allocation4 + $0x194c] sm:$0xff]
        %v1080 = vld [vmem:[#allocation4 + $0x1954] sm:$0xff]
        %v1081 = vld [vmem:[#allocation4 + $0x195c] sm:$0xff]
        %v1082 = vld [vmem:[#allocation4 + $0x1964] sm:$0xff]
        %v1083 = vld [vmem:[#allocation4 + $0x196c] sm:$0xff]
        %v1084 = vld [vmem:[#allocation4 + $0x1974] sm:$0xff]
        %v1085 = vld [vmem:[#allocation4 + $0x197c] sm:$0xff]
        %v1086 = vld [vmem:[#allocation4 + $0x1984] sm:$0xff]
        %v1087 = vld [vmem:[#allocation4 + $0x198c] sm:$0xff]
        %v1088 = vld [vmem:[#allocation4 + $0x1994] sm:$0xf]
        %v1089 = vld [vmem:[#allocation4 + $0x1998] sm:$0xff]
        %v1090 = vld [vmem:[#allocation4 + $0x19a0] sm:$0xff]
        %v1091 = vld [vmem:[#allocation4 + $0x19a8] sm:$0xff]
        %v1092 = vld [vmem:[#allocation4 + $0x19b0] sm:$0xff]
        %v1093 = vld [vmem:[#allocation4 + $0x19b8] sm:$0xff]
        %v1094 = vld [vmem:[#allocation4 + $0x19c0] sm:$0xff]
        %v1095 = vld [vmem:[#allocation4 + $0x19c8] sm:$0xff]
        %v1096 = vld [vmem:[#allocation4 + $0x19d0] sm:$0xff]
        %v1097 = vld [vmem:[#allocation4 + $0x19d8] sm:$0xff]
        %v1098 = vld [vmem:[#allocation4 + $0x19e0] sm:$0xff]
        %v1099 = vld [vmem:[#allocation4 + $0x19e8] sm:$0xf]
        %v1100 = vld [vmem:[#allocation4 + $0x19ec] sm:$0xff]
        %v1101 = vld [vmem:[#allocation4 + $0x19f4] sm:$0xff]
        %v1102 = vld [vmem:[#allocation4 + $0x19fc] sm:$0xff]
        %v1103 = vld [vmem:[#allocation4 + $0x1a04] sm:$0xff]
        %v1104 = vld [vmem:[#allocation4 + $0x1a0c] sm:$0xff]
        %v1105 = vld [vmem:[#allocation4 + $0x1a14] sm:$0xff]
        %v1106 = vld [vmem:[#allocation4 + $0x1a1c] sm:$0xff]
        %v1107 = vld [vmem:[#allocation4 + $0x1a24] sm:$0xff]
        %v1108 = vld [vmem:[#allocation4 + $0x1a2c] sm:$0xff]
        %v1109 = vld [vmem:[#allocation4 + $0x1a34] sm:$0xff]
        %v1110 = vld [vmem:[#allocation4 + $0x1a3c] sm:$0xf]
        %v1111 = vld [vmem:[#allocation4 + $0x1a40] sm:$0xff]
        %v1112 = vld [vmem:[#allocation4 + $0x1a48] sm:$0xff]
        %v1113 = vld [vmem:[#allocation4 + $0x1a50] sm:$0xff]
        %v1114 = vld [vmem:[#allocation4 + $0x1a58] sm:$0xff]
        %v1115 = vld [vmem:[#allocation4 + $0x1a60] sm:$0xff]
        %v1116 = vld [vmem:[#allocation4 + $0x1a68] sm:$0xff]
        %v1117 = vld [vmem:[#allocation4 + $0x1a70] sm:$0xff]
        %v1118 = vld [vmem:[#allocation4 + $0x1a78] sm:$0xff]
        %v1119 = vld [vmem:[#allocation4 + $0x1a80] sm:$0xff]
        %v1120 = vld [vmem:[#allocation4 + $0x1a88] sm:$0xff]
        %v1121 = vld [vmem:[#allocation4 + $0x1a90] sm:$0xf]
        %v1122 = vld [vmem:[#allocation4 + $0x1a94] sm:$0xff]
        %v1123 = vld [vmem:[#allocation4 + $0x1a9c] sm:$0xff]
        %v1124 = vld [vmem:[#allocation4 + $0x1aa4] sm:$0xff]
        %v1125 = vld [vmem:[#allocation4 + $0x1aac] sm:$0xff]
        %v1126 = vld [vmem:[#allocation4 + $0x1ab4] sm:$0xff]
        %v1127 = vld [vmem:[#allocation4 + $0x1abc] sm:$0xff]
        %v1128 = vld [vmem:[#allocation4 + $0x1ac4] sm:$0xff]
        %v1129 = vld [vmem:[#allocation4 + $0x1acc] sm:$0xff]
        %v1130 = vld [vmem:[#allocation4 + $0x1ad4] sm:$0xff]
        %v1131 = vld [vmem:[#allocation4 + $0x1adc] sm:$0xff]
        %v1132 = vld [vmem:[#allocation4 + $0x1ae4] sm:$0xf]
        %v1133 = vld [vmem:[#allocation4 + $0x1ae8] sm:$0xff]
        %v1134 = vld [vmem:[#allocation4 + $0x1af0] sm:$0xff]
        %v1135 = vld [vmem:[#allocation4 + $0x1af8] sm:$0xff]
        %v1136 = vld [vmem:[#allocation4 + $0x1b00] sm:$0xff]
        %v1137 = vld [vmem:[#allocation4 + $0x1b08] sm:$0xff]
        %v1138 = vld [vmem:[#allocation4 + $0x1b10] sm:$0xff]
        %v1139 = vld [vmem:[#allocation4 + $0x1b18] sm:$0xff]
        %v1140 = vld [vmem:[#allocation4 + $0x1b20] sm:$0xff]
        %v1141 = vld [vmem:[#allocation4 + $0x1b28] sm:$0xff]
        %v1142 = vld [vmem:[#allocation4 + $0x1b30] sm:$0xff]
        %v1143 = vld [vmem:[#allocation4 + $0x1b38] sm:$0xf]
        %v1144 = vld [vmem:[#allocation4 + $0x1b3c] sm:$0xff]
        %v1145 = vld [vmem:[#allocation4 + $0x1b44] sm:$0xff]
        %v1146 = vld [vmem:[#allocation4 + $0x1b4c] sm:$0xff]
        %v1147 = vld [vmem:[#allocation4 + $0x1b54] sm:$0xff]
        %v1148 = vld [vmem:[#allocation4 + $0x1b5c] sm:$0xff]
        %v1149 = vld [vmem:[#allocation4 + $0x1b64] sm:$0xff]
        %v1150 = vld [vmem:[#allocation4 + $0x1b6c] sm:$0xff]
        %v1151 = vld [vmem:[#allocation4 + $0x1b74] sm:$0xff]
        %v1152 = vld [vmem:[#allocation4 + $0x1b7c] sm:$0xff]
        %v1153 = vld [vmem:[#allocation4 + $0x1b84] sm:$0xff]
        %v1154 = vld [vmem:[#allocation4 + $0x1b8c] sm:$0xf]
        %v1155 = vld [vmem:[#allocation4 + $0x1b90] sm:$0xff]
        %v1156 = vld [vmem:[#allocation4 + $0x1b98] sm:$0xff]
        %v1157 = vld [vmem:[#allocation4 + $0x1ba0] sm:$0xff]
        %v1158 = vld [vmem:[#allocation4 + $0x1ba8] sm:$0xff]
        %v1159 = vld [vmem:[#allocation4 + $0x1bb0] sm:$0xff]
        %v1160 = vld [vmem:[#allocation4 + $0x1bb8] sm:$0xff]
        %v1161 = vld [vmem:[#allocation4 + $0x1bc0] sm:$0xff]
        %v1162 = vld [vmem:[#allocation4 + $0x1bc8] sm:$0xff]
        %v1163 = vld [vmem:[#allocation4 + $0x1bd0] sm:$0xff]
        %v1164 = vld [vmem:[#allocation4 + $0x1bd8] sm:$0xff]
        %v1165 = vld [vmem:[#allocation4 + $0x1be0] sm:$0xf]
        %v1166 = vld [vmem:[#allocation4 + $0x1be4] sm:$0xff]
        %v1167 = vld [vmem:[#allocation4 + $0x1bec] sm:$0xff]
        %v1168 = vld [vmem:[#allocation4 + $0x1bf4] sm:$0xff]
        %v1169 = vld [vmem:[#allocation4 + $0x1bfc] sm:$0xff]
        %v1170 = vld [vmem:[#allocation4 + $0x1c04] sm:$0xff]
        %v1171 = vld [vmem:[#allocation4 + $0x1c0c] sm:$0xff]
        %v1172 = vld [vmem:[#allocation4 + $0x1c14] sm:$0xff]
        %v1173 = vld [vmem:[#allocation4 + $0x1c1c] sm:$0xff]
        %v1174 = vld [vmem:[#allocation4 + $0x1c24] sm:$0xff]
        %v1175 = vld [vmem:[#allocation4 + $0x1c2c] sm:$0xff]
        %v1176 = vld [vmem:[#allocation4 + $0x1c34] sm:$0xf]
        %v1177 = vld [vmem:[#allocation4 + $0x1c38] sm:$0xff]
        %v1178 = vld [vmem:[#allocation4 + $0x1c40] sm:$0xff]
        %v1179 = vld [vmem:[#allocation4 + $0x1c48] sm:$0xff]
        %v1180 = vld [vmem:[#allocation4 + $0x1c50] sm:$0xff]
        %v1181 = vld [vmem:[#allocation4 + $0x1c58] sm:$0xff]
        %v1182 = vld [vmem:[#allocation4 + $0x1c60] sm:$0xff]
        %v1183 = vld [vmem:[#allocation4 + $0x1c68] sm:$0xff]
        %v1184 = vld [vmem:[#allocation4 + $0x1c70] sm:$0xff]
        %v1185 = vld [vmem:[#allocation4 + $0x1c78] sm:$0xff]
        %v1186 = vld [vmem:[#allocation4 + $0x1c80] sm:$0xff]
        %v1187 = vld [vmem:[#allocation4 + $0x1c88] sm:$0xf]
        %v1188 = vld [vmem:[#allocation4 + $0x1c8c] sm:$0xff]
        %v1189 = vld [vmem:[#allocation4 + $0x1c94] sm:$0xff]
        %v1190 = vld [vmem:[#allocation4 + $0x1c9c] sm:$0xff]
        %v1191 = vld [vmem:[#allocation4 + $0x1ca4] sm:$0xff]
        %v1192 = vld [vmem:[#allocation4 + $0x1cac] sm:$0xff]
        %v1193 = vld [vmem:[#allocation4 + $0x1cb4] sm:$0xff]
        %v1194 = vld [vmem:[#allocation4 + $0x1cbc] sm:$0xff]
        %v1195 = vld [vmem:[#allocation4 + $0x1cc4] sm:$0xff]
        %v1196 = vld [vmem:[#allocation4 + $0x1ccc] sm:$0xff]
        %v1197 = vld [vmem:[#allocation4 + $0x1cd4] sm:$0xff]
        %v1198 = vld [vmem:[#allocation4 + $0x1cdc] sm:$0xf]
        %v1199 = vld [vmem:[#allocation4 + $0x1ce0] sm:$0xff]
        %v1200 = vld [vmem:[#allocation4 + $0x1ce8] sm:$0xff]
        %v1201 = vld [vmem:[#allocation4 + $0x1cf0] sm:$0xff]
        %v1202 = vld [vmem:[#allocation4 + $0x1cf8] sm:$0xff]
        %v1203 = vld [vmem:[#allocation4 + $0x1d00] sm:$0xff]
        %v1204 = vld [vmem:[#allocation4 + $0x1d08] sm:$0xff]
        %v1205 = vld [vmem:[#allocation4 + $0x1d10] sm:$0xff]
        %v1206 = vld [vmem:[#allocation4 + $0x1d18] sm:$0xff]
        %v1207 = vld [vmem:[#allocation4 + $0x1d20] sm:$0xff]
        %v1208 = vld [vmem:[#allocation4 + $0x1d28] sm:$0xff]
        %v1209 = vld [vmem:[#allocation4 + $0x1d30] sm:$0xf]
        %v1210 = vld [vmem:[#allocation4 + $0x1d34] sm:$0xff]
        %v1211 = vld [vmem:[#allocation4 + $0x1d3c] sm:$0xff]
        %v1212 = vld [vmem:[#allocation4 + $0x1d44] sm:$0xff]
        %v1213 = vld [vmem:[#allocation4 + $0x1d4c] sm:$0xff]
        %v1214 = vld [vmem:[#allocation4 + $0x1d54] sm:$0xff]
        %v1215 = vld [vmem:[#allocation4 + $0x1d5c] sm:$0xff]
        %v1216 = vld [vmem:[#allocation4 + $0x1d64] sm:$0xff]
        %v1217 = vld [vmem:[#allocation4 + $0x1d6c] sm:$0xff]
        %v1218 = vld [vmem:[#allocation4 + $0x1d74] sm:$0xff]
        %v1219 = vld [vmem:[#allocation4 + $0x1d7c] sm:$0xff]
        %v1220 = vld [vmem:[#allocation4 + $0x1d84] sm:$0xf]
        %v1221 = vld [vmem:[#allocation4 + $0x1d88] sm:$0xff]
        %v1222 = vld [vmem:[#allocation4 + $0x1d90] sm:$0xff]
        %v1223 = vld [vmem:[#allocation4 + $0x1d98] sm:$0xff]
        %v1224 = vld [vmem:[#allocation4 + $0x1da0] sm:$0xff]
        %v1225 = vld [vmem:[#allocation4 + $0x1da8] sm:$0xff]
        %v1226 = vld [vmem:[#allocation4 + $0x1db0] sm:$0xff]
        %v1227 = vld [vmem:[#allocation4 + $0x1db8] sm:$0xff]
        %v1228 = vld [vmem:[#allocation4 + $0x1dc0] sm:$0xff]
        %v1229 = vld [vmem:[#allocation4 + $0x1dc8] sm:$0xff]
        %v1230 = vld [vmem:[#allocation4 + $0x1dd0] sm:$0xff]
        %v1231 = vld [vmem:[#allocation4 + $0x1dd8] sm:$0xf]
        %v1232 = vld [vmem:[#allocation4 + $0x1ddc] sm:$0xff]
        %v1233 = vld [vmem:[#allocation4 + $0x1de4] sm:$0xff]
        %v1234 = vld [vmem:[#allocation4 + $0x1dec] sm:$0xff]
        %v1235 = vld [vmem:[#allocation4 + $0x1df4] sm:$0xff]
        %v1236 = vld [vmem:[#allocation4 + $0x1dfc] sm:$0xff]
        %v1237 = vld [vmem:[#allocation4 + $0x1e04] sm:$0xff]
        %v1238 = vld [vmem:[#allocation4 + $0x1e0c] sm:$0xff]
        %v1239 = vld [vmem:[#allocation4 + $0x1e14] sm:$0xff]
        %v1240 = vld [vmem:[#allocation4 + $0x1e1c] sm:$0xff]
        %v1241 = vld [vmem:[#allocation4 + $0x1e24] sm:$0xff]
        %v1242 = vld [vmem:[#allocation4 + $0x1e2c] sm:$0xf]
        %v1243 = vld [vmem:[#allocation4 + $0x1e30] sm:$0xff]
        %v1244 = vld [vmem:[#allocation4 + $0x1e38] sm:$0xff]
        %v1245 = vld [vmem:[#allocation4 + $0x1e40] sm:$0xff]
        %v1246 = vld [vmem:[#allocation4 + $0x1e48] sm:$0xff]
        %v1247 = vld [vmem:[#allocation4 + $0x1e50] sm:$0xff]
        %v1248 = vld [vmem:[#allocation4 + $0x1e58] sm:$0xff]
        %v1249 = vld [vmem:[#allocation4 + $0x1e60] sm:$0xff]
        %v1250 = vld [vmem:[#allocation4 + $0x1e68] sm:$0xff]
        %v1251 = vld [vmem:[#allocation4 + $0x1e70] sm:$0xff]
        %v1252 = vld [vmem:[#allocation4 + $0x1e78] sm:$0xff]
        %v1253 = vld [vmem:[#allocation4 + $0x1e80] sm:$0xf]
        %v1254 = vld [vmem:[#allocation4 + $0x1e84] sm:$0xff]
        %v1255 = vld [vmem:[#allocation4 + $0x1e8c] sm:$0xff]
        %v1256 = vld [vmem:[#allocation4 + $0x1e94] sm:$0xff]
        %v1257 = vld [vmem:[#allocation4 + $0x1e9c] sm:$0xff]
        %v1258 = vld [vmem:[#allocation4 + $0x1ea4] sm:$0xff]
        %v1259 = vld [vmem:[#allocation4 + $0x1eac] sm:$0xff]
        %v1260 = vld [vmem:[#allocation4 + $0x1eb4] sm:$0xff]
        %v1261 = vld [vmem:[#allocation4 + $0x1ebc] sm:$0xff]
        %v1262 = vld [vmem:[#allocation4 + $0x1ec4] sm:$0xff]
        %v1263 = vld [vmem:[#allocation4 + $0x1ecc] sm:$0xff]
        %v1264 = vld [vmem:[#allocation4 + $0x1ed4] sm:$0xf]
        %v1265 = vld [vmem:[#allocation4 + $0x1ed8] sm:$0xff]
        %v1266 = vld [vmem:[#allocation4 + $0x1ee0] sm:$0xff]
        %v1267 = vld [vmem:[#allocation4 + $0x1ee8] sm:$0xff]
        %v1268 = vld [vmem:[#allocation4 + $0x1ef0] sm:$0xff]
        %v1269 = vld [vmem:[#allocation4 + $0x1ef8] sm:$0xff]
        %v1270 = vld [vmem:[#allocation4 + $0x1f00] sm:$0xff]
        %v1271 = vld [vmem:[#allocation4 + $0x1f08] sm:$0xff]
        %v1272 = vld [vmem:[#allocation4 + $0x1f10] sm:$0xff]
        %v1273 = vld [vmem:[#allocation4 + $0x1f18] sm:$0xff]
        %v1274 = vld [vmem:[#allocation4 + $0x1f20] sm:$0xff]
        %v1275 = vld [vmem:[#allocation4 + $0x1f28] sm:$0xf]
        %v1276 = vld [vmem:[#allocation4 + $0x1f2c] sm:$0xff]
        %v1277 = vld [vmem:[#allocation4 + $0x1f34] sm:$0xff]
        %v1278 = vld [vmem:[#allocation4 + $0x1f3c] sm:$0xff]
        %v1279 = vld [vmem:[#allocation4 + $0x1f44] sm:$0xff]
        %v1280 = vld [vmem:[#allocation4 + $0x1f4c] sm:$0xff]
        %v1281 = vld [vmem:[#allocation4 + $0x1f54] sm:$0xff]
        %v1282 = vld [vmem:[#allocation4 + $0x1f5c] sm:$0xff]
        %v1283 = vld [vmem:[#allocation4 + $0x1f64] sm:$0xff]
        %v1284 = vld [vmem:[#allocation4 + $0x1f6c] sm:$0xff]
        %v1285 = vld [vmem:[#allocation4 + $0x1f74] sm:$0xff]
        %v1286 = vld [vmem:[#allocation4 + $0x1f7c] sm:$0xf]
        %v1287 = vld [vmem:[#allocation4 + $0x1f80] sm:$0xff]
        %v1288 = vld [vmem:[#allocation4 + $0x1f88] sm:$0xff]
        %v1289 = vld [vmem:[#allocation4 + $0x1f90] sm:$0xff]
        %v1290 = vld [vmem:[#allocation4 + $0x1f98] sm:$0xff]
        %v1291 = vld [vmem:[#allocation4 + $0x1fa0] sm:$0xff]
        %v1292 = vld [vmem:[#allocation4 + $0x1fa8] sm:$0xff]
        %v1293 = vld [vmem:[#allocation4 + $0x1fb0] sm:$0xff]
        %v1294 = vld [vmem:[#allocation4 + $0x1fb8] sm:$0xff]
        %v1295 = vld [vmem:[#allocation4 + $0x1fc0] sm:$0xff]
        %v1296 = vld [vmem:[#allocation4 + $0x1fc8] sm:$0xff]
        %v1297 = vld [vmem:[#allocation4 + $0x1fd0] sm:$0xf]
        %v1298 = vld [vmem:[#allocation4 + $0x1fd4] sm:$0xff]
        %v1299 = vld [vmem:[#allocation4 + $0x1fdc] sm:$0xff]
        %v1300 = vld [vmem:[#allocation4 + $0x1fe4] sm:$0xff]
        %v1301 = vld [vmem:[#allocation4 + $0x1fec] sm:$0xff]
        %v1302 = vld [vmem:[#allocation4 + $0x1ff4] sm:$0xff]
        %v1303 = vld [vmem:[#allocation4 + $0x1ffc] sm:$0xff]
        %v1304 = vld [vmem:[#allocation4 + $0x2004] sm:$0xff]
        %v1305 = vld [vmem:[#allocation4 + $0x200c] sm:$0xff]
        %v1306 = vld [vmem:[#allocation4 + $0x2014] sm:$0xff]
        %v1307 = vld [vmem:[#allocation4 + $0x201c] sm:$0xff]
        %v1308 = vld [vmem:[#allocation4 + $0x2024] sm:$0xf]
        %v1309 = vld [vmem:[#allocation4 + $0x2028] sm:$0xff]
        %v1310 = vld [vmem:[#allocation4 + $0x2030] sm:$0xff]
        %v1311 = vld [vmem:[#allocation4 + $0x2038] sm:$0xff]
        %v1312 = vld [vmem:[#allocation4 + $0x2040] sm:$0xff]
        %v1313 = vld [vmem:[#allocation4 + $0x2048] sm:$0xff]
        %v1314 = vld [vmem:[#allocation4 + $0x2050] sm:$0xff]
        %v1315 = vld [vmem:[#allocation4 + $0x2058] sm:$0xff]
        %v1316 = vld [vmem:[#allocation4 + $0x2060] sm:$0xff]
        %v1317 = vld [vmem:[#allocation4 + $0x2068] sm:$0xff]
        %v1318 = vld [vmem:[#allocation4 + $0x2070] sm:$0xff]
        %v1319 = vld [vmem:[#allocation4 + $0x2078] sm:$0xf]
        %v1320 = vld [vmem:[#allocation4 + $0x207c] sm:$0xff]
        %v1321 = vld [vmem:[#allocation4 + $0x2084] sm:$0xff]
        %v1322 = vld [vmem:[#allocation4 + $0x208c] sm:$0xff]
        %v1323 = vld [vmem:[#allocation4 + $0x2094] sm:$0xff]
        %v1324 = vld [vmem:[#allocation4 + $0x209c] sm:$0xff]
        %v1325 = vld [vmem:[#allocation4 + $0x20a4] sm:$0xff]
        %v1326 = vld [vmem:[#allocation4 + $0x20ac] sm:$0xff]
        %v1327 = vld [vmem:[#allocation4 + $0x20b4] sm:$0xff]
        %v1328 = vld [vmem:[#allocation4 + $0x20bc] sm:$0xff]
        %v1329 = vld [vmem:[#allocation4 + $0x20c4] sm:$0xff]
        %v1330 = vld [vmem:[#allocation4 + $0x20cc] sm:$0xf]
        %v1331 = vld [vmem:[#allocation6] sm:$0xff]
        %v1332 = vld [vmem:[#allocation6 + $0x8] sm:$0xff]
        %v1333 = vld [vmem:[#allocation6 + $0x10] sm:$0x1f]
        %v1337 = vlaneseq
        %v1338 = vshrl.u32 %v1337, 7
        %v1339 = vsub.s32 0, %v1338
        %v1340 = vrot.slane %v1331, %v1339
        %v1341 = vlaneseq
        %v1342 = vshrl.u32 %v1341, 7
        %v1343 = vsub.s32 1, %v1342
        %v1344 = vrot.slane %v1331, %v1343
        %v1345 = vlaneseq
        %v1346 = vshrl.u32 %v1345, 7
        %v1347 = vsub.s32 2, %v1346
        %v1348 = vrot.slane %v1331, %v1347
        %v1349 = vlaneseq
        %v1350 = vshrl.u32 %v1349, 7
        %v1351 = vsub.s32 3, %v1350
        %v1352 = vrot.slane %v1331, %v1351
        %v1353 = vlaneseq
        %v1354 = vshrl.u32 %v1353, 7
        %v1355 = vsub.s32 4, %v1354
        %v1356 = vrot.slane %v1331, %v1355
        %v1357 = vlaneseq
        %v1358 = vshrl.u32 %v1357, 7
        %v1359 = vsub.s32 5, %v1358
        %v1360 = vrot.slane %v1331, %v1359
        %v1361 = vlaneseq
        %v1362 = vshrl.u32 %v1361, 7
        %v1363 = vsub.s32 6, %v1362
        %v1364 = vrot.slane %v1331, %v1363
        %v1365 = vlaneseq
        %v1366 = vshrl.u32 %v1365, 7
        %v1367 = vsub.s32 7, %v1366
        %v1368 = vrot.slane %v1331, %v1367
        %v1369 = vlaneseq
        %v1370 = vshrl.u32 %v1369, 7
        %v1371 = vsub.s32 0, %v1370
        %v1372 = vrot.slane %v1332, %v1371
        %v1373 = vlaneseq
        %v1374 = vshrl.u32 %v1373, 7
        %v1375 = vsub.s32 1, %v1374
        %v1376 = vrot.slane %v1332, %v1375
        %v1377 = vlaneseq
        %v1378 = vshrl.u32 %v1377, 7
        %v1379 = vsub.s32 2, %v1378
        %v1380 = vrot.slane %v1332, %v1379
        %v1381 = vlaneseq
        %v1382 = vshrl.u32 %v1381, 7
        %v1383 = vsub.s32 3, %v1382
        %v1384 = vrot.slane %v1332, %v1383
        %v1385 = vlaneseq
        %v1386 = vshrl.u32 %v1385, 7
        %v1387 = vsub.s32 4, %v1386
        %v1388 = vrot.slane %v1332, %v1387
        %v1389 = vlaneseq
        %v1390 = vshrl.u32 %v1389, 7
        %v1391 = vsub.s32 5, %v1390
        %v1392 = vrot.slane %v1332, %v1391
        %v1393 = vlaneseq
        %v1394 = vshrl.u32 %v1393, 7
        %v1395 = vsub.s32 6, %v1394
        %v1396 = vrot.slane %v1332, %v1395
        %v1397 = vlaneseq
        %v1398 = vshrl.u32 %v1397, 7
        %v1399 = vsub.s32 7, %v1398
        %v1400 = vrot.slane %v1332, %v1399
        %v1401 = vlaneseq
        %v1402 = vshrl.u32 %v1401, 7
        %v1403 = vsub.s32 0, %v1402
        %v1404 = vrot.slane %v1333, %v1403
        %v1405 = vlaneseq
        %v1406 = vshrl.u32 %v1405, 7
        %v1407 = vsub.s32 1, %v1406
        %v1408 = vrot.slane %v1333, %v1407
        %v1409 = vlaneseq
        %v1410 = vshrl.u32 %v1409, 7
        %v1411 = vsub.s32 2, %v1410
        %v1412 = vrot.slane %v1333, %v1411
        %v1413 = vlaneseq
        %v1414 = vshrl.u32 %v1413, 7
        %v1415 = vsub.s32 3, %v1414
        %v1416 = vrot.slane %v1333, %v1415
        %v1417 = vlaneseq
        %v1418 = vshrl.u32 %v1417, 7
        %v1419 = vsub.s32 4, %v1418
        %v1420 = vrot.slane %v1333, %v1419
        %v2542 = vunpack.c.l.b16 %v231
        %v2543 = vunpack.c.h.b16 %v231
        %v2544 = vunpack.c.l.b16 %v232
        %v2545 = vunpack.c.h.b16 %v232
        %v2546 = vunpack.c.l.b16 %v233
        %v2547 = vunpack.c.h.b16 %v233
        %v2548 = vunpack.c.l.b16 %v234
        %v2549 = vunpack.c.h.b16 %v234
        %v2550 = vunpack.c.l.b16 %v235
        %v2551 = vunpack.c.h.b16 %v235
        %v2552 = vunpack.c.l.b16 %v236
        %v2553 = vunpack.c.h.b16 %v236
        %v2554 = vunpack.c.l.b16 %v237
        %v2555 = vunpack.c.h.b16 %v237
        %v2556 = vunpack.c.l.b16 %v238
        %v2557 = vunpack.c.h.b16 %v238
        %v2558 = vunpack.c.l.b16 %v239
        %v2559 = vunpack.c.h.b16 %v239
        %v2560 = vunpack.c.l.b16 %v240
        %v2561 = vunpack.c.h.b16 %v240
        %v2562 = vunpack.c.l.b16 %v241
        %v2563 = vunpack.c.l.b16 %v242
        %v2564 = vunpack.c.h.b16 %v242
        %v2565 = vunpack.c.l.b16 %v243
        %v2566 = vunpack.c.h.b16 %v243
        %v2567 = vunpack.c.l.b16 %v244
        %v2568 = vunpack.c.h.b16 %v244
        %v2569 = vunpack.c.l.b16 %v245
        %v2570 = vunpack.c.h.b16 %v245
        %v2571 = vunpack.c.l.b16 %v246
        %v2572 = vunpack.c.h.b16 %v246
        %v2573 = vunpack.c.l.b16 %v247
        %v2574 = vunpack.c.h.b16 %v247
        %v2575 = vunpack.c.l.b16 %v248
        %v2576 = vunpack.c.h.b16 %v248
        %v2577 = vunpack.c.l.b16 %v249
        %v2578 = vunpack.c.h.b16 %v249
        %v2579 = vunpack.c.l.b16 %v250
        %v2580 = vunpack.c.h.b16 %v250
        %v2581 = vunpack.c.l.b16 %v251
        %v2582 = vunpack.c.h.b16 %v251
        %v2583 = vunpack.c.l.b16 %v252
        %v2584 = vunpack.c.l.b16 %v253
        %v2585 = vunpack.c.h.b16 %v253
        %v2586 = vunpack.c.l.b16 %v254
        %v2587 = vunpack.c.h.b16 %v254
        %v2588 = vunpack.c.l.b16 %v255
        %v2589 = vunpack.c.h.b16 %v255
        %v2590 = vunpack.c.l.b16 %v256
        %v2591 = vunpack.c.h.b16 %v256
        %v2592 = vunpack.c.l.b16 %v257
        %v2593 = vunpack.c.h.b16 %v257
        %v2594 = vunpack.c.l.b16 %v258
        %v2595 = vunpack.c.h.b16 %v258
        %v2596 = vunpack.c.l.b16 %v259
        %v2597 = vunpack.c.h.b16 %v259
        %v2598 = vunpack.c.l.b16 %v260
        %v2599 = vunpack.c.h.b16 %v260
        %v2600 = vunpack.c.l.b16 %v261
        %v2601 = vunpack.c.h.b16 %v261
        %v2602 = vunpack.c.l.b16 %v262
        %v2603 = vunpack.c.h.b16 %v262
        %v2604 = vunpack.c.l.b16 %v263
        %v2605 = vunpack.c.l.b16 %v264
        %v2606 = vunpack.c.h.b16 %v264
        %v2607 = vunpack.c.l.b16 %v265
        %v2608 = vunpack.c.h.b16 %v265
        %v2609 = vunpack.c.l.b16 %v266
        %v2610 = vunpack.c.h.b16 %v266
        %v2611 = vunpack.c.l.b16 %v267
        %v2612 = vunpack.c.h.b16 %v267
        %v2613 = vunpack.c.l.b16 %v268
        %v2614 = vunpack.c.h.b16 %v268
        %v2615 = vunpack.c.l.b16 %v269
        %v2616 = vunpack.c.h.b16 %v269
        %v2617 = vunpack.c.l.b16 %v270
        %v2618 = vunpack.c.h.b16 %v270
        %v2619 = vunpack.c.l.b16 %v271
        %v2620 = vunpack.c.h.b16 %v271
        %v2621 = vunpack.c.l.b16 %v272
        %v2622 = vunpack.c.h.b16 %v272
        %v2623 = vunpack.c.l.b16 %v273
        %v2624 = vunpack.c.h.b16 %v273
        %v2625 = vunpack.c.l.b16 %v274
        %v2626 = vunpack.c.l.b16 %v275
        %v2627 = vunpack.c.h.b16 %v275
        %v2628 = vunpack.c.l.b16 %v276
        %v2629 = vunpack.c.h.b16 %v276
        %v2630 = vunpack.c.l.b16 %v277
        %v2631 = vunpack.c.h.b16 %v277
        %v2632 = vunpack.c.l.b16 %v278
        %v2633 = vunpack.c.h.b16 %v278
        %v2634 = vunpack.c.l.b16 %v279
        %v2635 = vunpack.c.h.b16 %v279
        %v2636 = vunpack.c.l.b16 %v280
        %v2637 = vunpack.c.h.b16 %v280
        %v2638 = vunpack.c.l.b16 %v281
        %v2639 = vunpack.c.h.b16 %v281
        %v2640 = vunpack.c.l.b16 %v282
        %v2641 = vunpack.c.h.b16 %v282
        %v2642 = vunpack.c.l.b16 %v283
        %v2643 = vunpack.c.h.b16 %v283
        %v2644 = vunpack.c.l.b16 %v284
        %v2645 = vunpack.c.h.b16 %v284
        %v2646 = vunpack.c.l.b16 %v285
        %v2647 = vunpack.c.l.b16 %v286
        %v2648 = vunpack.c.h.b16 %v286
        %v2649 = vunpack.c.l.b16 %v287
        %v2650 = vunpack.c.h.b16 %v287
        %v2651 = vunpack.c.l.b16 %v288
        %v2652 = vunpack.c.h.b16 %v288
        %v2653 = vunpack.c.l.b16 %v289
        %v2654 = vunpack.c.h.b16 %v289
        %v2655 = vunpack.c.l.b16 %v290
        %v2656 = vunpack.c.h.b16 %v290
        %v2657 = vunpack.c.l.b16 %v291
        %v2658 = vunpack.c.h.b16 %v291
        %v2659 = vunpack.c.l.b16 %v292
        %v2660 = vunpack.c.h.b16 %v292
        %v2661 = vunpack.c.l.b16 %v293
        %v2662 = vunpack.c.h.b16 %v293
        %v2663 = vunpack.c.l.b16 %v294
        %v2664 = vunpack.c.h.b16 %v294
        %v2665 = vunpack.c.l.b16 %v295
        %v2666 = vunpack.c.h.b16 %v295
        %v2667 = vunpack.c.l.b16 %v296
        %v2668 = vunpack.c.l.b16 %v297
        %v2669 = vunpack.c.h.b16 %v297
        %v2670 = vunpack.c.l.b16 %v298
        %v2671 = vunpack.c.h.b16 %v298
        %v2672 = vunpack.c.l.b16 %v299
        %v2673 = vunpack.c.h.b16 %v299
        %v2674 = vunpack.c.l.b16 %v300
        %v2675 = vunpack.c.h.b16 %v300
        %v2676 = vunpack.c.l.b16 %v301
        %v2677 = vunpack.c.h.b16 %v301
        %v2678 = vunpack.c.l.b16 %v302
        %v2679 = vunpack.c.h.b16 %v302
        %v2680 = vunpack.c.l.b16 %v303
        %v2681 = vunpack.c.h.b16 %v303
        %v2682 = vunpack.c.l.b16 %v304
        %v2683 = vunpack.c.h.b16 %v304
        %v2684 = vunpack.c.l.b16 %v305
        %v2685 = vunpack.c.h.b16 %v305
        %v2686 = vunpack.c.l.b16 %v306
        %v2687 = vunpack.c.h.b16 %v306
        %v2688 = vunpack.c.l.b16 %v307
        %v2689 = vunpack.c.l.b16 %v308
        %v2690 = vunpack.c.h.b16 %v308
        %v2691 = vunpack.c.l.b16 %v309
        %v2692 = vunpack.c.h.b16 %v309
        %v2693 = vunpack.c.l.b16 %v310
        %v2694 = vunpack.c.h.b16 %v310
        %v2695 = vunpack.c.l.b16 %v311
        %v2696 = vunpack.c.h.b16 %v311
        %v2697 = vunpack.c.l.b16 %v312
        %v2698 = vunpack.c.h.b16 %v312
        %v2699 = vunpack.c.l.b16 %v313
        %v2700 = vunpack.c.h.b16 %v313
        %v2701 = vunpack.c.l.b16 %v314
        %v2702 = vunpack.c.h.b16 %v314
        %v2703 = vunpack.c.l.b16 %v315
        %v2704 = vunpack.c.h.b16 %v315
        %v2705 = vunpack.c.l.b16 %v316
        %v2706 = vunpack.c.h.b16 %v316
        %v2707 = vunpack.c.l.b16 %v317
        %v2708 = vunpack.c.h.b16 %v317
        %v2709 = vunpack.c.l.b16 %v318
        %v2710 = vunpack.c.l.b16 %v319
        %v2711 = vunpack.c.h.b16 %v319
        %v2712 = vunpack.c.l.b16 %v320
        %v2713 = vunpack.c.h.b16 %v320
        %v2714 = vunpack.c.l.b16 %v321
        %v2715 = vunpack.c.h.b16 %v321
        %v2716 = vunpack.c.l.b16 %v322
        %v2717 = vunpack.c.h.b16 %v322
        %v2718 = vunpack.c.l.b16 %v323
        %v2719 = vunpack.c.h.b16 %v323
        %v2720 = vunpack.c.l.b16 %v324
        %v2721 = vunpack.c.h.b16 %v324
        %v2722 = vunpack.c.l.b16 %v325
        %v2723 = vunpack.c.h.b16 %v325
        %v2724 = vunpack.c.l.b16 %v326
        %v2725 = vunpack.c.h.b16 %v326
        %v2726 = vunpack.c.l.b16 %v327
        %v2727 = vunpack.c.h.b16 %v327
        %v2728 = vunpack.c.l.b16 %v328
        %v2729 = vunpack.c.h.b16 %v328
        %v2730 = vunpack.c.l.b16 %v329
        %v2731 = vunpack.c.l.b16 %v330
        %v2732 = vunpack.c.h.b16 %v330
        %v2733 = vunpack.c.l.b16 %v331
        %v2734 = vunpack.c.h.b16 %v331
        %v2735 = vunpack.c.l.b16 %v332
        %v2736 = vunpack.c.h.b16 %v332
        %v2737 = vunpack.c.l.b16 %v333
        %v2738 = vunpack.c.h.b16 %v333
        %v2739 = vunpack.c.l.b16 %v334
        %v2740 = vunpack.c.h.b16 %v334
        %v2741 = vunpack.c.l.b16 %v335
        %v2742 = vunpack.c.h.b16 %v335
        %v2743 = vunpack.c.l.b16 %v336
        %v2744 = vunpack.c.h.b16 %v336
        %v2745 = vunpack.c.l.b16 %v337
        %v2746 = vunpack.c.h.b16 %v337
        %v2747 = vunpack.c.l.b16 %v338
        %v2748 = vunpack.c.h.b16 %v338
        %v2749 = vunpack.c.l.b16 %v339
        %v2750 = vunpack.c.h.b16 %v339
        %v2751 = vunpack.c.l.b16 %v340
        %v2752 = vunpack.c.l.b16 %v341
        %v2753 = vunpack.c.h.b16 %v341
        %v2754 = vunpack.c.l.b16 %v342
        %v2755 = vunpack.c.h.b16 %v342
        %v2756 = vunpack.c.l.b16 %v343
        %v2757 = vunpack.c.h.b16 %v343
        %v2758 = vunpack.c.l.b16 %v344
        %v2759 = vunpack.c.h.b16 %v344
        %v2760 = vunpack.c.l.b16 %v345
        %v2761 = vunpack.c.h.b16 %v345
        %v2762 = vunpack.c.l.b16 %v346
        %v2763 = vunpack.c.h.b16 %v346
        %v2764 = vunpack.c.l.b16 %v347
        %v2765 = vunpack.c.h.b16 %v347
        %v2766 = vunpack.c.l.b16 %v348
        %v2767 = vunpack.c.h.b16 %v348
        %v2768 = vunpack.c.l.b16 %v349
        %v2769 = vunpack.c.h.b16 %v349
        %v2770 = vunpack.c.l.b16 %v350
        %v2771 = vunpack.c.h.b16 %v350
        %v2772 = vunpack.c.l.b16 %v351
        %v2773 = vunpack.c.l.b16 %v352
        %v2774 = vunpack.c.h.b16 %v352
        %v2775 = vunpack.c.l.b16 %v353
        %v2776 = vunpack.c.h.b16 %v353
        %v2777 = vunpack.c.l.b16 %v354
        %v2778 = vunpack.c.h.b16 %v354
        %v2779 = vunpack.c.l.b16 %v355
        %v2780 = vunpack.c.h.b16 %v355
        %v2781 = vunpack.c.l.b16 %v356
        %v2782 = vunpack.c.h.b16 %v356
        %v2783 = vunpack.c.l.b16 %v357
        %v2784 = vunpack.c.h.b16 %v357
        %v2785 = vunpack.c.l.b16 %v358
        %v2786 = vunpack.c.h.b16 %v358
        %v2787 = vunpack.c.l.b16 %v359
        %v2788 = vunpack.c.h.b16 %v359
        %v2789 = vunpack.c.l.b16 %v360
        %v2790 = vunpack.c.h.b16 %v360
        %v2791 = vunpack.c.l.b16 %v361
        %v2792 = vunpack.c.h.b16 %v361
        %v2793 = vunpack.c.l.b16 %v362
        %v2794 = vunpack.c.l.b16 %v363
        %v2795 = vunpack.c.h.b16 %v363
        %v2796 = vunpack.c.l.b16 %v364
        %v2797 = vunpack.c.h.b16 %v364
        %v2798 = vunpack.c.l.b16 %v365
        %v2799 = vunpack.c.h.b16 %v365
        %v2800 = vunpack.c.l.b16 %v366
        %v2801 = vunpack.c.h.b16 %v366
        %v2802 = vunpack.c.l.b16 %v367
        %v2803 = vunpack.c.h.b16 %v367
        %v2804 = vunpack.c.l.b16 %v368
        %v2805 = vunpack.c.h.b16 %v368
        %v2806 = vunpack.c.l.b16 %v369
        %v2807 = vunpack.c.h.b16 %v369
        %v2808 = vunpack.c.l.b16 %v370
        %v2809 = vunpack.c.h.b16 %v370
        %v2810 = vunpack.c.l.b16 %v371
        %v2811 = vunpack.c.h.b16 %v371
        %v2812 = vunpack.c.l.b16 %v372
        %v2813 = vunpack.c.h.b16 %v372
        %v2814 = vunpack.c.l.b16 %v373
        %v2815 = vunpack.c.l.b16 %v374
        %v2816 = vunpack.c.h.b16 %v374
        %v2817 = vunpack.c.l.b16 %v375
        %v2818 = vunpack.c.h.b16 %v375
        %v2819 = vunpack.c.l.b16 %v376
        %v2820 = vunpack.c.h.b16 %v376
        %v2821 = vunpack.c.l.b16 %v377
        %v2822 = vunpack.c.h.b16 %v377
        %v2823 = vunpack.c.l.b16 %v378
        %v2824 = vunpack.c.h.b16 %v378
        %v2825 = vunpack.c.l.b16 %v379
        %v2826 = vunpack.c.h.b16 %v379
        %v2827 = vunpack.c.l.b16 %v380
        %v2828 = vunpack.c.h.b16 %v380
        %v2829 = vunpack.c.l.b16 %v381
        %v2830 = vunpack.c.h.b16 %v381
        %v2831 = vunpack.c.l.b16 %v382
        %v2832 = vunpack.c.h.b16 %v382
        %v2833 = vunpack.c.l.b16 %v383
        %v2834 = vunpack.c.h.b16 %v383
        %v2835 = vunpack.c.l.b16 %v384
        %v2836 = vunpack.c.l.b16 %v385
        %v2837 = vunpack.c.h.b16 %v385
        %v2838 = vunpack.c.l.b16 %v386
        %v2839 = vunpack.c.h.b16 %v386
        %v2840 = vunpack.c.l.b16 %v387
        %v2841 = vunpack.c.h.b16 %v387
        %v2842 = vunpack.c.l.b16 %v388
        %v2843 = vunpack.c.h.b16 %v388
        %v2844 = vunpack.c.l.b16 %v389
        %v2845 = vunpack.c.h.b16 %v389
        %v2846 = vunpack.c.l.b16 %v390
        %v2847 = vunpack.c.h.b16 %v390
        %v2848 = vunpack.c.l.b16 %v391
        %v2849 = vunpack.c.h.b16 %v391
        %v2850 = vunpack.c.l.b16 %v392
        %v2851 = vunpack.c.h.b16 %v392
        %v2852 = vunpack.c.l.b16 %v393
        %v2853 = vunpack.c.h.b16 %v393
        %v2854 = vunpack.c.l.b16 %v394
        %v2855 = vunpack.c.h.b16 %v394
        %v2856 = vunpack.c.l.b16 %v395
        %v2857 = vunpack.c.l.b16 %v396
        %v2858 = vunpack.c.h.b16 %v396
        %v2859 = vunpack.c.l.b16 %v397
        %v2860 = vunpack.c.h.b16 %v397
        %v2861 = vunpack.c.l.b16 %v398
        %v2862 = vunpack.c.h.b16 %v398
        %v2863 = vunpack.c.l.b16 %v399
        %v2864 = vunpack.c.h.b16 %v399
        %v2865 = vunpack.c.l.b16 %v400
        %v2866 = vunpack.c.h.b16 %v400
        %v2867 = vunpack.c.l.b16 %v401
        %v2868 = vunpack.c.h.b16 %v401
        %v2869 = vunpack.c.l.b16 %v402
        %v2870 = vunpack.c.h.b16 %v402
        %v2871 = vunpack.c.l.b16 %v403
        %v2872 = vunpack.c.h.b16 %v403
        %v2873 = vunpack.c.l.b16 %v404
        %v2874 = vunpack.c.h.b16 %v404
        %v2875 = vunpack.c.l.b16 %v405
        %v2876 = vunpack.c.h.b16 %v405
        %v2877 = vunpack.c.l.b16 %v406
        %v2878 = vunpack.c.l.b16 %v407
        %v2879 = vunpack.c.h.b16 %v407
        %v2880 = vunpack.c.l.b16 %v408
        %v2881 = vunpack.c.h.b16 %v408
        %v2882 = vunpack.c.l.b16 %v409
        %v2883 = vunpack.c.h.b16 %v409
        %v2884 = vunpack.c.l.b16 %v410
        %v2885 = vunpack.c.h.b16 %v410
        %v2886 = vunpack.c.l.b16 %v411
        %v2887 = vunpack.c.h.b16 %v411
        %v2888 = vunpack.c.l.b16 %v412
        %v2889 = vunpack.c.h.b16 %v412
        %v2890 = vunpack.c.l.b16 %v413
        %v2891 = vunpack.c.h.b16 %v413
        %v2892 = vunpack.c.l.b16 %v414
        %v2893 = vunpack.c.h.b16 %v414
        %v2894 = vunpack.c.l.b16 %v415
        %v2895 = vunpack.c.h.b16 %v415
        %v2896 = vunpack.c.l.b16 %v416
        %v2897 = vunpack.c.h.b16 %v416
        %v2898 = vunpack.c.l.b16 %v417
        %v2899 = vunpack.c.l.b16 %v418
        %v2900 = vunpack.c.h.b16 %v418
        %v2901 = vunpack.c.l.b16 %v419
        %v2902 = vunpack.c.h.b16 %v419
        %v2903 = vunpack.c.l.b16 %v420
        %v2904 = vunpack.c.h.b16 %v420
        %v2905 = vunpack.c.l.b16 %v421
        %v2906 = vunpack.c.h.b16 %v421
        %v2907 = vunpack.c.l.b16 %v422
        %v2908 = vunpack.c.h.b16 %v422
        %v2909 = vunpack.c.l.b16 %v423
        %v2910 = vunpack.c.h.b16 %v423
        %v2911 = vunpack.c.l.b16 %v424
        %v2912 = vunpack.c.h.b16 %v424
        %v2913 = vunpack.c.l.b16 %v425
        %v2914 = vunpack.c.h.b16 %v425
        %v2915 = vunpack.c.l.b16 %v426
        %v2916 = vunpack.c.h.b16 %v426
        %v2917 = vunpack.c.l.b16 %v427
        %v2918 = vunpack.c.h.b16 %v427
        %v2919 = vunpack.c.l.b16 %v428
        %v2920 = vunpack.c.l.b16 %v429
        %v2921 = vunpack.c.h.b16 %v429
        %v2922 = vunpack.c.l.b16 %v430
        %v2923 = vunpack.c.h.b16 %v430
        %v2924 = vunpack.c.l.b16 %v431
        %v2925 = vunpack.c.h.b16 %v431
        %v2926 = vunpack.c.l.b16 %v432
        %v2927 = vunpack.c.h.b16 %v432
        %v2928 = vunpack.c.l.b16 %v433
        %v2929 = vunpack.c.h.b16 %v433
        %v2930 = vunpack.c.l.b16 %v434
        %v2931 = vunpack.c.h.b16 %v434
        %v2932 = vunpack.c.l.b16 %v435
        %v2933 = vunpack.c.h.b16 %v435
        %v2934 = vunpack.c.l.b16 %v436
        %v2935 = vunpack.c.h.b16 %v436
        %v2936 = vunpack.c.l.b16 %v437
        %v2937 = vunpack.c.h.b16 %v437
        %v2938 = vunpack.c.l.b16 %v438
        %v2939 = vunpack.c.h.b16 %v438
        %v2940 = vunpack.c.l.b16 %v439
        %v2941 = vunpack.c.l.b16 %v440
        %v2942 = vunpack.c.h.b16 %v440
        %v2943 = vunpack.c.l.b16 %v441
        %v2944 = vunpack.c.h.b16 %v441
        %v2945 = vunpack.c.l.b16 %v442
        %v2946 = vunpack.c.h.b16 %v442
        %v2947 = vunpack.c.l.b16 %v443
        %v2948 = vunpack.c.h.b16 %v443
        %v2949 = vunpack.c.l.b16 %v444
        %v2950 = vunpack.c.h.b16 %v444
        %v2951 = vunpack.c.l.b16 %v445
        %v2952 = vunpack.c.h.b16 %v445
        %v2953 = vunpack.c.l.b16 %v446
        %v2954 = vunpack.c.h.b16 %v446
        %v2955 = vunpack.c.l.b16 %v447
        %v2956 = vunpack.c.h.b16 %v447
        %v2957 = vunpack.c.l.b16 %v448
        %v2958 = vunpack.c.h.b16 %v448
        %v2959 = vunpack.c.l.b16 %v449
        %v2960 = vunpack.c.h.b16 %v449
        %v2961 = vunpack.c.l.b16 %v450
        %v2962 = vunpack.c.l.b16 %v451
        %v2963 = vunpack.c.h.b16 %v451
        %v2964 = vunpack.c.l.b16 %v452
        %v2965 = vunpack.c.h.b16 %v452
        %v2966 = vunpack.c.l.b16 %v453
        %v2967 = vunpack.c.h.b16 %v453
        %v2968 = vunpack.c.l.b16 %v454
        %v2969 = vunpack.c.h.b16 %v454
        %v2970 = vunpack.c.l.b16 %v455
        %v2971 = vunpack.c.h.b16 %v455
        %v2972 = vunpack.c.l.b16 %v456
        %v2973 = vunpack.c.h.b16 %v456
        %v2974 = vunpack.c.l.b16 %v457
        %v2975 = vunpack.c.h.b16 %v457
        %v2976 = vunpack.c.l.b16 %v458
        %v2977 = vunpack.c.h.b16 %v458
        %v2978 = vunpack.c.l.b16 %v459
        %v2979 = vunpack.c.h.b16 %v459
        %v2980 = vunpack.c.l.b16 %v460
        %v2981 = vunpack.c.h.b16 %v460
        %v2982 = vunpack.c.l.b16 %v461
        %v2983 = vunpack.c.l.b16 %v462
        %v2984 = vunpack.c.h.b16 %v462
        %v2985 = vunpack.c.l.b16 %v463
        %v2986 = vunpack.c.h.b16 %v463
        %v2987 = vunpack.c.l.b16 %v464
        %v2988 = vunpack.c.h.b16 %v464
        %v2989 = vunpack.c.l.b16 %v465
        %v2990 = vunpack.c.h.b16 %v465
        %v2991 = vunpack.c.l.b16 %v466
        %v2992 = vunpack.c.h.b16 %v466
        %v2993 = vunpack.c.l.b16 %v467
        %v2994 = vunpack.c.h.b16 %v467
        %v2995 = vunpack.c.l.b16 %v468
        %v2996 = vunpack.c.h.b16 %v468
        %v2997 = vunpack.c.l.b16 %v469
        %v2998 = vunpack.c.h.b16 %v469
        %v2999 = vunpack.c.l.b16 %v470
        %v3000 = vunpack.c.h.b16 %v470
        %v3001 = vunpack.c.l.b16 %v471
        %v3002 = vunpack.c.h.b16 %v471
        %v3003 = vunpack.c.l.b16 %v472
        %v3004 = vunpack.c.l.b16 %v473
        %v3005 = vunpack.c.h.b16 %v473
        %v3006 = vunpack.c.l.b16 %v474
        %v3007 = vunpack.c.h.b16 %v474
        %v3008 = vunpack.c.l.b16 %v475
        %v3009 = vunpack.c.h.b16 %v475
        %v3010 = vunpack.c.l.b16 %v476
        %v3011 = vunpack.c.h.b16 %v476
        %v3012 = vunpack.c.l.b16 %v477
        %v3013 = vunpack.c.h.b16 %v477
        %v3014 = vunpack.c.l.b16 %v478
        %v3015 = vunpack.c.h.b16 %v478
        %v3016 = vunpack.c.l.b16 %v479
        %v3017 = vunpack.c.h.b16 %v479
        %v3018 = vunpack.c.l.b16 %v480
        %v3019 = vunpack.c.h.b16 %v480
        %v3020 = vunpack.c.l.b16 %v481
        %v3021 = vunpack.c.h.b16 %v481
        %v3022 = vunpack.c.l.b16 %v482
        %v3023 = vunpack.c.h.b16 %v482
        %v3024 = vunpack.c.l.b16 %v483
        %v3025 = vunpack.c.l.b16 %v484
        %v3026 = vunpack.c.h.b16 %v484
        %v3027 = vunpack.c.l.b16 %v485
        %v3028 = vunpack.c.h.b16 %v485
        %v3029 = vunpack.c.l.b16 %v486
        %v3030 = vunpack.c.h.b16 %v486
        %v3031 = vunpack.c.l.b16 %v487
        %v3032 = vunpack.c.h.b16 %v487
        %v3033 = vunpack.c.l.b16 %v488
        %v3034 = vunpack.c.h.b16 %v488
        %v3035 = vunpack.c.l.b16 %v489
        %v3036 = vunpack.c.h.b16 %v489
        %v3037 = vunpack.c.l.b16 %v490
        %v3038 = vunpack.c.h.b16 %v490
        %v3039 = vunpack.c.l.b16 %v491
        %v3040 = vunpack.c.h.b16 %v491
        %v3041 = vunpack.c.l.b16 %v492
        %v3042 = vunpack.c.h.b16 %v492
        %v3043 = vunpack.c.l.b16 %v493
        %v3044 = vunpack.c.h.b16 %v493
        %v3045 = vunpack.c.l.b16 %v494
        %v3046 = vunpack.c.l.b16 %v495
        %v3047 = vunpack.c.h.b16 %v495
        %v3048 = vunpack.c.l.b16 %v496
        %v3049 = vunpack.c.h.b16 %v496
        %v3050 = vunpack.c.l.b16 %v497
        %v3051 = vunpack.c.h.b16 %v497
        %v3052 = vunpack.c.l.b16 %v498
        %v3053 = vunpack.c.h.b16 %v498
        %v3054 = vunpack.c.l.b16 %v499
        %v3055 = vunpack.c.h.b16 %v499
        %v3056 = vunpack.c.l.b16 %v500
        %v3057 = vunpack.c.h.b16 %v500
        %v3058 = vunpack.c.l.b16 %v501
        %v3059 = vunpack.c.h.b16 %v501
        %v3060 = vunpack.c.l.b16 %v502
        %v3061 = vunpack.c.h.b16 %v502
        %v3062 = vunpack.c.l.b16 %v503
        %v3063 = vunpack.c.h.b16 %v503
        %v3064 = vunpack.c.l.b16 %v504
        %v3065 = vunpack.c.h.b16 %v504
        %v3066 = vunpack.c.l.b16 %v505
        %v3067 = vunpack.c.l.b16 %v506
        %v3068 = vunpack.c.h.b16 %v506
        %v3069 = vunpack.c.l.b16 %v507
        %v3070 = vunpack.c.h.b16 %v507
        %v3071 = vunpack.c.l.b16 %v508
        %v3072 = vunpack.c.h.b16 %v508
        %v3073 = vunpack.c.l.b16 %v509
        %v3074 = vunpack.c.h.b16 %v509
        %v3075 = vunpack.c.l.b16 %v510
        %v3076 = vunpack.c.h.b16 %v510
        %v3077 = vunpack.c.l.b16 %v511
        %v3078 = vunpack.c.h.b16 %v511
        %v3079 = vunpack.c.l.b16 %v512
        %v3080 = vunpack.c.h.b16 %v512
        %v3081 = vunpack.c.l.b16 %v513
        %v3082 = vunpack.c.h.b16 %v513
        %v3083 = vunpack.c.l.b16 %v514
        %v3084 = vunpack.c.h.b16 %v514
        %v3085 = vunpack.c.l.b16 %v515
        %v3086 = vunpack.c.h.b16 %v515
        %v3087 = vunpack.c.l.b16 %v516
        %v3088 = vunpack.c.l.b16 %v517
        %v3089 = vunpack.c.h.b16 %v517
        %v3090 = vunpack.c.l.b16 %v518
        %v3091 = vunpack.c.h.b16 %v518
        %v3092 = vunpack.c.l.b16 %v519
        %v3093 = vunpack.c.h.b16 %v519
        %v3094 = vunpack.c.l.b16 %v520
        %v3095 = vunpack.c.h.b16 %v520
        %v3096 = vunpack.c.l.b16 %v521
        %v3097 = vunpack.c.h.b16 %v521
        %v3098 = vunpack.c.l.b16 %v522
        %v3099 = vunpack.c.h.b16 %v522
        %v3100 = vunpack.c.l.b16 %v523
        %v3101 = vunpack.c.h.b16 %v523
        %v3102 = vunpack.c.l.b16 %v524
        %v3103 = vunpack.c.h.b16 %v524
        %v3104 = vunpack.c.l.b16 %v525
        %v3105 = vunpack.c.h.b16 %v525
        %v3106 = vunpack.c.l.b16 %v526
        %v3107 = vunpack.c.h.b16 %v526
        %v3108 = vunpack.c.l.b16 %v527
        %v3109 = vunpack.c.l.b16 %v528
        %v3110 = vunpack.c.h.b16 %v528
        %v3111 = vunpack.c.l.b16 %v529
        %v3112 = vunpack.c.h.b16 %v529
        %v3113 = vunpack.c.l.b16 %v530
        %v3114 = vunpack.c.h.b16 %v530
        %v3115 = vunpack.c.l.b16 %v531
        %v3116 = vunpack.c.h.b16 %v531
        %v3117 = vunpack.c.l.b16 %v532
        %v3118 = vunpack.c.h.b16 %v532
        %v3119 = vunpack.c.l.b16 %v533
        %v3120 = vunpack.c.h.b16 %v533
        %v3121 = vunpack.c.l.b16 %v534
        %v3122 = vunpack.c.h.b16 %v534
        %v3123 = vunpack.c.l.b16 %v535
        %v3124 = vunpack.c.h.b16 %v535
        %v3125 = vunpack.c.l.b16 %v536
        %v3126 = vunpack.c.h.b16 %v536
        %v3127 = vunpack.c.l.b16 %v537
        %v3128 = vunpack.c.h.b16 %v537
        %v3129 = vunpack.c.l.b16 %v538
        %v3130 = vunpack.c.l.b16 %v539
        %v3131 = vunpack.c.h.b16 %v539
        %v3132 = vunpack.c.l.b16 %v540
        %v3133 = vunpack.c.h.b16 %v540
        %v3134 = vunpack.c.l.b16 %v541
        %v3135 = vunpack.c.h.b16 %v541
        %v3136 = vunpack.c.l.b16 %v542
        %v3137 = vunpack.c.h.b16 %v542
        %v3138 = vunpack.c.l.b16 %v543
        %v3139 = vunpack.c.h.b16 %v543
        %v3140 = vunpack.c.l.b16 %v544
        %v3141 = vunpack.c.h.b16 %v544
        %v3142 = vunpack.c.l.b16 %v545
        %v3143 = vunpack.c.h.b16 %v545
        %v3144 = vunpack.c.l.b16 %v546
        %v3145 = vunpack.c.h.b16 %v546
        %v3146 = vunpack.c.l.b16 %v547
        %v3147 = vunpack.c.h.b16 %v547
        %v3148 = vunpack.c.l.b16 %v548
        %v3149 = vunpack.c.h.b16 %v548
        %v3150 = vunpack.c.l.b16 %v549
        %v3151 = vunpack.c.l.b16 %v550
        %v3152 = vunpack.c.h.b16 %v550
        %v3153 = vunpack.c.l.b16 %v551
        %v3154 = vunpack.c.h.b16 %v551
        %v3155 = vunpack.c.l.b16 %v552
        %v3156 = vunpack.c.h.b16 %v552
        %v3157 = vunpack.c.l.b16 %v553
        %v3158 = vunpack.c.h.b16 %v553
        %v3159 = vunpack.c.l.b16 %v554
        %v3160 = vunpack.c.h.b16 %v554
        %v3161 = vunpack.c.l.b16 %v555
        %v3162 = vunpack.c.h.b16 %v555
        %v3163 = vunpack.c.l.b16 %v556
        %v3164 = vunpack.c.h.b16 %v556
        %v3165 = vunpack.c.l.b16 %v557
        %v3166 = vunpack.c.h.b16 %v557
        %v3167 = vunpack.c.l.b16 %v558
        %v3168 = vunpack.c.h.b16 %v558
        %v3169 = vunpack.c.l.b16 %v559
        %v3170 = vunpack.c.h.b16 %v559
        %v3171 = vunpack.c.l.b16 %v560
        %v3172 = vunpack.c.l.b16 %v561
        %v3173 = vunpack.c.h.b16 %v561
        %v3174 = vunpack.c.l.b16 %v562
        %v3175 = vunpack.c.h.b16 %v562
        %v3176 = vunpack.c.l.b16 %v563
        %v3177 = vunpack.c.h.b16 %v563
        %v3178 = vunpack.c.l.b16 %v564
        %v3179 = vunpack.c.h.b16 %v564
        %v3180 = vunpack.c.l.b16 %v565
        %v3181 = vunpack.c.h.b16 %v565
        %v3182 = vunpack.c.l.b16 %v566
        %v3183 = vunpack.c.h.b16 %v566
        %v3184 = vunpack.c.l.b16 %v567
        %v3185 = vunpack.c.h.b16 %v567
        %v3186 = vunpack.c.l.b16 %v568
        %v3187 = vunpack.c.h.b16 %v568
        %v3188 = vunpack.c.l.b16 %v569
        %v3189 = vunpack.c.h.b16 %v569
        %v3190 = vunpack.c.l.b16 %v570
        %v3191 = vunpack.c.h.b16 %v570
        %v3192 = vunpack.c.l.b16 %v571
        %v3193 = vunpack.c.l.b16 %v572
        %v3194 = vunpack.c.h.b16 %v572
        %v3195 = vunpack.c.l.b16 %v573
        %v3196 = vunpack.c.h.b16 %v573
        %v3197 = vunpack.c.l.b16 %v574
        %v3198 = vunpack.c.h.b16 %v574
        %v3199 = vunpack.c.l.b16 %v575
        %v3200 = vunpack.c.h.b16 %v575
        %v3201 = vunpack.c.l.b16 %v576
        %v3202 = vunpack.c.h.b16 %v576
        %v3203 = vunpack.c.l.b16 %v577
        %v3204 = vunpack.c.h.b16 %v577
        %v3205 = vunpack.c.l.b16 %v578
        %v3206 = vunpack.c.h.b16 %v578
        %v3207 = vunpack.c.l.b16 %v579
        %v3208 = vunpack.c.h.b16 %v579
        %v3209 = vunpack.c.l.b16 %v580
        %v3210 = vunpack.c.h.b16 %v580
        %v3211 = vunpack.c.l.b16 %v581
        %v3212 = vunpack.c.h.b16 %v581
        %v3213 = vunpack.c.l.b16 %v582
        %v3214 = vunpack.c.l.b16 %v583
        %v3215 = vunpack.c.h.b16 %v583
        %v3216 = vunpack.c.l.b16 %v584
        %v3217 = vunpack.c.h.b16 %v584
        %v3218 = vunpack.c.l.b16 %v585
        %v3219 = vunpack.c.h.b16 %v585
        %v3220 = vunpack.c.l.b16 %v586
        %v3221 = vunpack.c.h.b16 %v586
        %v3222 = vunpack.c.l.b16 %v587
        %v3223 = vunpack.c.h.b16 %v587
        %v3224 = vunpack.c.l.b16 %v588
        %v3225 = vunpack.c.h.b16 %v588
        %v3226 = vunpack.c.l.b16 %v589
        %v3227 = vunpack.c.h.b16 %v589
        %v3228 = vunpack.c.l.b16 %v590
        %v3229 = vunpack.c.h.b16 %v590
        %v3230 = vunpack.c.l.b16 %v591
        %v3231 = vunpack.c.h.b16 %v591
        %v3232 = vunpack.c.l.b16 %v592
        %v3233 = vunpack.c.h.b16 %v592
        %v3234 = vunpack.c.l.b16 %v593
        %v3235 = vunpack.c.l.b16 %v594
        %v3236 = vunpack.c.h.b16 %v594
        %v3237 = vunpack.c.l.b16 %v595
        %v3238 = vunpack.c.h.b16 %v595
        %v3239 = vunpack.c.l.b16 %v596
        %v3240 = vunpack.c.h.b16 %v596
        %v3241 = vunpack.c.l.b16 %v597
        %v3242 = vunpack.c.h.b16 %v597
        %v3243 = vunpack.c.l.b16 %v598
        %v3244 = vunpack.c.h.b16 %v598
        %v3245 = vunpack.c.l.b16 %v599
        %v3246 = vunpack.c.h.b16 %v599
        %v3247 = vunpack.c.l.b16 %v600
        %v3248 = vunpack.c.h.b16 %v600
        %v3249 = vunpack.c.l.b16 %v601
        %v3250 = vunpack.c.h.b16 %v601
        %v3251 = vunpack.c.l.b16 %v602
        %v3252 = vunpack.c.h.b16 %v602
        %v3253 = vunpack.c.l.b16 %v603
        %v3254 = vunpack.c.h.b16 %v603
        %v3255 = vunpack.c.l.b16 %v604
        %v3256 = vunpack.c.l.b16 %v605
        %v3257 = vunpack.c.h.b16 %v605
        %v3258 = vunpack.c.l.b16 %v606
        %v3259 = vunpack.c.h.b16 %v606
        %v3260 = vunpack.c.l.b16 %v607
        %v3261 = vunpack.c.h.b16 %v607
        %v3262 = vunpack.c.l.b16 %v608
        %v3263 = vunpack.c.h.b16 %v608
        %v3264 = vunpack.c.l.b16 %v609
        %v3265 = vunpack.c.h.b16 %v609
        %v3266 = vunpack.c.l.b16 %v610
        %v3267 = vunpack.c.h.b16 %v610
        %v3268 = vunpack.c.l.b16 %v611
        %v3269 = vunpack.c.h.b16 %v611
        %v3270 = vunpack.c.l.b16 %v612
        %v3271 = vunpack.c.h.b16 %v612
        %v3272 = vunpack.c.l.b16 %v613
        %v3273 = vunpack.c.h.b16 %v613
        %v3274 = vunpack.c.l.b16 %v614
        %v3275 = vunpack.c.h.b16 %v614
        %v3276 = vunpack.c.l.b16 %v615
        %v3277 = vunpack.c.l.b16 %v616
        %v3278 = vunpack.c.h.b16 %v616
        %v3279 = vunpack.c.l.b16 %v617
        %v3280 = vunpack.c.h.b16 %v617
        %v3281 = vunpack.c.l.b16 %v618
        %v3282 = vunpack.c.h.b16 %v618
        %v3283 = vunpack.c.l.b16 %v619
        %v3284 = vunpack.c.h.b16 %v619
        %v3285 = vunpack.c.l.b16 %v620
        %v3286 = vunpack.c.h.b16 %v620
        %v3287 = vunpack.c.l.b16 %v621
        %v3288 = vunpack.c.h.b16 %v621
        %v3289 = vunpack.c.l.b16 %v622
        %v3290 = vunpack.c.h.b16 %v622
        %v3291 = vunpack.c.l.b16 %v623
        %v3292 = vunpack.c.h.b16 %v623
        %v3293 = vunpack.c.l.b16 %v624
        %v3294 = vunpack.c.h.b16 %v624
        %v3295 = vunpack.c.l.b16 %v625
        %v3296 = vunpack.c.h.b16 %v625
        %v3297 = vunpack.c.l.b16 %v626
        %v3298 = vunpack.c.l.b16 %v627
        %v3299 = vunpack.c.h.b16 %v627
        %v3300 = vunpack.c.l.b16 %v628
        %v3301 = vunpack.c.h.b16 %v628
        %v3302 = vunpack.c.l.b16 %v629
        %v3303 = vunpack.c.h.b16 %v629
        %v3304 = vunpack.c.l.b16 %v630
        %v3305 = vunpack.c.h.b16 %v630
        %v3306 = vunpack.c.l.b16 %v631
        %v3307 = vunpack.c.h.b16 %v631
        %v3308 = vunpack.c.l.b16 %v632
        %v3309 = vunpack.c.h.b16 %v632
        %v3310 = vunpack.c.l.b16 %v633
        %v3311 = vunpack.c.h.b16 %v633
        %v3312 = vunpack.c.l.b16 %v634
        %v3313 = vunpack.c.h.b16 %v634
        %v3314 = vunpack.c.l.b16 %v635
        %v3315 = vunpack.c.h.b16 %v635
        %v3316 = vunpack.c.l.b16 %v636
        %v3317 = vunpack.c.h.b16 %v636
        %v3318 = vunpack.c.l.b16 %v637
        %v3319 = vunpack.c.l.b16 %v638
        %v3320 = vunpack.c.h.b16 %v638
        %v3321 = vunpack.c.l.b16 %v639
        %v3322 = vunpack.c.h.b16 %v639
        %v3323 = vunpack.c.l.b16 %v640
        %v3324 = vunpack.c.h.b16 %v640
        %v3325 = vunpack.c.l.b16 %v641
        %v3326 = vunpack.c.h.b16 %v641
        %v3327 = vunpack.c.l.b16 %v642
        %v3328 = vunpack.c.h.b16 %v642
        %v3329 = vunpack.c.l.b16 %v643
        %v3330 = vunpack.c.h.b16 %v643
        %v3331 = vunpack.c.l.b16 %v644
        %v3332 = vunpack.c.h.b16 %v644
        %v3333 = vunpack.c.l.b16 %v645
        %v3334 = vunpack.c.h.b16 %v645
        %v3335 = vunpack.c.l.b16 %v646
        %v3336 = vunpack.c.h.b16 %v646
        %v3337 = vunpack.c.l.b16 %v647
        %v3338 = vunpack.c.h.b16 %v647
        %v3339 = vunpack.c.l.b16 %v648
        %v3340 = vunpack.c.l.b16 %v649
        %v3341 = vunpack.c.h.b16 %v649
        %v3342 = vunpack.c.l.b16 %v650
        %v3343 = vunpack.c.h.b16 %v650
        %v3344 = vunpack.c.l.b16 %v651
        %v3345 = vunpack.c.h.b16 %v651
        %v3346 = vunpack.c.l.b16 %v652
        %v3347 = vunpack.c.h.b16 %v652
        %v3348 = vunpack.c.l.b16 %v653
        %v3349 = vunpack.c.h.b16 %v653
        %v3350 = vunpack.c.l.b16 %v654
        %v3351 = vunpack.c.h.b16 %v654
        %v3352 = vunpack.c.l.b16 %v655
        %v3353 = vunpack.c.h.b16 %v655
        %v3354 = vunpack.c.l.b16 %v656
        %v3355 = vunpack.c.h.b16 %v656
        %v3356 = vunpack.c.l.b16 %v657
        %v3357 = vunpack.c.h.b16 %v657
        %v3358 = vunpack.c.l.b16 %v658
        %v3359 = vunpack.c.h.b16 %v658
        %v3360 = vunpack.c.l.b16 %v659
        %v3361 = vunpack.c.l.b16 %v660
        %v3362 = vunpack.c.h.b16 %v660
        %v3363 = vunpack.c.l.b16 %v661
        %v3364 = vunpack.c.h.b16 %v661
        %v3365 = vunpack.c.l.b16 %v662
        %v3366 = vunpack.c.h.b16 %v662
        %v3367 = vunpack.c.l.b16 %v663
        %v3368 = vunpack.c.h.b16 %v663
        %v3369 = vunpack.c.l.b16 %v664
        %v3370 = vunpack.c.h.b16 %v664
        %v3371 = vunpack.c.l.b16 %v665
        %v3372 = vunpack.c.h.b16 %v665
        %v3373 = vunpack.c.l.b16 %v666
        %v3374 = vunpack.c.h.b16 %v666
        %v3375 = vunpack.c.l.b16 %v667
        %v3376 = vunpack.c.h.b16 %v667
        %v3377 = vunpack.c.l.b16 %v668
        %v3378 = vunpack.c.h.b16 %v668
        %v3379 = vunpack.c.l.b16 %v669
        %v3380 = vunpack.c.h.b16 %v669
        %v3381 = vunpack.c.l.b16 %v670
        %v3382 = vunpack.c.l.b16 %v671
        %v3383 = vunpack.c.h.b16 %v671
        %v3384 = vunpack.c.l.b16 %v672
        %v3385 = vunpack.c.h.b16 %v672
        %v3386 = vunpack.c.l.b16 %v673
        %v3387 = vunpack.c.h.b16 %v673
        %v3388 = vunpack.c.l.b16 %v674
        %v3389 = vunpack.c.h.b16 %v674
        %v3390 = vunpack.c.l.b16 %v675
        %v3391 = vunpack.c.h.b16 %v675
        %v3392 = vunpack.c.l.b16 %v676
        %v3393 = vunpack.c.h.b16 %v676
        %v3394 = vunpack.c.l.b16 %v677
        %v3395 = vunpack.c.h.b16 %v677
        %v3396 = vunpack.c.l.b16 %v678
        %v3397 = vunpack.c.h.b16 %v678
        %v3398 = vunpack.c.l.b16 %v679
        %v3399 = vunpack.c.h.b16 %v679
        %v3400 = vunpack.c.l.b16 %v680
        %v3401 = vunpack.c.h.b16 %v680
        %v3402 = vunpack.c.l.b16 %v681
        %v3403 = vunpack.c.l.b16 %v682
        %v3404 = vunpack.c.h.b16 %v682
        %v3405 = vunpack.c.l.b16 %v683
        %v3406 = vunpack.c.h.b16 %v683
        %v3407 = vunpack.c.l.b16 %v684
        %v3408 = vunpack.c.h.b16 %v684
        %v3409 = vunpack.c.l.b16 %v685
        %v3410 = vunpack.c.h.b16 %v685
        %v3411 = vunpack.c.l.b16 %v686
        %v3412 = vunpack.c.h.b16 %v686
        %v3413 = vunpack.c.l.b16 %v687
        %v3414 = vunpack.c.h.b16 %v687
        %v3415 = vunpack.c.l.b16 %v688
        %v3416 = vunpack.c.h.b16 %v688
        %v3417 = vunpack.c.l.b16 %v689
        %v3418 = vunpack.c.h.b16 %v689
        %v3419 = vunpack.c.l.b16 %v690
        %v3420 = vunpack.c.h.b16 %v690
        %v3421 = vunpack.c.l.b16 %v691
        %v3422 = vunpack.c.h.b16 %v691
        %v3423 = vunpack.c.l.b16 %v692
        %v3424 = vunpack.c.l.b16 %v693
        %v3425 = vunpack.c.h.b16 %v693
        %v3426 = vunpack.c.l.b16 %v694
        %v3427 = vunpack.c.h.b16 %v694
        %v3428 = vunpack.c.l.b16 %v695
        %v3429 = vunpack.c.h.b16 %v695
        %v3430 = vunpack.c.l.b16 %v696
        %v3431 = vunpack.c.h.b16 %v696
        %v3432 = vunpack.c.l.b16 %v697
        %v3433 = vunpack.c.h.b16 %v697
        %v3434 = vunpack.c.l.b16 %v698
        %v3435 = vunpack.c.h.b16 %v698
        %v3436 = vunpack.c.l.b16 %v699
        %v3437 = vunpack.c.h.b16 %v699
        %v3438 = vunpack.c.l.b16 %v700
        %v3439 = vunpack.c.h.b16 %v700
        %v3440 = vunpack.c.l.b16 %v701
        %v3441 = vunpack.c.h.b16 %v701
        %v3442 = vunpack.c.l.b16 %v702
        %v3443 = vunpack.c.h.b16 %v702
        %v3444 = vunpack.c.l.b16 %v703
        %v3445 = vunpack.c.l.b16 %v704
        %v3446 = vunpack.c.h.b16 %v704
        %v3447 = vunpack.c.l.b16 %v705
        %v3448 = vunpack.c.h.b16 %v705
        %v3449 = vunpack.c.l.b16 %v706
        %v3450 = vunpack.c.h.b16 %v706
        %v3451 = vunpack.c.l.b16 %v707
        %v3452 = vunpack.c.h.b16 %v707
        %v3453 = vunpack.c.l.b16 %v708
        %v3454 = vunpack.c.h.b16 %v708
        %v3455 = vunpack.c.l.b16 %v709
        %v3456 = vunpack.c.h.b16 %v709
        %v3457 = vunpack.c.l.b16 %v710
        %v3458 = vunpack.c.h.b16 %v710
        %v3459 = vunpack.c.l.b16 %v711
        %v3460 = vunpack.c.h.b16 %v711
        %v3461 = vunpack.c.l.b16 %v712
        %v3462 = vunpack.c.h.b16 %v712
        %v3463 = vunpack.c.l.b16 %v713
        %v3464 = vunpack.c.h.b16 %v713
        %v3465 = vunpack.c.l.b16 %v714
        %v3466 = vunpack.c.l.b16 %v715
        %v3467 = vunpack.c.h.b16 %v715
        %v3468 = vunpack.c.l.b16 %v716
        %v3469 = vunpack.c.h.b16 %v716
        %v3470 = vunpack.c.l.b16 %v717
        %v3471 = vunpack.c.h.b16 %v717
        %v3472 = vunpack.c.l.b16 %v718
        %v3473 = vunpack.c.h.b16 %v718
        %v3474 = vunpack.c.l.b16 %v719
        %v3475 = vunpack.c.h.b16 %v719
        %v3476 = vunpack.c.l.b16 %v720
        %v3477 = vunpack.c.h.b16 %v720
        %v3478 = vunpack.c.l.b16 %v721
        %v3479 = vunpack.c.h.b16 %v721
        %v3480 = vunpack.c.l.b16 %v722
        %v3481 = vunpack.c.h.b16 %v722
        %v3482 = vunpack.c.l.b16 %v723
        %v3483 = vunpack.c.h.b16 %v723
        %v3484 = vunpack.c.l.b16 %v724
        %v3485 = vunpack.c.h.b16 %v724
        %v3486 = vunpack.c.l.b16 %v725
        %v3487 = vunpack.c.l.b16 %v726
        %v3488 = vunpack.c.h.b16 %v726
        %v3489 = vunpack.c.l.b16 %v727
        %v3490 = vunpack.c.h.b16 %v727
        %v3491 = vunpack.c.l.b16 %v728
        %v3492 = vunpack.c.h.b16 %v728
        %v3493 = vunpack.c.l.b16 %v729
        %v3494 = vunpack.c.h.b16 %v729
        %v3495 = vunpack.c.l.b16 %v730
        %v3496 = vunpack.c.h.b16 %v730
        %v3497 = vunpack.c.l.b16 %v731
        %v3498 = vunpack.c.h.b16 %v731
        %v3499 = vunpack.c.l.b16 %v732
        %v3500 = vunpack.c.h.b16 %v732
        %v3501 = vunpack.c.l.b16 %v733
        %v3502 = vunpack.c.h.b16 %v733
        %v3503 = vunpack.c.l.b16 %v734
        %v3504 = vunpack.c.h.b16 %v734
        %v3505 = vunpack.c.l.b16 %v735
        %v3506 = vunpack.c.h.b16 %v735
        %v3507 = vunpack.c.l.b16 %v736
        %v3508 = vunpack.c.l.b16 %v737
        %v3509 = vunpack.c.h.b16 %v737
        %v3510 = vunpack.c.l.b16 %v738
        %v3511 = vunpack.c.h.b16 %v738
        %v3512 = vunpack.c.l.b16 %v739
        %v3513 = vunpack.c.h.b16 %v739
        %v3514 = vunpack.c.l.b16 %v740
        %v3515 = vunpack.c.h.b16 %v740
        %v3516 = vunpack.c.l.b16 %v741
        %v3517 = vunpack.c.h.b16 %v741
        %v3518 = vunpack.c.l.b16 %v742
        %v3519 = vunpack.c.h.b16 %v742
        %v3520 = vunpack.c.l.b16 %v743
        %v3521 = vunpack.c.h.b16 %v743
        %v3522 = vunpack.c.l.b16 %v744
        %v3523 = vunpack.c.h.b16 %v744
        %v3524 = vunpack.c.l.b16 %v745
        %v3525 = vunpack.c.h.b16 %v745
        %v3526 = vunpack.c.l.b16 %v746
        %v3527 = vunpack.c.h.b16 %v746
        %v3528 = vunpack.c.l.b16 %v747
        %v3529 = vunpack.c.l.b16 %v748
        %v3530 = vunpack.c.h.b16 %v748
        %v3531 = vunpack.c.l.b16 %v749
        %v3532 = vunpack.c.h.b16 %v749
        %v3533 = vunpack.c.l.b16 %v750
        %v3534 = vunpack.c.h.b16 %v750
        %v3535 = vunpack.c.l.b16 %v751
        %v3536 = vunpack.c.h.b16 %v751
        %v3537 = vunpack.c.l.b16 %v752
        %v3538 = vunpack.c.h.b16 %v752
        %v3539 = vunpack.c.l.b16 %v753
        %v3540 = vunpack.c.h.b16 %v753
        %v3541 = vunpack.c.l.b16 %v754
        %v3542 = vunpack.c.h.b16 %v754
        %v3543 = vunpack.c.l.b16 %v755
        %v3544 = vunpack.c.h.b16 %v755
        %v3545 = vunpack.c.l.b16 %v756
        %v3546 = vunpack.c.h.b16 %v756
        %v3547 = vunpack.c.l.b16 %v757
        %v3548 = vunpack.c.h.b16 %v757
        %v3549 = vunpack.c.l.b16 %v758
        %v3550 = vunpack.c.l.b16 %v759
        %v3551 = vunpack.c.h.b16 %v759
        %v3552 = vunpack.c.l.b16 %v760
        %v3553 = vunpack.c.h.b16 %v760
        %v3554 = vunpack.c.l.b16 %v761
        %v3555 = vunpack.c.h.b16 %v761
        %v3556 = vunpack.c.l.b16 %v762
        %v3557 = vunpack.c.h.b16 %v762
        %v3558 = vunpack.c.l.b16 %v763
        %v3559 = vunpack.c.h.b16 %v763
        %v3560 = vunpack.c.l.b16 %v764
        %v3561 = vunpack.c.h.b16 %v764
        %v3562 = vunpack.c.l.b16 %v765
        %v3563 = vunpack.c.h.b16 %v765
        %v3564 = vunpack.c.l.b16 %v766
        %v3565 = vunpack.c.h.b16 %v766
        %v3566 = vunpack.c.l.b16 %v767
        %v3567 = vunpack.c.h.b16 %v767
        %v3568 = vunpack.c.l.b16 %v768
        %v3569 = vunpack.c.h.b16 %v768
        %v3570 = vunpack.c.l.b16 %v769
        %v3571 = vunpack.c.l.b16 %v770
        %v3572 = vunpack.c.h.b16 %v770
        %v3573 = vunpack.c.l.b16 %v771
        %v3574 = vunpack.c.h.b16 %v771
        %v3575 = vunpack.c.l.b16 %v772
        %v3576 = vunpack.c.h.b16 %v772
        %v3577 = vunpack.c.l.b16 %v773
        %v3578 = vunpack.c.h.b16 %v773
        %v3579 = vunpack.c.l.b16 %v774
        %v3580 = vunpack.c.h.b16 %v774
        %v3581 = vunpack.c.l.b16 %v775
        %v3582 = vunpack.c.h.b16 %v775
        %v3583 = vunpack.c.l.b16 %v776
        %v3584 = vunpack.c.h.b16 %v776
        %v3585 = vunpack.c.l.b16 %v777
        %v3586 = vunpack.c.h.b16 %v777
        %v3587 = vunpack.c.l.b16 %v778
        %v3588 = vunpack.c.h.b16 %v778
        %v3589 = vunpack.c.l.b16 %v779
        %v3590 = vunpack.c.h.b16 %v779
        %v3591 = vunpack.c.l.b16 %v780
        %v3592 = vunpack.c.l.b16 %v781
        %v3593 = vunpack.c.h.b16 %v781
        %v3594 = vunpack.c.l.b16 %v782
        %v3595 = vunpack.c.h.b16 %v782
        %v3596 = vunpack.c.l.b16 %v783
        %v3597 = vunpack.c.h.b16 %v783
        %v3598 = vunpack.c.l.b16 %v784
        %v3599 = vunpack.c.h.b16 %v784
        %v3600 = vunpack.c.l.b16 %v785
        %v3601 = vunpack.c.h.b16 %v785
        %v3602 = vunpack.c.l.b16 %v786
        %v3603 = vunpack.c.h.b16 %v786
        %v3604 = vunpack.c.l.b16 %v787
        %v3605 = vunpack.c.h.b16 %v787
        %v3606 = vunpack.c.l.b16 %v788
        %v3607 = vunpack.c.h.b16 %v788
        %v3608 = vunpack.c.l.b16 %v789
        %v3609 = vunpack.c.h.b16 %v789
        %v3610 = vunpack.c.l.b16 %v790
        %v3611 = vunpack.c.h.b16 %v790
        %v3612 = vunpack.c.l.b16 %v791
        %v3613 = vunpack.c.l.b16 %v792
        %v3614 = vunpack.c.h.b16 %v792
        %v3615 = vunpack.c.l.b16 %v793
        %v3616 = vunpack.c.h.b16 %v793
        %v3617 = vunpack.c.l.b16 %v794
        %v3618 = vunpack.c.h.b16 %v794
        %v3619 = vunpack.c.l.b16 %v795
        %v3620 = vunpack.c.h.b16 %v795
        %v3621 = vunpack.c.l.b16 %v796
        %v3622 = vunpack.c.h.b16 %v796
        %v3623 = vunpack.c.l.b16 %v797
        %v3624 = vunpack.c.h.b16 %v797
        %v3625 = vunpack.c.l.b16 %v798
        %v3626 = vunpack.c.h.b16 %v798
        %v3627 = vunpack.c.l.b16 %v799
        %v3628 = vunpack.c.h.b16 %v799
        %v3629 = vunpack.c.l.b16 %v800
        %v3630 = vunpack.c.h.b16 %v800
        %v3631 = vunpack.c.l.b16 %v801
        %v3632 = vunpack.c.h.b16 %v801
        %v3633 = vunpack.c.l.b16 %v802
        %v3634 = vunpack.c.l.b16 %v803
        %v3635 = vunpack.c.h.b16 %v803
        %v3636 = vunpack.c.l.b16 %v804
        %v3637 = vunpack.c.h.b16 %v804
        %v3638 = vunpack.c.l.b16 %v805
        %v3639 = vunpack.c.h.b16 %v805
        %v3640 = vunpack.c.l.b16 %v806
        %v3641 = vunpack.c.h.b16 %v806
        %v3642 = vunpack.c.l.b16 %v807
        %v3643 = vunpack.c.h.b16 %v807
        %v3644 = vunpack.c.l.b16 %v808
        %v3645 = vunpack.c.h.b16 %v808
        %v3646 = vunpack.c.l.b16 %v809
        %v3647 = vunpack.c.h.b16 %v809
        %v3648 = vunpack.c.l.b16 %v810
        %v3649 = vunpack.c.h.b16 %v810
        %v3650 = vunpack.c.l.b16 %v811
        %v3651 = vunpack.c.h.b16 %v811
        %v3652 = vunpack.c.l.b16 %v812
        %v3653 = vunpack.c.h.b16 %v812
        %v3654 = vunpack.c.l.b16 %v813
        %v3655 = vunpack.c.l.b16 %v814
        %v3656 = vunpack.c.h.b16 %v814
        %v3657 = vunpack.c.l.b16 %v815
        %v3658 = vunpack.c.h.b16 %v815
        %v3659 = vunpack.c.l.b16 %v816
        %v3660 = vunpack.c.h.b16 %v816
        %v3661 = vunpack.c.l.b16 %v817
        %v3662 = vunpack.c.h.b16 %v817
        %v3663 = vunpack.c.l.b16 %v818
        %v3664 = vunpack.c.h.b16 %v818
        %v3665 = vunpack.c.l.b16 %v819
        %v3666 = vunpack.c.h.b16 %v819
        %v3667 = vunpack.c.l.b16 %v820
        %v3668 = vunpack.c.h.b16 %v820
        %v3669 = vunpack.c.l.b16 %v821
        %v3670 = vunpack.c.h.b16 %v821
        %v3671 = vunpack.c.l.b16 %v822
        %v3672 = vunpack.c.h.b16 %v822
        %v3673 = vunpack.c.l.b16 %v823
        %v3674 = vunpack.c.h.b16 %v823
        %v3675 = vunpack.c.l.b16 %v824
        %v3676 = vunpack.c.l.b16 %v825
        %v3677 = vunpack.c.h.b16 %v825
        %v3678 = vunpack.c.l.b16 %v826
        %v3679 = vunpack.c.h.b16 %v826
        %v3680 = vunpack.c.l.b16 %v827
        %v3681 = vunpack.c.h.b16 %v827
        %v3682 = vunpack.c.l.b16 %v828
        %v3683 = vunpack.c.h.b16 %v828
        %v3684 = vunpack.c.l.b16 %v829
        %v3685 = vunpack.c.h.b16 %v829
        %v3686 = vunpack.c.l.b16 %v830
        %v3687 = vunpack.c.h.b16 %v830
        %v3688 = vunpack.c.l.b16 %v831
        %v3689 = vunpack.c.h.b16 %v831
        %v3690 = vunpack.c.l.b16 %v832
        %v3691 = vunpack.c.h.b16 %v832
        %v3692 = vunpack.c.l.b16 %v833
        %v3693 = vunpack.c.h.b16 %v833
        %v3694 = vunpack.c.l.b16 %v834
        %v3695 = vunpack.c.h.b16 %v834
        %v3696 = vunpack.c.l.b16 %v835
        %v3697 = vunpack.c.l.b16 %v836
        %v3698 = vunpack.c.h.b16 %v836
        %v3699 = vunpack.c.l.b16 %v837
        %v3700 = vunpack.c.h.b16 %v837
        %v3701 = vunpack.c.l.b16 %v838
        %v3702 = vunpack.c.h.b16 %v838
        %v3703 = vunpack.c.l.b16 %v839
        %v3704 = vunpack.c.h.b16 %v839
        %v3705 = vunpack.c.l.b16 %v840
        %v3706 = vunpack.c.h.b16 %v840
        %v3707 = vunpack.c.l.b16 %v841
        %v3708 = vunpack.c.h.b16 %v841
        %v3709 = vunpack.c.l.b16 %v842
        %v3710 = vunpack.c.h.b16 %v842
        %v3711 = vunpack.c.l.b16 %v843
        %v3712 = vunpack.c.h.b16 %v843
        %v3713 = vunpack.c.l.b16 %v844
        %v3714 = vunpack.c.h.b16 %v844
        %v3715 = vunpack.c.l.b16 %v845
        %v3716 = vunpack.c.h.b16 %v845
        %v3717 = vunpack.c.l.b16 %v846
        %v3718 = vunpack.c.l.b16 %v847
        %v3719 = vunpack.c.h.b16 %v847
        %v3720 = vunpack.c.l.b16 %v848
        %v3721 = vunpack.c.h.b16 %v848
        %v3722 = vunpack.c.l.b16 %v849
        %v3723 = vunpack.c.h.b16 %v849
        %v3724 = vunpack.c.l.b16 %v850
        %v3725 = vunpack.c.h.b16 %v850
        %v3726 = vunpack.c.l.b16 %v851
        %v3727 = vunpack.c.h.b16 %v851
        %v3728 = vunpack.c.l.b16 %v852
        %v3729 = vunpack.c.h.b16 %v852
        %v3730 = vunpack.c.l.b16 %v853
        %v3731 = vunpack.c.h.b16 %v853
        %v3732 = vunpack.c.l.b16 %v854
        %v3733 = vunpack.c.h.b16 %v854
        %v3734 = vunpack.c.l.b16 %v855
        %v3735 = vunpack.c.h.b16 %v855
        %v3736 = vunpack.c.l.b16 %v856
        %v3737 = vunpack.c.h.b16 %v856
        %v3738 = vunpack.c.l.b16 %v857
        %v3739 = vunpack.c.l.b16 %v858
        %v3740 = vunpack.c.h.b16 %v858
        %v3741 = vunpack.c.l.b16 %v859
        %v3742 = vunpack.c.h.b16 %v859
        %v3743 = vunpack.c.l.b16 %v860
        %v3744 = vunpack.c.h.b16 %v860
        %v3745 = vunpack.c.l.b16 %v861
        %v3746 = vunpack.c.h.b16 %v861
        %v3747 = vunpack.c.l.b16 %v862
        %v3748 = vunpack.c.h.b16 %v862
        %v3749 = vunpack.c.l.b16 %v863
        %v3750 = vunpack.c.h.b16 %v863
        %v3751 = vunpack.c.l.b16 %v864
        %v3752 = vunpack.c.h.b16 %v864
        %v3753 = vunpack.c.l.b16 %v865
        %v3754 = vunpack.c.h.b16 %v865
        %v3755 = vunpack.c.l.b16 %v866
        %v3756 = vunpack.c.h.b16 %v866
        %v3757 = vunpack.c.l.b16 %v867
        %v3758 = vunpack.c.h.b16 %v867
        %v3759 = vunpack.c.l.b16 %v868
        %v3760 = vunpack.c.l.b16 %v869
        %v3761 = vunpack.c.h.b16 %v869
        %v3762 = vunpack.c.l.b16 %v870
        %v3763 = vunpack.c.h.b16 %v870
        %v3764 = vunpack.c.l.b16 %v871
        %v3765 = vunpack.c.h.b16 %v871
        %v3766 = vunpack.c.l.b16 %v872
        %v3767 = vunpack.c.h.b16 %v872
        %v3768 = vunpack.c.l.b16 %v873
        %v3769 = vunpack.c.h.b16 %v873
        %v3770 = vunpack.c.l.b16 %v874
        %v3771 = vunpack.c.h.b16 %v874
        %v3772 = vunpack.c.l.b16 %v875
        %v3773 = vunpack.c.h.b16 %v875
        %v3774 = vunpack.c.l.b16 %v876
        %v3775 = vunpack.c.h.b16 %v876
        %v3776 = vunpack.c.l.b16 %v877
        %v3777 = vunpack.c.h.b16 %v877
        %v3778 = vunpack.c.l.b16 %v878
        %v3779 = vunpack.c.h.b16 %v878
        %v3780 = vunpack.c.l.b16 %v879
        %v3781 = vunpack.c.l.b16 %v880
        %v3782 = vunpack.c.h.b16 %v880
        %v3783 = vunpack.c.l.b16 %v881
        %v3784 = vunpack.c.h.b16 %v881
        %v3785 = vunpack.c.l.b16 %v882
        %v3786 = vunpack.c.h.b16 %v882
        %v3787 = vunpack.c.l.b16 %v883
        %v3788 = vunpack.c.h.b16 %v883
        %v3789 = vunpack.c.l.b16 %v884
        %v3790 = vunpack.c.h.b16 %v884
        %v3791 = vunpack.c.l.b16 %v885
        %v3792 = vunpack.c.h.b16 %v885
        %v3793 = vunpack.c.l.b16 %v886
        %v3794 = vunpack.c.h.b16 %v886
        %v3795 = vunpack.c.l.b16 %v887
        %v3796 = vunpack.c.h.b16 %v887
        %v3797 = vunpack.c.l.b16 %v888
        %v3798 = vunpack.c.h.b16 %v888
        %v3799 = vunpack.c.l.b16 %v889
        %v3800 = vunpack.c.h.b16 %v889
        %v3801 = vunpack.c.l.b16 %v890
        %v3802 = vunpack.c.l.b16 %v891
        %v3803 = vunpack.c.h.b16 %v891
        %v3804 = vunpack.c.l.b16 %v892
        %v3805 = vunpack.c.h.b16 %v892
        %v3806 = vunpack.c.l.b16 %v893
        %v3807 = vunpack.c.h.b16 %v893
        %v3808 = vunpack.c.l.b16 %v894
        %v3809 = vunpack.c.h.b16 %v894
        %v3810 = vunpack.c.l.b16 %v895
        %v3811 = vunpack.c.h.b16 %v895
        %v3812 = vunpack.c.l.b16 %v896
        %v3813 = vunpack.c.h.b16 %v896
        %v3814 = vunpack.c.l.b16 %v897
        %v3815 = vunpack.c.h.b16 %v897
        %v3816 = vunpack.c.l.b16 %v898
        %v3817 = vunpack.c.h.b16 %v898
        %v3818 = vunpack.c.l.b16 %v899
        %v3819 = vunpack.c.h.b16 %v899
        %v3820 = vunpack.c.l.b16 %v900
        %v3821 = vunpack.c.h.b16 %v900
        %v3822 = vunpack.c.l.b16 %v901
        %v3823 = vunpack.c.l.b16 %v902
        %v3824 = vunpack.c.h.b16 %v902
        %v3825 = vunpack.c.l.b16 %v903
        %v3826 = vunpack.c.h.b16 %v903
        %v3827 = vunpack.c.l.b16 %v904
        %v3828 = vunpack.c.h.b16 %v904
        %v3829 = vunpack.c.l.b16 %v905
        %v3830 = vunpack.c.h.b16 %v905
        %v3831 = vunpack.c.l.b16 %v906
        %v3832 = vunpack.c.h.b16 %v906
        %v3833 = vunpack.c.l.b16 %v907
        %v3834 = vunpack.c.h.b16 %v907
        %v3835 = vunpack.c.l.b16 %v908
        %v3836 = vunpack.c.h.b16 %v908
        %v3837 = vunpack.c.l.b16 %v909
        %v3838 = vunpack.c.h.b16 %v909
        %v3839 = vunpack.c.l.b16 %v910
        %v3840 = vunpack.c.h.b16 %v910
        %v3841 = vunpack.c.l.b16 %v911
        %v3842 = vunpack.c.h.b16 %v911
        %v3843 = vunpack.c.l.b16 %v912
        %v3844 = vunpack.c.l.b16 %v913
        %v3845 = vunpack.c.h.b16 %v913
        %v3846 = vunpack.c.l.b16 %v914
        %v3847 = vunpack.c.h.b16 %v914
        %v3848 = vunpack.c.l.b16 %v915
        %v3849 = vunpack.c.h.b16 %v915
        %v3850 = vunpack.c.l.b16 %v916
        %v3851 = vunpack.c.h.b16 %v916
        %v3852 = vunpack.c.l.b16 %v917
        %v3853 = vunpack.c.h.b16 %v917
        %v3854 = vunpack.c.l.b16 %v918
        %v3855 = vunpack.c.h.b16 %v918
        %v3856 = vunpack.c.l.b16 %v919
        %v3857 = vunpack.c.h.b16 %v919
        %v3858 = vunpack.c.l.b16 %v920
        %v3859 = vunpack.c.h.b16 %v920
        %v3860 = vunpack.c.l.b16 %v921
        %v3861 = vunpack.c.h.b16 %v921
        %v3862 = vunpack.c.l.b16 %v922
        %v3863 = vunpack.c.h.b16 %v922
        %v3864 = vunpack.c.l.b16 %v923
        %v3865 = vunpack.c.l.b16 %v924
        %v3866 = vunpack.c.h.b16 %v924
        %v3867 = vunpack.c.l.b16 %v925
        %v3868 = vunpack.c.h.b16 %v925
        %v3869 = vunpack.c.l.b16 %v926
        %v3870 = vunpack.c.h.b16 %v926
        %v3871 = vunpack.c.l.b16 %v927
        %v3872 = vunpack.c.h.b16 %v927
        %v3873 = vunpack.c.l.b16 %v928
        %v3874 = vunpack.c.h.b16 %v928
        %v3875 = vunpack.c.l.b16 %v929
        %v3876 = vunpack.c.h.b16 %v929
        %v3877 = vunpack.c.l.b16 %v930
        %v3878 = vunpack.c.h.b16 %v930
        %v3879 = vunpack.c.l.b16 %v931
        %v3880 = vunpack.c.h.b16 %v931
        %v3881 = vunpack.c.l.b16 %v932
        %v3882 = vunpack.c.h.b16 %v932
        %v3883 = vunpack.c.l.b16 %v933
        %v3884 = vunpack.c.h.b16 %v933
        %v3885 = vunpack.c.l.b16 %v934
        %v3886 = vunpack.c.l.b16 %v935
        %v3887 = vunpack.c.h.b16 %v935
        %v3888 = vunpack.c.l.b16 %v936
        %v3889 = vunpack.c.h.b16 %v936
        %v3890 = vunpack.c.l.b16 %v937
        %v3891 = vunpack.c.h.b16 %v937
        %v3892 = vunpack.c.l.b16 %v938
        %v3893 = vunpack.c.h.b16 %v938
        %v3894 = vunpack.c.l.b16 %v939
        %v3895 = vunpack.c.h.b16 %v939
        %v3896 = vunpack.c.l.b16 %v940
        %v3897 = vunpack.c.h.b16 %v940
        %v3898 = vunpack.c.l.b16 %v941
        %v3899 = vunpack.c.h.b16 %v941
        %v3900 = vunpack.c.l.b16 %v942
        %v3901 = vunpack.c.h.b16 %v942
        %v3902 = vunpack.c.l.b16 %v943
        %v3903 = vunpack.c.h.b16 %v943
        %v3904 = vunpack.c.l.b16 %v944
        %v3905 = vunpack.c.h.b16 %v944
        %v3906 = vunpack.c.l.b16 %v945
        %v3907 = vunpack.c.l.b16 %v946
        %v3908 = vunpack.c.h.b16 %v946
        %v3909 = vunpack.c.l.b16 %v947
        %v3910 = vunpack.c.h.b16 %v947
        %v3911 = vunpack.c.l.b16 %v948
        %v3912 = vunpack.c.h.b16 %v948
        %v3913 = vunpack.c.l.b16 %v949
        %v3914 = vunpack.c.h.b16 %v949
        %v3915 = vunpack.c.l.b16 %v950
        %v3916 = vunpack.c.h.b16 %v950
        %v3917 = vunpack.c.l.b16 %v951
        %v3918 = vunpack.c.h.b16 %v951
        %v3919 = vunpack.c.l.b16 %v952
        %v3920 = vunpack.c.h.b16 %v952
        %v3921 = vunpack.c.l.b16 %v953
        %v3922 = vunpack.c.h.b16 %v953
        %v3923 = vunpack.c.l.b16 %v954
        %v3924 = vunpack.c.h.b16 %v954
        %v3925 = vunpack.c.l.b16 %v955
        %v3926 = vunpack.c.h.b16 %v955
        %v3927 = vunpack.c.l.b16 %v956
        %v3928 = vunpack.c.l.b16 %v957
        %v3929 = vunpack.c.h.b16 %v957
        %v3930 = vunpack.c.l.b16 %v958
        %v3931 = vunpack.c.h.b16 %v958
        %v3932 = vunpack.c.l.b16 %v959
        %v3933 = vunpack.c.h.b16 %v959
        %v3934 = vunpack.c.l.b16 %v960
        %v3935 = vunpack.c.h.b16 %v960
        %v3936 = vunpack.c.l.b16 %v961
        %v3937 = vunpack.c.h.b16 %v961
        %v3938 = vunpack.c.l.b16 %v962
        %v3939 = vunpack.c.h.b16 %v962
        %v3940 = vunpack.c.l.b16 %v963
        %v3941 = vunpack.c.h.b16 %v963
        %v3942 = vunpack.c.l.b16 %v964
        %v3943 = vunpack.c.h.b16 %v964
        %v3944 = vunpack.c.l.b16 %v965
        %v3945 = vunpack.c.h.b16 %v965
        %v3946 = vunpack.c.l.b16 %v966
        %v3947 = vunpack.c.h.b16 %v966
        %v3948 = vunpack.c.l.b16 %v967
        %v3949 = vunpack.c.l.b16 %v968
        %v3950 = vunpack.c.h.b16 %v968
        %v3951 = vunpack.c.l.b16 %v969
        %v3952 = vunpack.c.h.b16 %v969
        %v3953 = vunpack.c.l.b16 %v970
        %v3954 = vunpack.c.h.b16 %v970
        %v3955 = vunpack.c.l.b16 %v971
        %v3956 = vunpack.c.h.b16 %v971
        %v3957 = vunpack.c.l.b16 %v972
        %v3958 = vunpack.c.h.b16 %v972
        %v3959 = vunpack.c.l.b16 %v973
        %v3960 = vunpack.c.h.b16 %v973
        %v3961 = vunpack.c.l.b16 %v974
        %v3962 = vunpack.c.h.b16 %v974
        %v3963 = vunpack.c.l.b16 %v975
        %v3964 = vunpack.c.h.b16 %v975
        %v3965 = vunpack.c.l.b16 %v976
        %v3966 = vunpack.c.h.b16 %v976
        %v3967 = vunpack.c.l.b16 %v977
        %v3968 = vunpack.c.h.b16 %v977
        %v3969 = vunpack.c.l.b16 %v978
        %v3970 = vunpack.c.l.b16 %v979
        %v3971 = vunpack.c.h.b16 %v979
        %v3972 = vunpack.c.l.b16 %v980
        %v3973 = vunpack.c.h.b16 %v980
        %v3974 = vunpack.c.l.b16 %v981
        %v3975 = vunpack.c.h.b16 %v981
        %v3976 = vunpack.c.l.b16 %v982
        %v3977 = vunpack.c.h.b16 %v982
        %v3978 = vunpack.c.l.b16 %v983
        %v3979 = vunpack.c.h.b16 %v983
        %v3980 = vunpack.c.l.b16 %v984
        %v3981 = vunpack.c.h.b16 %v984
        %v3982 = vunpack.c.l.b16 %v985
        %v3983 = vunpack.c.h.b16 %v985
        %v3984 = vunpack.c.l.b16 %v986
        %v3985 = vunpack.c.h.b16 %v986
        %v3986 = vunpack.c.l.b16 %v987
        %v3987 = vunpack.c.h.b16 %v987
        %v3988 = vunpack.c.l.b16 %v988
        %v3989 = vunpack.c.h.b16 %v988
        %v3990 = vunpack.c.l.b16 %v989
        %v3991 = vunpack.c.l.b16 %v990
        %v3992 = vunpack.c.h.b16 %v990
        %v3993 = vunpack.c.l.b16 %v991
        %v3994 = vunpack.c.h.b16 %v991
        %v3995 = vunpack.c.l.b16 %v992
        %v3996 = vunpack.c.h.b16 %v992
        %v3997 = vunpack.c.l.b16 %v993
        %v3998 = vunpack.c.h.b16 %v993
        %v3999 = vunpack.c.l.b16 %v994
        %v4000 = vunpack.c.h.b16 %v994
        %v4001 = vunpack.c.l.b16 %v995
        %v4002 = vunpack.c.h.b16 %v995
        %v4003 = vunpack.c.l.b16 %v996
        %v4004 = vunpack.c.h.b16 %v996
        %v4005 = vunpack.c.l.b16 %v997
        %v4006 = vunpack.c.h.b16 %v997
        %v4007 = vunpack.c.l.b16 %v998
        %v4008 = vunpack.c.h.b16 %v998
        %v4009 = vunpack.c.l.b16 %v999
        %v4010 = vunpack.c.h.b16 %v999
        %v4011 = vunpack.c.l.b16 %v1000
        %v4012 = vunpack.c.l.b16 %v1001
        %v4013 = vunpack.c.h.b16 %v1001
        %v4014 = vunpack.c.l.b16 %v1002
        %v4015 = vunpack.c.h.b16 %v1002
        %v4016 = vunpack.c.l.b16 %v1003
        %v4017 = vunpack.c.h.b16 %v1003
        %v4018 = vunpack.c.l.b16 %v1004
        %v4019 = vunpack.c.h.b16 %v1004
        %v4020 = vunpack.c.l.b16 %v1005
        %v4021 = vunpack.c.h.b16 %v1005
        %v4022 = vunpack.c.l.b16 %v1006
        %v4023 = vunpack.c.h.b16 %v1006
        %v4024 = vunpack.c.l.b16 %v1007
        %v4025 = vunpack.c.h.b16 %v1007
        %v4026 = vunpack.c.l.b16 %v1008
        %v4027 = vunpack.c.h.b16 %v1008
        %v4028 = vunpack.c.l.b16 %v1009
        %v4029 = vunpack.c.h.b16 %v1009
        %v4030 = vunpack.c.l.b16 %v1010
        %v4031 = vunpack.c.h.b16 %v1010
        %v4032 = vunpack.c.l.b16 %v1011
        %v4033 = vunpack.c.l.b16 %v1012
        %v4034 = vunpack.c.h.b16 %v1012
        %v4035 = vunpack.c.l.b16 %v1013
        %v4036 = vunpack.c.h.b16 %v1013
        %v4037 = vunpack.c.l.b16 %v1014
        %v4038 = vunpack.c.h.b16 %v1014
        %v4039 = vunpack.c.l.b16 %v1015
        %v4040 = vunpack.c.h.b16 %v1015
        %v4041 = vunpack.c.l.b16 %v1016
        %v4042 = vunpack.c.h.b16 %v1016
        %v4043 = vunpack.c.l.b16 %v1017
        %v4044 = vunpack.c.h.b16 %v1017
        %v4045 = vunpack.c.l.b16 %v1018
        %v4046 = vunpack.c.h.b16 %v1018
        %v4047 = vunpack.c.l.b16 %v1019
        %v4048 = vunpack.c.h.b16 %v1019
        %v4049 = vunpack.c.l.b16 %v1020
        %v4050 = vunpack.c.h.b16 %v1020
        %v4051 = vunpack.c.l.b16 %v1021
        %v4052 = vunpack.c.h.b16 %v1021
        %v4053 = vunpack.c.l.b16 %v1022
        %v4054 = vunpack.c.l.b16 %v1023
        %v4055 = vunpack.c.h.b16 %v1023
        %v4056 = vunpack.c.l.b16 %v1024
        %v4057 = vunpack.c.h.b16 %v1024
        %v4058 = vunpack.c.l.b16 %v1025
        %v4059 = vunpack.c.h.b16 %v1025
        %v4060 = vunpack.c.l.b16 %v1026
        %v4061 = vunpack.c.h.b16 %v1026
        %v4062 = vunpack.c.l.b16 %v1027
        %v4063 = vunpack.c.h.b16 %v1027
        %v4064 = vunpack.c.l.b16 %v1028
        %v4065 = vunpack.c.h.b16 %v1028
        %v4066 = vunpack.c.l.b16 %v1029
        %v4067 = vunpack.c.h.b16 %v1029
        %v4068 = vunpack.c.l.b16 %v1030
        %v4069 = vunpack.c.h.b16 %v1030
        %v4070 = vunpack.c.l.b16 %v1031
        %v4071 = vunpack.c.h.b16 %v1031
        %v4072 = vunpack.c.l.b16 %v1032
        %v4073 = vunpack.c.h.b16 %v1032
        %v4074 = vunpack.c.l.b16 %v1033
        %v4075 = vunpack.c.l.b16 %v1034
        %v4076 = vunpack.c.h.b16 %v1034
        %v4077 = vunpack.c.l.b16 %v1035
        %v4078 = vunpack.c.h.b16 %v1035
        %v4079 = vunpack.c.l.b16 %v1036
        %v4080 = vunpack.c.h.b16 %v1036
        %v4081 = vunpack.c.l.b16 %v1037
        %v4082 = vunpack.c.h.b16 %v1037
        %v4083 = vunpack.c.l.b16 %v1038
        %v4084 = vunpack.c.h.b16 %v1038
        %v4085 = vunpack.c.l.b16 %v1039
        %v4086 = vunpack.c.h.b16 %v1039
        %v4087 = vunpack.c.l.b16 %v1040
        %v4088 = vunpack.c.h.b16 %v1040
        %v4089 = vunpack.c.l.b16 %v1041
        %v4090 = vunpack.c.h.b16 %v1041
        %v4091 = vunpack.c.l.b16 %v1042
        %v4092 = vunpack.c.h.b16 %v1042
        %v4093 = vunpack.c.l.b16 %v1043
        %v4094 = vunpack.c.h.b16 %v1043
        %v4095 = vunpack.c.l.b16 %v1044
        %v4096 = vunpack.c.l.b16 %v1045
        %v4097 = vunpack.c.h.b16 %v1045
        %v4098 = vunpack.c.l.b16 %v1046
        %v4099 = vunpack.c.h.b16 %v1046
        %v4100 = vunpack.c.l.b16 %v1047
        %v4101 = vunpack.c.h.b16 %v1047
        %v4102 = vunpack.c.l.b16 %v1048
        %v4103 = vunpack.c.h.b16 %v1048
        %v4104 = vunpack.c.l.b16 %v1049
        %v4105 = vunpack.c.h.b16 %v1049
        %v4106 = vunpack.c.l.b16 %v1050
        %v4107 = vunpack.c.h.b16 %v1050
        %v4108 = vunpack.c.l.b16 %v1051
        %v4109 = vunpack.c.h.b16 %v1051
        %v4110 = vunpack.c.l.b16 %v1052
        %v4111 = vunpack.c.h.b16 %v1052
        %v4112 = vunpack.c.l.b16 %v1053
        %v4113 = vunpack.c.h.b16 %v1053
        %v4114 = vunpack.c.l.b16 %v1054
        %v4115 = vunpack.c.h.b16 %v1054
        %v4116 = vunpack.c.l.b16 %v1055
        %v4117 = vunpack.c.l.b16 %v1056
        %v4118 = vunpack.c.h.b16 %v1056
        %v4119 = vunpack.c.l.b16 %v1057
        %v4120 = vunpack.c.h.b16 %v1057
        %v4121 = vunpack.c.l.b16 %v1058
        %v4122 = vunpack.c.h.b16 %v1058
        %v4123 = vunpack.c.l.b16 %v1059
        %v4124 = vunpack.c.h.b16 %v1059
        %v4125 = vunpack.c.l.b16 %v1060
        %v4126 = vunpack.c.h.b16 %v1060
        %v4127 = vunpack.c.l.b16 %v1061
        %v4128 = vunpack.c.h.b16 %v1061
        %v4129 = vunpack.c.l.b16 %v1062
        %v4130 = vunpack.c.h.b16 %v1062
        %v4131 = vunpack.c.l.b16 %v1063
        %v4132 = vunpack.c.h.b16 %v1063
        %v4133 = vunpack.c.l.b16 %v1064
        %v4134 = vunpack.c.h.b16 %v1064
        %v4135 = vunpack.c.l.b16 %v1065
        %v4136 = vunpack.c.h.b16 %v1065
        %v4137 = vunpack.c.l.b16 %v1066
        %v4138 = vunpack.c.l.b16 %v1067
        %v4139 = vunpack.c.h.b16 %v1067
        %v4140 = vunpack.c.l.b16 %v1068
        %v4141 = vunpack.c.h.b16 %v1068
        %v4142 = vunpack.c.l.b16 %v1069
        %v4143 = vunpack.c.h.b16 %v1069
        %v4144 = vunpack.c.l.b16 %v1070
        %v4145 = vunpack.c.h.b16 %v1070
        %v4146 = vunpack.c.l.b16 %v1071
        %v4147 = vunpack.c.h.b16 %v1071
        %v4148 = vunpack.c.l.b16 %v1072
        %v4149 = vunpack.c.h.b16 %v1072
        %v4150 = vunpack.c.l.b16 %v1073
        %v4151 = vunpack.c.h.b16 %v1073
        %v4152 = vunpack.c.l.b16 %v1074
        %v4153 = vunpack.c.h.b16 %v1074
        %v4154 = vunpack.c.l.b16 %v1075
        %v4155 = vunpack.c.h.b16 %v1075
        %v4156 = vunpack.c.l.b16 %v1076
        %v4157 = vunpack.c.h.b16 %v1076
        %v4158 = vunpack.c.l.b16 %v1077
        %v4159 = vunpack.c.l.b16 %v1078
        %v4160 = vunpack.c.h.b16 %v1078
        %v4161 = vunpack.c.l.b16 %v1079
        %v4162 = vunpack.c.h.b16 %v1079
        %v4163 = vunpack.c.l.b16 %v1080
        %v4164 = vunpack.c.h.b16 %v1080
        %v4165 = vunpack.c.l.b16 %v1081
        %v4166 = vunpack.c.h.b16 %v1081
        %v4167 = vunpack.c.l.b16 %v1082
        %v4168 = vunpack.c.h.b16 %v1082
        %v4169 = vunpack.c.l.b16 %v1083
        %v4170 = vunpack.c.h.b16 %v1083
        %v4171 = vunpack.c.l.b16 %v1084
        %v4172 = vunpack.c.h.b16 %v1084
        %v4173 = vunpack.c.l.b16 %v1085
        %v4174 = vunpack.c.h.b16 %v1085
        %v4175 = vunpack.c.l.b16 %v1086
        %v4176 = vunpack.c.h.b16 %v1086
        %v4177 = vunpack.c.l.b16 %v1087
        %v4178 = vunpack.c.h.b16 %v1087
        %v4179 = vunpack.c.l.b16 %v1088
        %v4180 = vunpack.c.l.b16 %v1089
        %v4181 = vunpack.c.h.b16 %v1089
        %v4182 = vunpack.c.l.b16 %v1090
        %v4183 = vunpack.c.h.b16 %v1090
        %v4184 = vunpack.c.l.b16 %v1091
        %v4185 = vunpack.c.h.b16 %v1091
        %v4186 = vunpack.c.l.b16 %v1092
        %v4187 = vunpack.c.h.b16 %v1092
        %v4188 = vunpack.c.l.b16 %v1093
        %v4189 = vunpack.c.h.b16 %v1093
        %v4190 = vunpack.c.l.b16 %v1094
        %v4191 = vunpack.c.h.b16 %v1094
        %v4192 = vunpack.c.l.b16 %v1095
        %v4193 = vunpack.c.h.b16 %v1095
        %v4194 = vunpack.c.l.b16 %v1096
        %v4195 = vunpack.c.h.b16 %v1096
        %v4196 = vunpack.c.l.b16 %v1097
        %v4197 = vunpack.c.h.b16 %v1097
        %v4198 = vunpack.c.l.b16 %v1098
        %v4199 = vunpack.c.h.b16 %v1098
        %v4200 = vunpack.c.l.b16 %v1099
        %v4201 = vunpack.c.l.b16 %v1100
        %v4202 = vunpack.c.h.b16 %v1100
        %v4203 = vunpack.c.l.b16 %v1101
        %v4204 = vunpack.c.h.b16 %v1101
        %v4205 = vunpack.c.l.b16 %v1102
        %v4206 = vunpack.c.h.b16 %v1102
        %v4207 = vunpack.c.l.b16 %v1103
        %v4208 = vunpack.c.h.b16 %v1103
        %v4209 = vunpack.c.l.b16 %v1104
        %v4210 = vunpack.c.h.b16 %v1104
        %v4211 = vunpack.c.l.b16 %v1105
        %v4212 = vunpack.c.h.b16 %v1105
        %v4213 = vunpack.c.l.b16 %v1106
        %v4214 = vunpack.c.h.b16 %v1106
        %v4215 = vunpack.c.l.b16 %v1107
        %v4216 = vunpack.c.h.b16 %v1107
        %v4217 = vunpack.c.l.b16 %v1108
        %v4218 = vunpack.c.h.b16 %v1108
        %v4219 = vunpack.c.l.b16 %v1109
        %v4220 = vunpack.c.h.b16 %v1109
        %v4221 = vunpack.c.l.b16 %v1110
        %v4222 = vunpack.c.l.b16 %v1111
        %v4223 = vunpack.c.h.b16 %v1111
        %v4224 = vunpack.c.l.b16 %v1112
        %v4225 = vunpack.c.h.b16 %v1112
        %v4226 = vunpack.c.l.b16 %v1113
        %v4227 = vunpack.c.h.b16 %v1113
        %v4228 = vunpack.c.l.b16 %v1114
        %v4229 = vunpack.c.h.b16 %v1114
        %v4230 = vunpack.c.l.b16 %v1115
        %v4231 = vunpack.c.h.b16 %v1115
        %v4232 = vunpack.c.l.b16 %v1116
        %v4233 = vunpack.c.h.b16 %v1116
        %v4234 = vunpack.c.l.b16 %v1117
        %v4235 = vunpack.c.h.b16 %v1117
        %v4236 = vunpack.c.l.b16 %v1118
        %v4237 = vunpack.c.h.b16 %v1118
        %v4238 = vunpack.c.l.b16 %v1119
        %v4239 = vunpack.c.h.b16 %v1119
        %v4240 = vunpack.c.l.b16 %v1120
        %v4241 = vunpack.c.h.b16 %v1120
        %v4242 = vunpack.c.l.b16 %v1121
        %v4243 = vunpack.c.l.b16 %v1122
        %v4244 = vunpack.c.h.b16 %v1122
        %v4245 = vunpack.c.l.b16 %v1123
        %v4246 = vunpack.c.h.b16 %v1123
        %v4247 = vunpack.c.l.b16 %v1124
        %v4248 = vunpack.c.h.b16 %v1124
        %v4249 = vunpack.c.l.b16 %v1125
        %v4250 = vunpack.c.h.b16 %v1125
        %v4251 = vunpack.c.l.b16 %v1126
        %v4252 = vunpack.c.h.b16 %v1126
        %v4253 = vunpack.c.l.b16 %v1127
        %v4254 = vunpack.c.h.b16 %v1127
        %v4255 = vunpack.c.l.b16 %v1128
        %v4256 = vunpack.c.h.b16 %v1128
        %v4257 = vunpack.c.l.b16 %v1129
        %v4258 = vunpack.c.h.b16 %v1129
        %v4259 = vunpack.c.l.b16 %v1130
        %v4260 = vunpack.c.h.b16 %v1130
        %v4261 = vunpack.c.l.b16 %v1131
        %v4262 = vunpack.c.h.b16 %v1131
        %v4263 = vunpack.c.l.b16 %v1132
        %v4264 = vunpack.c.l.b16 %v1133
        %v4265 = vunpack.c.h.b16 %v1133
        %v4266 = vunpack.c.l.b16 %v1134
        %v4267 = vunpack.c.h.b16 %v1134
        %v4268 = vunpack.c.l.b16 %v1135
        %v4269 = vunpack.c.h.b16 %v1135
        %v4270 = vunpack.c.l.b16 %v1136
        %v4271 = vunpack.c.h.b16 %v1136
        %v4272 = vunpack.c.l.b16 %v1137
        %v4273 = vunpack.c.h.b16 %v1137
        %v4274 = vunpack.c.l.b16 %v1138
        %v4275 = vunpack.c.h.b16 %v1138
        %v4276 = vunpack.c.l.b16 %v1139
        %v4277 = vunpack.c.h.b16 %v1139
        %v4278 = vunpack.c.l.b16 %v1140
        %v4279 = vunpack.c.h.b16 %v1140
        %v4280 = vunpack.c.l.b16 %v1141
        %v4281 = vunpack.c.h.b16 %v1141
        %v4282 = vunpack.c.l.b16 %v1142
        %v4283 = vunpack.c.h.b16 %v1142
        %v4284 = vunpack.c.l.b16 %v1143
        %v4285 = vunpack.c.l.b16 %v1144
        %v4286 = vunpack.c.h.b16 %v1144
        %v4287 = vunpack.c.l.b16 %v1145
        %v4288 = vunpack.c.h.b16 %v1145
        %v4289 = vunpack.c.l.b16 %v1146
        %v4290 = vunpack.c.h.b16 %v1146
        %v4291 = vunpack.c.l.b16 %v1147
        %v4292 = vunpack.c.h.b16 %v1147
        %v4293 = vunpack.c.l.b16 %v1148
        %v4294 = vunpack.c.h.b16 %v1148
        %v4295 = vunpack.c.l.b16 %v1149
        %v4296 = vunpack.c.h.b16 %v1149
        %v4297 = vunpack.c.l.b16 %v1150
        %v4298 = vunpack.c.h.b16 %v1150
        %v4299 = vunpack.c.l.b16 %v1151
        %v4300 = vunpack.c.h.b16 %v1151
        %v4301 = vunpack.c.l.b16 %v1152
        %v4302 = vunpack.c.h.b16 %v1152
        %v4303 = vunpack.c.l.b16 %v1153
        %v4304 = vunpack.c.h.b16 %v1153
        %v4305 = vunpack.c.l.b16 %v1154
        %v4306 = vunpack.c.l.b16 %v1155
        %v4307 = vunpack.c.h.b16 %v1155
        %v4308 = vunpack.c.l.b16 %v1156
        %v4309 = vunpack.c.h.b16 %v1156
        %v4310 = vunpack.c.l.b16 %v1157
        %v4311 = vunpack.c.h.b16 %v1157
        %v4312 = vunpack.c.l.b16 %v1158
        %v4313 = vunpack.c.h.b16 %v1158
        %v4314 = vunpack.c.l.b16 %v1159
        %v4315 = vunpack.c.h.b16 %v1159
        %v4316 = vunpack.c.l.b16 %v1160
        %v4317 = vunpack.c.h.b16 %v1160
        %v4318 = vunpack.c.l.b16 %v1161
        %v4319 = vunpack.c.h.b16 %v1161
        %v4320 = vunpack.c.l.b16 %v1162
        %v4321 = vunpack.c.h.b16 %v1162
        %v4322 = vunpack.c.l.b16 %v1163
        %v4323 = vunpack.c.h.b16 %v1163
        %v4324 = vunpack.c.l.b16 %v1164
        %v4325 = vunpack.c.h.b16 %v1164
        %v4326 = vunpack.c.l.b16 %v1165
        %v4327 = vunpack.c.l.b16 %v1166
        %v4328 = vunpack.c.h.b16 %v1166
        %v4329 = vunpack.c.l.b16 %v1167
        %v4330 = vunpack.c.h.b16 %v1167
        %v4331 = vunpack.c.l.b16 %v1168
        %v4332 = vunpack.c.h.b16 %v1168
        %v4333 = vunpack.c.l.b16 %v1169
        %v4334 = vunpack.c.h.b16 %v1169
        %v4335 = vunpack.c.l.b16 %v1170
        %v4336 = vunpack.c.h.b16 %v1170
        %v4337 = vunpack.c.l.b16 %v1171
        %v4338 = vunpack.c.h.b16 %v1171
        %v4339 = vunpack.c.l.b16 %v1172
        %v4340 = vunpack.c.h.b16 %v1172
        %v4341 = vunpack.c.l.b16 %v1173
        %v4342 = vunpack.c.h.b16 %v1173
        %v4343 = vunpack.c.l.b16 %v1174
        %v4344 = vunpack.c.h.b16 %v1174
        %v4345 = vunpack.c.l.b16 %v1175
        %v4346 = vunpack.c.h.b16 %v1175
        %v4347 = vunpack.c.l.b16 %v1176
        %v4348 = vunpack.c.l.b16 %v1177
        %v4349 = vunpack.c.h.b16 %v1177
        %v4350 = vunpack.c.l.b16 %v1178
        %v4351 = vunpack.c.h.b16 %v1178
        %v4352 = vunpack.c.l.b16 %v1179
        %v4353 = vunpack.c.h.b16 %v1179
        %v4354 = vunpack.c.l.b16 %v1180
        %v4355 = vunpack.c.h.b16 %v1180
        %v4356 = vunpack.c.l.b16 %v1181
        %v4357 = vunpack.c.h.b16 %v1181
        %v4358 = vunpack.c.l.b16 %v1182
        %v4359 = vunpack.c.h.b16 %v1182
        %v4360 = vunpack.c.l.b16 %v1183
        %v4361 = vunpack.c.h.b16 %v1183
        %v4362 = vunpack.c.l.b16 %v1184
        %v4363 = vunpack.c.h.b16 %v1184
        %v4364 = vunpack.c.l.b16 %v1185
        %v4365 = vunpack.c.h.b16 %v1185
        %v4366 = vunpack.c.l.b16 %v1186
        %v4367 = vunpack.c.h.b16 %v1186
        %v4368 = vunpack.c.l.b16 %v1187
        %v4369 = vunpack.c.l.b16 %v1188
        %v4370 = vunpack.c.h.b16 %v1188
        %v4371 = vunpack.c.l.b16 %v1189
        %v4372 = vunpack.c.h.b16 %v1189
        %v4373 = vunpack.c.l.b16 %v1190
        %v4374 = vunpack.c.h.b16 %v1190
        %v4375 = vunpack.c.l.b16 %v1191
        %v4376 = vunpack.c.h.b16 %v1191
        %v4377 = vunpack.c.l.b16 %v1192
        %v4378 = vunpack.c.h.b16 %v1192
        %v4379 = vunpack.c.l.b16 %v1193
        %v4380 = vunpack.c.h.b16 %v1193
        %v4381 = vunpack.c.l.b16 %v1194
        %v4382 = vunpack.c.h.b16 %v1194
        %v4383 = vunpack.c.l.b16 %v1195
        %v4384 = vunpack.c.h.b16 %v1195
        %v4385 = vunpack.c.l.b16 %v1196
        %v4386 = vunpack.c.h.b16 %v1196
        %v4387 = vunpack.c.l.b16 %v1197
        %v4388 = vunpack.c.h.b16 %v1197
        %v4389 = vunpack.c.l.b16 %v1198
        %v4390 = vunpack.c.l.b16 %v1199
        %v4391 = vunpack.c.h.b16 %v1199
        %v4392 = vunpack.c.l.b16 %v1200
        %v4393 = vunpack.c.h.b16 %v1200
        %v4394 = vunpack.c.l.b16 %v1201
        %v4395 = vunpack.c.h.b16 %v1201
        %v4396 = vunpack.c.l.b16 %v1202
        %v4397 = vunpack.c.h.b16 %v1202
        %v4398 = vunpack.c.l.b16 %v1203
        %v4399 = vunpack.c.h.b16 %v1203
        %v4400 = vunpack.c.l.b16 %v1204
        %v4401 = vunpack.c.h.b16 %v1204
        %v4402 = vunpack.c.l.b16 %v1205
        %v4403 = vunpack.c.h.b16 %v1205
        %v4404 = vunpack.c.l.b16 %v1206
        %v4405 = vunpack.c.h.b16 %v1206
        %v4406 = vunpack.c.l.b16 %v1207
        %v4407 = vunpack.c.h.b16 %v1207
        %v4408 = vunpack.c.l.b16 %v1208
        %v4409 = vunpack.c.h.b16 %v1208
        %v4410 = vunpack.c.l.b16 %v1209
        %v4411 = vunpack.c.l.b16 %v1210
        %v4412 = vunpack.c.h.b16 %v1210
        %v4413 = vunpack.c.l.b16 %v1211
        %v4414 = vunpack.c.h.b16 %v1211
        %v4415 = vunpack.c.l.b16 %v1212
        %v4416 = vunpack.c.h.b16 %v1212
        %v4417 = vunpack.c.l.b16 %v1213
        %v4418 = vunpack.c.h.b16 %v1213
        %v4419 = vunpack.c.l.b16 %v1214
        %v4420 = vunpack.c.h.b16 %v1214
        %v4421 = vunpack.c.l.b16 %v1215
        %v4422 = vunpack.c.h.b16 %v1215
        %v4423 = vunpack.c.l.b16 %v1216
        %v4424 = vunpack.c.h.b16 %v1216
        %v4425 = vunpack.c.l.b16 %v1217
        %v4426 = vunpack.c.h.b16 %v1217
        %v4427 = vunpack.c.l.b16 %v1218
        %v4428 = vunpack.c.h.b16 %v1218
        %v4429 = vunpack.c.l.b16 %v1219
        %v4430 = vunpack.c.h.b16 %v1219
        %v4431 = vunpack.c.l.b16 %v1220
        %v4432 = vunpack.c.l.b16 %v1221
        %v4433 = vunpack.c.h.b16 %v1221
        %v4434 = vunpack.c.l.b16 %v1222
        %v4435 = vunpack.c.h.b16 %v1222
        %v4436 = vunpack.c.l.b16 %v1223
        %v4437 = vunpack.c.h.b16 %v1223
        %v4438 = vunpack.c.l.b16 %v1224
        %v4439 = vunpack.c.h.b16 %v1224
        %v4440 = vunpack.c.l.b16 %v1225
        %v4441 = vunpack.c.h.b16 %v1225
        %v4442 = vunpack.c.l.b16 %v1226
        %v4443 = vunpack.c.h.b16 %v1226
        %v4444 = vunpack.c.l.b16 %v1227
        %v4445 = vunpack.c.h.b16 %v1227
        %v4446 = vunpack.c.l.b16 %v1228
        %v4447 = vunpack.c.h.b16 %v1228
        %v4448 = vunpack.c.l.b16 %v1229
        %v4449 = vunpack.c.h.b16 %v1229
        %v4450 = vunpack.c.l.b16 %v1230
        %v4451 = vunpack.c.h.b16 %v1230
        %v4452 = vunpack.c.l.b16 %v1231
        %v4453 = vunpack.c.l.b16 %v1232
        %v4454 = vunpack.c.h.b16 %v1232
        %v4455 = vunpack.c.l.b16 %v1233
        %v4456 = vunpack.c.h.b16 %v1233
        %v4457 = vunpack.c.l.b16 %v1234
        %v4458 = vunpack.c.h.b16 %v1234
        %v4459 = vunpack.c.l.b16 %v1235
        %v4460 = vunpack.c.h.b16 %v1235
        %v4461 = vunpack.c.l.b16 %v1236
        %v4462 = vunpack.c.h.b16 %v1236
        %v4463 = vunpack.c.l.b16 %v1237
        %v4464 = vunpack.c.h.b16 %v1237
        %v4465 = vunpack.c.l.b16 %v1238
        %v4466 = vunpack.c.h.b16 %v1238
        %v4467 = vunpack.c.l.b16 %v1239
        %v4468 = vunpack.c.h.b16 %v1239
        %v4469 = vunpack.c.l.b16 %v1240
        %v4470 = vunpack.c.h.b16 %v1240
        %v4471 = vunpack.c.l.b16 %v1241
        %v4472 = vunpack.c.h.b16 %v1241
        %v4473 = vunpack.c.l.b16 %v1242
        %v4474 = vunpack.c.l.b16 %v1243
        %v4475 = vunpack.c.h.b16 %v1243
        %v4476 = vunpack.c.l.b16 %v1244
        %v4477 = vunpack.c.h.b16 %v1244
        %v4478 = vunpack.c.l.b16 %v1245
        %v4479 = vunpack.c.h.b16 %v1245
        %v4480 = vunpack.c.l.b16 %v1246
        %v4481 = vunpack.c.h.b16 %v1246
        %v4482 = vunpack.c.l.b16 %v1247
        %v4483 = vunpack.c.h.b16 %v1247
        %v4484 = vunpack.c.l.b16 %v1248
        %v4485 = vunpack.c.h.b16 %v1248
        %v4486 = vunpack.c.l.b16 %v1249
        %v4487 = vunpack.c.h.b16 %v1249
        %v4488 = vunpack.c.l.b16 %v1250
        %v4489 = vunpack.c.h.b16 %v1250
        %v4490 = vunpack.c.l.b16 %v1251
        %v4491 = vunpack.c.h.b16 %v1251
        %v4492 = vunpack.c.l.b16 %v1252
        %v4493 = vunpack.c.h.b16 %v1252
        %v4494 = vunpack.c.l.b16 %v1253
        %v4495 = vunpack.c.l.b16 %v1254
        %v4496 = vunpack.c.h.b16 %v1254
        %v4497 = vunpack.c.l.b16 %v1255
        %v4498 = vunpack.c.h.b16 %v1255
        %v4499 = vunpack.c.l.b16 %v1256
        %v4500 = vunpack.c.h.b16 %v1256
        %v4501 = vunpack.c.l.b16 %v1257
        %v4502 = vunpack.c.h.b16 %v1257
        %v4503 = vunpack.c.l.b16 %v1258
        %v4504 = vunpack.c.h.b16 %v1258
        %v4505 = vunpack.c.l.b16 %v1259
        %v4506 = vunpack.c.h.b16 %v1259
        %v4507 = vunpack.c.l.b16 %v1260
        %v4508 = vunpack.c.h.b16 %v1260
        %v4509 = vunpack.c.l.b16 %v1261
        %v4510 = vunpack.c.h.b16 %v1261
        %v4511 = vunpack.c.l.b16 %v1262
        %v4512 = vunpack.c.h.b16 %v1262
        %v4513 = vunpack.c.l.b16 %v1263
        %v4514 = vunpack.c.h.b16 %v1263
        %v4515 = vunpack.c.l.b16 %v1264
        %v4516 = vunpack.c.l.b16 %v1265
        %v4517 = vunpack.c.h.b16 %v1265
        %v4518 = vunpack.c.l.b16 %v1266
        %v4519 = vunpack.c.h.b16 %v1266
        %v4520 = vunpack.c.l.b16 %v1267
        %v4521 = vunpack.c.h.b16 %v1267
        %v4522 = vunpack.c.l.b16 %v1268
        %v4523 = vunpack.c.h.b16 %v1268
        %v4524 = vunpack.c.l.b16 %v1269
        %v4525 = vunpack.c.h.b16 %v1269
        %v4526 = vunpack.c.l.b16 %v1270
        %v4527 = vunpack.c.h.b16 %v1270
        %v4528 = vunpack.c.l.b16 %v1271
        %v4529 = vunpack.c.h.b16 %v1271
        %v4530 = vunpack.c.l.b16 %v1272
        %v4531 = vunpack.c.h.b16 %v1272
        %v4532 = vunpack.c.l.b16 %v1273
        %v4533 = vunpack.c.h.b16 %v1273
        %v4534 = vunpack.c.l.b16 %v1274
        %v4535 = vunpack.c.h.b16 %v1274
        %v4536 = vunpack.c.l.b16 %v1275
        %v4537 = vunpack.c.l.b16 %v1276
        %v4538 = vunpack.c.h.b16 %v1276
        %v4539 = vunpack.c.l.b16 %v1277
        %v4540 = vunpack.c.h.b16 %v1277
        %v4541 = vunpack.c.l.b16 %v1278
        %v4542 = vunpack.c.h.b16 %v1278
        %v4543 = vunpack.c.l.b16 %v1279
        %v4544 = vunpack.c.h.b16 %v1279
        %v4545 = vunpack.c.l.b16 %v1280
        %v4546 = vunpack.c.h.b16 %v1280
        %v4547 = vunpack.c.l.b16 %v1281
        %v4548 = vunpack.c.h.b16 %v1281
        %v4549 = vunpack.c.l.b16 %v1282
        %v4550 = vunpack.c.h.b16 %v1282
        %v4551 = vunpack.c.l.b16 %v1283
        %v4552 = vunpack.c.h.b16 %v1283
        %v4553 = vunpack.c.l.b16 %v1284
        %v4554 = vunpack.c.h.b16 %v1284
        %v4555 = vunpack.c.l.b16 %v1285
        %v4556 = vunpack.c.h.b16 %v1285
        %v4557 = vunpack.c.l.b16 %v1286
        %v4558 = vunpack.c.l.b16 %v1287
        %v4559 = vunpack.c.h.b16 %v1287
        %v4560 = vunpack.c.l.b16 %v1288
        %v4561 = vunpack.c.h.b16 %v1288
        %v4562 = vunpack.c.l.b16 %v1289
        %v4563 = vunpack.c.h.b16 %v1289
        %v4564 = vunpack.c.l.b16 %v1290
        %v4565 = vunpack.c.h.b16 %v1290
        %v4566 = vunpack.c.l.b16 %v1291
        %v4567 = vunpack.c.h.b16 %v1291
        %v4568 = vunpack.c.l.b16 %v1292
        %v4569 = vunpack.c.h.b16 %v1292
        %v4570 = vunpack.c.l.b16 %v1293
        %v4571 = vunpack.c.h.b16 %v1293
        %v4572 = vunpack.c.l.b16 %v1294
        %v4573 = vunpack.c.h.b16 %v1294
        %v4574 = vunpack.c.l.b16 %v1295
        %v4575 = vunpack.c.h.b16 %v1295
        %v4576 = vunpack.c.l.b16 %v1296
        %v4577 = vunpack.c.h.b16 %v1296
        %v4578 = vunpack.c.l.b16 %v1297
        %v4579 = vunpack.c.l.b16 %v1298
        %v4580 = vunpack.c.h.b16 %v1298
        %v4581 = vunpack.c.l.b16 %v1299
        %v4582 = vunpack.c.h.b16 %v1299
        %v4583 = vunpack.c.l.b16 %v1300
        %v4584 = vunpack.c.h.b16 %v1300
        %v4585 = vunpack.c.l.b16 %v1301
        %v4586 = vunpack.c.h.b16 %v1301
        %v4587 = vunpack.c.l.b16 %v1302
        %v4588 = vunpack.c.h.b16 %v1302
        %v4589 = vunpack.c.l.b16 %v1303
        %v4590 = vunpack.c.h.b16 %v1303
        %v4591 = vunpack.c.l.b16 %v1304
        %v4592 = vunpack.c.h.b16 %v1304
        %v4593 = vunpack.c.l.b16 %v1305
        %v4594 = vunpack.c.h.b16 %v1305
        %v4595 = vunpack.c.l.b16 %v1306
        %v4596 = vunpack.c.h.b16 %v1306
        %v4597 = vunpack.c.l.b16 %v1307
        %v4598 = vunpack.c.h.b16 %v1307
        %v4599 = vunpack.c.l.b16 %v1308
        %v4600 = vunpack.c.l.b16 %v1309
        %v4601 = vunpack.c.h.b16 %v1309
        %v4602 = vunpack.c.l.b16 %v1310
        %v4603 = vunpack.c.h.b16 %v1310
        %v4604 = vunpack.c.l.b16 %v1311
        %v4605 = vunpack.c.h.b16 %v1311
        %v4606 = vunpack.c.l.b16 %v1312
        %v4607 = vunpack.c.h.b16 %v1312
        %v4608 = vunpack.c.l.b16 %v1313
        %v4609 = vunpack.c.h.b16 %v1313
        %v4610 = vunpack.c.l.b16 %v1314
        %v4611 = vunpack.c.h.b16 %v1314
        %v4612 = vunpack.c.l.b16 %v1315
        %v4613 = vunpack.c.h.b16 %v1315
        %v4614 = vunpack.c.l.b16 %v1316
        %v4615 = vunpack.c.h.b16 %v1316
        %v4616 = vunpack.c.l.b16 %v1317
        %v4617 = vunpack.c.h.b16 %v1317
        %v4618 = vunpack.c.l.b16 %v1318
        %v4619 = vunpack.c.h.b16 %v1318
        %v4620 = vunpack.c.l.b16 %v1319
        %v4621 = vunpack.c.l.b16 %v1320
        %v4622 = vunpack.c.h.b16 %v1320
        %v4623 = vunpack.c.l.b16 %v1321
        %v4624 = vunpack.c.h.b16 %v1321
        %v4625 = vunpack.c.l.b16 %v1322
        %v4626 = vunpack.c.h.b16 %v1322
        %v4627 = vunpack.c.l.b16 %v1323
        %v4628 = vunpack.c.h.b16 %v1323
        %v4629 = vunpack.c.l.b16 %v1324
        %v4630 = vunpack.c.h.b16 %v1324
        %v4631 = vunpack.c.l.b16 %v1325
        %v4632 = vunpack.c.h.b16 %v1325
        %v4633 = vunpack.c.l.b16 %v1326
        %v4634 = vunpack.c.h.b16 %v1326
        %v4635 = vunpack.c.l.b16 %v1327
        %v4636 = vunpack.c.h.b16 %v1327
        %v4637 = vunpack.c.l.b16 %v1328
        %v4638 = vunpack.c.h.b16 %v1328
        %v4639 = vunpack.c.l.b16 %v1329
        %v4640 = vunpack.c.h.b16 %v1329
        %v4641 = vunpack.c.l.b16 %v1330
        %v4642 = vpack.c.b16 %v2563, %v2542
        %v4643 = vpack.c.b16 %v2564, %v2543
        %v4644 = vpack.c.b16 %v2565, %v2544
        %v4645 = vpack.c.b16 %v2566, %v2545
        %v4646 = vpack.c.b16 %v2567, %v2546
        %v4647 = vpack.c.b16 %v2568, %v2547
        %v4648 = vpack.c.b16 %v2569, %v2548
        %v4649 = vpack.c.b16 %v2570, %v2549
        %v4650 = vpack.c.b16 %v2571, %v2550
        %v4651 = vpack.c.b16 %v2572, %v2551
        %v4652 = vpack.c.b16 %v2573, %v2552
        %v4653 = vpack.c.b16 %v2574, %v2553
        %v4654 = vpack.c.b16 %v2575, %v2554
        %v4655 = vpack.c.b16 %v2576, %v2555
        %v4656 = vpack.c.b16 %v2577, %v2556
        %v4657 = vpack.c.b16 %v2578, %v2557
        %v4658 = vpack.c.b16 %v2579, %v2558
        %v4659 = vpack.c.b16 %v2580, %v2559
        %v4660 = vpack.c.b16 %v2581, %v2560
        %v4661 = vpack.c.b16 %v2582, %v2561
        %v4662 = vpack.c.b16 %v2583, %v2562
        %v4663 = vpack.c.b16 %v2605, %v2584
        %v4664 = vpack.c.b16 %v2606, %v2585
        %v4665 = vpack.c.b16 %v2607, %v2586
        %v4666 = vpack.c.b16 %v2608, %v2587
        %v4667 = vpack.c.b16 %v2609, %v2588
        %v4668 = vpack.c.b16 %v2610, %v2589
        %v4669 = vpack.c.b16 %v2611, %v2590
        %v4670 = vpack.c.b16 %v2612, %v2591
        %v4671 = vpack.c.b16 %v2613, %v2592
        %v4672 = vpack.c.b16 %v2614, %v2593
        %v4673 = vpack.c.b16 %v2615, %v2594
        %v4674 = vpack.c.b16 %v2616, %v2595
        %v4675 = vpack.c.b16 %v2617, %v2596
        %v4676 = vpack.c.b16 %v2618, %v2597
        %v4677 = vpack.c.b16 %v2619, %v2598
        %v4678 = vpack.c.b16 %v2620, %v2599
        %v4679 = vpack.c.b16 %v2621, %v2600
        %v4680 = vpack.c.b16 %v2622, %v2601
        %v4681 = vpack.c.b16 %v2623, %v2602
        %v4682 = vpack.c.b16 %v2624, %v2603
        %v4683 = vpack.c.b16 %v2625, %v2604
        %v4684 = vpack.c.b16 %v2647, %v2626
        %v4685 = vpack.c.b16 %v2648, %v2627
        %v4686 = vpack.c.b16 %v2649, %v2628
        %v4687 = vpack.c.b16 %v2650, %v2629
        %v4688 = vpack.c.b16 %v2651, %v2630
        %v4689 = vpack.c.b16 %v2652, %v2631
        %v4690 = vpack.c.b16 %v2653, %v2632
        %v4691 = vpack.c.b16 %v2654, %v2633
        %v4692 = vpack.c.b16 %v2655, %v2634
        %v4693 = vpack.c.b16 %v2656, %v2635
        %v4694 = vpack.c.b16 %v2657, %v2636
        %v4695 = vpack.c.b16 %v2658, %v2637
        %v4696 = vpack.c.b16 %v2659, %v2638
        %v4697 = vpack.c.b16 %v2660, %v2639
        %v4698 = vpack.c.b16 %v2661, %v2640
        %v4699 = vpack.c.b16 %v2662, %v2641
        %v4700 = vpack.c.b16 %v2663, %v2642
        %v4701 = vpack.c.b16 %v2664, %v2643
        %v4702 = vpack.c.b16 %v2665, %v2644
        %v4703 = vpack.c.b16 %v2666, %v2645
        %v4704 = vpack.c.b16 %v2667, %v2646
        %v4705 = vpack.c.b16 %v2689, %v2668
        %v4706 = vpack.c.b16 %v2690, %v2669
        %v4707 = vpack.c.b16 %v2691, %v2670
        %v4708 = vpack.c.b16 %v2692, %v2671
        %v4709 = vpack.c.b16 %v2693, %v2672
        %v4710 = vpack.c.b16 %v2694, %v2673
        %v4711 = vpack.c.b16 %v2695, %v2674
        %v4712 = vpack.c.b16 %v2696, %v2675
        %v4713 = vpack.c.b16 %v2697, %v2676
        %v4714 = vpack.c.b16 %v2698, %v2677
        %v4715 = vpack.c.b16 %v2699, %v2678
        %v4716 = vpack.c.b16 %v2700, %v2679
        %v4717 = vpack.c.b16 %v2701, %v2680
        %v4718 = vpack.c.b16 %v2702, %v2681
        %v4719 = vpack.c.b16 %v2703, %v2682
        %v4720 = vpack.c.b16 %v2704, %v2683
        %v4721 = vpack.c.b16 %v2705, %v2684
        %v4722 = vpack.c.b16 %v2706, %v2685
        %v4723 = vpack.c.b16 %v2707, %v2686
        %v4724 = vpack.c.b16 %v2708, %v2687
        %v4725 = vpack.c.b16 %v2709, %v2688
        %v4726 = vpack.c.b16 %v2731, %v2710
        %v4727 = vpack.c.b16 %v2732, %v2711
        %v4728 = vpack.c.b16 %v2733, %v2712
        %v4729 = vpack.c.b16 %v2734, %v2713
        %v4730 = vpack.c.b16 %v2735, %v2714
        %v4731 = vpack.c.b16 %v2736, %v2715
        %v4732 = vpack.c.b16 %v2737, %v2716
        %v4733 = vpack.c.b16 %v2738, %v2717
        %v4734 = vpack.c.b16 %v2739, %v2718
        %v4735 = vpack.c.b16 %v2740, %v2719
        %v4736 = vpack.c.b16 %v2741, %v2720
        %v4737 = vpack.c.b16 %v2742, %v2721
        %v4738 = vpack.c.b16 %v2743, %v2722
        %v4739 = vpack.c.b16 %v2744, %v2723
        %v4740 = vpack.c.b16 %v2745, %v2724
        %v4741 = vpack.c.b16 %v2746, %v2725
        %v4742 = vpack.c.b16 %v2747, %v2726
        %v4743 = vpack.c.b16 %v2748, %v2727
        %v4744 = vpack.c.b16 %v2749, %v2728
        %v4745 = vpack.c.b16 %v2750, %v2729
        %v4746 = vpack.c.b16 %v2751, %v2730
        %v4747 = vpack.c.b16 %v2773, %v2752
        %v4748 = vpack.c.b16 %v2774, %v2753
        %v4749 = vpack.c.b16 %v2775, %v2754
        %v4750 = vpack.c.b16 %v2776, %v2755
        %v4751 = vpack.c.b16 %v2777, %v2756
        %v4752 = vpack.c.b16 %v2778, %v2757
        %v4753 = vpack.c.b16 %v2779, %v2758
        %v4754 = vpack.c.b16 %v2780, %v2759
        %v4755 = vpack.c.b16 %v2781, %v2760
        %v4756 = vpack.c.b16 %v2782, %v2761
        %v4757 = vpack.c.b16 %v2783, %v2762
        %v4758 = vpack.c.b16 %v2784, %v2763
        %v4759 = vpack.c.b16 %v2785, %v2764
        %v4760 = vpack.c.b16 %v2786, %v2765
        %v4761 = vpack.c.b16 %v2787, %v2766
        %v4762 = vpack.c.b16 %v2788, %v2767
        %v4763 = vpack.c.b16 %v2789, %v2768
        %v4764 = vpack.c.b16 %v2790, %v2769
        %v4765 = vpack.c.b16 %v2791, %v2770
        %v4766 = vpack.c.b16 %v2792, %v2771
        %v4767 = vpack.c.b16 %v2793, %v2772
        %v4768 = vpack.c.b16 %v2815, %v2794
        %v4769 = vpack.c.b16 %v2816, %v2795
        %v4770 = vpack.c.b16 %v2817, %v2796
        %v4771 = vpack.c.b16 %v2818, %v2797
        %v4772 = vpack.c.b16 %v2819, %v2798
        %v4773 = vpack.c.b16 %v2820, %v2799
        %v4774 = vpack.c.b16 %v2821, %v2800
        %v4775 = vpack.c.b16 %v2822, %v2801
        %v4776 = vpack.c.b16 %v2823, %v2802
        %v4777 = vpack.c.b16 %v2824, %v2803
        %v4778 = vpack.c.b16 %v2825, %v2804
        %v4779 = vpack.c.b16 %v2826, %v2805
        %v4780 = vpack.c.b16 %v2827, %v2806
        %v4781 = vpack.c.b16 %v2828, %v2807
        %v4782 = vpack.c.b16 %v2829, %v2808
        %v4783 = vpack.c.b16 %v2830, %v2809
        %v4784 = vpack.c.b16 %v2831, %v2810
        %v4785 = vpack.c.b16 %v2832, %v2811
        %v4786 = vpack.c.b16 %v2833, %v2812
        %v4787 = vpack.c.b16 %v2834, %v2813
        %v4788 = vpack.c.b16 %v2835, %v2814
        %v4789 = vpack.c.b16 %v2857, %v2836
        %v4790 = vpack.c.b16 %v2858, %v2837
        %v4791 = vpack.c.b16 %v2859, %v2838
        %v4792 = vpack.c.b16 %v2860, %v2839
        %v4793 = vpack.c.b16 %v2861, %v2840
        %v4794 = vpack.c.b16 %v2862, %v2841
        %v4795 = vpack.c.b16 %v2863, %v2842
        %v4796 = vpack.c.b16 %v2864, %v2843
        %v4797 = vpack.c.b16 %v2865, %v2844
        %v4798 = vpack.c.b16 %v2866, %v2845
        %v4799 = vpack.c.b16 %v2867, %v2846
        %v4800 = vpack.c.b16 %v2868, %v2847
        %v4801 = vpack.c.b16 %v2869, %v2848
        %v4802 = vpack.c.b16 %v2870, %v2849
        %v4803 = vpack.c.b16 %v2871, %v2850
        %v4804 = vpack.c.b16 %v2872, %v2851
        %v4805 = vpack.c.b16 %v2873, %v2852
        %v4806 = vpack.c.b16 %v2874, %v2853
        %v4807 = vpack.c.b16 %v2875, %v2854
        %v4808 = vpack.c.b16 %v2876, %v2855
        %v4809 = vpack.c.b16 %v2877, %v2856
        %v4810 = vpack.c.b16 %v2899, %v2878
        %v4811 = vpack.c.b16 %v2900, %v2879
        %v4812 = vpack.c.b16 %v2901, %v2880
        %v4813 = vpack.c.b16 %v2902, %v2881
        %v4814 = vpack.c.b16 %v2903, %v2882
        %v4815 = vpack.c.b16 %v2904, %v2883
        %v4816 = vpack.c.b16 %v2905, %v2884
        %v4817 = vpack.c.b16 %v2906, %v2885
        %v4818 = vpack.c.b16 %v2907, %v2886
        %v4819 = vpack.c.b16 %v2908, %v2887
        %v4820 = vpack.c.b16 %v2909, %v2888
        %v4821 = vpack.c.b16 %v2910, %v2889
        %v4822 = vpack.c.b16 %v2911, %v2890
        %v4823 = vpack.c.b16 %v2912, %v2891
        %v4824 = vpack.c.b16 %v2913, %v2892
        %v4825 = vpack.c.b16 %v2914, %v2893
        %v4826 = vpack.c.b16 %v2915, %v2894
        %v4827 = vpack.c.b16 %v2916, %v2895
        %v4828 = vpack.c.b16 %v2917, %v2896
        %v4829 = vpack.c.b16 %v2918, %v2897
        %v4830 = vpack.c.b16 %v2919, %v2898
        %v4831 = vpack.c.b16 %v2941, %v2920
        %v4832 = vpack.c.b16 %v2942, %v2921
        %v4833 = vpack.c.b16 %v2943, %v2922
        %v4834 = vpack.c.b16 %v2944, %v2923
        %v4835 = vpack.c.b16 %v2945, %v2924
        %v4836 = vpack.c.b16 %v2946, %v2925
        %v4837 = vpack.c.b16 %v2947, %v2926
        %v4838 = vpack.c.b16 %v2948, %v2927
        %v4839 = vpack.c.b16 %v2949, %v2928
        %v4840 = vpack.c.b16 %v2950, %v2929
        %v4841 = vpack.c.b16 %v2951, %v2930
        %v4842 = vpack.c.b16 %v2952, %v2931
        %v4843 = vpack.c.b16 %v2953, %v2932
        %v4844 = vpack.c.b16 %v2954, %v2933
        %v4845 = vpack.c.b16 %v2955, %v2934
        %v4846 = vpack.c.b16 %v2956, %v2935
        %v4847 = vpack.c.b16 %v2957, %v2936
        %v4848 = vpack.c.b16 %v2958, %v2937
        %v4849 = vpack.c.b16 %v2959, %v2938
        %v4850 = vpack.c.b16 %v2960, %v2939
        %v4851 = vpack.c.b16 %v2961, %v2940
        %v4852 = vpack.c.b16 %v2983, %v2962
        %v4853 = vpack.c.b16 %v2984, %v2963
        %v4854 = vpack.c.b16 %v2985, %v2964
        %v4855 = vpack.c.b16 %v2986, %v2965
        %v4856 = vpack.c.b16 %v2987, %v2966
        %v4857 = vpack.c.b16 %v2988, %v2967
        %v4858 = vpack.c.b16 %v2989, %v2968
        %v4859 = vpack.c.b16 %v2990, %v2969
        %v4860 = vpack.c.b16 %v2991, %v2970
        %v4861 = vpack.c.b16 %v2992, %v2971
        %v4862 = vpack.c.b16 %v2993, %v2972
        %v4863 = vpack.c.b16 %v2994, %v2973
        %v4864 = vpack.c.b16 %v2995, %v2974
        %v4865 = vpack.c.b16 %v2996, %v2975
        %v4866 = vpack.c.b16 %v2997, %v2976
        %v4867 = vpack.c.b16 %v2998, %v2977
        %v4868 = vpack.c.b16 %v2999, %v2978
        %v4869 = vpack.c.b16 %v3000, %v2979
        %v4870 = vpack.c.b16 %v3001, %v2980
        %v4871 = vpack.c.b16 %v3002, %v2981
        %v4872 = vpack.c.b16 %v3003, %v2982
        %v4873 = vpack.c.b16 %v3025, %v3004
        %v4874 = vpack.c.b16 %v3026, %v3005
        %v4875 = vpack.c.b16 %v3027, %v3006
        %v4876 = vpack.c.b16 %v3028, %v3007
        %v4877 = vpack.c.b16 %v3029, %v3008
        %v4878 = vpack.c.b16 %v3030, %v3009
        %v4879 = vpack.c.b16 %v3031, %v3010
        %v4880 = vpack.c.b16 %v3032, %v3011
        %v4881 = vpack.c.b16 %v3033, %v3012
        %v4882 = vpack.c.b16 %v3034, %v3013
        %v4883 = vpack.c.b16 %v3035, %v3014
        %v4884 = vpack.c.b16 %v3036, %v3015
        %v4885 = vpack.c.b16 %v3037, %v3016
        %v4886 = vpack.c.b16 %v3038, %v3017
        %v4887 = vpack.c.b16 %v3039, %v3018
        %v4888 = vpack.c.b16 %v3040, %v3019
        %v4889 = vpack.c.b16 %v3041, %v3020
        %v4890 = vpack.c.b16 %v3042, %v3021
        %v4891 = vpack.c.b16 %v3043, %v3022
        %v4892 = vpack.c.b16 %v3044, %v3023
        %v4893 = vpack.c.b16 %v3045, %v3024
        %v4894 = vpack.c.b16 %v3067, %v3046
        %v4895 = vpack.c.b16 %v3068, %v3047
        %v4896 = vpack.c.b16 %v3069, %v3048
        %v4897 = vpack.c.b16 %v3070, %v3049
        %v4898 = vpack.c.b16 %v3071, %v3050
        %v4899 = vpack.c.b16 %v3072, %v3051
        %v4900 = vpack.c.b16 %v3073, %v3052
        %v4901 = vpack.c.b16 %v3074, %v3053
        %v4902 = vpack.c.b16 %v3075, %v3054
        %v4903 = vpack.c.b16 %v3076, %v3055
        %v4904 = vpack.c.b16 %v3077, %v3056
        %v4905 = vpack.c.b16 %v3078, %v3057
        %v4906 = vpack.c.b16 %v3079, %v3058
        %v4907 = vpack.c.b16 %v3080, %v3059
        %v4908 = vpack.c.b16 %v3081, %v3060
        %v4909 = vpack.c.b16 %v3082, %v3061
        %v4910 = vpack.c.b16 %v3083, %v3062
        %v4911 = vpack.c.b16 %v3084, %v3063
        %v4912 = vpack.c.b16 %v3085, %v3064
        %v4913 = vpack.c.b16 %v3086, %v3065
        %v4914 = vpack.c.b16 %v3087, %v3066
        %v4915 = vpack.c.b16 %v3109, %v3088
        %v4916 = vpack.c.b16 %v3110, %v3089
        %v4917 = vpack.c.b16 %v3111, %v3090
        %v4918 = vpack.c.b16 %v3112, %v3091
        %v4919 = vpack.c.b16 %v3113, %v3092
        %v4920 = vpack.c.b16 %v3114, %v3093
        %v4921 = vpack.c.b16 %v3115, %v3094
        %v4922 = vpack.c.b16 %v3116, %v3095
        %v4923 = vpack.c.b16 %v3117, %v3096
        %v4924 = vpack.c.b16 %v3118, %v3097
        %v4925 = vpack.c.b16 %v3119, %v3098
        %v4926 = vpack.c.b16 %v3120, %v3099
        %v4927 = vpack.c.b16 %v3121, %v3100
        %v4928 = vpack.c.b16 %v3122, %v3101
        %v4929 = vpack.c.b16 %v3123, %v3102
        %v4930 = vpack.c.b16 %v3124, %v3103
        %v4931 = vpack.c.b16 %v3125, %v3104
        %v4932 = vpack.c.b16 %v3126, %v3105
        %v4933 = vpack.c.b16 %v3127, %v3106
        %v4934 = vpack.c.b16 %v3128, %v3107
        %v4935 = vpack.c.b16 %v3129, %v3108
        %v4936 = vpack.c.b16 %v3151, %v3130
        %v4937 = vpack.c.b16 %v3152, %v3131
        %v4938 = vpack.c.b16 %v3153, %v3132
        %v4939 = vpack.c.b16 %v3154, %v3133
        %v4940 = vpack.c.b16 %v3155, %v3134
        %v4941 = vpack.c.b16 %v3156, %v3135
        %v4942 = vpack.c.b16 %v3157, %v3136
        %v4943 = vpack.c.b16 %v3158, %v3137
        %v4944 = vpack.c.b16 %v3159, %v3138
        %v4945 = vpack.c.b16 %v3160, %v3139
        %v4946 = vpack.c.b16 %v3161, %v3140
        %v4947 = vpack.c.b16 %v3162, %v3141
        %v4948 = vpack.c.b16 %v3163, %v3142
        %v4949 = vpack.c.b16 %v3164, %v3143
        %v4950 = vpack.c.b16 %v3165, %v3144
        %v4951 = vpack.c.b16 %v3166, %v3145
        %v4952 = vpack.c.b16 %v3167, %v3146
        %v4953 = vpack.c.b16 %v3168, %v3147
        %v4954 = vpack.c.b16 %v3169, %v3148
        %v4955 = vpack.c.b16 %v3170, %v3149
        %v4956 = vpack.c.b16 %v3171, %v3150
        %v4957 = vpack.c.b16 %v3193, %v3172
        %v4958 = vpack.c.b16 %v3194, %v3173
        %v4959 = vpack.c.b16 %v3195, %v3174
        %v4960 = vpack.c.b16 %v3196, %v3175
        %v4961 = vpack.c.b16 %v3197, %v3176
        %v4962 = vpack.c.b16 %v3198, %v3177
        %v4963 = vpack.c.b16 %v3199, %v3178
        %v4964 = vpack.c.b16 %v3200, %v3179
        %v4965 = vpack.c.b16 %v3201, %v3180
        %v4966 = vpack.c.b16 %v3202, %v3181
        %v4967 = vpack.c.b16 %v3203, %v3182
        %v4968 = vpack.c.b16 %v3204, %v3183
        %v4969 = vpack.c.b16 %v3205, %v3184
        %v4970 = vpack.c.b16 %v3206, %v3185
        %v4971 = vpack.c.b16 %v3207, %v3186
        %v4972 = vpack.c.b16 %v3208, %v3187
        %v4973 = vpack.c.b16 %v3209, %v3188
        %v4974 = vpack.c.b16 %v3210, %v3189
        %v4975 = vpack.c.b16 %v3211, %v3190
        %v4976 = vpack.c.b16 %v3212, %v3191
        %v4977 = vpack.c.b16 %v3213, %v3192
        %v4978 = vpack.c.b16 %v3235, %v3214
        %v4979 = vpack.c.b16 %v3236, %v3215
        %v4980 = vpack.c.b16 %v3237, %v3216
        %v4981 = vpack.c.b16 %v3238, %v3217
        %v4982 = vpack.c.b16 %v3239, %v3218
        %v4983 = vpack.c.b16 %v3240, %v3219
        %v4984 = vpack.c.b16 %v3241, %v3220
        %v4985 = vpack.c.b16 %v3242, %v3221
        %v4986 = vpack.c.b16 %v3243, %v3222
        %v4987 = vpack.c.b16 %v3244, %v3223
        %v4988 = vpack.c.b16 %v3245, %v3224
        %v4989 = vpack.c.b16 %v3246, %v3225
        %v4990 = vpack.c.b16 %v3247, %v3226
        %v4991 = vpack.c.b16 %v3248, %v3227
        %v4992 = vpack.c.b16 %v3249, %v3228
        %v4993 = vpack.c.b16 %v3250, %v3229
        %v4994 = vpack.c.b16 %v3251, %v3230
        %v4995 = vpack.c.b16 %v3252, %v3231
        %v4996 = vpack.c.b16 %v3253, %v3232
        %v4997 = vpack.c.b16 %v3254, %v3233
        %v4998 = vpack.c.b16 %v3255, %v3234
        %v4999 = vpack.c.b16 %v3277, %v3256
        %v5000 = vpack.c.b16 %v3278, %v3257
        %v5001 = vpack.c.b16 %v3279, %v3258
        %v5002 = vpack.c.b16 %v3280, %v3259
        %v5003 = vpack.c.b16 %v3281, %v3260
        %v5004 = vpack.c.b16 %v3282, %v3261
        %v5005 = vpack.c.b16 %v3283, %v3262
        %v5006 = vpack.c.b16 %v3284, %v3263
        %v5007 = vpack.c.b16 %v3285, %v3264
        %v5008 = vpack.c.b16 %v3286, %v3265
        %v5009 = vpack.c.b16 %v3287, %v3266
        %v5010 = vpack.c.b16 %v3288, %v3267
        %v5011 = vpack.c.b16 %v3289, %v3268
        %v5012 = vpack.c.b16 %v3290, %v3269
        %v5013 = vpack.c.b16 %v3291, %v3270
        %v5014 = vpack.c.b16 %v3292, %v3271
        %v5015 = vpack.c.b16 %v3293, %v3272
        %v5016 = vpack.c.b16 %v3294, %v3273
        %v5017 = vpack.c.b16 %v3295, %v3274
        %v5018 = vpack.c.b16 %v3296, %v3275
        %v5019 = vpack.c.b16 %v3297, %v3276
        %v5020 = vpack.c.b16 %v3319, %v3298
        %v5021 = vpack.c.b16 %v3320, %v3299
        %v5022 = vpack.c.b16 %v3321, %v3300
        %v5023 = vpack.c.b16 %v3322, %v3301
        %v5024 = vpack.c.b16 %v3323, %v3302
        %v5025 = vpack.c.b16 %v3324, %v3303
        %v5026 = vpack.c.b16 %v3325, %v3304
        %v5027 = vpack.c.b16 %v3326, %v3305
        %v5028 = vpack.c.b16 %v3327, %v3306
        %v5029 = vpack.c.b16 %v3328, %v3307
        %v5030 = vpack.c.b16 %v3329, %v3308
        %v5031 = vpack.c.b16 %v3330, %v3309
        %v5032 = vpack.c.b16 %v3331, %v3310
        %v5033 = vpack.c.b16 %v3332, %v3311
        %v5034 = vpack.c.b16 %v3333, %v3312
        %v5035 = vpack.c.b16 %v3334, %v3313
        %v5036 = vpack.c.b16 %v3335, %v3314
        %v5037 = vpack.c.b16 %v3336, %v3315
        %v5038 = vpack.c.b16 %v3337, %v3316
        %v5039 = vpack.c.b16 %v3338, %v3317
        %v5040 = vpack.c.b16 %v3339, %v3318
        %v5041 = vpack.c.b16 %v3361, %v3340
        %v5042 = vpack.c.b16 %v3362, %v3341
        %v5043 = vpack.c.b16 %v3363, %v3342
        %v5044 = vpack.c.b16 %v3364, %v3343
        %v5045 = vpack.c.b16 %v3365, %v3344
        %v5046 = vpack.c.b16 %v3366, %v3345
        %v5047 = vpack.c.b16 %v3367, %v3346
        %v5048 = vpack.c.b16 %v3368, %v3347
        %v5049 = vpack.c.b16 %v3369, %v3348
        %v5050 = vpack.c.b16 %v3370, %v3349
        %v5051 = vpack.c.b16 %v3371, %v3350
        %v5052 = vpack.c.b16 %v3372, %v3351
        %v5053 = vpack.c.b16 %v3373, %v3352
        %v5054 = vpack.c.b16 %v3374, %v3353
        %v5055 = vpack.c.b16 %v3375, %v3354
        %v5056 = vpack.c.b16 %v3376, %v3355
        %v5057 = vpack.c.b16 %v3377, %v3356
        %v5058 = vpack.c.b16 %v3378, %v3357
        %v5059 = vpack.c.b16 %v3379, %v3358
        %v5060 = vpack.c.b16 %v3380, %v3359
        %v5061 = vpack.c.b16 %v3381, %v3360
        %v5062 = vpack.c.b16 %v3403, %v3382
        %v5063 = vpack.c.b16 %v3404, %v3383
        %v5064 = vpack.c.b16 %v3405, %v3384
        %v5065 = vpack.c.b16 %v3406, %v3385
        %v5066 = vpack.c.b16 %v3407, %v3386
        %v5067 = vpack.c.b16 %v3408, %v3387
        %v5068 = vpack.c.b16 %v3409, %v3388
        %v5069 = vpack.c.b16 %v3410, %v3389
        %v5070 = vpack.c.b16 %v3411, %v3390
        %v5071 = vpack.c.b16 %v3412, %v3391
        %v5072 = vpack.c.b16 %v3413, %v3392
        %v5073 = vpack.c.b16 %v3414, %v3393
        %v5074 = vpack.c.b16 %v3415, %v3394
        %v5075 = vpack.c.b16 %v3416, %v3395
        %v5076 = vpack.c.b16 %v3417, %v3396
        %v5077 = vpack.c.b16 %v3418, %v3397
        %v5078 = vpack.c.b16 %v3419, %v3398
        %v5079 = vpack.c.b16 %v3420, %v3399
        %v5080 = vpack.c.b16 %v3421, %v3400
        %v5081 = vpack.c.b16 %v3422, %v3401
        %v5082 = vpack.c.b16 %v3423, %v3402
        %v5083 = vpack.c.b16 %v3445, %v3424
        %v5084 = vpack.c.b16 %v3446, %v3425
        %v5085 = vpack.c.b16 %v3447, %v3426
        %v5086 = vpack.c.b16 %v3448, %v3427
        %v5087 = vpack.c.b16 %v3449, %v3428
        %v5088 = vpack.c.b16 %v3450, %v3429
        %v5089 = vpack.c.b16 %v3451, %v3430
        %v5090 = vpack.c.b16 %v3452, %v3431
        %v5091 = vpack.c.b16 %v3453, %v3432
        %v5092 = vpack.c.b16 %v3454, %v3433
        %v5093 = vpack.c.b16 %v3455, %v3434
        %v5094 = vpack.c.b16 %v3456, %v3435
        %v5095 = vpack.c.b16 %v3457, %v3436
        %v5096 = vpack.c.b16 %v3458, %v3437
        %v5097 = vpack.c.b16 %v3459, %v3438
        %v5098 = vpack.c.b16 %v3460, %v3439
        %v5099 = vpack.c.b16 %v3461, %v3440
        %v5100 = vpack.c.b16 %v3462, %v3441
        %v5101 = vpack.c.b16 %v3463, %v3442
        %v5102 = vpack.c.b16 %v3464, %v3443
        %v5103 = vpack.c.b16 %v3465, %v3444
        %v5104 = vpack.c.b16 %v3487, %v3466
        %v5105 = vpack.c.b16 %v3488, %v3467
        %v5106 = vpack.c.b16 %v3489, %v3468
        %v5107 = vpack.c.b16 %v3490, %v3469
        %v5108 = vpack.c.b16 %v3491, %v3470
        %v5109 = vpack.c.b16 %v3492, %v3471
        %v5110 = vpack.c.b16 %v3493, %v3472
        %v5111 = vpack.c.b16 %v3494, %v3473
        %v5112 = vpack.c.b16 %v3495, %v3474
        %v5113 = vpack.c.b16 %v3496, %v3475
        %v5114 = vpack.c.b16 %v3497, %v3476
        %v5115 = vpack.c.b16 %v3498, %v3477
        %v5116 = vpack.c.b16 %v3499, %v3478
        %v5117 = vpack.c.b16 %v3500, %v3479
        %v5118 = vpack.c.b16 %v3501, %v3480
        %v5119 = vpack.c.b16 %v3502, %v3481
        %v5120 = vpack.c.b16 %v3503, %v3482
        %v5121 = vpack.c.b16 %v3504, %v3483
        %v5122 = vpack.c.b16 %v3505, %v3484
        %v5123 = vpack.c.b16 %v3506, %v3485
        %v5124 = vpack.c.b16 %v3507, %v3486
        %v5125 = vpack.c.b16 %v3529, %v3508
        %v5126 = vpack.c.b16 %v3530, %v3509
        %v5127 = vpack.c.b16 %v3531, %v3510
        %v5128 = vpack.c.b16 %v3532, %v3511
        %v5129 = vpack.c.b16 %v3533, %v3512
        %v5130 = vpack.c.b16 %v3534, %v3513
        %v5131 = vpack.c.b16 %v3535, %v3514
        %v5132 = vpack.c.b16 %v3536, %v3515
        %v5133 = vpack.c.b16 %v3537, %v3516
        %v5134 = vpack.c.b16 %v3538, %v3517
        %v5135 = vpack.c.b16 %v3539, %v3518
        %v5136 = vpack.c.b16 %v3540, %v3519
        %v5137 = vpack.c.b16 %v3541, %v3520
        %v5138 = vpack.c.b16 %v3542, %v3521
        %v5139 = vpack.c.b16 %v3543, %v3522
        %v5140 = vpack.c.b16 %v3544, %v3523
        %v5141 = vpack.c.b16 %v3545, %v3524
        %v5142 = vpack.c.b16 %v3546, %v3525
        %v5143 = vpack.c.b16 %v3547, %v3526
        %v5144 = vpack.c.b16 %v3548, %v3527
        %v5145 = vpack.c.b16 %v3549, %v3528
        %v5146 = vpack.c.b16 %v3571, %v3550
        %v5147 = vpack.c.b16 %v3572, %v3551
        %v5148 = vpack.c.b16 %v3573, %v3552
        %v5149 = vpack.c.b16 %v3574, %v3553
        %v5150 = vpack.c.b16 %v3575, %v3554
        %v5151 = vpack.c.b16 %v3576, %v3555
        %v5152 = vpack.c.b16 %v3577, %v3556
        %v5153 = vpack.c.b16 %v3578, %v3557
        %v5154 = vpack.c.b16 %v3579, %v3558
        %v5155 = vpack.c.b16 %v3580, %v3559
        %v5156 = vpack.c.b16 %v3581, %v3560
        %v5157 = vpack.c.b16 %v3582, %v3561
        %v5158 = vpack.c.b16 %v3583, %v3562
        %v5159 = vpack.c.b16 %v3584, %v3563
        %v5160 = vpack.c.b16 %v3585, %v3564
        %v5161 = vpack.c.b16 %v3586, %v3565
        %v5162 = vpack.c.b16 %v3587, %v3566
        %v5163 = vpack.c.b16 %v3588, %v3567
        %v5164 = vpack.c.b16 %v3589, %v3568
        %v5165 = vpack.c.b16 %v3590, %v3569
        %v5166 = vpack.c.b16 %v3591, %v3570
        %v5167 = vpack.c.b16 %v3613, %v3592
        %v5168 = vpack.c.b16 %v3614, %v3593
        %v5169 = vpack.c.b16 %v3615, %v3594
        %v5170 = vpack.c.b16 %v3616, %v3595
        %v5171 = vpack.c.b16 %v3617, %v3596
        %v5172 = vpack.c.b16 %v3618, %v3597
        %v5173 = vpack.c.b16 %v3619, %v3598
        %v5174 = vpack.c.b16 %v3620, %v3599
        %v5175 = vpack.c.b16 %v3621, %v3600
        %v5176 = vpack.c.b16 %v3622, %v3601
        %v5177 = vpack.c.b16 %v3623, %v3602
        %v5178 = vpack.c.b16 %v3624, %v3603
        %v5179 = vpack.c.b16 %v3625, %v3604
        %v5180 = vpack.c.b16 %v3626, %v3605
        %v5181 = vpack.c.b16 %v3627, %v3606
        %v5182 = vpack.c.b16 %v3628, %v3607
        %v5183 = vpack.c.b16 %v3629, %v3608
        %v5184 = vpack.c.b16 %v3630, %v3609
        %v5185 = vpack.c.b16 %v3631, %v3610
        %v5186 = vpack.c.b16 %v3632, %v3611
        %v5187 = vpack.c.b16 %v3633, %v3612
        %v5188 = vpack.c.b16 %v3655, %v3634
        %v5189 = vpack.c.b16 %v3656, %v3635
        %v5190 = vpack.c.b16 %v3657, %v3636
        %v5191 = vpack.c.b16 %v3658, %v3637
        %v5192 = vpack.c.b16 %v3659, %v3638
        %v5193 = vpack.c.b16 %v3660, %v3639
        %v5194 = vpack.c.b16 %v3661, %v3640
        %v5195 = vpack.c.b16 %v3662, %v3641
        %v5196 = vpack.c.b16 %v3663, %v3642
        %v5197 = vpack.c.b16 %v3664, %v3643
        %v5198 = vpack.c.b16 %v3665, %v3644
        %v5199 = vpack.c.b16 %v3666, %v3645
        %v5200 = vpack.c.b16 %v3667, %v3646
        %v5201 = vpack.c.b16 %v3668, %v3647
        %v5202 = vpack.c.b16 %v3669, %v3648
        %v5203 = vpack.c.b16 %v3670, %v3649
        %v5204 = vpack.c.b16 %v3671, %v3650
        %v5205 = vpack.c.b16 %v3672, %v3651
        %v5206 = vpack.c.b16 %v3673, %v3652
        %v5207 = vpack.c.b16 %v3674, %v3653
        %v5208 = vpack.c.b16 %v3675, %v3654
        %v5209 = vpack.c.b16 %v3697, %v3676
        %v5210 = vpack.c.b16 %v3698, %v3677
        %v5211 = vpack.c.b16 %v3699, %v3678
        %v5212 = vpack.c.b16 %v3700, %v3679
        %v5213 = vpack.c.b16 %v3701, %v3680
        %v5214 = vpack.c.b16 %v3702, %v3681
        %v5215 = vpack.c.b16 %v3703, %v3682
        %v5216 = vpack.c.b16 %v3704, %v3683
        %v5217 = vpack.c.b16 %v3705, %v3684
        %v5218 = vpack.c.b16 %v3706, %v3685
        %v5219 = vpack.c.b16 %v3707, %v3686
        %v5220 = vpack.c.b16 %v3708, %v3687
        %v5221 = vpack.c.b16 %v3709, %v3688
        %v5222 = vpack.c.b16 %v3710, %v3689
        %v5223 = vpack.c.b16 %v3711, %v3690
        %v5224 = vpack.c.b16 %v3712, %v3691
        %v5225 = vpack.c.b16 %v3713, %v3692
        %v5226 = vpack.c.b16 %v3714, %v3693
        %v5227 = vpack.c.b16 %v3715, %v3694
        %v5228 = vpack.c.b16 %v3716, %v3695
        %v5229 = vpack.c.b16 %v3717, %v3696
        %v5230 = vpack.c.b16 %v3739, %v3718
        %v5231 = vpack.c.b16 %v3740, %v3719
        %v5232 = vpack.c.b16 %v3741, %v3720
        %v5233 = vpack.c.b16 %v3742, %v3721
        %v5234 = vpack.c.b16 %v3743, %v3722
        %v5235 = vpack.c.b16 %v3744, %v3723
        %v5236 = vpack.c.b16 %v3745, %v3724
        %v5237 = vpack.c.b16 %v3746, %v3725
        %v5238 = vpack.c.b16 %v3747, %v3726
        %v5239 = vpack.c.b16 %v3748, %v3727
        %v5240 = vpack.c.b16 %v3749, %v3728
        %v5241 = vpack.c.b16 %v3750, %v3729
        %v5242 = vpack.c.b16 %v3751, %v3730
        %v5243 = vpack.c.b16 %v3752, %v3731
        %v5244 = vpack.c.b16 %v3753, %v3732
        %v5245 = vpack.c.b16 %v3754, %v3733
        %v5246 = vpack.c.b16 %v3755, %v3734
        %v5247 = vpack.c.b16 %v3756, %v3735
        %v5248 = vpack.c.b16 %v3757, %v3736
        %v5249 = vpack.c.b16 %v3758, %v3737
        %v5250 = vpack.c.b16 %v3759, %v3738
        %v5251 = vpack.c.b16 %v3781, %v3760
        %v5252 = vpack.c.b16 %v3782, %v3761
        %v5253 = vpack.c.b16 %v3783, %v3762
        %v5254 = vpack.c.b16 %v3784, %v3763
        %v5255 = vpack.c.b16 %v3785, %v3764
        %v5256 = vpack.c.b16 %v3786, %v3765
        %v5257 = vpack.c.b16 %v3787, %v3766
        %v5258 = vpack.c.b16 %v3788, %v3767
        %v5259 = vpack.c.b16 %v3789, %v3768
        %v5260 = vpack.c.b16 %v3790, %v3769
        %v5261 = vpack.c.b16 %v3791, %v3770
        %v5262 = vpack.c.b16 %v3792, %v3771
        %v5263 = vpack.c.b16 %v3793, %v3772
        %v5264 = vpack.c.b16 %v3794, %v3773
        %v5265 = vpack.c.b16 %v3795, %v3774
        %v5266 = vpack.c.b16 %v3796, %v3775
        %v5267 = vpack.c.b16 %v3797, %v3776
        %v5268 = vpack.c.b16 %v3798, %v3777
        %v5269 = vpack.c.b16 %v3799, %v3778
        %v5270 = vpack.c.b16 %v3800, %v3779
        %v5271 = vpack.c.b16 %v3801, %v3780
        %v5272 = vpack.c.b16 %v3823, %v3802
        %v5273 = vpack.c.b16 %v3824, %v3803
        %v5274 = vpack.c.b16 %v3825, %v3804
        %v5275 = vpack.c.b16 %v3826, %v3805
        %v5276 = vpack.c.b16 %v3827, %v3806
        %v5277 = vpack.c.b16 %v3828, %v3807
        %v5278 = vpack.c.b16 %v3829, %v3808
        %v5279 = vpack.c.b16 %v3830, %v3809
        %v5280 = vpack.c.b16 %v3831, %v3810
        %v5281 = vpack.c.b16 %v3832, %v3811
        %v5282 = vpack.c.b16 %v3833, %v3812
        %v5283 = vpack.c.b16 %v3834, %v3813
        %v5284 = vpack.c.b16 %v3835, %v3814
        %v5285 = vpack.c.b16 %v3836, %v3815
        %v5286 = vpack.c.b16 %v3837, %v3816
        %v5287 = vpack.c.b16 %v3838, %v3817
        %v5288 = vpack.c.b16 %v3839, %v3818
        %v5289 = vpack.c.b16 %v3840, %v3819
        %v5290 = vpack.c.b16 %v3841, %v3820
        %v5291 = vpack.c.b16 %v3842, %v3821
        %v5292 = vpack.c.b16 %v3843, %v3822
        %v5293 = vpack.c.b16 %v3865, %v3844
        %v5294 = vpack.c.b16 %v3866, %v3845
        %v5295 = vpack.c.b16 %v3867, %v3846
        %v5296 = vpack.c.b16 %v3868, %v3847
        %v5297 = vpack.c.b16 %v3869, %v3848
        %v5298 = vpack.c.b16 %v3870, %v3849
        %v5299 = vpack.c.b16 %v3871, %v3850
        %v5300 = vpack.c.b16 %v3872, %v3851
        %v5301 = vpack.c.b16 %v3873, %v3852
        %v5302 = vpack.c.b16 %v3874, %v3853
        %v5303 = vpack.c.b16 %v3875, %v3854
        %v5304 = vpack.c.b16 %v3876, %v3855
        %v5305 = vpack.c.b16 %v3877, %v3856
        %v5306 = vpack.c.b16 %v3878, %v3857
        %v5307 = vpack.c.b16 %v3879, %v3858
        %v5308 = vpack.c.b16 %v3880, %v3859
        %v5309 = vpack.c.b16 %v3881, %v3860
        %v5310 = vpack.c.b16 %v3882, %v3861
        %v5311 = vpack.c.b16 %v3883, %v3862
        %v5312 = vpack.c.b16 %v3884, %v3863
        %v5313 = vpack.c.b16 %v3885, %v3864
        %v5314 = vpack.c.b16 %v3907, %v3886
        %v5315 = vpack.c.b16 %v3908, %v3887
        %v5316 = vpack.c.b16 %v3909, %v3888
        %v5317 = vpack.c.b16 %v3910, %v3889
        %v5318 = vpack.c.b16 %v3911, %v3890
        %v5319 = vpack.c.b16 %v3912, %v3891
        %v5320 = vpack.c.b16 %v3913, %v3892
        %v5321 = vpack.c.b16 %v3914, %v3893
        %v5322 = vpack.c.b16 %v3915, %v3894
        %v5323 = vpack.c.b16 %v3916, %v3895
        %v5324 = vpack.c.b16 %v3917, %v3896
        %v5325 = vpack.c.b16 %v3918, %v3897
        %v5326 = vpack.c.b16 %v3919, %v3898
        %v5327 = vpack.c.b16 %v3920, %v3899
        %v5328 = vpack.c.b16 %v3921, %v3900
        %v5329 = vpack.c.b16 %v3922, %v3901
        %v5330 = vpack.c.b16 %v3923, %v3902
        %v5331 = vpack.c.b16 %v3924, %v3903
        %v5332 = vpack.c.b16 %v3925, %v3904
        %v5333 = vpack.c.b16 %v3926, %v3905
        %v5334 = vpack.c.b16 %v3927, %v3906
        %v5335 = vpack.c.b16 %v3949, %v3928
        %v5336 = vpack.c.b16 %v3950, %v3929
        %v5337 = vpack.c.b16 %v3951, %v3930
        %v5338 = vpack.c.b16 %v3952, %v3931
        %v5339 = vpack.c.b16 %v3953, %v3932
        %v5340 = vpack.c.b16 %v3954, %v3933
        %v5341 = vpack.c.b16 %v3955, %v3934
        %v5342 = vpack.c.b16 %v3956, %v3935
        %v5343 = vpack.c.b16 %v3957, %v3936
        %v5344 = vpack.c.b16 %v3958, %v3937
        %v5345 = vpack.c.b16 %v3959, %v3938
        %v5346 = vpack.c.b16 %v3960, %v3939
        %v5347 = vpack.c.b16 %v3961, %v3940
        %v5348 = vpack.c.b16 %v3962, %v3941
        %v5349 = vpack.c.b16 %v3963, %v3942
        %v5350 = vpack.c.b16 %v3964, %v3943
        %v5351 = vpack.c.b16 %v3965, %v3944
        %v5352 = vpack.c.b16 %v3966, %v3945
        %v5353 = vpack.c.b16 %v3967, %v3946
        %v5354 = vpack.c.b16 %v3968, %v3947
        %v5355 = vpack.c.b16 %v3969, %v3948
        %v5356 = vpack.c.b16 %v3991, %v3970
        %v5357 = vpack.c.b16 %v3992, %v3971
        %v5358 = vpack.c.b16 %v3993, %v3972
        %v5359 = vpack.c.b16 %v3994, %v3973
        %v5360 = vpack.c.b16 %v3995, %v3974
        %v5361 = vpack.c.b16 %v3996, %v3975
        %v5362 = vpack.c.b16 %v3997, %v3976
        %v5363 = vpack.c.b16 %v3998, %v3977
        %v5364 = vpack.c.b16 %v3999, %v3978
        %v5365 = vpack.c.b16 %v4000, %v3979
        %v5366 = vpack.c.b16 %v4001, %v3980
        %v5367 = vpack.c.b16 %v4002, %v3981
        %v5368 = vpack.c.b16 %v4003, %v3982
        %v5369 = vpack.c.b16 %v4004, %v3983
        %v5370 = vpack.c.b16 %v4005, %v3984
        %v5371 = vpack.c.b16 %v4006, %v3985
        %v5372 = vpack.c.b16 %v4007, %v3986
        %v5373 = vpack.c.b16 %v4008, %v3987
        %v5374 = vpack.c.b16 %v4009, %v3988
        %v5375 = vpack.c.b16 %v4010, %v3989
        %v5376 = vpack.c.b16 %v4011, %v3990
        %v5377 = vpack.c.b16 %v4033, %v4012
        %v5378 = vpack.c.b16 %v4034, %v4013
        %v5379 = vpack.c.b16 %v4035, %v4014
        %v5380 = vpack.c.b16 %v4036, %v4015
        %v5381 = vpack.c.b16 %v4037, %v4016
        %v5382 = vpack.c.b16 %v4038, %v4017
        %v5383 = vpack.c.b16 %v4039, %v4018
        %v5384 = vpack.c.b16 %v4040, %v4019
        %v5385 = vpack.c.b16 %v4041, %v4020
        %v5386 = vpack.c.b16 %v4042, %v4021
        %v5387 = vpack.c.b16 %v4043, %v4022
        %v5388 = vpack.c.b16 %v4044, %v4023
        %v5389 = vpack.c.b16 %v4045, %v4024
        %v5390 = vpack.c.b16 %v4046, %v4025
        %v5391 = vpack.c.b16 %v4047, %v4026
        %v5392 = vpack.c.b16 %v4048, %v4027
        %v5393 = vpack.c.b16 %v4049, %v4028
        %v5394 = vpack.c.b16 %v4050, %v4029
        %v5395 = vpack.c.b16 %v4051, %v4030
        %v5396 = vpack.c.b16 %v4052, %v4031
        %v5397 = vpack.c.b16 %v4053, %v4032
        %v5398 = vpack.c.b16 %v4075, %v4054
        %v5399 = vpack.c.b16 %v4076, %v4055
        %v5400 = vpack.c.b16 %v4077, %v4056
        %v5401 = vpack.c.b16 %v4078, %v4057
        %v5402 = vpack.c.b16 %v4079, %v4058
        %v5403 = vpack.c.b16 %v4080, %v4059
        %v5404 = vpack.c.b16 %v4081, %v4060
        %v5405 = vpack.c.b16 %v4082, %v4061
        %v5406 = vpack.c.b16 %v4083, %v4062
        %v5407 = vpack.c.b16 %v4084, %v4063
        %v5408 = vpack.c.b16 %v4085, %v4064
        %v5409 = vpack.c.b16 %v4086, %v4065
        %v5410 = vpack.c.b16 %v4087, %v4066
        %v5411 = vpack.c.b16 %v4088, %v4067
        %v5412 = vpack.c.b16 %v4089, %v4068
        %v5413 = vpack.c.b16 %v4090, %v4069
        %v5414 = vpack.c.b16 %v4091, %v4070
        %v5415 = vpack.c.b16 %v4092, %v4071
        %v5416 = vpack.c.b16 %v4093, %v4072
        %v5417 = vpack.c.b16 %v4094, %v4073
        %v5418 = vpack.c.b16 %v4095, %v4074
        %v5419 = vpack.c.b16 %v4117, %v4096
        %v5420 = vpack.c.b16 %v4118, %v4097
        %v5421 = vpack.c.b16 %v4119, %v4098
        %v5422 = vpack.c.b16 %v4120, %v4099
        %v5423 = vpack.c.b16 %v4121, %v4100
        %v5424 = vpack.c.b16 %v4122, %v4101
        %v5425 = vpack.c.b16 %v4123, %v4102
        %v5426 = vpack.c.b16 %v4124, %v4103
        %v5427 = vpack.c.b16 %v4125, %v4104
        %v5428 = vpack.c.b16 %v4126, %v4105
        %v5429 = vpack.c.b16 %v4127, %v4106
        %v5430 = vpack.c.b16 %v4128, %v4107
        %v5431 = vpack.c.b16 %v4129, %v4108
        %v5432 = vpack.c.b16 %v4130, %v4109
        %v5433 = vpack.c.b16 %v4131, %v4110
        %v5434 = vpack.c.b16 %v4132, %v4111
        %v5435 = vpack.c.b16 %v4133, %v4112
        %v5436 = vpack.c.b16 %v4134, %v4113
        %v5437 = vpack.c.b16 %v4135, %v4114
        %v5438 = vpack.c.b16 %v4136, %v4115
        %v5439 = vpack.c.b16 %v4137, %v4116
        %v5440 = vpack.c.b16 %v4159, %v4138
        %v5441 = vpack.c.b16 %v4160, %v4139
        %v5442 = vpack.c.b16 %v4161, %v4140
        %v5443 = vpack.c.b16 %v4162, %v4141
        %v5444 = vpack.c.b16 %v4163, %v4142
        %v5445 = vpack.c.b16 %v4164, %v4143
        %v5446 = vpack.c.b16 %v4165, %v4144
        %v5447 = vpack.c.b16 %v4166, %v4145
        %v5448 = vpack.c.b16 %v4167, %v4146
        %v5449 = vpack.c.b16 %v4168, %v4147
        %v5450 = vpack.c.b16 %v4169, %v4148
        %v5451 = vpack.c.b16 %v4170, %v4149
        %v5452 = vpack.c.b16 %v4171, %v4150
        %v5453 = vpack.c.b16 %v4172, %v4151
        %v5454 = vpack.c.b16 %v4173, %v4152
        %v5455 = vpack.c.b16 %v4174, %v4153
        %v5456 = vpack.c.b16 %v4175, %v4154
        %v5457 = vpack.c.b16 %v4176, %v4155
        %v5458 = vpack.c.b16 %v4177, %v4156
        %v5459 = vpack.c.b16 %v4178, %v4157
        %v5460 = vpack.c.b16 %v4179, %v4158
        %v5461 = vpack.c.b16 %v4201, %v4180
        %v5462 = vpack.c.b16 %v4202, %v4181
        %v5463 = vpack.c.b16 %v4203, %v4182
        %v5464 = vpack.c.b16 %v4204, %v4183
        %v5465 = vpack.c.b16 %v4205, %v4184
        %v5466 = vpack.c.b16 %v4206, %v4185
        %v5467 = vpack.c.b16 %v4207, %v4186
        %v5468 = vpack.c.b16 %v4208, %v4187
        %v5469 = vpack.c.b16 %v4209, %v4188
        %v5470 = vpack.c.b16 %v4210, %v4189
        %v5471 = vpack.c.b16 %v4211, %v4190
        %v5472 = vpack.c.b16 %v4212, %v4191
        %v5473 = vpack.c.b16 %v4213, %v4192
        %v5474 = vpack.c.b16 %v4214, %v4193
        %v5475 = vpack.c.b16 %v4215, %v4194
        %v5476 = vpack.c.b16 %v4216, %v4195
        %v5477 = vpack.c.b16 %v4217, %v4196
        %v5478 = vpack.c.b16 %v4218, %v4197
        %v5479 = vpack.c.b16 %v4219, %v4198
        %v5480 = vpack.c.b16 %v4220, %v4199
        %v5481 = vpack.c.b16 %v4221, %v4200
        %v5482 = vpack.c.b16 %v4243, %v4222
        %v5483 = vpack.c.b16 %v4244, %v4223
        %v5484 = vpack.c.b16 %v4245, %v4224
        %v5485 = vpack.c.b16 %v4246, %v4225
        %v5486 = vpack.c.b16 %v4247, %v4226
        %v5487 = vpack.c.b16 %v4248, %v4227
        %v5488 = vpack.c.b16 %v4249, %v4228
        %v5489 = vpack.c.b16 %v4250, %v4229
        %v5490 = vpack.c.b16 %v4251, %v4230
        %v5491 = vpack.c.b16 %v4252, %v4231
        %v5492 = vpack.c.b16 %v4253, %v4232
        %v5493 = vpack.c.b16 %v4254, %v4233
        %v5494 = vpack.c.b16 %v4255, %v4234
        %v5495 = vpack.c.b16 %v4256, %v4235
        %v5496 = vpack.c.b16 %v4257, %v4236
        %v5497 = vpack.c.b16 %v4258, %v4237
        %v5498 = vpack.c.b16 %v4259, %v4238
        %v5499 = vpack.c.b16 %v4260, %v4239
        %v5500 = vpack.c.b16 %v4261, %v4240
        %v5501 = vpack.c.b16 %v4262, %v4241
        %v5502 = vpack.c.b16 %v4263, %v4242
        %v5503 = vpack.c.b16 %v4285, %v4264
        %v5504 = vpack.c.b16 %v4286, %v4265
        %v5505 = vpack.c.b16 %v4287, %v4266
        %v5506 = vpack.c.b16 %v4288, %v4267
        %v5507 = vpack.c.b16 %v4289, %v4268
        %v5508 = vpack.c.b16 %v4290, %v4269
        %v5509 = vpack.c.b16 %v4291, %v4270
        %v5510 = vpack.c.b16 %v4292, %v4271
        %v5511 = vpack.c.b16 %v4293, %v4272
        %v5512 = vpack.c.b16 %v4294, %v4273
        %v5513 = vpack.c.b16 %v4295, %v4274
        %v5514 = vpack.c.b16 %v4296, %v4275
        %v5515 = vpack.c.b16 %v4297, %v4276
        %v5516 = vpack.c.b16 %v4298, %v4277
        %v5517 = vpack.c.b16 %v4299, %v4278
        %v5518 = vpack.c.b16 %v4300, %v4279
        %v5519 = vpack.c.b16 %v4301, %v4280
        %v5520 = vpack.c.b16 %v4302, %v4281
        %v5521 = vpack.c.b16 %v4303, %v4282
        %v5522 = vpack.c.b16 %v4304, %v4283
        %v5523 = vpack.c.b16 %v4305, %v4284
        %v5524 = vpack.c.b16 %v4327, %v4306
        %v5525 = vpack.c.b16 %v4328, %v4307
        %v5526 = vpack.c.b16 %v4329, %v4308
        %v5527 = vpack.c.b16 %v4330, %v4309
        %v5528 = vpack.c.b16 %v4331, %v4310
        %v5529 = vpack.c.b16 %v4332, %v4311
        %v5530 = vpack.c.b16 %v4333, %v4312
        %v5531 = vpack.c.b16 %v4334, %v4313
        %v5532 = vpack.c.b16 %v4335, %v4314
        %v5533 = vpack.c.b16 %v4336, %v4315
        %v5534 = vpack.c.b16 %v4337, %v4316
        %v5535 = vpack.c.b16 %v4338, %v4317
        %v5536 = vpack.c.b16 %v4339, %v4318
        %v5537 = vpack.c.b16 %v4340, %v4319
        %v5538 = vpack.c.b16 %v4341, %v4320
        %v5539 = vpack.c.b16 %v4342, %v4321
        %v5540 = vpack.c.b16 %v4343, %v4322
        %v5541 = vpack.c.b16 %v4344, %v4323
        %v5542 = vpack.c.b16 %v4345, %v4324
        %v5543 = vpack.c.b16 %v4346, %v4325
        %v5544 = vpack.c.b16 %v4347, %v4326
        %v5545 = vpack.c.b16 %v4369, %v4348
        %v5546 = vpack.c.b16 %v4370, %v4349
        %v5547 = vpack.c.b16 %v4371, %v4350
        %v5548 = vpack.c.b16 %v4372, %v4351
        %v5549 = vpack.c.b16 %v4373, %v4352
        %v5550 = vpack.c.b16 %v4374, %v4353
        %v5551 = vpack.c.b16 %v4375, %v4354
        %v5552 = vpack.c.b16 %v4376, %v4355
        %v5553 = vpack.c.b16 %v4377, %v4356
        %v5554 = vpack.c.b16 %v4378, %v4357
        %v5555 = vpack.c.b16 %v4379, %v4358
        %v5556 = vpack.c.b16 %v4380, %v4359
        %v5557 = vpack.c.b16 %v4381, %v4360
        %v5558 = vpack.c.b16 %v4382, %v4361
        %v5559 = vpack.c.b16 %v4383, %v4362
        %v5560 = vpack.c.b16 %v4384, %v4363
        %v5561 = vpack.c.b16 %v4385, %v4364
        %v5562 = vpack.c.b16 %v4386, %v4365
        %v5563 = vpack.c.b16 %v4387, %v4366
        %v5564 = vpack.c.b16 %v4388, %v4367
        %v5565 = vpack.c.b16 %v4389, %v4368
        %v5566 = vpack.c.b16 %v4411, %v4390
        %v5567 = vpack.c.b16 %v4412, %v4391
        %v5568 = vpack.c.b16 %v4413, %v4392
        %v5569 = vpack.c.b16 %v4414, %v4393
        %v5570 = vpack.c.b16 %v4415, %v4394
        %v5571 = vpack.c.b16 %v4416, %v4395
        %v5572 = vpack.c.b16 %v4417, %v4396
        %v5573 = vpack.c.b16 %v4418, %v4397
        %v5574 = vpack.c.b16 %v4419, %v4398
        %v5575 = vpack.c.b16 %v4420, %v4399
        %v5576 = vpack.c.b16 %v4421, %v4400
        %v5577 = vpack.c.b16 %v4422, %v4401
        %v5578 = vpack.c.b16 %v4423, %v4402
        %v5579 = vpack.c.b16 %v4424, %v4403
        %v5580 = vpack.c.b16 %v4425, %v4404
        %v5581 = vpack.c.b16 %v4426, %v4405
        %v5582 = vpack.c.b16 %v4427, %v4406
        %v5583 = vpack.c.b16 %v4428, %v4407
        %v5584 = vpack.c.b16 %v4429, %v4408
        %v5585 = vpack.c.b16 %v4430, %v4409
        %v5586 = vpack.c.b16 %v4431, %v4410
        %v5587 = vpack.c.b16 %v4453, %v4432
        %v5588 = vpack.c.b16 %v4454, %v4433
        %v5589 = vpack.c.b16 %v4455, %v4434
        %v5590 = vpack.c.b16 %v4456, %v4435
        %v5591 = vpack.c.b16 %v4457, %v4436
        %v5592 = vpack.c.b16 %v4458, %v4437
        %v5593 = vpack.c.b16 %v4459, %v4438
        %v5594 = vpack.c.b16 %v4460, %v4439
        %v5595 = vpack.c.b16 %v4461, %v4440
        %v5596 = vpack.c.b16 %v4462, %v4441
        %v5597 = vpack.c.b16 %v4463, %v4442
        %v5598 = vpack.c.b16 %v4464, %v4443
        %v5599 = vpack.c.b16 %v4465, %v4444
        %v5600 = vpack.c.b16 %v4466, %v4445
        %v5601 = vpack.c.b16 %v4467, %v4446
        %v5602 = vpack.c.b16 %v4468, %v4447
        %v5603 = vpack.c.b16 %v4469, %v4448
        %v5604 = vpack.c.b16 %v4470, %v4449
        %v5605 = vpack.c.b16 %v4471, %v4450
        %v5606 = vpack.c.b16 %v4472, %v4451
        %v5607 = vpack.c.b16 %v4473, %v4452
        %v5608 = vpack.c.b16 %v4495, %v4474
        %v5609 = vpack.c.b16 %v4496, %v4475
        %v5610 = vpack.c.b16 %v4497, %v4476
        %v5611 = vpack.c.b16 %v4498, %v4477
        %v5612 = vpack.c.b16 %v4499, %v4478
        %v5613 = vpack.c.b16 %v4500, %v4479
        %v5614 = vpack.c.b16 %v4501, %v4480
        %v5615 = vpack.c.b16 %v4502, %v4481
        %v5616 = vpack.c.b16 %v4503, %v4482
        %v5617 = vpack.c.b16 %v4504, %v4483
        %v5618 = vpack.c.b16 %v4505, %v4484
        %v5619 = vpack.c.b16 %v4506, %v4485
        %v5620 = vpack.c.b16 %v4507, %v4486
        %v5621 = vpack.c.b16 %v4508, %v4487
        %v5622 = vpack.c.b16 %v4509, %v4488
        %v5623 = vpack.c.b16 %v4510, %v4489
        %v5624 = vpack.c.b16 %v4511, %v4490
        %v5625 = vpack.c.b16 %v4512, %v4491
        %v5626 = vpack.c.b16 %v4513, %v4492
        %v5627 = vpack.c.b16 %v4514, %v4493
        %v5628 = vpack.c.b16 %v4515, %v4494
        %v5629 = vpack.c.b16 %v4537, %v4516
        %v5630 = vpack.c.b16 %v4538, %v4517
        %v5631 = vpack.c.b16 %v4539, %v4518
        %v5632 = vpack.c.b16 %v4540, %v4519
        %v5633 = vpack.c.b16 %v4541, %v4520
        %v5634 = vpack.c.b16 %v4542, %v4521
        %v5635 = vpack.c.b16 %v4543, %v4522
        %v5636 = vpack.c.b16 %v4544, %v4523
        %v5637 = vpack.c.b16 %v4545, %v4524
        %v5638 = vpack.c.b16 %v4546, %v4525
        %v5639 = vpack.c.b16 %v4547, %v4526
        %v5640 = vpack.c.b16 %v4548, %v4527
        %v5641 = vpack.c.b16 %v4549, %v4528
        %v5642 = vpack.c.b16 %v4550, %v4529
        %v5643 = vpack.c.b16 %v4551, %v4530
        %v5644 = vpack.c.b16 %v4552, %v4531
        %v5645 = vpack.c.b16 %v4553, %v4532
        %v5646 = vpack.c.b16 %v4554, %v4533
        %v5647 = vpack.c.b16 %v4555, %v4534
        %v5648 = vpack.c.b16 %v4556, %v4535
        %v5649 = vpack.c.b16 %v4557, %v4536
        %v5650 = vpack.c.b16 %v4579, %v4558
        %v5651 = vpack.c.b16 %v4580, %v4559
        %v5652 = vpack.c.b16 %v4581, %v4560
        %v5653 = vpack.c.b16 %v4582, %v4561
        %v5654 = vpack.c.b16 %v4583, %v4562
        %v5655 = vpack.c.b16 %v4584, %v4563
        %v5656 = vpack.c.b16 %v4585, %v4564
        %v5657 = vpack.c.b16 %v4586, %v4565
        %v5658 = vpack.c.b16 %v4587, %v4566
        %v5659 = vpack.c.b16 %v4588, %v4567
        %v5660 = vpack.c.b16 %v4589, %v4568
        %v5661 = vpack.c.b16 %v4590, %v4569
        %v5662 = vpack.c.b16 %v4591, %v4570
        %v5663 = vpack.c.b16 %v4592, %v4571
        %v5664 = vpack.c.b16 %v4593, %v4572
        %v5665 = vpack.c.b16 %v4594, %v4573
        %v5666 = vpack.c.b16 %v4595, %v4574
        %v5667 = vpack.c.b16 %v4596, %v4575
        %v5668 = vpack.c.b16 %v4597, %v4576
        %v5669 = vpack.c.b16 %v4598, %v4577
        %v5670 = vpack.c.b16 %v4599, %v4578
        %v5671 = vpack.c.b16 %v4621, %v4600
        %v5672 = vpack.c.b16 %v4622, %v4601
        %v5673 = vpack.c.b16 %v4623, %v4602
        %v5674 = vpack.c.b16 %v4624, %v4603
        %v5675 = vpack.c.b16 %v4625, %v4604
        %v5676 = vpack.c.b16 %v4626, %v4605
        %v5677 = vpack.c.b16 %v4627, %v4606
        %v5678 = vpack.c.b16 %v4628, %v4607
        %v5679 = vpack.c.b16 %v4629, %v4608
        %v5680 = vpack.c.b16 %v4630, %v4609
        %v5681 = vpack.c.b16 %v4631, %v4610
        %v5682 = vpack.c.b16 %v4632, %v4611
        %v5683 = vpack.c.b16 %v4633, %v4612
        %v5684 = vpack.c.b16 %v4634, %v4613
        %v5685 = vpack.c.b16 %v4635, %v4614
        %v5686 = vpack.c.b16 %v4636, %v4615
        %v5687 = vpack.c.b16 %v4637, %v4616
        %v5688 = vpack.c.b16 %v4638, %v4617
        %v5689 = vpack.c.b16 %v4639, %v4618
        %v5690 = vpack.c.b16 %v4640, %v4619
        %v5691 = vpack.c.b16 %v4641, %v4620
        %vm6742 = vcmask 261120
        %v6744 = vsel %vm6742, %v230, 0
        %6746 = vmatprep.subr.bf16.mxu0 %v4790
        %6747 = vmatpush1.bf16.msra.mxu0 %v4789
        %6748 = vmatprep.subr.bf16.mxu0 %v4769
        %6749 = vmatpush1.bf16.msra.mxu0 %v4768
        %6750 = vmatprep.subr.bf16.mxu0 %v4748
        %6751 = vmatpush1.bf16.msra.mxu0 %v4747
        %6752 = vmatprep.subr.bf16.mxu0 %v4727
        %6753 = vmatpush1.bf16.msra.mxu0 %v4726
        %6754 = vmatprep.subr.bf16.mxu0 %v4706
        %6755 = vmatpush1.bf16.msra.mxu0 %v4705
        %6756 = vmatprep.subr.bf16.mxu0 %v4685
        %6757 = vmatpush1.bf16.msra.mxu0 %v4684
        %6758 = vmatprep.subr.bf16.mxu0 %v4664
        %6759 = vmatpush1.bf16.msra.mxu0 %v4663
        %6760 = vmatprep.subr.bf16.mxu0 %v4643
        %6761 = vmatpush1.bf16.msra.mxu0 %v4642
        %6762 = vmatprep.subr.bf16.mxu0 %v4958
        %6763 = vmatpush2.bf16.msra.mxu0 %v4957
        %6764 = vmatprep.subr.bf16.mxu0 %v4937
        %6765 = vmatpush2.bf16.msra.mxu0 %v4936
        %6766 = vmatprep.subr.bf16.mxu0 %v4916
        %6767 = vmatpush2.bf16.msra.mxu0 %v4915
        %6768 = vmatprep.subr.bf16.mxu0 %v4895
        %6769 = vmatpush2.bf16.msra.mxu0 %v4894
        %6770 = vmatprep.subr.bf16.mxu0 %v4874
        %6771 = vmatpush2.bf16.msra.mxu0 %v4873
        %6772 = vmatprep.subr.bf16.mxu0 %v4853
        %6773 = vmatpush2.bf16.msra.mxu0 %v4852
        %6774 = vmatprep.subr.bf16.mxu0 %v4832
        %6775 = vmatpush2.bf16.msra.mxu0 %v4831
        %6776 = vmatprep.subr.bf16.mxu0 %v4811
        %6777 = vmatpush2.bf16.msra.mxu0 %v4810
        %6778 = vmatprep.mubr.bf16.mxu0 %v225
        %6779 = vmatmul.mubr.bf16.gmra.mxu0 %v224
        %v6780 = vpop.f32.mrf.mxu0
        %v6781 = vadd.f32 %v1340, %v6780
        %v6782 = vpop.f32.mrf.mxu0
        %v6783 = vadd.f32 %v1344, %v6782
        %v6784 = vpop.f32.mrf.mxu0
        %v6785 = vpop.f32.mrf.mxu0
        %6786 = vdwg.mxu0
        %6787 = vmatprep.subr.bf16.mxu0 %v5126
        %6788 = vmatpush1.bf16.msra.mxu0 %v5125
        %6789 = vmatprep.subr.bf16.mxu0 %v5105
        %6790 = vmatpush1.bf16.msra.mxu0 %v5104
        %6791 = vmatprep.subr.bf16.mxu0 %v5084
        %6792 = vmatpush1.bf16.msra.mxu0 %v5083
        %6793 = vmatprep.subr.bf16.mxu0 %v5063
        %6794 = vmatpush1.bf16.msra.mxu0 %v5062
        %6795 = vmatprep.subr.bf16.mxu0 %v5042
        %6796 = vmatpush1.bf16.msra.mxu0 %v5041
        %6797 = vmatprep.subr.bf16.mxu0 %v5021
        %6798 = vmatpush1.bf16.msra.mxu0 %v5020
        %6799 = vmatprep.subr.bf16.mxu0 %v5000
        %6800 = vmatpush1.bf16.msra.mxu0 %v4999
        %6801 = vmatprep.subr.bf16.mxu0 %v4979
        %6802 = vmatpush1.bf16.msra.mxu0 %v4978
        %6803 = vmatprep.subr.bf16.mxu0 %v5294
        %6804 = vmatpush2.bf16.msra.mxu0 %v5293
        %6805 = vmatprep.subr.bf16.mxu0 %v5273
        %6806 = vmatpush2.bf16.msra.mxu0 %v5272
        %6807 = vmatprep.subr.bf16.mxu0 %v5252
        %6808 = vmatpush2.bf16.msra.mxu0 %v5251
        %6809 = vmatprep.subr.bf16.mxu0 %v5231
        %6810 = vmatpush2.bf16.msra.mxu0 %v5230
        %6811 = vmatprep.subr.bf16.mxu0 %v5210
        %6812 = vmatpush2.bf16.msra.mxu0 %v5209
        %6813 = vmatprep.subr.bf16.mxu0 %v5189
        %6814 = vmatpush2.bf16.msra.mxu0 %v5188
        %6815 = vmatprep.subr.bf16.mxu0 %v5168
        %6816 = vmatpush2.bf16.msra.mxu0 %v5167
        %6817 = vmatprep.subr.bf16.mxu0 %v5147
        %6818 = vmatpush2.bf16.msra.mxu0 %v5146
        %6819 = vmatprep.mubr.bf16.mxu0 %v227
        %6820 = vmatmul.mubr.bf16.gmra.mxu0 %v226
        %v6821 = vpop.f32.mrf.mxu0
        %v6822 = vadd.f32 %v6781, %v6821
        %v6823 = vpop.f32.mrf.mxu0
        %v6824 = vadd.f32 %v6783, %v6823
        %v6825 = vpop.f32.mrf.mxu0
        %v6826 = vpop.f32.mrf.mxu0
        %6827 = vdwg.mxu0
        %6828 = vmatprep.subr.bf16.mxu0 %v5462
        %6829 = vmatpush1.bf16.msra.mxu0 %v5461
        %6830 = vmatprep.subr.bf16.mxu0 %v5441
        %6831 = vmatpush1.bf16.msra.mxu0 %v5440
        %6832 = vmatprep.subr.bf16.mxu0 %v5420
        %6833 = vmatpush1.bf16.msra.mxu0 %v5419
        %6834 = vmatprep.subr.bf16.mxu0 %v5399
        %6835 = vmatpush1.bf16.msra.mxu0 %v5398
        %6836 = vmatprep.subr.bf16.mxu0 %v5378
        %6837 = vmatpush1.bf16.msra.mxu0 %v5377
        %6838 = vmatprep.subr.bf16.mxu0 %v5357
        %6839 = vmatpush1.bf16.msra.mxu0 %v5356
        %6840 = vmatprep.subr.bf16.mxu0 %v5336
        %6841 = vmatpush1.bf16.msra.mxu0 %v5335
        %6842 = vmatprep.subr.bf16.mxu0 %v5315
        %6843 = vmatpush1.bf16.msra.mxu0 %v5314
        %6844 = vmatprep.subr.bf16.mxu0 %v5630
        %6845 = vmatpush2.bf16.msra.mxu0 %v5629
        %6846 = vmatprep.subr.bf16.mxu0 %v5609
        %6847 = vmatpush2.bf16.msra.mxu0 %v5608
        %6848 = vmatprep.subr.bf16.mxu0 %v5588
        %6849 = vmatpush2.bf16.msra.mxu0 %v5587
        %6850 = vmatprep.subr.bf16.mxu0 %v5567
        %6851 = vmatpush2.bf16.msra.mxu0 %v5566
        %6852 = vmatprep.subr.bf16.mxu0 %v5546
        %6853 = vmatpush2.bf16.msra.mxu0 %v5545
        %6854 = vmatprep.subr.bf16.mxu0 %v5525
        %6855 = vmatpush2.bf16.msra.mxu0 %v5524
        %6856 = vmatprep.subr.bf16.mxu0 %v5504
        %6857 = vmatpush2.bf16.msra.mxu0 %v5503
        %6858 = vmatprep.subr.bf16.mxu0 %v5483
        %6859 = vmatpush2.bf16.msra.mxu0 %v5482
        %6860 = vmatprep.mubr.bf16.mxu0 %v229
        %6861 = vmatmul.mubr.bf16.gmra.mxu0 %v228
        %v6862 = vpop.f32.mrf.mxu0
        %v6863 = vadd.f32 %v6822, %v6862
        %v6864 = vpop.f32.mrf.mxu0
        %v6865 = vadd.f32 %v6824, %v6864
        %v6866 = vpop.f32.mrf.mxu0
        %v6867 = vpop.f32.mrf.mxu0
        %6868 = vdwg.mxu0
        %6869 = vmatprep.subr.bf16.mxu0 0
        %6870 = vmatpush1.bf16.msra.mxu0 0
        %6871 = vmatprep.subr.bf16.mxu0 0
        %6872 = vmatpush1.bf16.msra.mxu0 0
        %6873 = vmatprep.subr.bf16.mxu0 0
        %6874 = vmatpush1.bf16.msra.mxu0 0
        %6875 = vmatprep.subr.bf16.mxu0 0
        %6876 = vmatpush1.bf16.msra.mxu0 0
        %6877 = vmatprep.subr.bf16.mxu0 0
        %6878 = vmatpush1.bf16.msra.mxu0 0
        %6879 = vmatprep.subr.bf16.mxu0 0
        %6880 = vmatpush1.bf16.msra.mxu0 0
        %6881 = vmatprep.subr.bf16.mxu0 %v5672
        %6882 = vmatpush1.bf16.msra.mxu0 %v5671
        %6883 = vmatprep.subr.bf16.mxu0 %v5651
        %6884 = vmatpush1.bf16.msra.mxu0 %v5650
        %6885 = vmatprep.subr.bf16.mxu0 0
        %6886 = vmatpush2.bf16.msra.mxu0 0
        %6887 = vmatprep.subr.bf16.mxu0 0
        %6888 = vmatpush2.bf16.msra.mxu0 0
        %6889 = vmatprep.subr.bf16.mxu0 0
        %6890 = vmatpush2.bf16.msra.mxu0 0
        %6891 = vmatprep.subr.bf16.mxu0 0
        %6892 = vmatpush2.bf16.msra.mxu0 0
        %6893 = vmatprep.subr.bf16.mxu0 0
        %6894 = vmatpush2.bf16.msra.mxu0 0
        %6895 = vmatprep.subr.bf16.mxu0 0
        %6896 = vmatpush2.bf16.msra.mxu0 0
        %6897 = vmatprep.subr.bf16.mxu0 0
        %6898 = vmatpush2.bf16.msra.mxu0 0
        %6899 = vmatprep.subr.bf16.mxu0 0
        %6900 = vmatpush2.bf16.msra.mxu0 0
        %6901 = vmatprep.mubr.bf16.mxu0 0
        %6902 = vmatmul.mubr.bf16.gmra.mxu0 %v6744
        %v6903 = vpop.f32.mrf.mxu0
        %v6904 = vadd.f32 %v6863, %v6903
        %v6905 = vpop.f32.mrf.mxu0
        %v6906 = vadd.f32 %v6865, %v6905
        %v6907 = vpop.f32.mrf.mxu0
        %v6908 = vpop.f32.mrf.mxu0
        %6909 = vdwg.mxu0
        %6910 = vmatprep.subr.bf16.mxu0 %v4792
        %6911 = vmatpush1.bf16.msra.mxu0 %v4791
        %6912 = vmatprep.subr.bf16.mxu0 %v4771
        %6913 = vmatpush1.bf16.msra.mxu0 %v4770
        %6914 = vmatprep.subr.bf16.mxu0 %v4750
        %6915 = vmatpush1.bf16.msra.mxu0 %v4749
        %6916 = vmatprep.subr.bf16.mxu0 %v4729
        %6917 = vmatpush1.bf16.msra.mxu0 %v4728
        %6918 = vmatprep.subr.bf16.mxu0 %v4708
        %6919 = vmatpush1.bf16.msra.mxu0 %v4707
        %6920 = vmatprep.subr.bf16.mxu0 %v4687
        %6921 = vmatpush1.bf16.msra.mxu0 %v4686
        %6922 = vmatprep.subr.bf16.mxu0 %v4666
        %6923 = vmatpush1.bf16.msra.mxu0 %v4665
        %6924 = vmatprep.subr.bf16.mxu0 %v4645
        %6925 = vmatpush1.bf16.msra.mxu0 %v4644
        %6926 = vmatprep.subr.bf16.mxu0 %v4960
        %6927 = vmatpush2.bf16.msra.mxu0 %v4959
        %6928 = vmatprep.subr.bf16.mxu0 %v4939
        %6929 = vmatpush2.bf16.msra.mxu0 %v4938
        %6930 = vmatprep.subr.bf16.mxu0 %v4918
        %6931 = vmatpush2.bf16.msra.mxu0 %v4917
        %6932 = vmatprep.subr.bf16.mxu0 %v4897
        %6933 = vmatpush2.bf16.msra.mxu0 %v4896
        %6934 = vmatprep.subr.bf16.mxu0 %v4876
        %6935 = vmatpush2.bf16.msra.mxu0 %v4875
        %6936 = vmatprep.subr.bf16.mxu0 %v4855
        %6937 = vmatpush2.bf16.msra.mxu0 %v4854
        %6938 = vmatprep.subr.bf16.mxu0 %v4834
        %6939 = vmatpush2.bf16.msra.mxu0 %v4833
        %6940 = vmatprep.subr.bf16.mxu0 %v4813
        %6941 = vmatpush2.bf16.msra.mxu0 %v4812
        %6942 = vmatprep.mubr.bf16.mxu0 %v225
        %6943 = vmatmul.mubr.bf16.gmra.mxu0 %v224
        %v6944 = vpop.f32.mrf.mxu0
        %v6945 = vadd.f32 %v1348, %v6944
        %v6946 = vpop.f32.mrf.mxu0
        %v6947 = vadd.f32 %v1352, %v6946
        %v6948 = vpop.f32.mrf.mxu0
        %v6949 = vpop.f32.mrf.mxu0
        %6950 = vdwg.mxu0
        %6951 = vmatprep.subr.bf16.mxu0 %v5128
        %6952 = vmatpush1.bf16.msra.mxu0 %v5127
        %6953 = vmatprep.subr.bf16.mxu0 %v5107
        %6954 = vmatpush1.bf16.msra.mxu0 %v5106
        %6955 = vmatprep.subr.bf16.mxu0 %v5086
        %6956 = vmatpush1.bf16.msra.mxu0 %v5085
        %6957 = vmatprep.subr.bf16.mxu0 %v5065
        %6958 = vmatpush1.bf16.msra.mxu0 %v5064
        %6959 = vmatprep.subr.bf16.mxu0 %v5044
        %6960 = vmatpush1.bf16.msra.mxu0 %v5043
        %6961 = vmatprep.subr.bf16.mxu0 %v5023
        %6962 = vmatpush1.bf16.msra.mxu0 %v5022
        %6963 = vmatprep.subr.bf16.mxu0 %v5002
        %6964 = vmatpush1.bf16.msra.mxu0 %v5001
        %6965 = vmatprep.subr.bf16.mxu0 %v4981
        %6966 = vmatpush1.bf16.msra.mxu0 %v4980
        %6967 = vmatprep.subr.bf16.mxu0 %v5296
        %6968 = vmatpush2.bf16.msra.mxu0 %v5295
        %6969 = vmatprep.subr.bf16.mxu0 %v5275
        %6970 = vmatpush2.bf16.msra.mxu0 %v5274
        %6971 = vmatprep.subr.bf16.mxu0 %v5254
        %6972 = vmatpush2.bf16.msra.mxu0 %v5253
        %6973 = vmatprep.subr.bf16.mxu0 %v5233
        %6974 = vmatpush2.bf16.msra.mxu0 %v5232
        %6975 = vmatprep.subr.bf16.mxu0 %v5212
        %6976 = vmatpush2.bf16.msra.mxu0 %v5211
        %6977 = vmatprep.subr.bf16.mxu0 %v5191
        %6978 = vmatpush2.bf16.msra.mxu0 %v5190
        %6979 = vmatprep.subr.bf16.mxu0 %v5170
        %6980 = vmatpush2.bf16.msra.mxu0 %v5169
        %6981 = vmatprep.subr.bf16.mxu0 %v5149
        %6982 = vmatpush2.bf16.msra.mxu0 %v5148
        %6983 = vmatprep.mubr.bf16.mxu0 %v227
        %6984 = vmatmul.mubr.bf16.gmra.mxu0 %v226
        %v6985 = vpop.f32.mrf.mxu0
        %v6986 = vadd.f32 %v6945, %v6985
        %v6987 = vpop.f32.mrf.mxu0
        %v6988 = vadd.f32 %v6947, %v6987
        %v6989 = vpop.f32.mrf.mxu0
        %v6990 = vpop.f32.mrf.mxu0
        %6991 = vdwg.mxu0
        %6992 = vmatprep.subr.bf16.mxu0 %v5464
        %6993 = vmatpush1.bf16.msra.mxu0 %v5463
        %6994 = vmatprep.subr.bf16.mxu0 %v5443
        %6995 = vmatpush1.bf16.msra.mxu0 %v5442
        %6996 = vmatprep.subr.bf16.mxu0 %v5422
        %6997 = vmatpush1.bf16.msra.mxu0 %v5421
        %6998 = vmatprep.subr.bf16.mxu0 %v5401
        %6999 = vmatpush1.bf16.msra.mxu0 %v5400
        %7000 = vmatprep.subr.bf16.mxu0 %v5380
        %7001 = vmatpush1.bf16.msra.mxu0 %v5379
        %7002 = vmatprep.subr.bf16.mxu0 %v5359
        %7003 = vmatpush1.bf16.msra.mxu0 %v5358
        %7004 = vmatprep.subr.bf16.mxu0 %v5338
        %7005 = vmatpush1.bf16.msra.mxu0 %v5337
        %7006 = vmatprep.subr.bf16.mxu0 %v5317
        %7007 = vmatpush1.bf16.msra.mxu0 %v5316
        %7008 = vmatprep.subr.bf16.mxu0 %v5632
        %7009 = vmatpush2.bf16.msra.mxu0 %v5631
        %7010 = vmatprep.subr.bf16.mxu0 %v5611
        %7011 = vmatpush2.bf16.msra.mxu0 %v5610
        %7012 = vmatprep.subr.bf16.mxu0 %v5590
        %7013 = vmatpush2.bf16.msra.mxu0 %v5589
        %7014 = vmatprep.subr.bf16.mxu0 %v5569
        %7015 = vmatpush2.bf16.msra.mxu0 %v5568
        %7016 = vmatprep.subr.bf16.mxu0 %v5548
        %7017 = vmatpush2.bf16.msra.mxu0 %v5547
        %7018 = vmatprep.subr.bf16.mxu0 %v5527
        %7019 = vmatpush2.bf16.msra.mxu0 %v5526
        %7020 = vmatprep.subr.bf16.mxu0 %v5506
        %7021 = vmatpush2.bf16.msra.mxu0 %v5505
        %7022 = vmatprep.subr.bf16.mxu0 %v5485
        %7023 = vmatpush2.bf16.msra.mxu0 %v5484
        %7024 = vmatprep.mubr.bf16.mxu0 %v229
        %7025 = vmatmul.mubr.bf16.gmra.mxu0 %v228
        %v7026 = vpop.f32.mrf.mxu0
        %v7027 = vadd.f32 %v6986, %v7026
        %v7028 = vpop.f32.mrf.mxu0
        %v7029 = vadd.f32 %v6988, %v7028
        %v7030 = vpop.f32.mrf.mxu0
        %v7031 = vpop.f32.mrf.mxu0
        %7032 = vdwg.mxu0
        %7033 = vmatprep.subr.bf16.mxu0 0
        %7034 = vmatpush1.bf16.msra.mxu0 0
        %7035 = vmatprep.subr.bf16.mxu0 0
        %7036 = vmatpush1.bf16.msra.mxu0 0
        %7037 = vmatprep.subr.bf16.mxu0 0
        %7038 = vmatpush1.bf16.msra.mxu0 0
        %7039 = vmatprep.subr.bf16.mxu0 0
        %7040 = vmatpush1.bf16.msra.mxu0 0
        %7041 = vmatprep.subr.bf16.mxu0 0
        %7042 = vmatpush1.bf16.msra.mxu0 0
        %7043 = vmatprep.subr.bf16.mxu0 0
        %7044 = vmatpush1.bf16.msra.mxu0 0
        %7045 = vmatprep.subr.bf16.mxu0 %v5674
        %7046 = vmatpush1.bf16.msra.mxu0 %v5673
        %7047 = vmatprep.subr.bf16.mxu0 %v5653
        %7048 = vmatpush1.bf16.msra.mxu0 %v5652
        %7049 = vmatprep.subr.bf16.mxu0 0
        %7050 = vmatpush2.bf16.msra.mxu0 0
        %7051 = vmatprep.subr.bf16.mxu0 0
        %7052 = vmatpush2.bf16.msra.mxu0 0
        %7053 = vmatprep.subr.bf16.mxu0 0
        %7054 = vmatpush2.bf16.msra.mxu0 0
        %7055 = vmatprep.subr.bf16.mxu0 0
        %7056 = vmatpush2.bf16.msra.mxu0 0
        %7057 = vmatprep.subr.bf16.mxu0 0
        %7058 = vmatpush2.bf16.msra.mxu0 0
        %7059 = vmatprep.subr.bf16.mxu0 0
        %7060 = vmatpush2.bf16.msra.mxu0 0
        %7061 = vmatprep.subr.bf16.mxu0 0
        %7062 = vmatpush2.bf16.msra.mxu0 0
        %7063 = vmatprep.subr.bf16.mxu0 0
        %7064 = vmatpush2.bf16.msra.mxu0 0
        %7065 = vmatprep.mubr.bf16.mxu0 0
        %7066 = vmatmul.mubr.bf16.gmra.mxu0 %v6744
        %v7067 = vpop.f32.mrf.mxu0
        %v7068 = vadd.f32 %v7027, %v7067
        %v7069 = vpop.f32.mrf.mxu0
        %v7070 = vadd.f32 %v7029, %v7069
        %v7071 = vpop.f32.mrf.mxu0
        %v7072 = vpop.f32.mrf.mxu0
        %7073 = vdwg.mxu0
        %7074 = vmatprep.subr.bf16.mxu0 %v4794
        %7075 = vmatpush1.bf16.msra.mxu0 %v4793
        %7076 = vmatprep.subr.bf16.mxu0 %v4773
        %7077 = vmatpush1.bf16.msra.mxu0 %v4772
        %7078 = vmatprep.subr.bf16.mxu0 %v4752
        %7079 = vmatpush1.bf16.msra.mxu0 %v4751
        %7080 = vmatprep.subr.bf16.mxu0 %v4731
        %7081 = vmatpush1.bf16.msra.mxu0 %v4730
        %7082 = vmatprep.subr.bf16.mxu0 %v4710
        %7083 = vmatpush1.bf16.msra.mxu0 %v4709
        %7084 = vmatprep.subr.bf16.mxu0 %v4689
        %7085 = vmatpush1.bf16.msra.mxu0 %v4688
        %7086 = vmatprep.subr.bf16.mxu0 %v4668
        %7087 = vmatpush1.bf16.msra.mxu0 %v4667
        %7088 = vmatprep.subr.bf16.mxu0 %v4647
        %7089 = vmatpush1.bf16.msra.mxu0 %v4646
        %7090 = vmatprep.subr.bf16.mxu0 %v4962
        %7091 = vmatpush2.bf16.msra.mxu0 %v4961
        %7092 = vmatprep.subr.bf16.mxu0 %v4941
        %7093 = vmatpush2.bf16.msra.mxu0 %v4940
        %7094 = vmatprep.subr.bf16.mxu0 %v4920
        %7095 = vmatpush2.bf16.msra.mxu0 %v4919
        %7096 = vmatprep.subr.bf16.mxu0 %v4899
        %7097 = vmatpush2.bf16.msra.mxu0 %v4898
        %7098 = vmatprep.subr.bf16.mxu0 %v4878
        %7099 = vmatpush2.bf16.msra.mxu0 %v4877
        %7100 = vmatprep.subr.bf16.mxu0 %v4857
        %7101 = vmatpush2.bf16.msra.mxu0 %v4856
        %7102 = vmatprep.subr.bf16.mxu0 %v4836
        %7103 = vmatpush2.bf16.msra.mxu0 %v4835
        %7104 = vmatprep.subr.bf16.mxu0 %v4815
        %7105 = vmatpush2.bf16.msra.mxu0 %v4814
        %7106 = vmatprep.mubr.bf16.mxu0 %v225
        %7107 = vmatmul.mubr.bf16.gmra.mxu0 %v224
        %v7108 = vpop.f32.mrf.mxu0
        %v7109 = vadd.f32 %v1356, %v7108
        %v7110 = vpop.f32.mrf.mxu0
        %v7111 = vadd.f32 %v1360, %v7110
        %v7112 = vpop.f32.mrf.mxu0
        %v7113 = vpop.f32.mrf.mxu0
        %7114 = vdwg.mxu0
        %7115 = vmatprep.subr.bf16.mxu0 %v5130
        %7116 = vmatpush1.bf16.msra.mxu0 %v5129
        %7117 = vmatprep.subr.bf16.mxu0 %v5109
        %7118 = vmatpush1.bf16.msra.mxu0 %v5108
        %7119 = vmatprep.subr.bf16.mxu0 %v5088
        %7120 = vmatpush1.bf16.msra.mxu0 %v5087
        %7121 = vmatprep.subr.bf16.mxu0 %v5067
        %7122 = vmatpush1.bf16.msra.mxu0 %v5066
        %7123 = vmatprep.subr.bf16.mxu0 %v5046
        %7124 = vmatpush1.bf16.msra.mxu0 %v5045
        %7125 = vmatprep.subr.bf16.mxu0 %v5025
        %7126 = vmatpush1.bf16.msra.mxu0 %v5024
        %7127 = vmatprep.subr.bf16.mxu0 %v5004
        %7128 = vmatpush1.bf16.msra.mxu0 %v5003
        %7129 = vmatprep.subr.bf16.mxu0 %v4983
        %7130 = vmatpush1.bf16.msra.mxu0 %v4982
        %7131 = vmatprep.subr.bf16.mxu0 %v5298
        %7132 = vmatpush2.bf16.msra.mxu0 %v5297
        %7133 = vmatprep.subr.bf16.mxu0 %v5277
        %7134 = vmatpush2.bf16.msra.mxu0 %v5276
        %7135 = vmatprep.subr.bf16.mxu0 %v5256
        %7136 = vmatpush2.bf16.msra.mxu0 %v5255
        %7137 = vmatprep.subr.bf16.mxu0 %v5235
        %7138 = vmatpush2.bf16.msra.mxu0 %v5234
        %7139 = vmatprep.subr.bf16.mxu0 %v5214
        %7140 = vmatpush2.bf16.msra.mxu0 %v5213
        %7141 = vmatprep.subr.bf16.mxu0 %v5193
        %7142 = vmatpush2.bf16.msra.mxu0 %v5192
        %7143 = vmatprep.subr.bf16.mxu0 %v5172
        %7144 = vmatpush2.bf16.msra.mxu0 %v5171
        %7145 = vmatprep.subr.bf16.mxu0 %v5151
        %7146 = vmatpush2.bf16.msra.mxu0 %v5150
        %7147 = vmatprep.mubr.bf16.mxu0 %v227
        %7148 = vmatmul.mubr.bf16.gmra.mxu0 %v226
        %v7149 = vpop.f32.mrf.mxu0
        %v7150 = vadd.f32 %v7109, %v7149
        %v7151 = vpop.f32.mrf.mxu0
        %v7152 = vadd.f32 %v7111, %v7151
        %v7153 = vpop.f32.mrf.mxu0
        %v7154 = vpop.f32.mrf.mxu0
        %7155 = vdwg.mxu0
        %7156 = vmatprep.subr.bf16.mxu0 %v5466
        %7157 = vmatpush1.bf16.msra.mxu0 %v5465
        %7158 = vmatprep.subr.bf16.mxu0 %v5445
        %7159 = vmatpush1.bf16.msra.mxu0 %v5444
        %7160 = vmatprep.subr.bf16.mxu0 %v5424
        %7161 = vmatpush1.bf16.msra.mxu0 %v5423
        %7162 = vmatprep.subr.bf16.mxu0 %v5403
        %7163 = vmatpush1.bf16.msra.mxu0 %v5402
        %7164 = vmatprep.subr.bf16.mxu0 %v5382
        %7165 = vmatpush1.bf16.msra.mxu0 %v5381
        %7166 = vmatprep.subr.bf16.mxu0 %v5361
        %7167 = vmatpush1.bf16.msra.mxu0 %v5360
        %7168 = vmatprep.subr.bf16.mxu0 %v5340
        %7169 = vmatpush1.bf16.msra.mxu0 %v5339
        %7170 = vmatprep.subr.bf16.mxu0 %v5319
        %7171 = vmatpush1.bf16.msra.mxu0 %v5318
        %7172 = vmatprep.subr.bf16.mxu0 %v5634
        %7173 = vmatpush2.bf16.msra.mxu0 %v5633
        %7174 = vmatprep.subr.bf16.mxu0 %v5613
        %7175 = vmatpush2.bf16.msra.mxu0 %v5612
        %7176 = vmatprep.subr.bf16.mxu0 %v5592
        %7177 = vmatpush2.bf16.msra.mxu0 %v5591
        %7178 = vmatprep.subr.bf16.mxu0 %v5571
        %7179 = vmatpush2.bf16.msra.mxu0 %v5570
        %7180 = vmatprep.subr.bf16.mxu0 %v5550
        %7181 = vmatpush2.bf16.msra.mxu0 %v5549
        %7182 = vmatprep.subr.bf16.mxu0 %v5529
        %7183 = vmatpush2.bf16.msra.mxu0 %v5528
        %7184 = vmatprep.subr.bf16.mxu0 %v5508
        %7185 = vmatpush2.bf16.msra.mxu0 %v5507
        %7186 = vmatprep.subr.bf16.mxu0 %v5487
        %7187 = vmatpush2.bf16.msra.mxu0 %v5486
        %7188 = vmatprep.mubr.bf16.mxu0 %v229
        %7189 = vmatmul.mubr.bf16.gmra.mxu0 %v228
        %v7190 = vpop.f32.mrf.mxu0
        %v7191 = vadd.f32 %v7150, %v7190
        %v7192 = vpop.f32.mrf.mxu0
        %v7193 = vadd.f32 %v7152, %v7192
        %v7194 = vpop.f32.mrf.mxu0
        %v7195 = vpop.f32.mrf.mxu0
        %7196 = vdwg.mxu0
        %7197 = vmatprep.subr.bf16.mxu0 0
        %7198 = vmatpush1.bf16.msra.mxu0 0
        %7199 = vmatprep.subr.bf16.mxu0 0
        %7200 = vmatpush1.bf16.msra.mxu0 0
        %7201 = vmatprep.subr.bf16.mxu0 0
        %7202 = vmatpush1.bf16.msra.mxu0 0
        %7203 = vmatprep.subr.bf16.mxu0 0
        %7204 = vmatpush1.bf16.msra.mxu0 0
        %7205 = vmatprep.subr.bf16.mxu0 0
        %7206 = vmatpush1.bf16.msra.mxu0 0
        %7207 = vmatprep.subr.bf16.mxu0 0
        %7208 = vmatpush1.bf16.msra.mxu0 0
        %7209 = vmatprep.subr.bf16.mxu0 %v5676
        %7210 = vmatpush1.bf16.msra.mxu0 %v5675
        %7211 = vmatprep.subr.bf16.mxu0 %v5655
        %7212 = vmatpush1.bf16.msra.mxu0 %v5654
        %7213 = vmatprep.subr.bf16.mxu0 0
        %7214 = vmatpush2.bf16.msra.mxu0 0
        %7215 = vmatprep.subr.bf16.mxu0 0
        %7216 = vmatpush2.bf16.msra.mxu0 0
        %7217 = vmatprep.subr.bf16.mxu0 0
        %7218 = vmatpush2.bf16.msra.mxu0 0
        %7219 = vmatprep.subr.bf16.mxu0 0
        %7220 = vmatpush2.bf16.msra.mxu0 0
        %7221 = vmatprep.subr.bf16.mxu0 0
        %7222 = vmatpush2.bf16.msra.mxu0 0
        %7223 = vmatprep.subr.bf16.mxu0 0
        %7224 = vmatpush2.bf16.msra.mxu0 0
        %7225 = vmatprep.subr.bf16.mxu0 0
        %7226 = vmatpush2.bf16.msra.mxu0 0
        %7227 = vmatprep.subr.bf16.mxu0 0
        %7228 = vmatpush2.bf16.msra.mxu0 0
        %7229 = vmatprep.mubr.bf16.mxu0 0
        %7230 = vmatmul.mubr.bf16.gmra.mxu0 %v6744
        %v7231 = vpop.f32.mrf.mxu0
        %v7232 = vadd.f32 %v7191, %v7231
        %v7233 = vpop.f32.mrf.mxu0
        %v7234 = vadd.f32 %v7193, %v7233
        %v7235 = vpop.f32.mrf.mxu0
        %v7236 = vpop.f32.mrf.mxu0
        %7237 = vdwg.mxu0
        %7238 = vmatprep.subr.bf16.mxu0 %v4796
        %7239 = vmatpush1.bf16.msra.mxu0 %v4795
        %7240 = vmatprep.subr.bf16.mxu0 %v4775
        %7241 = vmatpush1.bf16.msra.mxu0 %v4774
        %7242 = vmatprep.subr.bf16.mxu0 %v4754
        %7243 = vmatpush1.bf16.msra.mxu0 %v4753
        %7244 = vmatprep.subr.bf16.mxu0 %v4733
        %7245 = vmatpush1.bf16.msra.mxu0 %v4732
        %7246 = vmatprep.subr.bf16.mxu0 %v4712
        %7247 = vmatpush1.bf16.msra.mxu0 %v4711
        %7248 = vmatprep.subr.bf16.mxu0 %v4691
        %7249 = vmatpush1.bf16.msra.mxu0 %v4690
        %7250 = vmatprep.subr.bf16.mxu0 %v4670
        %7251 = vmatpush1.bf16.msra.mxu0 %v4669
        %7252 = vmatprep.subr.bf16.mxu0 %v4649
        %7253 = vmatpush1.bf16.msra.mxu0 %v4648
        %7254 = vmatprep.subr.bf16.mxu0 %v4964
        %7255 = vmatpush2.bf16.msra.mxu0 %v4963
        %7256 = vmatprep.subr.bf16.mxu0 %v4943
        %7257 = vmatpush2.bf16.msra.mxu0 %v4942
        %7258 = vmatprep.subr.bf16.mxu0 %v4922
        %7259 = vmatpush2.bf16.msra.mxu0 %v4921
        %7260 = vmatprep.subr.bf16.mxu0 %v4901
        %7261 = vmatpush2.bf16.msra.mxu0 %v4900
        %7262 = vmatprep.subr.bf16.mxu0 %v4880
        %7263 = vmatpush2.bf16.msra.mxu0 %v4879
        %7264 = vmatprep.subr.bf16.mxu0 %v4859
        %7265 = vmatpush2.bf16.msra.mxu0 %v4858
        %7266 = vmatprep.subr.bf16.mxu0 %v4838
        %7267 = vmatpush2.bf16.msra.mxu0 %v4837
        %7268 = vmatprep.subr.bf16.mxu0 %v4817
        %7269 = vmatpush2.bf16.msra.mxu0 %v4816
        %7270 = vmatprep.mubr.bf16.mxu0 %v225
        %7271 = vmatmul.mubr.bf16.gmra.mxu0 %v224
        %v7272 = vpop.f32.mrf.mxu0
        %v7273 = vadd.f32 %v1364, %v7272
        %v7274 = vpop.f32.mrf.mxu0
        %v7275 = vadd.f32 %v1368, %v7274
        %v7276 = vpop.f32.mrf.mxu0
        %v7277 = vpop.f32.mrf.mxu0
        %7278 = vdwg.mxu0
        %7279 = vmatprep.subr.bf16.mxu0 %v5132
        %7280 = vmatpush1.bf16.msra.mxu0 %v5131
        %7281 = vmatprep.subr.bf16.mxu0 %v5111
        %7282 = vmatpush1.bf16.msra.mxu0 %v5110
        %7283 = vmatprep.subr.bf16.mxu0 %v5090
        %7284 = vmatpush1.bf16.msra.mxu0 %v5089
        %7285 = vmatprep.subr.bf16.mxu0 %v5069
        %7286 = vmatpush1.bf16.msra.mxu0 %v5068
        %7287 = vmatprep.subr.bf16.mxu0 %v5048
        %7288 = vmatpush1.bf16.msra.mxu0 %v5047
        %7289 = vmatprep.subr.bf16.mxu0 %v5027
        %7290 = vmatpush1.bf16.msra.mxu0 %v5026
        %7291 = vmatprep.subr.bf16.mxu0 %v5006
        %7292 = vmatpush1.bf16.msra.mxu0 %v5005
        %7293 = vmatprep.subr.bf16.mxu0 %v4985
        %7294 = vmatpush1.bf16.msra.mxu0 %v4984
        %7295 = vmatprep.subr.bf16.mxu0 %v5300
        %7296 = vmatpush2.bf16.msra.mxu0 %v5299
        %7297 = vmatprep.subr.bf16.mxu0 %v5279
        %7298 = vmatpush2.bf16.msra.mxu0 %v5278
        %7299 = vmatprep.subr.bf16.mxu0 %v5258
        %7300 = vmatpush2.bf16.msra.mxu0 %v5257
        %7301 = vmatprep.subr.bf16.mxu0 %v5237
        %7302 = vmatpush2.bf16.msra.mxu0 %v5236
        %7303 = vmatprep.subr.bf16.mxu0 %v5216
        %7304 = vmatpush2.bf16.msra.mxu0 %v5215
        %7305 = vmatprep.subr.bf16.mxu0 %v5195
        %7306 = vmatpush2.bf16.msra.mxu0 %v5194
        %7307 = vmatprep.subr.bf16.mxu0 %v5174
        %7308 = vmatpush2.bf16.msra.mxu0 %v5173
        %7309 = vmatprep.subr.bf16.mxu0 %v5153
        %7310 = vmatpush2.bf16.msra.mxu0 %v5152
        %7311 = vmatprep.mubr.bf16.mxu0 %v227
        %7312 = vmatmul.mubr.bf16.gmra.mxu0 %v226
        %v7313 = vpop.f32.mrf.mxu0
        %v7314 = vadd.f32 %v7273, %v7313
        %v7315 = vpop.f32.mrf.mxu0
        %v7316 = vadd.f32 %v7275, %v7315
        %v7317 = vpop.f32.mrf.mxu0
        %v7318 = vpop.f32.mrf.mxu0
        %7319 = vdwg.mxu0
        %7320 = vmatprep.subr.bf16.mxu0 %v5468
        %7321 = vmatpush1.bf16.msra.mxu0 %v5467
        %7322 = vmatprep.subr.bf16.mxu0 %v5447
        %7323 = vmatpush1.bf16.msra.mxu0 %v5446
        %7324 = vmatprep.subr.bf16.mxu0 %v5426
        %7325 = vmatpush1.bf16.msra.mxu0 %v5425
        %7326 = vmatprep.subr.bf16.mxu0 %v5405
        %7327 = vmatpush1.bf16.msra.mxu0 %v5404
        %7328 = vmatprep.subr.bf16.mxu0 %v5384
        %7329 = vmatpush1.bf16.msra.mxu0 %v5383
        %7330 = vmatprep.subr.bf16.mxu0 %v5363
        %7331 = vmatpush1.bf16.msra.mxu0 %v5362
        %7332 = vmatprep.subr.bf16.mxu0 %v5342
        %7333 = vmatpush1.bf16.msra.mxu0 %v5341
        %7334 = vmatprep.subr.bf16.mxu0 %v5321
        %7335 = vmatpush1.bf16.msra.mxu0 %v5320
        %7336 = vmatprep.subr.bf16.mxu0 %v5636
        %7337 = vmatpush2.bf16.msra.mxu0 %v5635
        %7338 = vmatprep.subr.bf16.mxu0 %v5615
        %7339 = vmatpush2.bf16.msra.mxu0 %v5614
        %7340 = vmatprep.subr.bf16.mxu0 %v5594
        %7341 = vmatpush2.bf16.msra.mxu0 %v5593
        %7342 = vmatprep.subr.bf16.mxu0 %v5573
        %7343 = vmatpush2.bf16.msra.mxu0 %v5572
        %7344 = vmatprep.subr.bf16.mxu0 %v5552
        %7345 = vmatpush2.bf16.msra.mxu0 %v5551
        %7346 = vmatprep.subr.bf16.mxu0 %v5531
        %7347 = vmatpush2.bf16.msra.mxu0 %v5530
        %7348 = vmatprep.subr.bf16.mxu0 %v5510
        %7349 = vmatpush2.bf16.msra.mxu0 %v5509
        %7350 = vmatprep.subr.bf16.mxu0 %v5489
        %7351 = vmatpush2.bf16.msra.mxu0 %v5488
        %7352 = vmatprep.mubr.bf16.mxu0 %v229
        %7353 = vmatmul.mubr.bf16.gmra.mxu0 %v228
        %v7354 = vpop.f32.mrf.mxu0
        %v7355 = vadd.f32 %v7314, %v7354
        %v7356 = vpop.f32.mrf.mxu0
        %v7357 = vadd.f32 %v7316, %v7356
        %v7358 = vpop.f32.mrf.mxu0
        %v7359 = vpop.f32.mrf.mxu0
        %7360 = vdwg.mxu0
        %7361 = vmatprep.subr.bf16.mxu0 0
        %7362 = vmatpush1.bf16.msra.mxu0 0
        %7363 = vmatprep.subr.bf16.mxu0 0
        %7364 = vmatpush1.bf16.msra.mxu0 0
        %7365 = vmatprep.subr.bf16.mxu0 0
        %7366 = vmatpush1.bf16.msra.mxu0 0
        %7367 = vmatprep.subr.bf16.mxu0 0
        %7368 = vmatpush1.bf16.msra.mxu0 0
        %7369 = vmatprep.subr.bf16.mxu0 0
        %7370 = vmatpush1.bf16.msra.mxu0 0
        %7371 = vmatprep.subr.bf16.mxu0 0
        %7372 = vmatpush1.bf16.msra.mxu0 0
        %7373 = vmatprep.subr.bf16.mxu0 %v5678
        %7374 = vmatpush1.bf16.msra.mxu0 %v5677
        %7375 = vmatprep.subr.bf16.mxu0 %v5657
        %7376 = vmatpush1.bf16.msra.mxu0 %v5656
        %7377 = vmatprep.subr.bf16.mxu0 0
        %7378 = vmatpush2.bf16.msra.mxu0 0
        %7379 = vmatprep.subr.bf16.mxu0 0
        %7380 = vmatpush2.bf16.msra.mxu0 0
        %7381 = vmatprep.subr.bf16.mxu0 0
        %7382 = vmatpush2.bf16.msra.mxu0 0
        %7383 = vmatprep.subr.bf16.mxu0 0
        %7384 = vmatpush2.bf16.msra.mxu0 0
        %7385 = vmatprep.subr.bf16.mxu0 0
        %7386 = vmatpush2.bf16.msra.mxu0 0
        %7387 = vmatprep.subr.bf16.mxu0 0
        %7388 = vmatpush2.bf16.msra.mxu0 0
        %7389 = vmatprep.subr.bf16.mxu0 0
        %7390 = vmatpush2.bf16.msra.mxu0 0
        %7391 = vmatprep.subr.bf16.mxu0 0
        %7392 = vmatpush2.bf16.msra.mxu0 0
        %7393 = vmatprep.mubr.bf16.mxu0 0
        %7394 = vmatmul.mubr.bf16.gmra.mxu0 %v6744
        %v7395 = vpop.f32.mrf.mxu0
        %v7396 = vadd.f32 %v7355, %v7395
        %v7397 = vpop.f32.mrf.mxu0
        %v7398 = vadd.f32 %v7357, %v7397
        %v7399 = vpop.f32.mrf.mxu0
        %v7400 = vpop.f32.mrf.mxu0
        %7401 = vdwg.mxu0
        %7402 = vmatprep.subr.bf16.mxu0 %v4798
        %7403 = vmatpush1.bf16.msra.mxu0 %v4797
        %7404 = vmatprep.subr.bf16.mxu0 %v4777
        %7405 = vmatpush1.bf16.msra.mxu0 %v4776
        %7406 = vmatprep.subr.bf16.mxu0 %v4756
        %7407 = vmatpush1.bf16.msra.mxu0 %v4755
        %7408 = vmatprep.subr.bf16.mxu0 %v4735
        %7409 = vmatpush1.bf16.msra.mxu0 %v4734
        %7410 = vmatprep.subr.bf16.mxu0 %v4714
        %7411 = vmatpush1.bf16.msra.mxu0 %v4713
        %7412 = vmatprep.subr.bf16.mxu0 %v4693
        %7413 = vmatpush1.bf16.msra.mxu0 %v4692
        %7414 = vmatprep.subr.bf16.mxu0 %v4672
        %7415 = vmatpush1.bf16.msra.mxu0 %v4671
        %7416 = vmatprep.subr.bf16.mxu0 %v4651
        %7417 = vmatpush1.bf16.msra.mxu0 %v4650
        %7418 = vmatprep.subr.bf16.mxu0 %v4966
        %7419 = vmatpush2.bf16.msra.mxu0 %v4965
        %7420 = vmatprep.subr.bf16.mxu0 %v4945
        %7421 = vmatpush2.bf16.msra.mxu0 %v4944
        %7422 = vmatprep.subr.bf16.mxu0 %v4924
        %7423 = vmatpush2.bf16.msra.mxu0 %v4923
        %7424 = vmatprep.subr.bf16.mxu0 %v4903
        %7425 = vmatpush2.bf16.msra.mxu0 %v4902
        %7426 = vmatprep.subr.bf16.mxu0 %v4882
        %7427 = vmatpush2.bf16.msra.mxu0 %v4881
        %7428 = vmatprep.subr.bf16.mxu0 %v4861
        %7429 = vmatpush2.bf16.msra.mxu0 %v4860
        %7430 = vmatprep.subr.bf16.mxu0 %v4840
        %7431 = vmatpush2.bf16.msra.mxu0 %v4839
        %7432 = vmatprep.subr.bf16.mxu0 %v4819
        %7433 = vmatpush2.bf16.msra.mxu0 %v4818
        %7434 = vmatprep.mubr.bf16.mxu0 %v225
        %7435 = vmatmul.mubr.bf16.gmra.mxu0 %v224
        %v7436 = vpop.f32.mrf.mxu0
        %v7437 = vadd.f32 %v1372, %v7436
        %v7438 = vpop.f32.mrf.mxu0
        %v7439 = vadd.f32 %v1376, %v7438
        %v7440 = vpop.f32.mrf.mxu0
        %v7441 = vpop.f32.mrf.mxu0
        %7442 = vdwg.mxu0
        %7443 = vmatprep.subr.bf16.mxu0 %v5134
        %7444 = vmatpush1.bf16.msra.mxu0 %v5133
        %7445 = vmatprep.subr.bf16.mxu0 %v5113
        %7446 = vmatpush1.bf16.msra.mxu0 %v5112
        %7447 = vmatprep.subr.bf16.mxu0 %v5092
        %7448 = vmatpush1.bf16.msra.mxu0 %v5091
        %7449 = vmatprep.subr.bf16.mxu0 %v5071
        %7450 = vmatpush1.bf16.msra.mxu0 %v5070
        %7451 = vmatprep.subr.bf16.mxu0 %v5050
        %7452 = vmatpush1.bf16.msra.mxu0 %v5049
        %7453 = vmatprep.subr.bf16.mxu0 %v5029
        %7454 = vmatpush1.bf16.msra.mxu0 %v5028
        %7455 = vmatprep.subr.bf16.mxu0 %v5008
        %7456 = vmatpush1.bf16.msra.mxu0 %v5007
        %7457 = vmatprep.subr.bf16.mxu0 %v4987
        %7458 = vmatpush1.bf16.msra.mxu0 %v4986
        %7459 = vmatprep.subr.bf16.mxu0 %v5302
        %7460 = vmatpush2.bf16.msra.mxu0 %v5301
        %7461 = vmatprep.subr.bf16.mxu0 %v5281
        %7462 = vmatpush2.bf16.msra.mxu0 %v5280
        %7463 = vmatprep.subr.bf16.mxu0 %v5260
        %7464 = vmatpush2.bf16.msra.mxu0 %v5259
        %7465 = vmatprep.subr.bf16.mxu0 %v5239
        %7466 = vmatpush2.bf16.msra.mxu0 %v5238
        %7467 = vmatprep.subr.bf16.mxu0 %v5218
        %7468 = vmatpush2.bf16.msra.mxu0 %v5217
        %7469 = vmatprep.subr.bf16.mxu0 %v5197
        %7470 = vmatpush2.bf16.msra.mxu0 %v5196
        %7471 = vmatprep.subr.bf16.mxu0 %v5176
        %7472 = vmatpush2.bf16.msra.mxu0 %v5175
        %7473 = vmatprep.subr.bf16.mxu0 %v5155
        %7474 = vmatpush2.bf16.msra.mxu0 %v5154
        %7475 = vmatprep.mubr.bf16.mxu0 %v227
        %7476 = vmatmul.mubr.bf16.gmra.mxu0 %v226
        %v7477 = vpop.f32.mrf.mxu0
        %v7478 = vadd.f32 %v7437, %v7477
        %v7479 = vpop.f32.mrf.mxu0
        %v7480 = vadd.f32 %v7439, %v7479
        %v7481 = vpop.f32.mrf.mxu0
        %v7482 = vpop.f32.mrf.mxu0
        %7483 = vdwg.mxu0
        %7484 = vmatprep.subr.bf16.mxu0 %v5470
        %7485 = vmatpush1.bf16.msra.mxu0 %v5469
        %7486 = vmatprep.subr.bf16.mxu0 %v5449
        %7487 = vmatpush1.bf16.msra.mxu0 %v5448
        %7488 = vmatprep.subr.bf16.mxu0 %v5428
        %7489 = vmatpush1.bf16.msra.mxu0 %v5427
        %7490 = vmatprep.subr.bf16.mxu0 %v5407
        %7491 = vmatpush1.bf16.msra.mxu0 %v5406
        %7492 = vmatprep.subr.bf16.mxu0 %v5386
        %7493 = vmatpush1.bf16.msra.mxu0 %v5385
        %7494 = vmatprep.subr.bf16.mxu0 %v5365
        %7495 = vmatpush1.bf16.msra.mxu0 %v5364
        %7496 = vmatprep.subr.bf16.mxu0 %v5344
        %7497 = vmatpush1.bf16.msra.mxu0 %v5343
        %7498 = vmatprep.subr.bf16.mxu0 %v5323
        %7499 = vmatpush1.bf16.msra.mxu0 %v5322
        %7500 = vmatprep.subr.bf16.mxu0 %v5638
        %7501 = vmatpush2.bf16.msra.mxu0 %v5637
        %7502 = vmatprep.subr.bf16.mxu0 %v5617
        %7503 = vmatpush2.bf16.msra.mxu0 %v5616
        %7504 = vmatprep.subr.bf16.mxu0 %v5596
        %7505 = vmatpush2.bf16.msra.mxu0 %v5595
        %7506 = vmatprep.subr.bf16.mxu0 %v5575
        %7507 = vmatpush2.bf16.msra.mxu0 %v5574
        %7508 = vmatprep.subr.bf16.mxu0 %v5554
        %7509 = vmatpush2.bf16.msra.mxu0 %v5553
        %7510 = vmatprep.subr.bf16.mxu0 %v5533
        %7511 = vmatpush2.bf16.msra.mxu0 %v5532
        %7512 = vmatprep.subr.bf16.mxu0 %v5512
        %7513 = vmatpush2.bf16.msra.mxu0 %v5511
        %7514 = vmatprep.subr.bf16.mxu0 %v5491
        %7515 = vmatpush2.bf16.msra.mxu0 %v5490
        %7516 = vmatprep.mubr.bf16.mxu0 %v229
        %7517 = vmatmul.mubr.bf16.gmra.mxu0 %v228
        %v7518 = vpop.f32.mrf.mxu0
        %v7519 = vadd.f32 %v7478, %v7518
        %v7520 = vpop.f32.mrf.mxu0
        %v7521 = vadd.f32 %v7480, %v7520
        %v7522 = vpop.f32.mrf.mxu0
        %v7523 = vpop.f32.mrf.mxu0
        %7524 = vdwg.mxu0
        %7525 = vmatprep.subr.bf16.mxu0 0
        %7526 = vmatpush1.bf16.msra.mxu0 0
        %7527 = vmatprep.subr.bf16.mxu0 0
        %7528 = vmatpush1.bf16.msra.mxu0 0
        %7529 = vmatprep.subr.bf16.mxu0 0
        %7530 = vmatpush1.bf16.msra.mxu0 0
        %7531 = vmatprep.subr.bf16.mxu0 0
        %7532 = vmatpush1.bf16.msra.mxu0 0
        %7533 = vmatprep.subr.bf16.mxu0 0
        %7534 = vmatpush1.bf16.msra.mxu0 0
        %7535 = vmatprep.subr.bf16.mxu0 0
        %7536 = vmatpush1.bf16.msra.mxu0 0
        %7537 = vmatprep.subr.bf16.mxu0 %v5680
        %7538 = vmatpush1.bf16.msra.mxu0 %v5679
        %7539 = vmatprep.subr.bf16.mxu0 %v5659
        %7540 = vmatpush1.bf16.msra.mxu0 %v5658
        %7541 = vmatprep.subr.bf16.mxu0 0
        %7542 = vmatpush2.bf16.msra.mxu0 0
        %7543 = vmatprep.subr.bf16.mxu0 0
        %7544 = vmatpush2.bf16.msra.mxu0 0
        %7545 = vmatprep.subr.bf16.mxu0 0
        %7546 = vmatpush2.bf16.msra.mxu0 0
        %7547 = vmatprep.subr.bf16.mxu0 0
        %7548 = vmatpush2.bf16.msra.mxu0 0
        %7549 = vmatprep.subr.bf16.mxu0 0
        %7550 = vmatpush2.bf16.msra.mxu0 0
        %7551 = vmatprep.subr.bf16.mxu0 0
        %7552 = vmatpush2.bf16.msra.mxu0 0
        %7553 = vmatprep.subr.bf16.mxu0 0
        %7554 = vmatpush2.bf16.msra.mxu0 0
        %7555 = vmatprep.subr.bf16.mxu0 0
        %7556 = vmatpush2.bf16.msra.mxu0 0
        %7557 = vmatprep.mubr.bf16.mxu0 0
        %7558 = vmatmul.mubr.bf16.gmra.mxu0 %v6744
        %v7559 = vpop.f32.mrf.mxu0
        %v7560 = vadd.f32 %v7519, %v7559
        %v7561 = vpop.f32.mrf.mxu0
        %v7562 = vadd.f32 %v7521, %v7561
        %v7563 = vpop.f32.mrf.mxu0
        %v7564 = vpop.f32.mrf.mxu0
        %7565 = vdwg.mxu0
        %7566 = vmatprep.subr.bf16.mxu0 %v4800
        %7567 = vmatpush1.bf16.msra.mxu0 %v4799
        %7568 = vmatprep.subr.bf16.mxu0 %v4779
        %7569 = vmatpush1.bf16.msra.mxu0 %v4778
        %7570 = vmatprep.subr.bf16.mxu0 %v4758
        %7571 = vmatpush1.bf16.msra.mxu0 %v4757
        %7572 = vmatprep.subr.bf16.mxu0 %v4737
        %7573 = vmatpush1.bf16.msra.mxu0 %v4736
        %7574 = vmatprep.subr.bf16.mxu0 %v4716
        %7575 = vmatpush1.bf16.msra.mxu0 %v4715
        %7576 = vmatprep.subr.bf16.mxu0 %v4695
        %7577 = vmatpush1.bf16.msra.mxu0 %v4694
        %7578 = vmatprep.subr.bf16.mxu0 %v4674
        %7579 = vmatpush1.bf16.msra.mxu0 %v4673
        %7580 = vmatprep.subr.bf16.mxu0 %v4653
        %7581 = vmatpush1.bf16.msra.mxu0 %v4652
        %7582 = vmatprep.subr.bf16.mxu0 %v4968
        %7583 = vmatpush2.bf16.msra.mxu0 %v4967
        %7584 = vmatprep.subr.bf16.mxu0 %v4947
        %7585 = vmatpush2.bf16.msra.mxu0 %v4946
        %7586 = vmatprep.subr.bf16.mxu0 %v4926
        %7587 = vmatpush2.bf16.msra.mxu0 %v4925
        %7588 = vmatprep.subr.bf16.mxu0 %v4905
        %7589 = vmatpush2.bf16.msra.mxu0 %v4904
        %7590 = vmatprep.subr.bf16.mxu0 %v4884
        %7591 = vmatpush2.bf16.msra.mxu0 %v4883
        %7592 = vmatprep.subr.bf16.mxu0 %v4863
        %7593 = vmatpush2.bf16.msra.mxu0 %v4862
        %7594 = vmatprep.subr.bf16.mxu0 %v4842
        %7595 = vmatpush2.bf16.msra.mxu0 %v4841
        %7596 = vmatprep.subr.bf16.mxu0 %v4821
        %7597 = vmatpush2.bf16.msra.mxu0 %v4820
        %7598 = vmatprep.mubr.bf16.mxu0 %v225
        %7599 = vmatmul.mubr.bf16.gmra.mxu0 %v224
        %v7600 = vpop.f32.mrf.mxu0
        %v7601 = vadd.f32 %v1380, %v7600
        %v7602 = vpop.f32.mrf.mxu0
        %v7603 = vadd.f32 %v1384, %v7602
        %v7604 = vpop.f32.mrf.mxu0
        %v7605 = vpop.f32.mrf.mxu0
        %7606 = vdwg.mxu0
        %7607 = vmatprep.subr.bf16.mxu0 %v5136
        %7608 = vmatpush1.bf16.msra.mxu0 %v5135
        %7609 = vmatprep.subr.bf16.mxu0 %v5115
        %7610 = vmatpush1.bf16.msra.mxu0 %v5114
        %7611 = vmatprep.subr.bf16.mxu0 %v5094
        %7612 = vmatpush1.bf16.msra.mxu0 %v5093
        %7613 = vmatprep.subr.bf16.mxu0 %v5073
        %7614 = vmatpush1.bf16.msra.mxu0 %v5072
        %7615 = vmatprep.subr.bf16.mxu0 %v5052
        %7616 = vmatpush1.bf16.msra.mxu0 %v5051
        %7617 = vmatprep.subr.bf16.mxu0 %v5031
        %7618 = vmatpush1.bf16.msra.mxu0 %v5030
        %7619 = vmatprep.subr.bf16.mxu0 %v5010
        %7620 = vmatpush1.bf16.msra.mxu0 %v5009
        %7621 = vmatprep.subr.bf16.mxu0 %v4989
        %7622 = vmatpush1.bf16.msra.mxu0 %v4988
        %7623 = vmatprep.subr.bf16.mxu0 %v5304
        %7624 = vmatpush2.bf16.msra.mxu0 %v5303
        %7625 = vmatprep.subr.bf16.mxu0 %v5283
        %7626 = vmatpush2.bf16.msra.mxu0 %v5282
        %7627 = vmatprep.subr.bf16.mxu0 %v5262
        %7628 = vmatpush2.bf16.msra.mxu0 %v5261
        %7629 = vmatprep.subr.bf16.mxu0 %v5241
        %7630 = vmatpush2.bf16.msra.mxu0 %v5240
        %7631 = vmatprep.subr.bf16.mxu0 %v5220
        %7632 = vmatpush2.bf16.msra.mxu0 %v5219
        %7633 = vmatprep.subr.bf16.mxu0 %v5199
        %7634 = vmatpush2.bf16.msra.mxu0 %v5198
        %7635 = vmatprep.subr.bf16.mxu0 %v5178
        %7636 = vmatpush2.bf16.msra.mxu0 %v5177
        %7637 = vmatprep.subr.bf16.mxu0 %v5157
        %7638 = vmatpush2.bf16.msra.mxu0 %v5156
        %7639 = vmatprep.mubr.bf16.mxu0 %v227
        %7640 = vmatmul.mubr.bf16.gmra.mxu0 %v226
        %v7641 = vpop.f32.mrf.mxu0
        %v7642 = vadd.f32 %v7601, %v7641
        %v7643 = vpop.f32.mrf.mxu0
        %v7644 = vadd.f32 %v7603, %v7643
        %v7645 = vpop.f32.mrf.mxu0
        %v7646 = vpop.f32.mrf.mxu0
        %7647 = vdwg.mxu0
        %7648 = vmatprep.subr.bf16.mxu0 %v5472
        %7649 = vmatpush1.bf16.msra.mxu0 %v5471
        %7650 = vmatprep.subr.bf16.mxu0 %v5451
        %7651 = vmatpush1.bf16.msra.mxu0 %v5450
        %7652 = vmatprep.subr.bf16.mxu0 %v5430
        %7653 = vmatpush1.bf16.msra.mxu0 %v5429
        %7654 = vmatprep.subr.bf16.mxu0 %v5409
        %7655 = vmatpush1.bf16.msra.mxu0 %v5408
        %7656 = vmatprep.subr.bf16.mxu0 %v5388
        %7657 = vmatpush1.bf16.msra.mxu0 %v5387
        %7658 = vmatprep.subr.bf16.mxu0 %v5367
        %7659 = vmatpush1.bf16.msra.mxu0 %v5366
        %7660 = vmatprep.subr.bf16.mxu0 %v5346
        %7661 = vmatpush1.bf16.msra.mxu0 %v5345
        %7662 = vmatprep.subr.bf16.mxu0 %v5325
        %7663 = vmatpush1.bf16.msra.mxu0 %v5324
        %7664 = vmatprep.subr.bf16.mxu0 %v5640
        %7665 = vmatpush2.bf16.msra.mxu0 %v5639
        %7666 = vmatprep.subr.bf16.mxu0 %v5619
        %7667 = vmatpush2.bf16.msra.mxu0 %v5618
        %7668 = vmatprep.subr.bf16.mxu0 %v5598
        %7669 = vmatpush2.bf16.msra.mxu0 %v5597
        %7670 = vmatprep.subr.bf16.mxu0 %v5577
        %7671 = vmatpush2.bf16.msra.mxu0 %v5576
        %7672 = vmatprep.subr.bf16.mxu0 %v5556
        %7673 = vmatpush2.bf16.msra.mxu0 %v5555
        %7674 = vmatprep.subr.bf16.mxu0 %v5535
        %7675 = vmatpush2.bf16.msra.mxu0 %v5534
        %7676 = vmatprep.subr.bf16.mxu0 %v5514
        %7677 = vmatpush2.bf16.msra.mxu0 %v5513
        %7678 = vmatprep.subr.bf16.mxu0 %v5493
        %7679 = vmatpush2.bf16.msra.mxu0 %v5492
        %7680 = vmatprep.mubr.bf16.mxu0 %v229
        %7681 = vmatmul.mubr.bf16.gmra.mxu0 %v228
        %v7682 = vpop.f32.mrf.mxu0
        %v7683 = vadd.f32 %v7642, %v7682
        %v7684 = vpop.f32.mrf.mxu0
        %v7685 = vadd.f32 %v7644, %v7684
        %v7686 = vpop.f32.mrf.mxu0
        %v7687 = vpop.f32.mrf.mxu0
        %7688 = vdwg.mxu0
        %7689 = vmatprep.subr.bf16.mxu0 0
        %7690 = vmatpush1.bf16.msra.mxu0 0
        %7691 = vmatprep.subr.bf16.mxu0 0
        %7692 = vmatpush1.bf16.msra.mxu0 0
        %7693 = vmatprep.subr.bf16.mxu0 0
        %7694 = vmatpush1.bf16.msra.mxu0 0
        %7695 = vmatprep.subr.bf16.mxu0 0
        %7696 = vmatpush1.bf16.msra.mxu0 0
        %7697 = vmatprep.subr.bf16.mxu0 0
        %7698 = vmatpush1.bf16.msra.mxu0 0
        %7699 = vmatprep.subr.bf16.mxu0 0
        %7700 = vmatpush1.bf16.msra.mxu0 0
        %7701 = vmatprep.subr.bf16.mxu0 %v5682
        %7702 = vmatpush1.bf16.msra.mxu0 %v5681
        %7703 = vmatprep.subr.bf16.mxu0 %v5661
        %7704 = vmatpush1.bf16.msra.mxu0 %v5660
        %7705 = vmatprep.subr.bf16.mxu0 0
        %7706 = vmatpush2.bf16.msra.mxu0 0
        %7707 = vmatprep.subr.bf16.mxu0 0
        %7708 = vmatpush2.bf16.msra.mxu0 0
        %7709 = vmatprep.subr.bf16.mxu0 0
        %7710 = vmatpush2.bf16.msra.mxu0 0
        %7711 = vmatprep.subr.bf16.mxu0 0
        %7712 = vmatpush2.bf16.msra.mxu0 0
        %7713 = vmatprep.subr.bf16.mxu0 0
        %7714 = vmatpush2.bf16.msra.mxu0 0
        %7715 = vmatprep.subr.bf16.mxu0 0
        %7716 = vmatpush2.bf16.msra.mxu0 0
        %7717 = vmatprep.subr.bf16.mxu0 0
        %7718 = vmatpush2.bf16.msra.mxu0 0
        %7719 = vmatprep.subr.bf16.mxu0 0
        %7720 = vmatpush2.bf16.msra.mxu0 0
        %7721 = vmatprep.mubr.bf16.mxu0 0
        %7722 = vmatmul.mubr.bf16.gmra.mxu0 %v6744
        %v7723 = vpop.f32.mrf.mxu0
        %v7724 = vadd.f32 %v7683, %v7723
        %v7725 = vpop.f32.mrf.mxu0
        %v7726 = vadd.f32 %v7685, %v7725
        %v7727 = vpop.f32.mrf.mxu0
        %v7728 = vpop.f32.mrf.mxu0
        %7729 = vdwg.mxu0
        %7730 = vmatprep.subr.bf16.mxu0 %v4802
        %7731 = vmatpush1.bf16.msra.mxu0 %v4801
        %7732 = vmatprep.subr.bf16.mxu0 %v4781
        %7733 = vmatpush1.bf16.msra.mxu0 %v4780
        %7734 = vmatprep.subr.bf16.mxu0 %v4760
        %7735 = vmatpush1.bf16.msra.mxu0 %v4759
        %7736 = vmatprep.subr.bf16.mxu0 %v4739
        %7737 = vmatpush1.bf16.msra.mxu0 %v4738
        %7738 = vmatprep.subr.bf16.mxu0 %v4718
        %7739 = vmatpush1.bf16.msra.mxu0 %v4717
        %7740 = vmatprep.subr.bf16.mxu0 %v4697
        %7741 = vmatpush1.bf16.msra.mxu0 %v4696
        %7742 = vmatprep.subr.bf16.mxu0 %v4676
        %7743 = vmatpush1.bf16.msra.mxu0 %v4675
        %7744 = vmatprep.subr.bf16.mxu0 %v4655
        %7745 = vmatpush1.bf16.msra.mxu0 %v4654
        %7746 = vmatprep.subr.bf16.mxu0 %v4970
        %7747 = vmatpush2.bf16.msra.mxu0 %v4969
        %7748 = vmatprep.subr.bf16.mxu0 %v4949
        %7749 = vmatpush2.bf16.msra.mxu0 %v4948
        %7750 = vmatprep.subr.bf16.mxu0 %v4928
        %7751 = vmatpush2.bf16.msra.mxu0 %v4927
        %7752 = vmatprep.subr.bf16.mxu0 %v4907
        %7753 = vmatpush2.bf16.msra.mxu0 %v4906
        %7754 = vmatprep.subr.bf16.mxu0 %v4886
        %7755 = vmatpush2.bf16.msra.mxu0 %v4885
        %7756 = vmatprep.subr.bf16.mxu0 %v4865
        %7757 = vmatpush2.bf16.msra.mxu0 %v4864
        %7758 = vmatprep.subr.bf16.mxu0 %v4844
        %7759 = vmatpush2.bf16.msra.mxu0 %v4843
        %7760 = vmatprep.subr.bf16.mxu0 %v4823
        %7761 = vmatpush2.bf16.msra.mxu0 %v4822
        %7762 = vmatprep.mubr.bf16.mxu0 %v225
        %7763 = vmatmul.mubr.bf16.gmra.mxu0 %v224
        %v7764 = vpop.f32.mrf.mxu0
        %v7765 = vadd.f32 %v1388, %v7764
        %v7766 = vpop.f32.mrf.mxu0
        %v7767 = vadd.f32 %v1392, %v7766
        %v7768 = vpop.f32.mrf.mxu0
        %v7769 = vpop.f32.mrf.mxu0
        %7770 = vdwg.mxu0
        %7771 = vmatprep.subr.bf16.mxu0 %v5138
        %7772 = vmatpush1.bf16.msra.mxu0 %v5137
        %7773 = vmatprep.subr.bf16.mxu0 %v5117
        %7774 = vmatpush1.bf16.msra.mxu0 %v5116
        %7775 = vmatprep.subr.bf16.mxu0 %v5096
        %7776 = vmatpush1.bf16.msra.mxu0 %v5095
        %7777 = vmatprep.subr.bf16.mxu0 %v5075
        %7778 = vmatpush1.bf16.msra.mxu0 %v5074
        %7779 = vmatprep.subr.bf16.mxu0 %v5054
        %7780 = vmatpush1.bf16.msra.mxu0 %v5053
        %7781 = vmatprep.subr.bf16.mxu0 %v5033
        %7782 = vmatpush1.bf16.msra.mxu0 %v5032
        %7783 = vmatprep.subr.bf16.mxu0 %v5012
        %7784 = vmatpush1.bf16.msra.mxu0 %v5011
        %7785 = vmatprep.subr.bf16.mxu0 %v4991
        %7786 = vmatpush1.bf16.msra.mxu0 %v4990
        %7787 = vmatprep.subr.bf16.mxu0 %v5306
        %7788 = vmatpush2.bf16.msra.mxu0 %v5305
        %7789 = vmatprep.subr.bf16.mxu0 %v5285
        %7790 = vmatpush2.bf16.msra.mxu0 %v5284
        %7791 = vmatprep.subr.bf16.mxu0 %v5264
        %7792 = vmatpush2.bf16.msra.mxu0 %v5263
        %7793 = vmatprep.subr.bf16.mxu0 %v5243
        %7794 = vmatpush2.bf16.msra.mxu0 %v5242
        %7795 = vmatprep.subr.bf16.mxu0 %v5222
        %7796 = vmatpush2.bf16.msra.mxu0 %v5221
        %7797 = vmatprep.subr.bf16.mxu0 %v5201
        %7798 = vmatpush2.bf16.msra.mxu0 %v5200
        %7799 = vmatprep.subr.bf16.mxu0 %v5180
        %7800 = vmatpush2.bf16.msra.mxu0 %v5179
        %7801 = vmatprep.subr.bf16.mxu0 %v5159
        %7802 = vmatpush2.bf16.msra.mxu0 %v5158
        %7803 = vmatprep.mubr.bf16.mxu0 %v227
        %7804 = vmatmul.mubr.bf16.gmra.mxu0 %v226
        %v7805 = vpop.f32.mrf.mxu0
        %v7806 = vadd.f32 %v7765, %v7805
        %v7807 = vpop.f32.mrf.mxu0
        %v7808 = vadd.f32 %v7767, %v7807
        %v7809 = vpop.f32.mrf.mxu0
        %v7810 = vpop.f32.mrf.mxu0
        %7811 = vdwg.mxu0
        %7812 = vmatprep.subr.bf16.mxu0 %v5474
        %7813 = vmatpush1.bf16.msra.mxu0 %v5473
        %7814 = vmatprep.subr.bf16.mxu0 %v5453
        %7815 = vmatpush1.bf16.msra.mxu0 %v5452
        %7816 = vmatprep.subr.bf16.mxu0 %v5432
        %7817 = vmatpush1.bf16.msra.mxu0 %v5431
        %7818 = vmatprep.subr.bf16.mxu0 %v5411
        %7819 = vmatpush1.bf16.msra.mxu0 %v5410
        %7820 = vmatprep.subr.bf16.mxu0 %v5390
        %7821 = vmatpush1.bf16.msra.mxu0 %v5389
        %7822 = vmatprep.subr.bf16.mxu0 %v5369
        %7823 = vmatpush1.bf16.msra.mxu0 %v5368
        %7824 = vmatprep.subr.bf16.mxu0 %v5348
        %7825 = vmatpush1.bf16.msra.mxu0 %v5347
        %7826 = vmatprep.subr.bf16.mxu0 %v5327
        %7827 = vmatpush1.bf16.msra.mxu0 %v5326
        %7828 = vmatprep.subr.bf16.mxu0 %v5642
        %7829 = vmatpush2.bf16.msra.mxu0 %v5641
        %7830 = vmatprep.subr.bf16.mxu0 %v5621
        %7831 = vmatpush2.bf16.msra.mxu0 %v5620
        %7832 = vmatprep.subr.bf16.mxu0 %v5600
        %7833 = vmatpush2.bf16.msra.mxu0 %v5599
        %7834 = vmatprep.subr.bf16.mxu0 %v5579
        %7835 = vmatpush2.bf16.msra.mxu0 %v5578
        %7836 = vmatprep.subr.bf16.mxu0 %v5558
        %7837 = vmatpush2.bf16.msra.mxu0 %v5557
        %7838 = vmatprep.subr.bf16.mxu0 %v5537
        %7839 = vmatpush2.bf16.msra.mxu0 %v5536
        %7840 = vmatprep.subr.bf16.mxu0 %v5516
        %7841 = vmatpush2.bf16.msra.mxu0 %v5515
        %7842 = vmatprep.subr.bf16.mxu0 %v5495
        %7843 = vmatpush2.bf16.msra.mxu0 %v5494
        %7844 = vmatprep.mubr.bf16.mxu0 %v229
        %7845 = vmatmul.mubr.bf16.gmra.mxu0 %v228
        %v7846 = vpop.f32.mrf.mxu0
        %v7847 = vadd.f32 %v7806, %v7846
        %v7848 = vpop.f32.mrf.mxu0
        %v7849 = vadd.f32 %v7808, %v7848
        %v7850 = vpop.f32.mrf.mxu0
        %v7851 = vpop.f32.mrf.mxu0
        %7852 = vdwg.mxu0
        %7853 = vmatprep.subr.bf16.mxu0 0
        %7854 = vmatpush1.bf16.msra.mxu0 0
        %7855 = vmatprep.subr.bf16.mxu0 0
        %7856 = vmatpush1.bf16.msra.mxu0 0
        %7857 = vmatprep.subr.bf16.mxu0 0
        %7858 = vmatpush1.bf16.msra.mxu0 0
        %7859 = vmatprep.subr.bf16.mxu0 0
        %7860 = vmatpush1.bf16.msra.mxu0 0
        %7861 = vmatprep.subr.bf16.mxu0 0
        %7862 = vmatpush1.bf16.msra.mxu0 0
        %7863 = vmatprep.subr.bf16.mxu0 0
        %7864 = vmatpush1.bf16.msra.mxu0 0
        %7865 = vmatprep.subr.bf16.mxu0 %v5684
        %7866 = vmatpush1.bf16.msra.mxu0 %v5683
        %7867 = vmatprep.subr.bf16.mxu0 %v5663
        %7868 = vmatpush1.bf16.msra.mxu0 %v5662
        %7869 = vmatprep.subr.bf16.mxu0 0
        %7870 = vmatpush2.bf16.msra.mxu0 0
        %7871 = vmatprep.subr.bf16.mxu0 0
        %7872 = vmatpush2.bf16.msra.mxu0 0
        %7873 = vmatprep.subr.bf16.mxu0 0
        %7874 = vmatpush2.bf16.msra.mxu0 0
        %7875 = vmatprep.subr.bf16.mxu0 0
        %7876 = vmatpush2.bf16.msra.mxu0 0
        %7877 = vmatprep.subr.bf16.mxu0 0
        %7878 = vmatpush2.bf16.msra.mxu0 0
        %7879 = vmatprep.subr.bf16.mxu0 0
        %7880 = vmatpush2.bf16.msra.mxu0 0
        %7881 = vmatprep.subr.bf16.mxu0 0
        %7882 = vmatpush2.bf16.msra.mxu0 0
        %7883 = vmatprep.subr.bf16.mxu0 0
        %7884 = vmatpush2.bf16.msra.mxu0 0
        %7885 = vmatprep.mubr.bf16.mxu0 0
        %7886 = vmatmul.mubr.bf16.gmra.mxu0 %v6744
        %v7887 = vpop.f32.mrf.mxu0
        %v7888 = vadd.f32 %v7847, %v7887
        %v7889 = vpop.f32.mrf.mxu0
        %v7890 = vadd.f32 %v7849, %v7889
        %v7891 = vpop.f32.mrf.mxu0
        %v7892 = vpop.f32.mrf.mxu0
        %7893 = vdwg.mxu0
        %7894 = vmatprep.subr.bf16.mxu0 %v4804
        %7895 = vmatpush1.bf16.msra.mxu0 %v4803
        %7896 = vmatprep.subr.bf16.mxu0 %v4783
        %7897 = vmatpush1.bf16.msra.mxu0 %v4782
        %7898 = vmatprep.subr.bf16.mxu0 %v4762
        %7899 = vmatpush1.bf16.msra.mxu0 %v4761
        %7900 = vmatprep.subr.bf16.mxu0 %v4741
        %7901 = vmatpush1.bf16.msra.mxu0 %v4740
        %7902 = vmatprep.subr.bf16.mxu0 %v4720
        %7903 = vmatpush1.bf16.msra.mxu0 %v4719
        %7904 = vmatprep.subr.bf16.mxu0 %v4699
        %7905 = vmatpush1.bf16.msra.mxu0 %v4698
        %7906 = vmatprep.subr.bf16.mxu0 %v4678
        %7907 = vmatpush1.bf16.msra.mxu0 %v4677
        %7908 = vmatprep.subr.bf16.mxu0 %v4657
        %7909 = vmatpush1.bf16.msra.mxu0 %v4656
        %7910 = vmatprep.subr.bf16.mxu0 %v4972
        %7911 = vmatpush2.bf16.msra.mxu0 %v4971
        %7912 = vmatprep.subr.bf16.mxu0 %v4951
        %7913 = vmatpush2.bf16.msra.mxu0 %v4950
        %7914 = vmatprep.subr.bf16.mxu0 %v4930
        %7915 = vmatpush2.bf16.msra.mxu0 %v4929
        %7916 = vmatprep.subr.bf16.mxu0 %v4909
        %7917 = vmatpush2.bf16.msra.mxu0 %v4908
        %7918 = vmatprep.subr.bf16.mxu0 %v4888
        %7919 = vmatpush2.bf16.msra.mxu0 %v4887
        %7920 = vmatprep.subr.bf16.mxu0 %v4867
        %7921 = vmatpush2.bf16.msra.mxu0 %v4866
        %7922 = vmatprep.subr.bf16.mxu0 %v4846
        %7923 = vmatpush2.bf16.msra.mxu0 %v4845
        %7924 = vmatprep.subr.bf16.mxu0 %v4825
        %7925 = vmatpush2.bf16.msra.mxu0 %v4824
        %7926 = vmatprep.mubr.bf16.mxu0 %v225
        %7927 = vmatmul.mubr.bf16.gmra.mxu0 %v224
        %v7928 = vpop.f32.mrf.mxu0
        %v7929 = vadd.f32 %v1396, %v7928
        %v7930 = vpop.f32.mrf.mxu0
        %v7931 = vadd.f32 %v1400, %v7930
        %v7932 = vpop.f32.mrf.mxu0
        %v7933 = vpop.f32.mrf.mxu0
        %7934 = vdwg.mxu0
        %7935 = vmatprep.subr.bf16.mxu0 %v5140
        %7936 = vmatpush1.bf16.msra.mxu0 %v5139
        %7937 = vmatprep.subr.bf16.mxu0 %v5119
        %7938 = vmatpush1.bf16.msra.mxu0 %v5118
        %7939 = vmatprep.subr.bf16.mxu0 %v5098
        %7940 = vmatpush1.bf16.msra.mxu0 %v5097
        %7941 = vmatprep.subr.bf16.mxu0 %v5077
        %7942 = vmatpush1.bf16.msra.mxu0 %v5076
        %7943 = vmatprep.subr.bf16.mxu0 %v5056
        %7944 = vmatpush1.bf16.msra.mxu0 %v5055
        %7945 = vmatprep.subr.bf16.mxu0 %v5035
        %7946 = vmatpush1.bf16.msra.mxu0 %v5034
        %7947 = vmatprep.subr.bf16.mxu0 %v5014
        %7948 = vmatpush1.bf16.msra.mxu0 %v5013
        %7949 = vmatprep.subr.bf16.mxu0 %v4993
        %7950 = vmatpush1.bf16.msra.mxu0 %v4992
        %7951 = vmatprep.subr.bf16.mxu0 %v5308
        %7952 = vmatpush2.bf16.msra.mxu0 %v5307
        %7953 = vmatprep.subr.bf16.mxu0 %v5287
        %7954 = vmatpush2.bf16.msra.mxu0 %v5286
        %7955 = vmatprep.subr.bf16.mxu0 %v5266
        %7956 = vmatpush2.bf16.msra.mxu0 %v5265
        %7957 = vmatprep.subr.bf16.mxu0 %v5245
        %7958 = vmatpush2.bf16.msra.mxu0 %v5244
        %7959 = vmatprep.subr.bf16.mxu0 %v5224
        %7960 = vmatpush2.bf16.msra.mxu0 %v5223
        %7961 = vmatprep.subr.bf16.mxu0 %v5203
        %7962 = vmatpush2.bf16.msra.mxu0 %v5202
        %7963 = vmatprep.subr.bf16.mxu0 %v5182
        %7964 = vmatpush2.bf16.msra.mxu0 %v5181
        %7965 = vmatprep.subr.bf16.mxu0 %v5161
        %7966 = vmatpush2.bf16.msra.mxu0 %v5160
        %7967 = vmatprep.mubr.bf16.mxu0 %v227
        %7968 = vmatmul.mubr.bf16.gmra.mxu0 %v226
        %v7969 = vpop.f32.mrf.mxu0
        %v7970 = vadd.f32 %v7929, %v7969
        %v7971 = vpop.f32.mrf.mxu0
        %v7972 = vadd.f32 %v7931, %v7971
        %v7973 = vpop.f32.mrf.mxu0
        %v7974 = vpop.f32.mrf.mxu0
        %7975 = vdwg.mxu0
        %7976 = vmatprep.subr.bf16.mxu0 %v5476
        %7977 = vmatpush1.bf16.msra.mxu0 %v5475
        %7978 = vmatprep.subr.bf16.mxu0 %v5455
        %7979 = vmatpush1.bf16.msra.mxu0 %v5454
        %7980 = vmatprep.subr.bf16.mxu0 %v5434
        %7981 = vmatpush1.bf16.msra.mxu0 %v5433
        %7982 = vmatprep.subr.bf16.mxu0 %v5413
        %7983 = vmatpush1.bf16.msra.mxu0 %v5412
        %7984 = vmatprep.subr.bf16.mxu0 %v5392
        %7985 = vmatpush1.bf16.msra.mxu0 %v5391
        %7986 = vmatprep.subr.bf16.mxu0 %v5371
        %7987 = vmatpush1.bf16.msra.mxu0 %v5370
        %7988 = vmatprep.subr.bf16.mxu0 %v5350
        %7989 = vmatpush1.bf16.msra.mxu0 %v5349
        %7990 = vmatprep.subr.bf16.mxu0 %v5329
        %7991 = vmatpush1.bf16.msra.mxu0 %v5328
        %7992 = vmatprep.subr.bf16.mxu0 %v5644
        %7993 = vmatpush2.bf16.msra.mxu0 %v5643
        %7994 = vmatprep.subr.bf16.mxu0 %v5623
        %7995 = vmatpush2.bf16.msra.mxu0 %v5622
        %7996 = vmatprep.subr.bf16.mxu0 %v5602
        %7997 = vmatpush2.bf16.msra.mxu0 %v5601
        %7998 = vmatprep.subr.bf16.mxu0 %v5581
        %7999 = vmatpush2.bf16.msra.mxu0 %v5580
        %8000 = vmatprep.subr.bf16.mxu0 %v5560
        %8001 = vmatpush2.bf16.msra.mxu0 %v5559
        %8002 = vmatprep.subr.bf16.mxu0 %v5539
        %8003 = vmatpush2.bf16.msra.mxu0 %v5538
        %8004 = vmatprep.subr.bf16.mxu0 %v5518
        %8005 = vmatpush2.bf16.msra.mxu0 %v5517
        %8006 = vmatprep.subr.bf16.mxu0 %v5497
        %8007 = vmatpush2.bf16.msra.mxu0 %v5496
        %8008 = vmatprep.mubr.bf16.mxu0 %v229
        %8009 = vmatmul.mubr.bf16.gmra.mxu0 %v228
        %v8010 = vpop.f32.mrf.mxu0
        %v8011 = vadd.f32 %v7970, %v8010
        %v8012 = vpop.f32.mrf.mxu0
        %v8013 = vadd.f32 %v7972, %v8012
        %v8014 = vpop.f32.mrf.mxu0
        %v8015 = vpop.f32.mrf.mxu0
        %8016 = vdwg.mxu0
        %8017 = vmatprep.subr.bf16.mxu0 0
        %8018 = vmatpush1.bf16.msra.mxu0 0
        %8019 = vmatprep.subr.bf16.mxu0 0
        %8020 = vmatpush1.bf16.msra.mxu0 0
        %8021 = vmatprep.subr.bf16.mxu0 0
        %8022 = vmatpush1.bf16.msra.mxu0 0
        %8023 = vmatprep.subr.bf16.mxu0 0
        %8024 = vmatpush1.bf16.msra.mxu0 0
        %8025 = vmatprep.subr.bf16.mxu0 0
        %8026 = vmatpush1.bf16.msra.mxu0 0
        %8027 = vmatprep.subr.bf16.mxu0 0
        %8028 = vmatpush1.bf16.msra.mxu0 0
        %8029 = vmatprep.subr.bf16.mxu0 %v5686
        %8030 = vmatpush1.bf16.msra.mxu0 %v5685
        %8031 = vmatprep.subr.bf16.mxu0 %v5665
        %8032 = vmatpush1.bf16.msra.mxu0 %v5664
        %8033 = vmatprep.subr.bf16.mxu0 0
        %8034 = vmatpush2.bf16.msra.mxu0 0
        %8035 = vmatprep.subr.bf16.mxu0 0
        %8036 = vmatpush2.bf16.msra.mxu0 0
        %8037 = vmatprep.subr.bf16.mxu0 0
        %8038 = vmatpush2.bf16.msra.mxu0 0
        %8039 = vmatprep.subr.bf16.mxu0 0
        %8040 = vmatpush2.bf16.msra.mxu0 0
        %8041 = vmatprep.subr.bf16.mxu0 0
        %8042 = vmatpush2.bf16.msra.mxu0 0
        %8043 = vmatprep.subr.bf16.mxu0 0
        %8044 = vmatpush2.bf16.msra.mxu0 0
        %8045 = vmatprep.subr.bf16.mxu0 0
        %8046 = vmatpush2.bf16.msra.mxu0 0
        %8047 = vmatprep.subr.bf16.mxu0 0
        %8048 = vmatpush2.bf16.msra.mxu0 0
        %8049 = vmatprep.mubr.bf16.mxu0 0
        %8050 = vmatmul.mubr.bf16.gmra.mxu0 %v6744
        %v8051 = vpop.f32.mrf.mxu0
        %v8052 = vadd.f32 %v8011, %v8051
        %v8053 = vpop.f32.mrf.mxu0
        %v8054 = vadd.f32 %v8013, %v8053
        %v8055 = vpop.f32.mrf.mxu0
        %v8056 = vpop.f32.mrf.mxu0
        %8057 = vdwg.mxu0
        %8058 = vmatprep.subr.bf16.mxu0 %v4806
        %8059 = vmatpush1.bf16.msra.mxu0 %v4805
        %8060 = vmatprep.subr.bf16.mxu0 %v4785
        %8061 = vmatpush1.bf16.msra.mxu0 %v4784
        %8062 = vmatprep.subr.bf16.mxu0 %v4764
        %8063 = vmatpush1.bf16.msra.mxu0 %v4763
        %8064 = vmatprep.subr.bf16.mxu0 %v4743
        %8065 = vmatpush1.bf16.msra.mxu0 %v4742
        %8066 = vmatprep.subr.bf16.mxu0 %v4722
        %8067 = vmatpush1.bf16.msra.mxu0 %v4721
        %8068 = vmatprep.subr.bf16.mxu0 %v4701
        %8069 = vmatpush1.bf16.msra.mxu0 %v4700
        %8070 = vmatprep.subr.bf16.mxu0 %v4680
        %8071 = vmatpush1.bf16.msra.mxu0 %v4679
        %8072 = vmatprep.subr.bf16.mxu0 %v4659
        %8073 = vmatpush1.bf16.msra.mxu0 %v4658
        %8074 = vmatprep.subr.bf16.mxu0 %v4974
        %8075 = vmatpush2.bf16.msra.mxu0 %v4973
        %8076 = vmatprep.subr.bf16.mxu0 %v4953
        %8077 = vmatpush2.bf16.msra.mxu0 %v4952
        %8078 = vmatprep.subr.bf16.mxu0 %v4932
        %8079 = vmatpush2.bf16.msra.mxu0 %v4931
        %8080 = vmatprep.subr.bf16.mxu0 %v4911
        %8081 = vmatpush2.bf16.msra.mxu0 %v4910
        %8082 = vmatprep.subr.bf16.mxu0 %v4890
        %8083 = vmatpush2.bf16.msra.mxu0 %v4889
        %8084 = vmatprep.subr.bf16.mxu0 %v4869
        %8085 = vmatpush2.bf16.msra.mxu0 %v4868
        %8086 = vmatprep.subr.bf16.mxu0 %v4848
        %8087 = vmatpush2.bf16.msra.mxu0 %v4847
        %8088 = vmatprep.subr.bf16.mxu0 %v4827
        %8089 = vmatpush2.bf16.msra.mxu0 %v4826
        %8090 = vmatprep.mubr.bf16.mxu0 %v225
        %8091 = vmatmul.mubr.bf16.gmra.mxu0 %v224
        %v8092 = vpop.f32.mrf.mxu0
        %v8093 = vadd.f32 %v1404, %v8092
        %v8094 = vpop.f32.mrf.mxu0
        %v8095 = vadd.f32 %v1408, %v8094
        %v8096 = vpop.f32.mrf.mxu0
        %v8097 = vpop.f32.mrf.mxu0
        %8098 = vdwg.mxu0
        %8099 = vmatprep.subr.bf16.mxu0 %v5142
        %8100 = vmatpush1.bf16.msra.mxu0 %v5141
        %8101 = vmatprep.subr.bf16.mxu0 %v5121
        %8102 = vmatpush1.bf16.msra.mxu0 %v5120
        %8103 = vmatprep.subr.bf16.mxu0 %v5100
        %8104 = vmatpush1.bf16.msra.mxu0 %v5099
        %8105 = vmatprep.subr.bf16.mxu0 %v5079
        %8106 = vmatpush1.bf16.msra.mxu0 %v5078
        %8107 = vmatprep.subr.bf16.mxu0 %v5058
        %8108 = vmatpush1.bf16.msra.mxu0 %v5057
        %8109 = vmatprep.subr.bf16.mxu0 %v5037
        %8110 = vmatpush1.bf16.msra.mxu0 %v5036
        %8111 = vmatprep.subr.bf16.mxu0 %v5016
        %8112 = vmatpush1.bf16.msra.mxu0 %v5015
        %8113 = vmatprep.subr.bf16.mxu0 %v4995
        %8114 = vmatpush1.bf16.msra.mxu0 %v4994
        %8115 = vmatprep.subr.bf16.mxu0 %v5310
        %8116 = vmatpush2.bf16.msra.mxu0 %v5309
        %8117 = vmatprep.subr.bf16.mxu0 %v5289
        %8118 = vmatpush2.bf16.msra.mxu0 %v5288
        %8119 = vmatprep.subr.bf16.mxu0 %v5268
        %8120 = vmatpush2.bf16.msra.mxu0 %v5267
        %8121 = vmatprep.subr.bf16.mxu0 %v5247
        %8122 = vmatpush2.bf16.msra.mxu0 %v5246
        %8123 = vmatprep.subr.bf16.mxu0 %v5226
        %8124 = vmatpush2.bf16.msra.mxu0 %v5225
        %8125 = vmatprep.subr.bf16.mxu0 %v5205
        %8126 = vmatpush2.bf16.msra.mxu0 %v5204
        %8127 = vmatprep.subr.bf16.mxu0 %v5184
        %8128 = vmatpush2.bf16.msra.mxu0 %v5183
        %8129 = vmatprep.subr.bf16.mxu0 %v5163
        %8130 = vmatpush2.bf16.msra.mxu0 %v5162
        %8131 = vmatprep.mubr.bf16.mxu0 %v227
        %8132 = vmatmul.mubr.bf16.gmra.mxu0 %v226
        %v8133 = vpop.f32.mrf.mxu0
        %v8134 = vadd.f32 %v8093, %v8133
        %v8135 = vpop.f32.mrf.mxu0
        %v8136 = vadd.f32 %v8095, %v8135
        %v8137 = vpop.f32.mrf.mxu0
        %v8138 = vpop.f32.mrf.mxu0
        %8139 = vdwg.mxu0
        %8140 = vmatprep.subr.bf16.mxu0 %v5478
        %8141 = vmatpush1.bf16.msra.mxu0 %v5477
        %8142 = vmatprep.subr.bf16.mxu0 %v5457
        %8143 = vmatpush1.bf16.msra.mxu0 %v5456
        %8144 = vmatprep.subr.bf16.mxu0 %v5436
        %8145 = vmatpush1.bf16.msra.mxu0 %v5435
        %8146 = vmatprep.subr.bf16.mxu0 %v5415
        %8147 = vmatpush1.bf16.msra.mxu0 %v5414
        %8148 = vmatprep.subr.bf16.mxu0 %v5394
        %8149 = vmatpush1.bf16.msra.mxu0 %v5393
        %8150 = vmatprep.subr.bf16.mxu0 %v5373
        %8151 = vmatpush1.bf16.msra.mxu0 %v5372
        %8152 = vmatprep.subr.bf16.mxu0 %v5352
        %8153 = vmatpush1.bf16.msra.mxu0 %v5351
        %8154 = vmatprep.subr.bf16.mxu0 %v5331
        %8155 = vmatpush1.bf16.msra.mxu0 %v5330
        %8156 = vmatprep.subr.bf16.mxu0 %v5646
        %8157 = vmatpush2.bf16.msra.mxu0 %v5645
        %8158 = vmatprep.subr.bf16.mxu0 %v5625
        %8159 = vmatpush2.bf16.msra.mxu0 %v5624
        %8160 = vmatprep.subr.bf16.mxu0 %v5604
        %8161 = vmatpush2.bf16.msra.mxu0 %v5603
        %8162 = vmatprep.subr.bf16.mxu0 %v5583
        %8163 = vmatpush2.bf16.msra.mxu0 %v5582
        %8164 = vmatprep.subr.bf16.mxu0 %v5562
        %8165 = vmatpush2.bf16.msra.mxu0 %v5561
        %8166 = vmatprep.subr.bf16.mxu0 %v5541
        %8167 = vmatpush2.bf16.msra.mxu0 %v5540
        %8168 = vmatprep.subr.bf16.mxu0 %v5520
        %8169 = vmatpush2.bf16.msra.mxu0 %v5519
        %8170 = vmatprep.subr.bf16.mxu0 %v5499
        %8171 = vmatpush2.bf16.msra.mxu0 %v5498
        %8172 = vmatprep.mubr.bf16.mxu0 %v229
        %8173 = vmatmul.mubr.bf16.gmra.mxu0 %v228
        %v8174 = vpop.f32.mrf.mxu0
        %v8175 = vadd.f32 %v8134, %v8174
        %v8176 = vpop.f32.mrf.mxu0
        %v8177 = vadd.f32 %v8136, %v8176
        %v8178 = vpop.f32.mrf.mxu0
        %v8179 = vpop.f32.mrf.mxu0
        %8180 = vdwg.mxu0
        %8181 = vmatprep.subr.bf16.mxu0 0
        %8182 = vmatpush1.bf16.msra.mxu0 0
        %8183 = vmatprep.subr.bf16.mxu0 0
        %8184 = vmatpush1.bf16.msra.mxu0 0
        %8185 = vmatprep.subr.bf16.mxu0 0
        %8186 = vmatpush1.bf16.msra.mxu0 0
        %8187 = vmatprep.subr.bf16.mxu0 0
        %8188 = vmatpush1.bf16.msra.mxu0 0
        %8189 = vmatprep.subr.bf16.mxu0 0
        %8190 = vmatpush1.bf16.msra.mxu0 0
        %8191 = vmatprep.subr.bf16.mxu0 0
        %8192 = vmatpush1.bf16.msra.mxu0 0
        %8193 = vmatprep.subr.bf16.mxu0 %v5688
        %8194 = vmatpush1.bf16.msra.mxu0 %v5687
        %8195 = vmatprep.subr.bf16.mxu0 %v5667
        %8196 = vmatpush1.bf16.msra.mxu0 %v5666
        %8197 = vmatprep.subr.bf16.mxu0 0
        %8198 = vmatpush2.bf16.msra.mxu0 0
        %8199 = vmatprep.subr.bf16.mxu0 0
        %8200 = vmatpush2.bf16.msra.mxu0 0
        %8201 = vmatprep.subr.bf16.mxu0 0
        %8202 = vmatpush2.bf16.msra.mxu0 0
        %8203 = vmatprep.subr.bf16.mxu0 0
        %8204 = vmatpush2.bf16.msra.mxu0 0
        %8205 = vmatprep.subr.bf16.mxu0 0
        %8206 = vmatpush2.bf16.msra.mxu0 0
        %8207 = vmatprep.subr.bf16.mxu0 0
        %8208 = vmatpush2.bf16.msra.mxu0 0
        %8209 = vmatprep.subr.bf16.mxu0 0
        %8210 = vmatpush2.bf16.msra.mxu0 0
        %8211 = vmatprep.subr.bf16.mxu0 0
        %8212 = vmatpush2.bf16.msra.mxu0 0
        %8213 = vmatprep.mubr.bf16.mxu0 0
        %8214 = vmatmul.mubr.bf16.gmra.mxu0 %v6744
        %v8215 = vpop.f32.mrf.mxu0
        %v8216 = vadd.f32 %v8175, %v8215
        %v8217 = vpop.f32.mrf.mxu0
        %v8218 = vadd.f32 %v8177, %v8217
        %v8219 = vpop.f32.mrf.mxu0
        %v8220 = vpop.f32.mrf.mxu0
        %8221 = vdwg.mxu0
        %8222 = vmatprep.subr.bf16.mxu0 %v4808
        %8223 = vmatpush1.bf16.msra.mxu0 %v4807
        %8224 = vmatprep.subr.bf16.mxu0 %v4787
        %8225 = vmatpush1.bf16.msra.mxu0 %v4786
        %8226 = vmatprep.subr.bf16.mxu0 %v4766
        %8227 = vmatpush1.bf16.msra.mxu0 %v4765
        %8228 = vmatprep.subr.bf16.mxu0 %v4745
        %8229 = vmatpush1.bf16.msra.mxu0 %v4744
        %8230 = vmatprep.subr.bf16.mxu0 %v4724
        %8231 = vmatpush1.bf16.msra.mxu0 %v4723
        %8232 = vmatprep.subr.bf16.mxu0 %v4703
        %8233 = vmatpush1.bf16.msra.mxu0 %v4702
        %8234 = vmatprep.subr.bf16.mxu0 %v4682
        %8235 = vmatpush1.bf16.msra.mxu0 %v4681
        %8236 = vmatprep.subr.bf16.mxu0 %v4661
        %8237 = vmatpush1.bf16.msra.mxu0 %v4660
        %8238 = vmatprep.subr.bf16.mxu0 %v4976
        %8239 = vmatpush2.bf16.msra.mxu0 %v4975
        %8240 = vmatprep.subr.bf16.mxu0 %v4955
        %8241 = vmatpush2.bf16.msra.mxu0 %v4954
        %8242 = vmatprep.subr.bf16.mxu0 %v4934
        %8243 = vmatpush2.bf16.msra.mxu0 %v4933
        %8244 = vmatprep.subr.bf16.mxu0 %v4913
        %8245 = vmatpush2.bf16.msra.mxu0 %v4912
        %8246 = vmatprep.subr.bf16.mxu0 %v4892
        %8247 = vmatpush2.bf16.msra.mxu0 %v4891
        %8248 = vmatprep.subr.bf16.mxu0 %v4871
        %8249 = vmatpush2.bf16.msra.mxu0 %v4870
        %8250 = vmatprep.subr.bf16.mxu0 %v4850
        %8251 = vmatpush2.bf16.msra.mxu0 %v4849
        %8252 = vmatprep.subr.bf16.mxu0 %v4829
        %8253 = vmatpush2.bf16.msra.mxu0 %v4828
        %8254 = vmatprep.mubr.bf16.mxu0 %v225
        %8255 = vmatmul.mubr.bf16.gmra.mxu0 %v224
        %v8256 = vpop.f32.mrf.mxu0
        %v8257 = vadd.f32 %v1412, %v8256
        %v8258 = vpop.f32.mrf.mxu0
        %v8259 = vadd.f32 %v1416, %v8258
        %v8260 = vpop.f32.mrf.mxu0
        %v8261 = vpop.f32.mrf.mxu0
        %8262 = vdwg.mxu0
        %8263 = vmatprep.subr.bf16.mxu0 %v5144
        %8264 = vmatpush1.bf16.msra.mxu0 %v5143
        %8265 = vmatprep.subr.bf16.mxu0 %v5123
        %8266 = vmatpush1.bf16.msra.mxu0 %v5122
        %8267 = vmatprep.subr.bf16.mxu0 %v5102
        %8268 = vmatpush1.bf16.msra.mxu0 %v5101
        %8269 = vmatprep.subr.bf16.mxu0 %v5081
        %8270 = vmatpush1.bf16.msra.mxu0 %v5080
        %8271 = vmatprep.subr.bf16.mxu0 %v5060
        %8272 = vmatpush1.bf16.msra.mxu0 %v5059
        %8273 = vmatprep.subr.bf16.mxu0 %v5039
        %8274 = vmatpush1.bf16.msra.mxu0 %v5038
        %8275 = vmatprep.subr.bf16.mxu0 %v5018
        %8276 = vmatpush1.bf16.msra.mxu0 %v5017
        %8277 = vmatprep.subr.bf16.mxu0 %v4997
        %8278 = vmatpush1.bf16.msra.mxu0 %v4996
        %8279 = vmatprep.subr.bf16.mxu0 %v5312
        %8280 = vmatpush2.bf16.msra.mxu0 %v5311
        %8281 = vmatprep.subr.bf16.mxu0 %v5291
        %8282 = vmatpush2.bf16.msra.mxu0 %v5290
        %8283 = vmatprep.subr.bf16.mxu0 %v5270
        %8284 = vmatpush2.bf16.msra.mxu0 %v5269
        %8285 = vmatprep.subr.bf16.mxu0 %v5249
        %8286 = vmatpush2.bf16.msra.mxu0 %v5248
        %8287 = vmatprep.subr.bf16.mxu0 %v5228
        %8288 = vmatpush2.bf16.msra.mxu0 %v5227
        %8289 = vmatprep.subr.bf16.mxu0 %v5207
        %8290 = vmatpush2.bf16.msra.mxu0 %v5206
        %8291 = vmatprep.subr.bf16.mxu0 %v5186
        %8292 = vmatpush2.bf16.msra.mxu0 %v5185
        %8293 = vmatprep.subr.bf16.mxu0 %v5165
        %8294 = vmatpush2.bf16.msra.mxu0 %v5164
        %8295 = vmatprep.mubr.bf16.mxu0 %v227
        %8296 = vmatmul.mubr.bf16.gmra.mxu0 %v226
        %v8297 = vpop.f32.mrf.mxu0
        %v8298 = vadd.f32 %v8257, %v8297
        %v8299 = vpop.f32.mrf.mxu0
        %v8300 = vadd.f32 %v8259, %v8299
        %v8301 = vpop.f32.mrf.mxu0
        %v8302 = vpop.f32.mrf.mxu0
        %8303 = vdwg.mxu0
        %8304 = vmatprep.subr.bf16.mxu0 %v5480
        %8305 = vmatpush1.bf16.msra.mxu0 %v5479
        %8306 = vmatprep.subr.bf16.mxu0 %v5459
        %8307 = vmatpush1.bf16.msra.mxu0 %v5458
        %8308 = vmatprep.subr.bf16.mxu0 %v5438
        %8309 = vmatpush1.bf16.msra.mxu0 %v5437
        %8310 = vmatprep.subr.bf16.mxu0 %v5417
        %8311 = vmatpush1.bf16.msra.mxu0 %v5416
        %8312 = vmatprep.subr.bf16.mxu0 %v5396
        %8313 = vmatpush1.bf16.msra.mxu0 %v5395
        %8314 = vmatprep.subr.bf16.mxu0 %v5375
        %8315 = vmatpush1.bf16.msra.mxu0 %v5374
        %8316 = vmatprep.subr.bf16.mxu0 %v5354
        %8317 = vmatpush1.bf16.msra.mxu0 %v5353
        %8318 = vmatprep.subr.bf16.mxu0 %v5333
        %8319 = vmatpush1.bf16.msra.mxu0 %v5332
        %8320 = vmatprep.subr.bf16.mxu0 %v5648
        %8321 = vmatpush2.bf16.msra.mxu0 %v5647
        %8322 = vmatprep.subr.bf16.mxu0 %v5627
        %8323 = vmatpush2.bf16.msra.mxu0 %v5626
        %8324 = vmatprep.subr.bf16.mxu0 %v5606
        %8325 = vmatpush2.bf16.msra.mxu0 %v5605
        %8326 = vmatprep.subr.bf16.mxu0 %v5585
        %8327 = vmatpush2.bf16.msra.mxu0 %v5584
        %8328 = vmatprep.subr.bf16.mxu0 %v5564
        %8329 = vmatpush2.bf16.msra.mxu0 %v5563
        %8330 = vmatprep.subr.bf16.mxu0 %v5543
        %8331 = vmatpush2.bf16.msra.mxu0 %v5542
        %8332 = vmatprep.subr.bf16.mxu0 %v5522
        %8333 = vmatpush2.bf16.msra.mxu0 %v5521
        %8334 = vmatprep.subr.bf16.mxu0 %v5501
        %8335 = vmatpush2.bf16.msra.mxu0 %v5500
        %8336 = vmatprep.mubr.bf16.mxu0 %v229
        %8337 = vmatmul.mubr.bf16.gmra.mxu0 %v228
        %v8338 = vpop.f32.mrf.mxu0
        %v8339 = vadd.f32 %v8298, %v8338
        %v8340 = vpop.f32.mrf.mxu0
        %v8341 = vadd.f32 %v8300, %v8340
        %v8342 = vpop.f32.mrf.mxu0
        %v8343 = vpop.f32.mrf.mxu0
        %8344 = vdwg.mxu0
        %8345 = vmatprep.subr.bf16.mxu0 0
        %8346 = vmatpush1.bf16.msra.mxu0 0
        %8347 = vmatprep.subr.bf16.mxu0 0
        %8348 = vmatpush1.bf16.msra.mxu0 0
        %8349 = vmatprep.subr.bf16.mxu0 0
        %8350 = vmatpush1.bf16.msra.mxu0 0
        %8351 = vmatprep.subr.bf16.mxu0 0
        %8352 = vmatpush1.bf16.msra.mxu0 0
        %8353 = vmatprep.subr.bf16.mxu0 0
        %8354 = vmatpush1.bf16.msra.mxu0 0
        %8355 = vmatprep.subr.bf16.mxu0 0
        %8356 = vmatpush1.bf16.msra.mxu0 0
        %8357 = vmatprep.subr.bf16.mxu0 %v5690
        %8358 = vmatpush1.bf16.msra.mxu0 %v5689
        %8359 = vmatprep.subr.bf16.mxu0 %v5669
        %8360 = vmatpush1.bf16.msra.mxu0 %v5668
        %8361 = vmatprep.subr.bf16.mxu0 0
        %8362 = vmatpush2.bf16.msra.mxu0 0
        %8363 = vmatprep.subr.bf16.mxu0 0
        %8364 = vmatpush2.bf16.msra.mxu0 0
        %8365 = vmatprep.subr.bf16.mxu0 0
        %8366 = vmatpush2.bf16.msra.mxu0 0
        %8367 = vmatprep.subr.bf16.mxu0 0
        %8368 = vmatpush2.bf16.msra.mxu0 0
        %8369 = vmatprep.subr.bf16.mxu0 0
        %8370 = vmatpush2.bf16.msra.mxu0 0
        %8371 = vmatprep.subr.bf16.mxu0 0
        %8372 = vmatpush2.bf16.msra.mxu0 0
        %8373 = vmatprep.subr.bf16.mxu0 0
        %8374 = vmatpush2.bf16.msra.mxu0 0
        %8375 = vmatprep.subr.bf16.mxu0 0
        %8376 = vmatpush2.bf16.msra.mxu0 0
        %8377 = vmatprep.mubr.bf16.mxu0 0
        %8378 = vmatmul.mubr.bf16.gmra.mxu0 %v6744
        %v8379 = vpop.f32.mrf.mxu0
        %v8380 = vadd.f32 %v8339, %v8379
        %v8381 = vpop.f32.mrf.mxu0
        %v8382 = vadd.f32 %v8341, %v8381
        %v8383 = vpop.f32.mrf.mxu0
        %v8384 = vpop.f32.mrf.mxu0
        %8385 = vdwg.mxu0
        %8386 = vmatprep.subr.bf16.mxu0 0
        %8387 = vmatpush1.bf16.msra.mxu0 %v4809
        %8388 = vmatprep.subr.bf16.mxu0 0
        %8389 = vmatpush1.bf16.msra.mxu0 %v4788
        %8390 = vmatprep.subr.bf16.mxu0 0
        %8391 = vmatpush1.bf16.msra.mxu0 %v4767
        %8392 = vmatprep.subr.bf16.mxu0 0
        %8393 = vmatpush1.bf16.msra.mxu0 %v4746
        %8394 = vmatprep.subr.bf16.mxu0 0
        %8395 = vmatpush1.bf16.msra.mxu0 %v4725
        %8396 = vmatprep.subr.bf16.mxu0 0
        %8397 = vmatpush1.bf16.msra.mxu0 %v4704
        %8398 = vmatprep.subr.bf16.mxu0 0
        %8399 = vmatpush1.bf16.msra.mxu0 %v4683
        %8400 = vmatprep.subr.bf16.mxu0 0
        %8401 = vmatpush1.bf16.msra.mxu0 %v4662
        %8402 = vmatprep.subr.bf16.mxu0 0
        %8403 = vmatpush2.bf16.msra.mxu0 %v4977
        %8404 = vmatprep.subr.bf16.mxu0 0
        %8405 = vmatpush2.bf16.msra.mxu0 %v4956
        %8406 = vmatprep.subr.bf16.mxu0 0
        %8407 = vmatpush2.bf16.msra.mxu0 %v4935
        %8408 = vmatprep.subr.bf16.mxu0 0
        %8409 = vmatpush2.bf16.msra.mxu0 %v4914
        %8410 = vmatprep.subr.bf16.mxu0 0
        %8411 = vmatpush2.bf16.msra.mxu0 %v4893
        %8412 = vmatprep.subr.bf16.mxu0 0
        %8413 = vmatpush2.bf16.msra.mxu0 %v4872
        %8414 = vmatprep.subr.bf16.mxu0 0
        %8415 = vmatpush2.bf16.msra.mxu0 %v4851
        %8416 = vmatprep.subr.bf16.mxu0 0
        %8417 = vmatpush2.bf16.msra.mxu0 %v4830
        %8418 = vmatprep.mubr.bf16.mxu0 %v225
        %8419 = vmatmul.mubr.bf16.gmra.mxu0 %v224
        %v8420 = vpop.f32.mrf.mxu0
        %v8421 = vadd.f32 %v1420, %v8420
        %v8422 = vpop.f32.mrf.mxu0
        %v8423 = vpop.f32.mrf.mxu0
        %v8424 = vpop.f32.mrf.mxu0
        %8425 = vdwg.mxu0
        %8426 = vmatprep.subr.bf16.mxu0 0
        %8427 = vmatpush1.bf16.msra.mxu0 %v5145
        %8428 = vmatprep.subr.bf16.mxu0 0
        %8429 = vmatpush1.bf16.msra.mxu0 %v5124
        %8430 = vmatprep.subr.bf16.mxu0 0
        %8431 = vmatpush1.bf16.msra.mxu0 %v5103
        %8432 = vmatprep.subr.bf16.mxu0 0
        %8433 = vmatpush1.bf16.msra.mxu0 %v5082
        %8434 = vmatprep.subr.bf16.mxu0 0
        %8435 = vmatpush1.bf16.msra.mxu0 %v5061
        %8436 = vmatprep.subr.bf16.mxu0 0
        %8437 = vmatpush1.bf16.msra.mxu0 %v5040
        %8438 = vmatprep.subr.bf16.mxu0 0
        %8439 = vmatpush1.bf16.msra.mxu0 %v5019
        %8440 = vmatprep.subr.bf16.mxu0 0
        %8441 = vmatpush1.bf16.msra.mxu0 %v4998
        %8442 = vmatprep.subr.bf16.mxu0 0
        %8443 = vmatpush2.bf16.msra.mxu0 %v5313
        %8444 = vmatprep.subr.bf16.mxu0 0
        %8445 = vmatpush2.bf16.msra.mxu0 %v5292
        %8446 = vmatprep.subr.bf16.mxu0 0
        %8447 = vmatpush2.bf16.msra.mxu0 %v5271
        %8448 = vmatprep.subr.bf16.mxu0 0
        %8449 = vmatpush2.bf16.msra.mxu0 %v5250
        %8450 = vmatprep.subr.bf16.mxu0 0
        %8451 = vmatpush2.bf16.msra.mxu0 %v5229
        %8452 = vmatprep.subr.bf16.mxu0 0
        %8453 = vmatpush2.bf16.msra.mxu0 %v5208
        %8454 = vmatprep.subr.bf16.mxu0 0
        %8455 = vmatpush2.bf16.msra.mxu0 %v5187
        %8456 = vmatprep.subr.bf16.mxu0 0
        %8457 = vmatpush2.bf16.msra.mxu0 %v5166
        %8458 = vmatprep.mubr.bf16.mxu0 %v227
        %8459 = vmatmul.mubr.bf16.gmra.mxu0 %v226
        %v8460 = vpop.f32.mrf.mxu0
        %v8461 = vadd.f32 %v8421, %v8460
        %v8462 = vpop.f32.mrf.mxu0
        %v8463 = vpop.f32.mrf.mxu0
        %v8464 = vpop.f32.mrf.mxu0
        %8465 = vdwg.mxu0
        %8466 = vmatprep.subr.bf16.mxu0 0
        %8467 = vmatpush1.bf16.msra.mxu0 %v5481
        %8468 = vmatprep.subr.bf16.mxu0 0
        %8469 = vmatpush1.bf16.msra.mxu0 %v5460
        %8470 = vmatprep.subr.bf16.mxu0 0
        %8471 = vmatpush1.bf16.msra.mxu0 %v5439
        %8472 = vmatprep.subr.bf16.mxu0 0
        %8473 = vmatpush1.bf16.msra.mxu0 %v5418
        %8474 = vmatprep.subr.bf16.mxu0 0
        %8475 = vmatpush1.bf16.msra.mxu0 %v5397
        %8476 = vmatprep.subr.bf16.mxu0 0
        %8477 = vmatpush1.bf16.msra.mxu0 %v5376
        %8478 = vmatprep.subr.bf16.mxu0 0
        %8479 = vmatpush1.bf16.msra.mxu0 %v5355
        %8480 = vmatprep.subr.bf16.mxu0 0
        %8481 = vmatpush1.bf16.msra.mxu0 %v5334
        %8482 = vmatprep.subr.bf16.mxu0 0
        %8483 = vmatpush2.bf16.msra.mxu0 %v5649
        %8484 = vmatprep.subr.bf16.mxu0 0
        %8485 = vmatpush2.bf16.msra.mxu0 %v5628
        %8486 = vmatprep.subr.bf16.mxu0 0
        %8487 = vmatpush2.bf16.msra.mxu0 %v5607
        %8488 = vmatprep.subr.bf16.mxu0 0
        %8489 = vmatpush2.bf16.msra.mxu0 %v5586
        %8490 = vmatprep.subr.bf16.mxu0 0
        %8491 = vmatpush2.bf16.msra.mxu0 %v5565
        %8492 = vmatprep.subr.bf16.mxu0 0
        %8493 = vmatpush2.bf16.msra.mxu0 %v5544
        %8494 = vmatprep.subr.bf16.mxu0 0
        %8495 = vmatpush2.bf16.msra.mxu0 %v5523
        %8496 = vmatprep.subr.bf16.mxu0 0
        %8497 = vmatpush2.bf16.msra.mxu0 %v5502
        %8498 = vmatprep.mubr.bf16.mxu0 %v229
        %8499 = vmatmul.mubr.bf16.gmra.mxu0 %v228
        %v8500 = vpop.f32.mrf.mxu0
        %v8501 = vadd.f32 %v8461, %v8500
        %v8502 = vpop.f32.mrf.mxu0
        %v8503 = vpop.f32.mrf.mxu0
        %v8504 = vpop.f32.mrf.mxu0
        %8505 = vdwg.mxu0
        %8506 = vmatprep.subr.bf16.mxu0 0
        %8507 = vmatpush1.bf16.msra.mxu0 0
        %8508 = vmatprep.subr.bf16.mxu0 0
        %8509 = vmatpush1.bf16.msra.mxu0 0
        %8510 = vmatprep.subr.bf16.mxu0 0
        %8511 = vmatpush1.bf16.msra.mxu0 0
        %8512 = vmatprep.subr.bf16.mxu0 0
        %8513 = vmatpush1.bf16.msra.mxu0 0
        %8514 = vmatprep.subr.bf16.mxu0 0
        %8515 = vmatpush1.bf16.msra.mxu0 0
        %8516 = vmatprep.subr.bf16.mxu0 0
        %8517 = vmatpush1.bf16.msra.mxu0 0
        %8518 = vmatprep.subr.bf16.mxu0 0
        %8519 = vmatpush1.bf16.msra.mxu0 %v5691
        %8520 = vmatprep.subr.bf16.mxu0 0
        %8521 = vmatpush1.bf16.msra.mxu0 %v5670
        %8522 = vmatprep.subr.bf16.mxu0 0
        %8523 = vmatpush2.bf16.msra.mxu0 0
        %8524 = vmatprep.subr.bf16.mxu0 0
        %8525 = vmatpush2.bf16.msra.mxu0 0
        %8526 = vmatprep.subr.bf16.mxu0 0
        %8527 = vmatpush2.bf16.msra.mxu0 0
        %8528 = vmatprep.subr.bf16.mxu0 0
        %8529 = vmatpush2.bf16.msra.mxu0 0
        %8530 = vmatprep.subr.bf16.mxu0 0
        %8531 = vmatpush2.bf16.msra.mxu0 0
        %8532 = vmatprep.subr.bf16.mxu0 0
        %8533 = vmatpush2.bf16.msra.mxu0 0
        %8534 = vmatprep.subr.bf16.mxu0 0
        %8535 = vmatpush2.bf16.msra.mxu0 0
        %8536 = vmatprep.subr.bf16.mxu0 0
        %8537 = vmatpush2.bf16.msra.mxu0 0
        %8538 = vmatprep.mubr.bf16.mxu0 0
        %8539 = vmatmul.mubr.bf16.gmra.mxu0 %v6744
        %v8540 = vpop.f32.mrf.mxu0
        %v8541 = vadd.f32 %v8501, %v8540
        %v8542 = vpop.f32.mrf.mxu0
        %v8543 = vpop.f32.mrf.mxu0
        %v8544 = vpop.f32.mrf.mxu0
        %8545 = vdwg.mxu0
        %v8546 = vmax.f32 %v6904, %v7232
        %v8547 = vmax.f32 %v6906, %v7234
        %v8548 = vmax.f32 %v7068, %v7396
        %v8549 = vmax.f32 %v7070, %v7398
        %v8550 = vmax.f32 %v8546, %v7560
        %v8551 = vmax.f32 %v8547, %v7562
        %v8552 = vmax.f32 %v8548, %v7724
        %v8553 = vmax.f32 %v8549, %v7726
        %v8554 = vmax.f32 %v8550, %v7888
        %v8555 = vmax.f32 %v8551, %v7890
        %v8556 = vmax.f32 %v8552, %v8052
        %v8557 = vmax.f32 %v8553, %v8054
        %v8558 = vmax.f32 %v8554, %v8216
        %v8559 = vmax.f32 %v8555, %v8218
        %v8560 = vmax.f32 %v8556, %v8380
        %v8561 = vmax.f32 %v8557, %v8382
        %v8562 = vmax.f32 %v8558, %v8541
        %v8563 = vmax.f32 %v8562, %v8559
        %v8564 = vmax.f32 %v8560, %v8561
        %v8565 = vmax.f32 %v8563, %v8564
        %8566 = vmax.xlane.f32.xlu0 %v8565
        %v8567 = vpop.xlane.xlu0 %8566
        %v8568 = vsub.f32 %v6904, %v8567
        %v8569 = vsub.f32 %v6906, %v8567
        %v8570 = vsub.f32 %v7068, %v8567
        %v8571 = vsub.f32 %v7070, %v8567
        %v8572 = vsub.f32 %v7232, %v8567
        %v8573 = vsub.f32 %v7234, %v8567
        %v8574 = vsub.f32 %v7396, %v8567
        %v8575 = vsub.f32 %v7398, %v8567
        %v8576 = vsub.f32 %v7560, %v8567
        %v8577 = vsub.f32 %v7562, %v8567
        %v8578 = vsub.f32 %v7724, %v8567
        %v8579 = vsub.f32 %v7726, %v8567
        %v8580 = vsub.f32 %v7888, %v8567
        %v8581 = vsub.f32 %v7890, %v8567
        %v8582 = vsub.f32 %v8052, %v8567
        %v8583 = vsub.f32 %v8054, %v8567
        %v8584 = vsub.f32 %v8216, %v8567
        %v8585 = vsub.f32 %v8218, %v8567
        %v8586 = vsub.f32 %v8380, %v8567
        %v8587 = vsub.f32 %v8382, %v8567
        %v8588 = vsub.f32 %v8541, %v8567
        %v8589 = vmul.f32 %v8568, 1.442695
        %v8590 = vpow.pop %v8589
        %v8591 = vmul.f32 %v8569, 1.442695
        %v8592 = vpow.pop %v8591
        %v8593 = vmul.f32 %v8570, 1.442695
        %v8594 = vpow.pop %v8593
        %v8595 = vmul.f32 %v8571, 1.442695
        %v8596 = vpow.pop %v8595
        %v8597 = vmul.f32 %v8572, 1.442695
        %v8598 = vpow.pop %v8597
        %v8599 = vmul.f32 %v8573, 1.442695
        %v8600 = vpow.pop %v8599
        %v8601 = vmul.f32 %v8574, 1.442695
        %v8602 = vpow.pop %v8601
        %v8603 = vmul.f32 %v8575, 1.442695
        %v8604 = vpow.pop %v8603
        %v8605 = vmul.f32 %v8576, 1.442695
        %v8606 = vpow.pop %v8605
        %v8607 = vmul.f32 %v8577, 1.442695
        %v8608 = vpow.pop %v8607
        %v8609 = vmul.f32 %v8578, 1.442695
        %v8610 = vpow.pop %v8609
        %v8611 = vmul.f32 %v8579, 1.442695
        %v8612 = vpow.pop %v8611
        %v8613 = vmul.f32 %v8580, 1.442695
        %v8614 = vpow.pop %v8613
        %v8615 = vmul.f32 %v8581, 1.442695
        %v8616 = vpow.pop %v8615
        %v8617 = vmul.f32 %v8582, 1.442695
        %v8618 = vpow.pop %v8617
        %v8619 = vmul.f32 %v8583, 1.442695
        %v8620 = vpow.pop %v8619
        %v8621 = vmul.f32 %v8584, 1.442695
        %v8622 = vpow.pop %v8621
        %v8623 = vmul.f32 %v8585, 1.442695
        %v8624 = vpow.pop %v8623
        %v8625 = vmul.f32 %v8586, 1.442695
        %v8626 = vpow.pop %v8625
        %v8627 = vmul.f32 %v8587, 1.442695
        %v8628 = vpow.pop %v8627
        %v8629 = vmul.f32 %v8588, 1.442695
        %v8630 = vpow.pop %v8629
        %v8631 = vadd.f32 %v8590, %v8592
        %v8632 = vadd.f32 %v8631, %v8594
        %v8633 = vadd.f32 %v8632, %v8596
        %v8634 = vadd.f32 %v8633, %v8598
        %v8635 = vadd.f32 %v8634, %v8600
        %v8636 = vadd.f32 %v8635, %v8602
        %v8637 = vadd.f32 %v8636, %v8604
        %v8638 = vadd.f32 %v8637, %v8606
        %v8639 = vadd.f32 %v8638, %v8608
        %v8640 = vadd.f32 %v8639, %v8610
        %v8641 = vadd.f32 %v8640, %v8612
        %v8642 = vadd.f32 %v8641, %v8614
        %v8643 = vadd.f32 %v8642, %v8616
        %v8644 = vadd.f32 %v8643, %v8618
        %v8645 = vadd.f32 %v8644, %v8620
        %v8646 = vadd.f32 %v8645, %v8622
        %v8647 = vadd.f32 %v8646, %v8624
        %v8648 = vadd.f32 %v8647, %v8626
        %v8649 = vadd.f32 %v8648, %v8628
        %v8650 = vadd.f32 %v8649, %v8630
        %8651 = vadd.xlane.f32.xlu0 %v8650
        %v8652 = vpop.xlane.xlu0 %8651
        %v8653 = vlog2.pop %v8652
        %v8654 = vmul.f32 %v8653, 0.6931472
        %v8655 = vadd.f32 %v8567, %v8654
        %v8656 = vsub.f32 %v6904, %v8655
        %v8657 = vsub.f32 %v6906, %v8655
        %v8658 = vsub.f32 %v7068, %v8655
        %v8659 = vsub.f32 %v7070, %v8655
        %v8660 = vsub.f32 %v7232, %v8655
        %v8661 = vsub.f32 %v7234, %v8655
        %v8662 = vsub.f32 %v7396, %v8655
        %v8663 = vsub.f32 %v7398, %v8655
        %v8664 = vsub.f32 %v7560, %v8655
        %v8665 = vsub.f32 %v7562, %v8655
        %v8666 = vsub.f32 %v7724, %v8655
        %v8667 = vsub.f32 %v7726, %v8655
        %v8668 = vsub.f32 %v7888, %v8655
        %v8669 = vsub.f32 %v7890, %v8655
        %v8670 = vsub.f32 %v8052, %v8655
        %v8671 = vsub.f32 %v8054, %v8655
        %v8672 = vsub.f32 %v8216, %v8655
        %v8673 = vsub.f32 %v8218, %v8655
        %v8674 = vsub.f32 %v8380, %v8655
        %v8675 = vsub.f32 %v8382, %v8655
        %v8676 = vsub.f32 %v8541, %v8655
        %8677 = vst [vmem:[%s215] sm:$0xff] %v8656
        %8678 = vst [vmem:[%s215 + $0x8] sm:$0xff] %v8657
        %8679 = vst [vmem:[%s215 + $0x10] sm:$0xff] %v8658
        %8680 = vst [vmem:[%s215 + $0x18] sm:$0xff] %v8659
        %8681 = vst [vmem:[%s215 + $0x20] sm:$0xff] %v8660
        %8682 = vst [vmem:[%s215 + $0x28] sm:$0xff] %v8661
        %8683 = vst [vmem:[%s215 + $0x30] sm:$0xff] %v8662
        %8684 = vst [vmem:[%s215 + $0x38] sm:$0xff] %v8663
        %8685 = vst [vmem:[%s215 + $0x40] sm:$0xff] %v8664
        %8686 = vst [vmem:[%s215 + $0x48] sm:$0xff] %v8665
        %8687 = vst [vmem:[%s215 + $0x50] sm:$0xff] %v8666
        %8688 = vst [vmem:[%s215 + $0x58] sm:$0xff] %v8667
        %8689 = vst [vmem:[%s215 + $0x60] sm:$0xff] %v8668
        %8690 = vst [vmem:[%s215 + $0x68] sm:$0xff] %v8669
        %8691 = vst [vmem:[%s215 + $0x70] sm:$0xff] %v8670
        %8692 = vst [vmem:[%s215 + $0x78] sm:$0xff] %v8671
        %8693 = vst [vmem:[%s215 + $0x80] sm:$0xff] %v8672
        %8694 = vst [vmem:[%s215 + $0x88] sm:$0xff] %v8673
        %8695 = vst [vmem:[%s215 + $0x90] sm:$0xff] %v8674
        %8696 = vst [vmem:[%s215 + $0x98] sm:$0xff] %v8675
        %8697 = vst [vmem:[%s215 + $0xa0] sm:$0xff] %v8676
        %p8698 = scmp.lt.s32.totalorder %s18, 1
        %s8699 = scalar_select %p8698, %s18, 1
        %s8700 = smul.addr %s8699, 21
        %s8701 = smul.addr %s8700, 8
        %s8702 = scalar_lea.vmem %s3, %s8701
        // Predicated region
        $region45: #{pre_encoder_forward.1} parent=31 // pred_check
          %p8703 = pneg %p104
        $region46: #{pre_encoder_forward.1} parent=31 // pred_check_branch
          %8705 = sbr.rel (%p8703) target = $region48
        $region47: #{pre_encoder_forward.1} parent=31 // pred_region
          _
        $region48: #{pre_encoder_forward.1} parent=31 // pred_fallthru
          _
      $region32: #{pre_encoder_forward.1} parent=5 // pred_fallthru
        _
      %p8706 = scmp.le.s32.totalorder 2, %s13
      // Predicated region
      $region49: #{pre_encoder_forward.1} parent=5 // pred_check
        %p8707 = pneg %p8706
      $region50: #{pre_encoder_forward.1} parent=5 // pred_check_branch
        %8709 = sbr.rel (%p8707) target = $region52
      $region51: #{pre_encoder_forward.1} parent=5 // pred_region
        %s8710 = ssub.s32 %s13, 2
        // Predicated region
        $region53: #{pre_encoder_forward.1} parent=51 // pred_check
          %p8711 = pneg %p110
        $region54: #{pre_encoder_forward.1} parent=51 // pred_check_branch
          %8713 = sbr.rel (%p8711) target = $region56
        $region55: #{pre_encoder_forward.1} parent=51 // pred_region
          %p8714 = scmp.lt.s32.totalorder %s19, 1
          %s8715 = scalar_select %p8714, %s19, 1
          %s8716 = smul.addr %s8715, 21
          %s8717 = smul.addr %s8716, 8
          %s8718 = scalar_lea.vmem %s3, %s8717
        $region56: #{pre_encoder_forward.1} parent=51 // pred_fallthru
          _
      $region52: #{pre_encoder_forward.1} parent=5 // pred_fallthru
        _
    $region6: #{pre_encoder_forward.1} parent=1 // loop_footer
      %s17 = sadd.s32 1, %s13
    $region7: #{pre_encoder_forward.1} parent=1 // loop_footer_branch
      %12 = sbr.rel target = $region3
    $region8: #{pre_encoder_forward.1} parent=1 // loop_exit
      _
    %8719 = vsyncpa [#allocation3], 1
    %s8720 = scalar_lea.sflag [#allocation3], 1
    %8721 = vsyncpa %s8720, 1
    %8722 = vsyncpa [#allocation5], 1

</llo_original>
